<compile_context>
chip_gen: v5e
topology: v5e:2x2
jax: 0.10.0
libtpu: 0.0.40
codegen_flags: <defaults>
</compile_context>

<pallas_src>
import functools

import jax
import jax.numpy as jnp
import numpy as np
from jax.experimental import pallas as pl
from jax.experimental.pallas import tpu as pltpu


def _round_up(x, m):
    return (x + m - 1) // m * m


def _num_tensorcores():
    """Best-effort detection of multi-TensorCore parts (v7x). Perf-only."""
    try:
        kind = jax.devices()[0].device_kind.lower()
    except Exception:
        return 1
    return 2 if ("v7" in kind or "7x" in kind) else 1


def _physical_vmem_bytes():
    try:
        return int(pltpu.get_tpu_info().vmem_capacity_bytes)
    except Exception:
        return 64 << 20          # conservative (v7x per-core VMEM)


def _vmem_limit_bytes(*, tb, dinp, hp, L, Lr, cblk, bblk, act_rows):
    n3 = 3 * hp
    need = (
        tb * dinp * 2 * 2                                   # x block, bf16, 2-buf
        + tb * hp * 4 * 2                                    # out block, f32, 2-buf
        + (dinp * n3 + Lr * hp * n3 + L * hp * n3) * 2 * 2   # weights bf16 (pessimistic 2-buf)
        + (L * n3 + L * hp) * 4 * 2                          # biases f32
        + act_rows * hp * 2                                  # act scratch bf16
        + cblk * n3 * 4                                      # gi scratch f32
        + bblk * hp * 4                                      # h scratch f32
    )
    limit = max(need * 5 // 4 + (4 << 20), 32 << 20)
    phys = _physical_vmem_bytes()
    return int(min(limit, max(phys - (2 << 20), 32 << 20)))


def _gru_stack_kernel(x_ref, wih0_ref, wihr_ref, whh_ref, bi_ref, bhn_ref,
                      out_ref, act_ref, gi_ref, h_ref, *,
                      num_layers, num_chunks, tchunk, bblk, hp,
                      carry_h, unroll):
    """All GRU layers + full time recurrence for one batch block.

    x_ref   : (TP*BBLK, DinP) bf16  layer-0 inputs, time-major rows
    wih0_ref: (DinP, 3*Hp)    bf16  layer-0 input weights, gates [r|z|n]
    wihr_ref: (max(L-1,1), Hp, 3*Hp) bf16  input weights of layers >= 1
    whh_ref : (L, Hp, 3*Hp)   bf16  hidden weights
    bi_ref  : (L, 1, 3*Hp)    f32   b_ih with b_hr/b_hz folded in
    bhn_ref : (L, 1, Hp)      f32   b_hn (kept separate)
    out_ref : (TP*BBLK, Hp)   f32   last layer's hidden states
    act_ref : (TP*BBLK, Hp)   bf16  inter-layer activation scratch
    gi_ref  : (TCHUNK*BBLK, 3*Hp) f32  per-chunk batched input projection
    h_ref   : (BBLK, Hp)      f32   hidden state (used only when not carry_h)
    """
    cblk = tchunk * bblk

    for layer in range(num_layers):
        is_last = layer == num_layers - 1
        # Per-layer constants, hoisted out of both time loops.
        w_ih = wih0_ref[...] if layer == 0 else wihr_ref[layer - 1]
        w_hh = whh_ref[layer]                                       # (Hp, 3Hp)
        b_i = bi_ref[layer]                                         # (1, 3Hp)
        b_hn = jnp.broadcast_to(bhn_ref[layer], (bblk, hp))         # hoisted bcast

        def gru_cell(h_prev, gi, w_hh=w_hh, b_hn=b_hn):
            gh = jnp.dot(h_prev.astype(w_hh.dtype), w_hh,
                         preferred_element_type=jnp.float32)        # (BBLK, 3Hp)
            r = jax.nn.sigmoid(gi[:, 0:hp] + gh[:, 0:hp])
            z = jax.nn.sigmoid(gi[:, hp:2 * hp] + gh[:, hp:2 * hp])
            n = jnp.tanh(gi[:, 2 * hp:3 * hp] + r * (gh[:, 2 * hp:3 * hp] + b_hn))
            return n + z * (h_prev - n)            # == (1 - z) * n + z * h_prev

        def chunk_body(c, carry, layer=layer, is_last=is_last,
                       w_ih=w_ih, b_i=b_i, gru_cell=gru_cell):
            row0 = pl.multiple_of(c * cblk, bblk)
            # ---- Phase 1: batched input projection for this TIME CHUNK only
            #      (one big MXU matmul, M = TCHUNK*BBLK). gi VMEM is bounded
            #      independent of T. Bias (with b_hr/b_hz folded) added once.
            x_chunk = (x_ref[pl.ds(row0, cblk), :] if layer == 0
                       else act_ref[pl.ds(row0, cblk), :])
            gi_ref[...] = jnp.dot(x_chunk, w_ih,
                                  preferred_element_type=jnp.float32) + b_i

            # ---- Phase 2: sequential recurrence over the chunk. Only the
            #      small hidden matmul + gate math remain in the time loop.
            def step(t, h_carry):
                roff = pl.multiple_of(t * bblk, bblk)
                h_prev = h_carry if carry_h else h_ref[...]
                h_new = gru_cell(h_prev, gi_ref[pl.ds(roff, bblk), :])
                row = row0 + roff
                if is_last:
                    # Lane-dense (BBLK, Hp) store, Hp multiple of 128.
                    out_ref[pl.ds(row, bblk), :] = h_new.astype(out_ref.dtype)
                else:
                    # bf16 store: already the next layer's matmul operand.
                    act_ref[pl.ds(row, bblk), :] = h_new.astype(act_ref.dtype)
                if carry_h:
                    return h_new
                h_ref[...] = h_new
                return h_carry

            return jax.lax.fori_loop(0, tchunk, step, carry, unroll=unroll)

        if carry_h:
            h0 = jnp.zeros((bblk, hp), jnp.float32)       # h lives in vregs
        else:
            h_ref[...] = jnp.zeros_like(h_ref)            # large block: keep in VMEM
            h0 = jnp.zeros((), jnp.int32)
        jax.lax.fori_loop(0, num_chunks, chunk_body, h0)


def _gru_stack_call(x_blk, wih0, wihr, whh, bi, bhn, *,
                    num_chunks, tchunk, bblk, hp, single_buffer_weights=True):
    nb, tb, dinp = x_blk.shape
    L = whh.shape[0]
    Lr = wihr.shape[0]
    cblk = tchunk * bblk
    act_rows = tb if L > 1 else 8                 # dummy tiny scratch when L == 1
    carry_h = bblk * hp * 4 <= 128 * 1024         # fits comfortably in vregs
    unroll = True if tchunk <= 8 else (2 if bblk * hp * 4 >= 128 * 1024 else 4)

    kernel = functools.partial(
        _gru_stack_kernel, num_layers=L, num_chunks=num_chunks, tchunk=tchunk,
        bblk=bblk, hp=hp, carry_h=carry_h, unroll=unroll)

    # Grid-invariant weights/biases: no point double-buffering them.
    w_mode = {"pipeline_mode": pl.Buffered(1)} if single_buffer_weights else {}

    vmem_limit = _vmem_limit_bytes(tb=tb, dinp=dinp, hp=hp, L=L, Lr=Lr,
                                   cblk=cblk, bblk=bblk, act_rows=act_rows)

    return pl.pallas_call(
        kernel,
        out_shape=jax.ShapeDtypeStruct((nb, tb, hp), jnp.float32),
        grid_spec=pltpu.PrefetchScalarGridSpec(
            num_scalar_prefetch=0,
            grid=(nb,),
            in_specs=[
                pl.BlockSpec((None, tb, dinp), lambda b: (b, 0, 0)),       # x
                pl.BlockSpec((dinp, 3 * hp), lambda b: (0, 0), **w_mode),  # wih0
                pl.BlockSpec((Lr, hp, 3 * hp), lambda b: (0, 0, 0), **w_mode),
                pl.BlockSpec((L, hp, 3 * hp), lambda b: (0, 0, 0), **w_mode),
                pl.BlockSpec((L, 1, 3 * hp), lambda b: (0, 0, 0), **w_mode),
                pl.BlockSpec((L, 1, hp), lambda b: (0, 0, 0), **w_mode),
            ],
            out_specs=pl.BlockSpec((None, tb, hp), lambda b: (b, 0, 0)),
            scratch_shapes=[
                pltpu.VMEM((act_rows, hp), jnp.bfloat16),     # inter-layer act
                pltpu.VMEM((cblk, 3 * hp), jnp.float32),      # per-chunk gi
                pltpu.VMEM((bblk, hp), jnp.float32),          # hidden (fallback)
            ],
        ),
        compiler_params=pltpu.CompilerParams(
            dimension_semantics=("parallel",),
            vmem_limit_bytes=vmem_limit),
    )(x_blk, wih0, wihr, whh, bi, bhn)


def _pad_gate_blocks(a, hidden, hp):
    """a: (rows, 3*hidden), gate order [r|z|n]. Pad each gate block to hp lanes."""
    blocks = [a[:, g * hidden:(g + 1) * hidden] for g in range(3)]
    blocks = [jnp.pad(b, ((0, 0), (0, hp - hidden))) for b in blocks]
    return jnp.concatenate(blocks, axis=1)


def gru_net_forward(x, params, *, single_buffer_weights=True,
                    max_bblk=None, max_tchunk=None):
    """x: (B, T, num_inputs), batch_first. params: [(w_ih, w_hh, b_ih, b_hh)] per layer.

    Returns out: (B, T, hidden_dims), matching nn.GRU(batch_first=True) eval fwd.
    """
    B, T, D = x.shape
    H = params[0][1].shape[1]
    L = len(params)

    hp = _round_up(H, 128)                    # lane-aligned hidden width
    dinp = _round_up(D, 128)                  # layer-0 K, decoupled from hp
    wdt = jnp.bfloat16                        # MXU operand dtype

    # ---- batch block: >= 2 "parallel" grid blocks on multi-TC parts (v7x);
    #      otherwise grow bblk for MXU fill (v5e/v6e). ----
    n_tc = _num_tensorcores()
    bcap = 128 if n_tc > 1 else 256
    if max_bblk is not None:
        bcap = min(bcap, max(8, (int(max_bblk) // 8) * 8))
    bblk = min(_round_up(B, 8), bcap)
    if n_tc > 1 and B > 8:
        bblk = min(bblk, _round_up(-(-B // n_tc), 8))
    nb = -(-B // bblk)
    bpad = nb * bblk

    # ---- time chunk for the phase-1 input projection (M ~= 1024 rows) ----
    tchunk = max(8, 1024 // bblk)
    if max_tchunk is not None:
        tchunk = min(tchunk, int(max_tchunk))
    tchunk = max(1, min(tchunk, T))
    nck = -(-T // tchunk)
    tp = nck * tchunk                         # padded sequence length
    tb = tp * bblk

    # ---- pack weights / biases (gate blocks lane-aligned, zero padded) ----
    wih0 = None
    wihr_l, whh_l, bi_l, bhn_l = [], [], [], []
    for layer, (w_ih, w_hh, b_ih, b_hh) in enumerate(params):
        w_ih_t = _pad_gate_blocks(jnp.transpose(w_ih).astype(jnp.float32), H, hp)
        w_hh_t = _pad_gate_blocks(jnp.transpose(w_hh).astype(jnp.float32), H, hp)
        w_hh_t = jnp.pad(w_hh_t, ((0, hp - H), (0, 0)))             # (hp, 3hp)
        if layer == 0:
            wih0 = jnp.pad(w_ih_t, ((0, dinp - D), (0, 0))).astype(wdt)
        else:
            wihr_l.append(jnp.pad(w_ih_t, ((0, hp - H), (0, 0))).astype(wdt))
        whh_l.append(w_hh_t.astype(wdt))
        b_i = b_ih.reshape(1, 3 * H).astype(jnp.float32)
        b_h = b_hh.reshape(1, 3 * H).astype(jnp.float32)
        # Fold b_hr / b_hz into the input bias; b_hn must stay separate.
        b_comb = jnp.concatenate(
            [b_i[:, 0:H] + b_h[:, 0:H],
             b_i[:, H:2 * H] + b_h[:, H:2 * H],
             b_i[:, 2 * H:3 * H]], axis=1)
        bi_l.append(_pad_gate_blocks(b_comb, H, hp))                # (1, 3hp)
        bhn_l.append(jnp.pad(b_h[:, 2 * H:3 * H], ((0, 0), (0, hp - H))))
    if not wihr_l:                                                  # L == 1 dummy
        wihr_l.append(jnp.zeros((hp, 3 * hp), wdt))
    wihr = jnp.stack(wihr_l)        # (max(L-1,1), hp, 3hp) bf16
    whh = jnp.stack(whh_l)          # (L, hp, 3hp) bf16
    bi = jnp.stack(bi_l)            # (L, 1, 3hp) f32
    bhn = jnp.stack(bhn_l)          # (L, 1, hp)  f32

    # ---- arrange x: (B,T,D) -> (nb, tp*bblk, dinp), time-major per block ----
    x_tm = jnp.transpose(x, (1, 0, 2)).astype(jnp.float32)          # (T, B, D)
    x_tm = jnp.pad(x_tm, ((0, tp - T), (0, bpad - B), (0, dinp - D)))
    x_blk = x_tm.reshape(tp, nb, bblk, dinp).transpose(1, 0, 2, 3)
    x_blk = x_blk.reshape(nb, tb, dinp).astype(wdt)

    out_blk = _gru_stack_call(
        x_blk, wih0, wihr, whh, bi, bhn,
        num_chunks=nck, tchunk=tchunk, bblk=bblk, hp=hp,
        single_buffer_weights=single_buffer_weights)                # (nb, tb, hp)

    out = out_blk.reshape(nb, tp, bblk, hp).transpose(1, 0, 2, 3)   # (tp,nb,bblk,hp)
    out = out.reshape(tp, bpad, hp)[:T, :B, :H]
    return jnp.transpose(out, (1, 0, 2)).astype(x.dtype)            # (B, T, H)


gru_net_forward_jit = jax.jit(
    gru_net_forward,
    static_argnames=("single_buffer_weights", "max_bblk", "max_tchunk"))


def init_gru_params(key, num_inputs, hidden_dims, num_layers):
    """Deterministic PyTorch-style init: U(-1/sqrt(H), 1/sqrt(H))."""
    bound = 1.0 / np.sqrt(hidden_dims)
    params = []
    for layer in range(num_layers):
        in_dim = num_inputs if layer == 0 else hidden_dims
        key, k1, k2, k3, k4 = jax.random.split(key, 5)
        w_ih = jax.random.uniform(k1, (3 * hidden_dims, in_dim),
                                  jnp.float32, -bound, bound)
        w_hh = jax.random.uniform(k2, (3 * hidden_dims, hidden_dims),
                                  jnp.float32, -bound, bound)
        b_ih = jax.random.uniform(k3, (3 * hidden_dims,),
                                  jnp.float32, -bound, bound)
        b_hh = jax.random.uniform(k4, (3 * hidden_dims,),
                                  jnp.float32, -bound, bound)
        params.append((w_ih, w_hh, b_ih, b_hh))
    return tuple(params)


def _gru_reference(x, params):
    """Pure-JAX f32 reference (lax.scan) for correctness checking."""
    def layer(h_seq, w_ih, w_hh, b_ih, b_hh):
        H = w_hh.shape[1]
        def step(h, x_t):
            gi = x_t @ w_ih.T + b_ih
            gh = h @ w_hh.T + b_hh
            i_r, i_z, i_n = gi[:, :H], gi[:, H:2 * H], gi[:, 2 * H:]
            h_r, h_z, h_n = gh[:, :H], gh[:, H:2 * H], gh[:, 2 * H:]
            r = jax.nn.sigmoid(i_r + h_r)
            z = jax.nn.sigmoid(i_z + h_z)
            n = jnp.tanh(i_n + r * h_n)
            h_new = (1.0 - z) * n + z * h
            return h_new, h_new
        h0 = jnp.zeros((h_seq.shape[1], H), jnp.float32)
        _, out = jax.lax.scan(step, h0, h_seq)
        return out
    h = jnp.transpose(x, (1, 0, 2))
    for (w_ih, w_hh, b_ih, b_hh) in params:
        h = layer(h, w_ih, w_hh, b_ih, b_hh)
    return jnp.transpose(h, (1, 0, 2))


def _run_case(key, *, B, T, D, H, L, sbw, max_bblk=None, max_tchunk=None):
    kx, kp = jax.random.split(key)
    x = jax.random.normal(kx, (B, T, D), jnp.float32)
    params = init_gru_params(kp, D, H, L)
    out = gru_net_forward_jit(x, params, single_buffer_weights=sbw,
                              max_bblk=max_bblk, max_tchunk=max_tchunk)
    jax.block_until_ready(out)
    ref = _gru_reference(x, params)
    assert out.shape == (B, T, H), out.shape
    # bf16 MXU operands -> relaxed tolerance (gate math / accumulation stay f32).
    np.testing.assert_allclose(np.asarray(out), np.asarray(ref),
                               rtol=2e-2, atol=2e-2)


if __name__ == "__main__":
    def _run_all(sbw):
        # Small GRUNet-like shapes: (batch=2, seq=8, num_inputs=16, hidden=32, layers=2).
        _run_case(jax.random.PRNGKey(0), B=2, T=8, D=16, H=32, L=2, sbw=sbw)
        # Exercises multi-block grid, time chunking, and batch/time/feature padding.
        _run_case(jax.random.PRNGKey(1), B=12, T=10, D=7, H=20, L=3, sbw=sbw,
                  max_bblk=8, max_tchunk=4)

    try:
        _run_all(sbw=True)
    except AssertionError:
        raise
    except Exception:
        # Fallback if this JAX build rejects pipeline_mode=pl.Buffered(1) on
        # pallas_call input BlockSpecs: rerun with default double buffering.
        _run_all(sbw=False)

    print("KERNEL_OK")
</pallas_src>

<mosaic_0001>
module attributes {stable_mosaic.version = 11 : i64} {
  func.func @_gru_stack_kernel(%arg0: i32, %arg1: memref<1x64x128xbf16, #tpu.memory_space<vmem>>, %arg2: memref<128x384xbf16, #tpu.memory_space<vmem>>, %arg3: memref<1x128x384xbf16, #tpu.memory_space<vmem>>, %arg4: memref<2x128x384xbf16, #tpu.memory_space<vmem>>, %arg5: memref<2x1x384xf32, #tpu.memory_space<vmem>>, %arg6: memref<2x1x128xf32, #tpu.memory_space<vmem>>, %arg7: memref<1x64x128xf32, #tpu.memory_space<vmem>>, %arg8: memref<64x128xbf16, #tpu.memory_space<vmem>>, %arg9: memref<64x384xf32, #tpu.memory_space<vmem>>, %arg10: memref<8x128xf32, #tpu.memory_space<vmem>>) attributes {dimension_semantics = [#tpu.dimension_semantics<parallel>], iteration_bounds = array<i64: 1>, scalar_prefetch = 0 : i64, scratch_operands = 3 : i64, tpu.core_type = #tpu.core_type<tc>, window_params = [{transform_indices = @transform_0, window_bounds = array<i64: 1, 64, 128>}, {pipeline_mode = #tpu.pipeline_mode<synchronous>, transform_indices = @transform_1, window_bounds = array<i64: 128, 384>}, {pipeline_mode = #tpu.pipeline_mode<synchronous>, transform_indices = @transform_2, window_bounds = array<i64: 1, 128, 384>}, {pipeline_mode = #tpu.pipeline_mode<synchronous>, transform_indices = @transform_3, window_bounds = array<i64: 2, 128, 384>}, {pipeline_mode = #tpu.pipeline_mode<synchronous>, transform_indices = @transform_4, window_bounds = array<i64: 2, 1, 384>}, {pipeline_mode = #tpu.pipeline_mode<synchronous>, transform_indices = @transform_5, window_bounds = array<i64: 2, 1, 128>}, {transform_indices = @transform_6, window_bounds = array<i64: 1, 64, 128>}]} {
    %c0 = arith.constant 0 : index
    %c0_0 = arith.constant 0 : index
    %0 = vector.load %arg2[%c0, %c0_0] : memref<128x384xbf16, #tpu.memory_space<vmem>>, vector<128x384xbf16>
    %c0_1 = arith.constant 0 : index
    %c0_2 = arith.constant 0 : index
    %c0_3 = arith.constant 0 : index
    %1 = vector.load %arg4[%c0_1, %c0_2, %c0_3] : memref<2x128x384xbf16, #tpu.memory_space<vmem>>, vector<1x128x384xbf16>
    %2 = vector.shape_cast %1 : vector<1x128x384xbf16> to vector<128x384xbf16>
    %c0_4 = arith.constant 0 : index
    %c0_5 = arith.constant 0 : index
    %c0_6 = arith.constant 0 : index
    %3 = vector.load %arg5[%c0_4, %c0_5, %c0_6] : memref<2x1x384xf32, #tpu.memory_space<vmem>>, vector<1x1x384xf32>
    %4 = vector.shape_cast %3 : vector<1x1x384xf32> to vector<1x384xf32>
    %c0_7 = arith.constant 0 : index
    %c0_8 = arith.constant 0 : index
    %c0_9 = arith.constant 0 : index
    %5 = vector.load %arg6[%c0_7, %c0_8, %c0_9] : memref<2x1x128xf32, #tpu.memory_space<vmem>>, vector<1x1x128xf32>
    %6 = vector.shape_cast %5 : vector<1x1x128xf32> to vector<1x128xf32>
    %7 = vector.shape_cast %6 : vector<1x128xf32> to vector<1x128xf32>
    %8 = vector.broadcast %7 : vector<1x128xf32> to vector<8x128xf32>
    %cst = arith.constant 0.000000e+00 : f32
    %9 = vector.broadcast %cst : f32 to vector<8x128xf32>
    %c0_i32 = arith.constant 0 : i32
    %c64_i32 = arith.constant 64 : i32
    %10 = arith.muli %c0_i32, %c64_i32 : i32
    %11 = tpu.assume_multiple %10, 8 : i32
    %c0_10 = arith.constant 0 : index
    %12 = arith.index_cast %11 : i32 to index
    %c0_11 = arith.constant 0 : index
    %13 = vector.load %arg1[%c0_10, %12, %c0_11] : memref<1x64x128xbf16, #tpu.memory_space<vmem>>, vector<1x64x128xbf16>
    %14 = vector.shape_cast %13 : vector<1x64x128xbf16> to vector<64x128xbf16>
    %cst_12 = arith.constant dense<0.000000e+00> : vector<64x384xf32>
    %15 = tpu.matmul %14, %0, %cst_12 {dimension_numbers = #tpu.dot_dimension_numbers<[1], [0], [0], [1], [0, 0, 1, 1], [], []>} : vector<64x128xbf16>, vector<128x384xbf16>, vector<64x384xf32> -> vector<64x384xf32>
    %16 = vector.broadcast %4 : vector<1x384xf32> to vector<64x384xf32>
    %17 = arith.addf %15, %16 : vector<64x384xf32>
    %c0_13 = arith.constant 0 : index
    %c0_14 = arith.constant 0 : index
    %18 = vector.load %arg9[%c0_13, %c0_14] : memref<64x384xf32, #tpu.memory_space<vmem>>, vector<64x384xf32>
    tpu.vector_store %arg9[%c0_13, %c0_14], %17 {strides = array<i32>} : memref<64x384xf32, #tpu.memory_space<vmem>>, vector<64x384xf32>,
    %c0_i32_15 = arith.constant 0 : i32
    %c8_i32 = arith.constant 8 : i32
    %19 = arith.muli %c0_i32_15, %c8_i32 : i32
    %20 = tpu.assume_multiple %19, 8 : i32
    %21 = arith.index_cast %20 : i32 to index
    %c0_16 = arith.constant 0 : index
    %22 = vector.load %arg9[%21, %c0_16] : memref<64x384xf32, #tpu.memory_space<vmem>>, vector<8x384xf32>
    %23 = arith.truncf %9 : vector<8x128xf32> to vector<8x128xbf16>
    %cst_17 = arith.constant dense<0.000000e+00> : vector<8x384xf32>
    %24 = tpu.matmul %23, %2, %cst_17 {dimension_numbers = #tpu.dot_dimension_numbers<[1], [0], [0], [1], [0, 0, 1, 1], [], []>} : vector<8x128xbf16>, vector<128x384xbf16>, vector<8x384xf32> -> vector<8x384xf32>
    %25 = vector.extract_strided_slice %22 {offsets = [0, 0], sizes = [8, 128], strides = [1, 1]} : vector<8x384xf32> to vector<8x128xf32>
    %26 = vector.extract_strided_slice %24 {offsets = [0, 0], sizes = [8, 128], strides = [1, 1]} : vector<8x384xf32> to vector<8x128xf32>
    %27 = arith.addf %25, %26 : vector<8x128xf32>
    %28 = arith.negf %27 : vector<8x128xf32>
    %29 = math.exp %28 : vector<8x128xf32>
    %cst_18 = arith.constant 1.000000e+00 : f32
    %30 = vector.broadcast %cst_18 : f32 to vector<8x128xf32>
    %31 = arith.addf %30, %29 : vector<8x128xf32>
    %32 = arith.divf %30, %31 : vector<8x128xf32>
    %33 = vector.extract_strided_slice %22 {offsets = [0, 128], sizes = [8, 128], strides = [1, 1]} : vector<8x384xf32> to vector<8x128xf32>
    %34 = vector.extract_strided_slice %24 {offsets = [0, 128], sizes = [8, 128], strides = [1, 1]} : vector<8x384xf32> to vector<8x128xf32>
    %35 = arith.addf %33, %34 : vector<8x128xf32>
    %36 = arith.negf %35 : vector<8x128xf32>
    %37 = math.exp %36 : vector<8x128xf32>
    %cst_19 = arith.constant 1.000000e+00 : f32
    %38 = vector.broadcast %cst_19 : f32 to vector<8x128xf32>
    %39 = arith.addf %38, %37 : vector<8x128xf32>
    %40 = arith.divf %38, %39 : vector<8x128xf32>
    %41 = vector.extract_strided_slice %22 {offsets = [0, 256], sizes = [8, 128], strides = [1, 1]} : vector<8x384xf32> to vector<8x128xf32>
    %42 = vector.extract_strided_slice %24 {offsets = [0, 256], sizes = [8, 128], strides = [1, 1]} : vector<8x384xf32> to vector<8x128xf32>
    %43 = arith.addf %42, %8 : vector<8x128xf32>
    %44 = arith.mulf %32, %43 : vector<8x128xf32>
    %45 = arith.addf %41, %44 : vector<8x128xf32>
    %46 = math.tanh %45 : vector<8x128xf32>
    %47 = arith.subf %9, %46 : vector<8x128xf32>
    %48 = arith.mulf %40, %47 : vector<8x128xf32>
    %49 = arith.addf %46, %48 : vector<8x128xf32>
    %50 = arith.addi %11, %20 : i32
    %51 = arith.truncf %49 : vector<8x128xf32> to vector<8x128xbf16>
    %52 = arith.index_cast %50 : i32 to index
    %c0_20 = arith.constant 0 : index
    %53 = vector.load %arg8[%52, %c0_20] : memref<64x128xbf16, #tpu.memory_space<vmem>>, vector<8x128xbf16>
    tpu.vector_store %arg8[%52, %c0_20], %51 {strides = array<i32>} : memref<64x128xbf16, #tpu.memory_space<vmem>>, vector<8x128xbf16>,
    %c1_i32 = arith.constant 1 : i32
    %c8_i32_21 = arith.constant 8 : i32
    %54 = arith.muli %c1_i32, %c8_i32_21 : i32
    %55 = tpu.assume_multiple %54, 8 : i32
    %56 = arith.index_cast %55 : i32 to index
    %c0_22 = arith.constant 0 : index
    %57 = vector.load %arg9[%56, %c0_22] : memref<64x384xf32, #tpu.memory_space<vmem>>, vector<8x384xf32>
    %58 = arith.truncf %49 : vector<8x128xf32> to vector<8x128xbf16>
    %cst_23 = arith.constant dense<0.000000e+00> : vector<8x384xf32>
    %59 = tpu.matmul %58, %2, %cst_23 {dimension_numbers = #tpu.dot_dimension_numbers<[1], [0], [0], [1], [0, 0, 1, 1], [], []>} : vector<8x128xbf16>, vector<128x384xbf16>, vector<8x384xf32> -> vector<8x384xf32>
    %60 = vector.extract_strided_slice %57 {offsets = [0, 0], sizes = [8, 128], strides = [1, 1]} : vector<8x384xf32> to vector<8x128xf32>
    %61 = vector.extract_strided_slice %59 {offsets = [0, 0], sizes = [8, 128], strides = [1, 1]} : vector<8x384xf32> to vector<8x128xf32>
    %62 = arith.addf %60, %61 : vector<8x128xf32>
    %63 = arith.negf %62 : vector<8x128xf32>
    %64 = math.exp %63 : vector<8x128xf32>
    %cst_24 = arith.constant 1.000000e+00 : f32
    %65 = vector.broadcast %cst_24 : f32 to vector<8x128xf32>
    %66 = arith.addf %65, %64 : vector<8x128xf32>
    %67 = arith.divf %65, %66 : vector<8x128xf32>
    %68 = vector.extract_strided_slice %57 {offsets = [0, 128], sizes = [8, 128], strides = [1, 1]} : vector<8x384xf32> to vector<8x128xf32>
    %69 = vector.extract_strided_slice %59 {offsets = [0, 128], sizes = [8, 128], strides = [1, 1]} : vector<8x384xf32> to vector<8x128xf32>
    %70 = arith.addf %68, %69 : vector<8x128xf32>
    %71 = arith.negf %70 : vector<8x128xf32>
    %72 = math.exp %71 : vector<8x128xf32>
    %cst_25 = arith.constant 1.000000e+00 : f32
    %73 = vector.broadcast %cst_25 : f32 to vector<8x128xf32>
    %74 = arith.addf %73, %72 : vector<8x128xf32>
    %75 = arith.divf %73, %74 : vector<8x128xf32>
    %76 = vector.extract_strided_slice %57 {offsets = [0, 256], sizes = [8, 128], strides = [1, 1]} : vector<8x384xf32> to vector<8x128xf32>
    %77 = vector.extract_strided_slice %59 {offsets = [0, 256], sizes = [8, 128], strides = [1, 1]} : vector<8x384xf32> to vector<8x128xf32>
    %78 = arith.addf %77, %8 : vector<8x128xf32>
    %79 = arith.mulf %67, %78 : vector<8x128xf32>
    %80 = arith.addf %76, %79 : vector<8x128xf32>
    %81 = math.tanh %80 : vector<8x128xf32>
    %82 = arith.subf %49, %81 : vector<8x128xf32>
    %83 = arith.mulf %75, %82 : vector<8x128xf32>
    %84 = arith.addf %81, %83 : vector<8x128xf32>
    %85 = arith.addi %11, %55 : i32
    %86 = arith.truncf %84 : vector<8x128xf32> to vector<8x128xbf16>
    %87 = arith.index_cast %85 : i32 to index
    %c0_26 = arith.constant 0 : index
    %88 = vector.load %arg8[%87, %c0_26] : memref<64x128xbf16, #tpu.memory_space<vmem>>, vector<8x128xbf16>
    tpu.vector_store %arg8[%87, %c0_26], %86 {strides = array<i32>} : memref<64x128xbf16, #tpu.memory_space<vmem>>, vector<8x128xbf16>,
    %c2_i32 = arith.constant 2 : i32
    %c8_i32_27 = arith.constant 8 : i32
    %89 = arith.muli %c2_i32, %c8_i32_27 : i32
    %90 = tpu.assume_multiple %89, 8 : i32
    %91 = arith.index_cast %90 : i32 to index
    %c0_28 = arith.constant 0 : index
    %92 = vector.load %arg9[%91, %c0_28] : memref<64x384xf32, #tpu.memory_space<vmem>>, vector<8x384xf32>
    %93 = arith.truncf %84 : vector<8x128xf32> to vector<8x128xbf16>
    %cst_29 = arith.constant dense<0.000000e+00> : vector<8x384xf32>
    %94 = tpu.matmul %93, %2, %cst_29 {dimension_numbers = #tpu.dot_dimension_numbers<[1], [0], [0], [1], [0, 0, 1, 1], [], []>} : vector<8x128xbf16>, vector<128x384xbf16>, vector<8x384xf32> -> vector<8x384xf32>
    %95 = vector.extract_strided_slice %92 {offsets = [0, 0], sizes = [8, 128], strides = [1, 1]} : vector<8x384xf32> to vector<8x128xf32>
    %96 = vector.extract_strided_slice %94 {offsets = [0, 0], sizes = [8, 128], strides = [1, 1]} : vector<8x384xf32> to vector<8x128xf32>
    %97 = arith.addf %95, %96 : vector<8x128xf32>
    %98 = arith.negf %97 : vector<8x128xf32>
    %99 = math.exp %98 : vector<8x128xf32>
    %cst_30 = arith.constant 1.000000e+00 : f32
    %100 = vector.broadcast %cst_30 : f32 to vector<8x128xf32>
    %101 = arith.addf %100, %99 : vector<8x128xf32>
    %102 = arith.divf %100, %101 : vector<8x128xf32>
    %103 = vector.extract_strided_slice %92 {offsets = [0, 128], sizes = [8, 128], strides = [1, 1]} : vector<8x384xf32> to vector<8x128xf32>
    %104 = vector.extract_strided_slice %94 {offsets = [0, 128], sizes = [8, 128], strides = [1, 1]} : vector<8x384xf32> to vector<8x128xf32>
    %105 = arith.addf %103, %104 : vector<8x128xf32>
    %106 = arith.negf %105 : vector<8x128xf32>
    %107 = math.exp %106 : vector<8x128xf32>
    %cst_31 = arith.constant 1.000000e+00 : f32
    %108 = vector.broadcast %cst_31 : f32 to vector<8x128xf32>
    %109 = arith.addf %108, %107 : vector<8x128xf32>
    %110 = arith.divf %108, %109 : vector<8x128xf32>
    %111 = vector.extract_strided_slice %92 {offsets = [0, 256], sizes = [8, 128], strides = [1, 1]} : vector<8x384xf32> to vector<8x128xf32>
    %112 = vector.extract_strided_slice %94 {offsets = [0, 256], sizes = [8, 128], strides = [1, 1]} : vector<8x384xf32> to vector<8x128xf32>
    %113 = arith.addf %112, %8 : vector<8x128xf32>
    %114 = arith.mulf %102, %113 : vector<8x128xf32>
    %115 = arith.addf %111, %114 : vector<8x128xf32>
    %116 = math.tanh %115 : vector<8x128xf32>
    %117 = arith.subf %84, %116 : vector<8x128xf32>
    %118 = arith.mulf %110, %117 : vector<8x128xf32>
    %119 = arith.addf %116, %118 : vector<8x128xf32>
    %120 = arith.addi %11, %90 : i32
    %121 = arith.truncf %119 : vector<8x128xf32> to vector<8x128xbf16>
    %122 = arith.index_cast %120 : i32 to index
    %c0_32 = arith.constant 0 : index
    %123 = vector.load %arg8[%122, %c0_32] : memref<64x128xbf16, #tpu.memory_space<vmem>>, vector<8x128xbf16>
    tpu.vector_store %arg8[%122, %c0_32], %121 {strides = array<i32>} : memref<64x128xbf16, #tpu.memory_space<vmem>>, vector<8x128xbf16>,
    %c3_i32 = arith.constant 3 : i32
    %c8_i32_33 = arith.constant 8 : i32
    %124 = arith.muli %c3_i32, %c8_i32_33 : i32
    %125 = tpu.assume_multiple %124, 8 : i32
    %126 = arith.index_cast %125 : i32 to index
    %c0_34 = arith.constant 0 : index
    %127 = vector.load %arg9[%126, %c0_34] : memref<64x384xf32, #tpu.memory_space<vmem>>, vector<8x384xf32>
    %128 = arith.truncf %119 : vector<8x128xf32> to vector<8x128xbf16>
    %cst_35 = arith.constant dense<0.000000e+00> : vector<8x384xf32>
    %129 = tpu.matmul %128, %2, %cst_35 {dimension_numbers = #tpu.dot_dimension_numbers<[1], [0], [0], [1], [0, 0, 1, 1], [], []>} : vector<8x128xbf16>, vector<128x384xbf16>, vector<8x384xf32> -> vector<8x384xf32>
    %130 = vector.extract_strided_slice %127 {offsets = [0, 0], sizes = [8, 128], strides = [1, 1]} : vector<8x384xf32> to vector<8x128xf32>
    %131 = vector.extract_strided_slice %129 {offsets = [0, 0], sizes = [8, 128], strides = [1, 1]} : vector<8x384xf32> to vector<8x128xf32>
    %132 = arith.addf %130, %131 : vector<8x128xf32>
    %133 = arith.negf %132 : vector<8x128xf32>
    %134 = math.exp %133 : vector<8x128xf32>
    %cst_36 = arith.constant 1.000000e+00 : f32
    %135 = vector.broadcast %cst_36 : f32 to vector<8x128xf32>
    %136 = arith.addf %135, %134 : vector<8x128xf32>
    %137 = arith.divf %135, %136 : vector<8x128xf32>
    %138 = vector.extract_strided_slice %127 {offsets = [0, 128], sizes = [8, 128], strides = [1, 1]} : vector<8x384xf32> to vector<8x128xf32>
    %139 = vector.extract_strided_slice %129 {offsets = [0, 128], sizes = [8, 128], strides = [1, 1]} : vector<8x384xf32> to vector<8x128xf32>
    %140 = arith.addf %138, %139 : vector<8x128xf32>
    %141 = arith.negf %140 : vector<8x128xf32>
    %142 = math.exp %141 : vector<8x128xf32>
    %cst_37 = arith.constant 1.000000e+00 : f32
    %143 = vector.broadcast %cst_37 : f32 to vector<8x128xf32>
    %144 = arith.addf %143, %142 : vector<8x128xf32>
    %145 = arith.divf %143, %144 : vector<8x128xf32>
    %146 = vector.extract_strided_slice %127 {offsets = [0, 256], sizes = [8, 128], strides = [1, 1]} : vector<8x384xf32> to vector<8x128xf32>
    %147 = vector.extract_strided_slice %129 {offsets = [0, 256], sizes = [8, 128], strides = [1, 1]} : vector<8x384xf32> to vector<8x128xf32>
    %148 = arith.addf %147, %8 : vector<8x128xf32>
    %149 = arith.mulf %137, %148 : vector<8x128xf32>
    %150 = arith.addf %146, %149 : vector<8x128xf32>
    %151 = math.tanh %150 : vector<8x128xf32>
    %152 = arith.subf %119, %151 : vector<8x128xf32>
    %153 = arith.mulf %145, %152 : vector<8x128xf32>
    %154 = arith.addf %151, %153 : vector<8x128xf32>
    %155 = arith.addi %11, %125 : i32
    %156 = arith.truncf %154 : vector<8x128xf32> to vector<8x128xbf16>
    %157 = arith.index_cast %155 : i32 to index
    %c0_38 = arith.constant 0 : index
    %158 = vector.load %arg8[%157, %c0_38] : memref<64x128xbf16, #tpu.memory_space<vmem>>, vector<8x128xbf16>
    tpu.vector_store %arg8[%157, %c0_38], %156 {strides = array<i32>} : memref<64x128xbf16, #tpu.memory_space<vmem>>, vector<8x128xbf16>,
    %c4_i32 = arith.constant 4 : i32
    %c8_i32_39 = arith.constant 8 : i32
    %159 = arith.muli %c4_i32, %c8_i32_39 : i32
    %160 = tpu.assume_multiple %159, 8 : i32
    %161 = arith.index_cast %160 : i32 to index
    %c0_40 = arith.constant 0 : index
    %162 = vector.load %arg9[%161, %c0_40] : memref<64x384xf32, #tpu.memory_space<vmem>>, vector<8x384xf32>
    %163 = arith.truncf %154 : vector<8x128xf32> to vector<8x128xbf16>
    %cst_41 = arith.constant dense<0.000000e+00> : vector<8x384xf32>
    %164 = tpu.matmul %163, %2, %cst_41 {dimension_numbers = #tpu.dot_dimension_numbers<[1], [0], [0], [1], [0, 0, 1, 1], [], []>} : vector<8x128xbf16>, vector<128x384xbf16>, vector<8x384xf32> -> vector<8x384xf32>
    %165 = vector.extract_strided_slice %162 {offsets = [0, 0], sizes = [8, 128], strides = [1, 1]} : vector<8x384xf32> to vector<8x128xf32>
    %166 = vector.extract_strided_slice %164 {offsets = [0, 0], sizes = [8, 128], strides = [1, 1]} : vector<8x384xf32> to vector<8x128xf32>
    %167 = arith.addf %165, %166 : vector<8x128xf32>
    %168 = arith.negf %167 : vector<8x128xf32>
    %169 = math.exp %168 : vector<8x128xf32>
    %cst_42 = arith.constant 1.000000e+00 : f32
    %170 = vector.broadcast %cst_42 : f32 to vector<8x128xf32>
    %171 = arith.addf %170, %169 : vector<8x128xf32>
    %172 = arith.divf %170, %171 : vector<8x128xf32>
    %173 = vector.extract_strided_slice %162 {offsets = [0, 128], sizes = [8, 128], strides = [1, 1]} : vector<8x384xf32> to vector<8x128xf32>
    %174 = vector.extract_strided_slice %164 {offsets = [0, 128], sizes = [8, 128], strides = [1, 1]} : vector<8x384xf32> to vector<8x128xf32>
    %175 = arith.addf %173, %174 : vector<8x128xf32>
    %176 = arith.negf %175 : vector<8x128xf32>
    %177 = math.exp %176 : vector<8x128xf32>
    %cst_43 = arith.constant 1.000000e+00 : f32
    %178 = vector.broadcast %cst_43 : f32 to vector<8x128xf32>
    %179 = arith.addf %178, %177 : vector<8x128xf32>
    %180 = arith.divf %178, %179 : vector<8x128xf32>
    %181 = vector.extract_strided_slice %162 {offsets = [0, 256], sizes = [8, 128], strides = [1, 1]} : vector<8x384xf32> to vector<8x128xf32>
    %182 = vector.extract_strided_slice %164 {offsets = [0, 256], sizes = [8, 128], strides = [1, 1]} : vector<8x384xf32> to vector<8x128xf32>
    %183 = arith.addf %182, %8 : vector<8x128xf32>
    %184 = arith.mulf %172, %183 : vector<8x128xf32>
    %185 = arith.addf %181, %184 : vector<8x128xf32>
    %186 = math.tanh %185 : vector<8x128xf32>
    %187 = arith.subf %154, %186 : vector<8x128xf32>
    %188 = arith.mulf %180, %187 : vector<8x128xf32>
    %189 = arith.addf %186, %188 : vector<8x128xf32>
    %190 = arith.addi %11, %160 : i32
    %191 = arith.truncf %189 : vector<8x128xf32> to vector<8x128xbf16>
    %192 = arith.index_cast %190 : i32 to index
    %c0_44 = arith.constant 0 : index
    %193 = vector.load %arg8[%192, %c0_44] : memref<64x128xbf16, #tpu.memory_space<vmem>>, vector<8x128xbf16>
    tpu.vector_store %arg8[%192, %c0_44], %191 {strides = array<i32>} : memref<64x128xbf16, #tpu.memory_space<vmem>>, vector<8x128xbf16>,
    %c5_i32 = arith.constant 5 : i32
    %c8_i32_45 = arith.constant 8 : i32
    %194 = arith.muli %c5_i32, %c8_i32_45 : i32
    %195 = tpu.assume_multiple %194, 8 : i32
    %196 = arith.index_cast %195 : i32 to index
    %c0_46 = arith.constant 0 : index
    %197 = vector.load %arg9[%196, %c0_46] : memref<64x384xf32, #tpu.memory_space<vmem>>, vector<8x384xf32>
    %198 = arith.truncf %189 : vector<8x128xf32> to vector<8x128xbf16>
    %cst_47 = arith.constant dense<0.000000e+00> : vector<8x384xf32>
    %199 = tpu.matmul %198, %2, %cst_47 {dimension_numbers = #tpu.dot_dimension_numbers<[1], [0], [0], [1], [0, 0, 1, 1], [], []>} : vector<8x128xbf16>, vector<128x384xbf16>, vector<8x384xf32> -> vector<8x384xf32>
    %200 = vector.extract_strided_slice %197 {offsets = [0, 0], sizes = [8, 128], strides = [1, 1]} : vector<8x384xf32> to vector<8x128xf32>
    %201 = vector.extract_strided_slice %199 {offsets = [0, 0], sizes = [8, 128], strides = [1, 1]} : vector<8x384xf32> to vector<8x128xf32>
    %202 = arith.addf %200, %201 : vector<8x128xf32>
    %203 = arith.negf %202 : vector<8x128xf32>
    %204 = math.exp %203 : vector<8x128xf32>
    %cst_48 = arith.constant 1.000000e+00 : f32
    %205 = vector.broadcast %cst_48 : f32 to vector<8x128xf32>
    %206 = arith.addf %205, %204 : vector<8x128xf32>
    %207 = arith.divf %205, %206 : vector<8x128xf32>
    %208 = vector.extract_strided_slice %197 {offsets = [0, 128], sizes = [8, 128], strides = [1, 1]} : vector<8x384xf32> to vector<8x128xf32>
    %209 = vector.extract_strided_slice %199 {offsets = [0, 128], sizes = [8, 128], strides = [1, 1]} : vector<8x384xf32> to vector<8x128xf32>
    %210 = arith.addf %208, %209 : vector<8x128xf32>
    %211 = arith.negf %210 : vector<8x128xf32>
    %212 = math.exp %211 : vector<8x128xf32>
    %cst_49 = arith.constant 1.000000e+00 : f32
    %213 = vector.broadcast %cst_49 : f32 to vector<8x128xf32>
    %214 = arith.addf %213, %212 : vector<8x128xf32>
    %215 = arith.divf %213, %214 : vector<8x128xf32>
    %216 = vector.extract_strided_slice %197 {offsets = [0, 256], sizes = [8, 128], strides = [1, 1]} : vector<8x384xf32> to vector<8x128xf32>
    %217 = vector.extract_strided_slice %199 {offsets = [0, 256], sizes = [8, 128], strides = [1, 1]} : vector<8x384xf32> to vector<8x128xf32>
    %218 = arith.addf %217, %8 : vector<8x128xf32>
    %219 = arith.mulf %207, %218 : vector<8x128xf32>
    %220 = arith.addf %216, %219 : vector<8x128xf32>
    %221 = math.tanh %220 : vector<8x128xf32>
    %222 = arith.subf %189, %221 : vector<8x128xf32>
    %223 = arith.mulf %215, %222 : vector<8x128xf32>
    %224 = arith.addf %221, %223 : vector<8x128xf32>
    %225 = arith.addi %11, %195 : i32
    %226 = arith.truncf %224 : vector<8x128xf32> to vector<8x128xbf16>
    %227 = arith.index_cast %225 : i32 to index
    %c0_50 = arith.constant 0 : index
    %228 = vector.load %arg8[%227, %c0_50] : memref<64x128xbf16, #tpu.memory_space<vmem>>, vector<8x128xbf16>
    tpu.vector_store %arg8[%227, %c0_50], %226 {strides = array<i32>} : memref<64x128xbf16, #tpu.memory_space<vmem>>, vector<8x128xbf16>,
    %c6_i32 = arith.constant 6 : i32
    %c8_i32_51 = arith.constant 8 : i32
    %229 = arith.muli %c6_i32, %c8_i32_51 : i32
    %230 = tpu.assume_multiple %229, 8 : i32
    %231 = arith.index_cast %230 : i32 to index
    %c0_52 = arith.constant 0 : index
    %232 = vector.load %arg9[%231, %c0_52] : memref<64x384xf32, #tpu.memory_space<vmem>>, vector<8x384xf32>
    %233 = arith.truncf %224 : vector<8x128xf32> to vector<8x128xbf16>
    %cst_53 = arith.constant dense<0.000000e+00> : vector<8x384xf32>
    %234 = tpu.matmul %233, %2, %cst_53 {dimension_numbers = #tpu.dot_dimension_numbers<[1], [0], [0], [1], [0, 0, 1, 1], [], []>} : vector<8x128xbf16>, vector<128x384xbf16>, vector<8x384xf32> -> vector<8x384xf32>
    %235 = vector.extract_strided_slice %232 {offsets = [0, 0], sizes = [8, 128], strides = [1, 1]} : vector<8x384xf32> to vector<8x128xf32>
    %236 = vector.extract_strided_slice %234 {offsets = [0, 0], sizes = [8, 128], strides = [1, 1]} : vector<8x384xf32> to vector<8x128xf32>
    %237 = arith.addf %235, %236 : vector<8x128xf32>
    %238 = arith.negf %237 : vector<8x128xf32>
    %239 = math.exp %238 : vector<8x128xf32>
    %cst_54 = arith.constant 1.000000e+00 : f32
    %240 = vector.broadcast %cst_54 : f32 to vector<8x128xf32>
    %241 = arith.addf %240, %239 : vector<8x128xf32>
    %242 = arith.divf %240, %241 : vector<8x128xf32>
    %243 = vector.extract_strided_slice %232 {offsets = [0, 128], sizes = [8, 128], strides = [1, 1]} : vector<8x384xf32> to vector<8x128xf32>
    %244 = vector.extract_strided_slice %234 {offsets = [0, 128], sizes = [8, 128], strides = [1, 1]} : vector<8x384xf32> to vector<8x128xf32>
    %245 = arith.addf %243, %244 : vector<8x128xf32>
    %246 = arith.negf %245 : vector<8x128xf32>
    %247 = math.exp %246 : vector<8x128xf32>
    %cst_55 = arith.constant 1.000000e+00 : f32
    %248 = vector.broadcast %cst_55 : f32 to vector<8x128xf32>
    %249 = arith.addf %248, %247 : vector<8x128xf32>
    %250 = arith.divf %248, %249 : vector<8x128xf32>
    %251 = vector.extract_strided_slice %232 {offsets = [0, 256], sizes = [8, 128], strides = [1, 1]} : vector<8x384xf32> to vector<8x128xf32>
    %252 = vector.extract_strided_slice %234 {offsets = [0, 256], sizes = [8, 128], strides = [1, 1]} : vector<8x384xf32> to vector<8x128xf32>
    %253 = arith.addf %252, %8 : vector<8x128xf32>
    %254 = arith.mulf %242, %253 : vector<8x128xf32>
    %255 = arith.addf %251, %254 : vector<8x128xf32>
    %256 = math.tanh %255 : vector<8x128xf32>
    %257 = arith.subf %224, %256 : vector<8x128xf32>
    %258 = arith.mulf %250, %257 : vector<8x128xf32>
    %259 = arith.addf %256, %258 : vector<8x128xf32>
    %260 = arith.addi %11, %230 : i32
    %261 = arith.truncf %259 : vector<8x128xf32> to vector<8x128xbf16>
    %262 = arith.index_cast %260 : i32 to index
    %c0_56 = arith.constant 0 : index
    %263 = vector.load %arg8[%262, %c0_56] : memref<64x128xbf16, #tpu.memory_space<vmem>>, vector<8x128xbf16>
    tpu.vector_store %arg8[%262, %c0_56], %261 {strides = array<i32>} : memref<64x128xbf16, #tpu.memory_space<vmem>>, vector<8x128xbf16>,
    %c7_i32 = arith.constant 7 : i32
    %c8_i32_57 = arith.constant 8 : i32
    %264 = arith.muli %c7_i32, %c8_i32_57 : i32
    %265 = tpu.assume_multiple %264, 8 : i32
    %266 = arith.index_cast %265 : i32 to index
    %c0_58 = arith.constant 0 : index
    %267 = vector.load %arg9[%266, %c0_58] : memref<64x384xf32, #tpu.memory_space<vmem>>, vector<8x384xf32>
    %268 = arith.truncf %259 : vector<8x128xf32> to vector<8x128xbf16>
    %cst_59 = arith.constant dense<0.000000e+00> : vector<8x384xf32>
    %269 = tpu.matmul %268, %2, %cst_59 {dimension_numbers = #tpu.dot_dimension_numbers<[1], [0], [0], [1], [0, 0, 1, 1], [], []>} : vector<8x128xbf16>, vector<128x384xbf16>, vector<8x384xf32> -> vector<8x384xf32>
    %270 = vector.extract_strided_slice %267 {offsets = [0, 0], sizes = [8, 128], strides = [1, 1]} : vector<8x384xf32> to vector<8x128xf32>
    %271 = vector.extract_strided_slice %269 {offsets = [0, 0], sizes = [8, 128], strides = [1, 1]} : vector<8x384xf32> to vector<8x128xf32>
    %272 = arith.addf %270, %271 : vector<8x128xf32>
    %273 = arith.negf %272 : vector<8x128xf32>
    %274 = math.exp %273 : vector<8x128xf32>
    %cst_60 = arith.constant 1.000000e+00 : f32
    %275 = vector.broadcast %cst_60 : f32 to vector<8x128xf32>
    %276 = arith.addf %275, %274 : vector<8x128xf32>
    %277 = arith.divf %275, %276 : vector<8x128xf32>
    %278 = vector.extract_strided_slice %267 {offsets = [0, 128], sizes = [8, 128], strides = [1, 1]} : vector<8x384xf32> to vector<8x128xf32>
    %279 = vector.extract_strided_slice %269 {offsets = [0, 128], sizes = [8, 128], strides = [1, 1]} : vector<8x384xf32> to vector<8x128xf32>
    %280 = arith.addf %278, %279 : vector<8x128xf32>
    %281 = arith.negf %280 : vector<8x128xf32>
    %282 = math.exp %281 : vector<8x128xf32>
    %cst_61 = arith.constant 1.000000e+00 : f32
    %283 = vector.broadcast %cst_61 : f32 to vector<8x128xf32>
    %284 = arith.addf %283, %282 : vector<8x128xf32>
    %285 = arith.divf %283, %284 : vector<8x128xf32>
    %286 = vector.extract_strided_slice %267 {offsets = [0, 256], sizes = [8, 128], strides = [1, 1]} : vector<8x384xf32> to vector<8x128xf32>
    %287 = vector.extract_strided_slice %269 {offsets = [0, 256], sizes = [8, 128], strides = [1, 1]} : vector<8x384xf32> to vector<8x128xf32>
    %288 = arith.addf %287, %8 : vector<8x128xf32>
    %289 = arith.mulf %277, %288 : vector<8x128xf32>
    %290 = arith.addf %286, %289 : vector<8x128xf32>
    %291 = math.tanh %290 : vector<8x128xf32>
    %292 = arith.subf %259, %291 : vector<8x128xf32>
    %293 = arith.mulf %285, %292 : vector<8x128xf32>
    %294 = arith.addf %291, %293 : vector<8x128xf32>
    %295 = arith.addi %11, %265 : i32
    %296 = arith.truncf %294 : vector<8x128xf32> to vector<8x128xbf16>
    %297 = arith.index_cast %295 : i32 to index
    %c0_62 = arith.constant 0 : index
    %298 = vector.load %arg8[%297, %c0_62] : memref<64x128xbf16, #tpu.memory_space<vmem>>, vector<8x128xbf16>
    tpu.vector_store %arg8[%297, %c0_62], %296 {strides = array<i32>} : memref<64x128xbf16, #tpu.memory_space<vmem>>, vector<8x128xbf16>,
    %c8_i32_63 = arith.constant 8 : i32
    %c1_i32_64 = arith.constant 1 : i32
    %c0_65 = arith.constant 0 : index
    %c0_66 = arith.constant 0 : index
    %c0_67 = arith.constant 0 : index
    %299 = vector.load %arg3[%c0_65, %c0_66, %c0_67] : memref<1x128x384xbf16, #tpu.memory_space<vmem>>, vector<1x128x384xbf16>
    %300 = vector.shape_cast %299 : vector<1x128x384xbf16> to vector<128x384xbf16>
    %c1 = arith.constant 1 : index
    %c0_68 = arith.constant 0 : index
    %c0_69 = arith.constant 0 : index
    %301 = vector.load %arg4[%c1, %c0_68, %c0_69] : memref<2x128x384xbf16, #tpu.memory_space<vmem>>, vector<1x128x384xbf16>
    %302 = vector.shape_cast %301 : vector<1x128x384xbf16> to vector<128x384xbf16>
    %c1_70 = arith.constant 1 : index
    %c0_71 = arith.constant 0 : index
    %c0_72 = arith.constant 0 : index
    %303 = vector.load %arg5[%c1_70, %c0_71, %c0_72] : memref<2x1x384xf32, #tpu.memory_space<vmem>>, vector<1x1x384xf32>
    %304 = vector.shape_cast %303 : vector<1x1x384xf32> to vector<1x384xf32>
    %c1_73 = arith.constant 1 : index
    %c0_74 = arith.constant 0 : index
    %c0_75 = arith.constant 0 : index
    %305 = vector.load %arg6[%c1_73, %c0_74, %c0_75] : memref<2x1x128xf32, #tpu.memory_space<vmem>>, vector<1x1x128xf32>
    %306 = vector.shape_cast %305 : vector<1x1x128xf32> to vector<1x128xf32>
    %307 = vector.shape_cast %306 : vector<1x128xf32> to vector<1x128xf32>
    %308 = vector.broadcast %307 : vector<1x128xf32> to vector<8x128xf32>
    %cst_76 = arith.constant 0.000000e+00 : f32
    %309 = vector.broadcast %cst_76 : f32 to vector<8x128xf32>
    %c0_i32_77 = arith.constant 0 : i32
    %c64_i32_78 = arith.constant 64 : i32
    %310 = arith.muli %c0_i32_77, %c64_i32_78 : i32
    %311 = tpu.assume_multiple %310, 8 : i32
    %312 = arith.index_cast %311 : i32 to index
    %c0_79 = arith.constant 0 : index
    %313 = vector.load %arg8[%312, %c0_79] : memref<64x128xbf16, #tpu.memory_space<vmem>>, vector<64x128xbf16>
    %cst_80 = arith.constant dense<0.000000e+00> : vector<64x384xf32>
    %314 = tpu.matmul %313, %300, %cst_80 {dimension_numbers = #tpu.dot_dimension_numbers<[1], [0], [0], [1], [0, 0, 1, 1], [], []>} : vector<64x128xbf16>, vector<128x384xbf16>, vector<64x384xf32> -> vector<64x384xf32>
    %315 = vector.broadcast %304 : vector<1x384xf32> to vector<64x384xf32>
    %316 = arith.addf %314, %315 : vector<64x384xf32>
    %c0_81 = arith.constant 0 : index
    %c0_82 = arith.constant 0 : index
    %317 = vector.load %arg9[%c0_81, %c0_82] : memref<64x384xf32, #tpu.memory_space<vmem>>, vector<64x384xf32>
    tpu.vector_store %arg9[%c0_81, %c0_82], %316 {strides = array<i32>} : memref<64x384xf32, #tpu.memory_space<vmem>>, vector<64x384xf32>,
    %c0_i32_83 = arith.constant 0 : i32
    %c8_i32_84 = arith.constant 8 : i32
    %318 = arith.muli %c0_i32_83, %c8_i32_84 : i32
    %319 = tpu.assume_multiple %318, 8 : i32
    %320 = arith.index_cast %319 : i32 to index
    %c0_85 = arith.constant 0 : index
    %321 = vector.load %arg9[%320, %c0_85] : memref<64x384xf32, #tpu.memory_space<vmem>>, vector<8x384xf32>
    %322 = arith.truncf %309 : vector<8x128xf32> to vector<8x128xbf16>
    %cst_86 = arith.constant dense<0.000000e+00> : vector<8x384xf32>
    %323 = tpu.matmul %322, %302, %cst_86 {dimension_numbers = #tpu.dot_dimension_numbers<[1], [0], [0], [1], [0, 0, 1, 1], [], []>} : vector<8x128xbf16>, vector<128x384xbf16>, vector<8x384xf32> -> vector<8x384xf32>
    %324 = vector.extract_strided_slice %321 {offsets = [0, 0], sizes = [8, 128], strides = [1, 1]} : vector<8x384xf32> to vector<8x128xf32>
    %325 = vector.extract_strided_slice %323 {offsets = [0, 0], sizes = [8, 128], strides = [1, 1]} : vector<8x384xf32> to vector<8x128xf32>
    %326 = arith.addf %324, %325 : vector<8x128xf32>
    %327 = arith.negf %326 : vector<8x128xf32>
    %328 = math.exp %327 : vector<8x128xf32>
    %cst_87 = arith.constant 1.000000e+00 : f32
    %329 = vector.broadcast %cst_87 : f32 to vector<8x128xf32>
    %330 = arith.addf %329, %328 : vector<8x128xf32>
    %331 = arith.divf %329, %330 : vector<8x128xf32>
    %332 = vector.extract_strided_slice %321 {offsets = [0, 128], sizes = [8, 128], strides = [1, 1]} : vector<8x384xf32> to vector<8x128xf32>
    %333 = vector.extract_strided_slice %323 {offsets = [0, 128], sizes = [8, 128], strides = [1, 1]} : vector<8x384xf32> to vector<8x128xf32>
    %334 = arith.addf %332, %333 : vector<8x128xf32>
    %335 = arith.negf %334 : vector<8x128xf32>
    %336 = math.exp %335 : vector<8x128xf32>
    %cst_88 = arith.constant 1.000000e+00 : f32
    %337 = vector.broadcast %cst_88 : f32 to vector<8x128xf32>
    %338 = arith.addf %337, %336 : vector<8x128xf32>
    %339 = arith.divf %337, %338 : vector<8x128xf32>
    %340 = vector.extract_strided_slice %321 {offsets = [0, 256], sizes = [8, 128], strides = [1, 1]} : vector<8x384xf32> to vector<8x128xf32>
    %341 = vector.extract_strided_slice %323 {offsets = [0, 256], sizes = [8, 128], strides = [1, 1]} : vector<8x384xf32> to vector<8x128xf32>
    %342 = arith.addf %341, %308 : vector<8x128xf32>
    %343 = arith.mulf %331, %342 : vector<8x128xf32>
    %344 = arith.addf %340, %343 : vector<8x128xf32>
    %345 = math.tanh %344 : vector<8x128xf32>
    %346 = arith.subf %309, %345 : vector<8x128xf32>
    %347 = arith.mulf %339, %346 : vector<8x128xf32>
    %348 = arith.addf %345, %347 : vector<8x128xf32>
    %349 = arith.addi %311, %319 : i32
    %c0_89 = arith.constant 0 : index
    %350 = arith.index_cast %349 : i32 to index
    %c0_90 = arith.constant 0 : index
    %351 = vector.load %arg7[%c0_89, %350, %c0_90] : memref<1x64x128xf32, #tpu.memory_space<vmem>>, vector<1x8x128xf32>
    %352 = vector.shape_cast %351 : vector<1x8x128xf32> to vector<8x128xf32>
    %353 = vector.shape_cast %348 : vector<8x128xf32> to vector<1x8x128xf32>
    tpu.vector_store %arg7[%c0_89, %350, %c0_90], %353 {strides = array<i32>} : memref<1x64x128xf32, #tpu.memory_space<vmem>>, vector<1x8x128xf32>,
    %c1_i32_91 = arith.constant 1 : i32
    %c8_i32_92 = arith.constant 8 : i32
    %354 = arith.muli %c1_i32_91, %c8_i32_92 : i32
    %355 = tpu.assume_multiple %354, 8 : i32
    %356 = arith.index_cast %355 : i32 to index
    %c0_93 = arith.constant 0 : index
    %357 = vector.load %arg9[%356, %c0_93] : memref<64x384xf32, #tpu.memory_space<vmem>>, vector<8x384xf32>
    %358 = arith.truncf %348 : vector<8x128xf32> to vector<8x128xbf16>
    %cst_94 = arith.constant dense<0.000000e+00> : vector<8x384xf32>
    %359 = tpu.matmul %358, %302, %cst_94 {dimension_numbers = #tpu.dot_dimension_numbers<[1], [0], [0], [1], [0, 0, 1, 1], [], []>} : vector<8x128xbf16>, vector<128x384xbf16>, vector<8x384xf32> -> vector<8x384xf32>
    %360 = vector.extract_strided_slice %357 {offsets = [0, 0], sizes = [8, 128], strides = [1, 1]} : vector<8x384xf32> to vector<8x128xf32>
    %361 = vector.extract_strided_slice %359 {offsets = [0, 0], sizes = [8, 128], strides = [1, 1]} : vector<8x384xf32> to vector<8x128xf32>
    %362 = arith.addf %360, %361 : vector<8x128xf32>
    %363 = arith.negf %362 : vector<8x128xf32>
    %364 = math.exp %363 : vector<8x128xf32>
    %cst_95 = arith.constant 1.000000e+00 : f32
    %365 = vector.broadcast %cst_95 : f32 to vector<8x128xf32>
    %366 = arith.addf %365, %364 : vector<8x128xf32>
    %367 = arith.divf %365, %366 : vector<8x128xf32>
    %368 = vector.extract_strided_slice %357 {offsets = [0, 128], sizes = [8, 128], strides = [1, 1]} : vector<8x384xf32> to vector<8x128xf32>
    %369 = vector.extract_strided_slice %359 {offsets = [0, 128], sizes = [8, 128], strides = [1, 1]} : vector<8x384xf32> to vector<8x128xf32>
    %370 = arith.addf %368, %369 : vector<8x128xf32>
    %371 = arith.negf %370 : vector<8x128xf32>
    %372 = math.exp %371 : vector<8x128xf32>
    %cst_96 = arith.constant 1.000000e+00 : f32
    %373 = vector.broadcast %cst_96 : f32 to vector<8x128xf32>
    %374 = arith.addf %373, %372 : vector<8x128xf32>
    %375 = arith.divf %373, %374 : vector<8x128xf32>
    %376 = vector.extract_strided_slice %357 {offsets = [0, 256], sizes = [8, 128], strides = [1, 1]} : vector<8x384xf32> to vector<8x128xf32>
    %377 = vector.extract_strided_slice %359 {offsets = [0, 256], sizes = [8, 128], strides = [1, 1]} : vector<8x384xf32> to vector<8x128xf32>
    %378 = arith.addf %377, %308 : vector<8x128xf32>
    %379 = arith.mulf %367, %378 : vector<8x128xf32>
    %380 = arith.addf %376, %379 : vector<8x128xf32>
    %381 = math.tanh %380 : vector<8x128xf32>
    %382 = arith.subf %348, %381 : vector<8x128xf32>
    %383 = arith.mulf %375, %382 : vector<8x128xf32>
    %384 = arith.addf %381, %383 : vector<8x128xf32>
    %385 = arith.addi %311, %355 : i32
    %c0_97 = arith.constant 0 : index
    %386 = arith.index_cast %385 : i32 to index
    %c0_98 = arith.constant 0 : index
    %387 = vector.load %arg7[%c0_97, %386, %c0_98] : memref<1x64x128xf32, #tpu.memory_space<vmem>>, vector<1x8x128xf32>
    %388 = vector.shape_cast %387 : vector<1x8x128xf32> to vector<8x128xf32>
    %389 = vector.shape_cast %384 : vector<8x128xf32> to vector<1x8x128xf32>
    tpu.vector_store %arg7[%c0_97, %386, %c0_98], %389 {strides = array<i32>} : memref<1x64x128xf32, #tpu.memory_space<vmem>>, vector<1x8x128xf32>,
    %c2_i32_99 = arith.constant 2 : i32
    %c8_i32_100 = arith.constant 8 : i32
    %390 = arith.muli %c2_i32_99, %c8_i32_100 : i32
    %391 = tpu.assume_multiple %390, 8 : i32
    %392 = arith.index_cast %391 : i32 to index
    %c0_101 = arith.constant 0 : index
    %393 = vector.load %arg9[%392, %c0_101] : memref<64x384xf32, #tpu.memory_space<vmem>>, vector<8x384xf32>
    %394 = arith.truncf %384 : vector<8x128xf32> to vector<8x128xbf16>
    %cst_102 = arith.constant dense<0.000000e+00> : vector<8x384xf32>
    %395 = tpu.matmul %394, %302, %cst_102 {dimension_numbers = #tpu.dot_dimension_numbers<[1], [0], [0], [1], [0, 0, 1, 1], [], []>} : vector<8x128xbf16>, vector<128x384xbf16>, vector<8x384xf32> -> vector<8x384xf32>
    %396 = vector.extract_strided_slice %393 {offsets = [0, 0], sizes = [8, 128], strides = [1, 1]} : vector<8x384xf32> to vector<8x128xf32>
    %397 = vector.extract_strided_slice %395 {offsets = [0, 0], sizes = [8, 128], strides = [1, 1]} : vector<8x384xf32> to vector<8x128xf32>
    %398 = arith.addf %396, %397 : vector<8x128xf32>
    %399 = arith.negf %398 : vector<8x128xf32>
    %400 = math.exp %399 : vector<8x128xf32>
    %cst_103 = arith.constant 1.000000e+00 : f32
    %401 = vector.broadcast %cst_103 : f32 to vector<8x128xf32>
    %402 = arith.addf %401, %400 : vector<8x128xf32>
    %403 = arith.divf %401, %402 : vector<8x128xf32>
    %404 = vector.extract_strided_slice %393 {offsets = [0, 128], sizes = [8, 128], strides = [1, 1]} : vector<8x384xf32> to vector<8x128xf32>
    %405 = vector.extract_strided_slice %395 {offsets = [0, 128], sizes = [8, 128], strides = [1, 1]} : vector<8x384xf32> to vector<8x128xf32>
    %406 = arith.addf %404, %405 : vector<8x128xf32>
    %407 = arith.negf %406 : vector<8x128xf32>
    %408 = math.exp %407 : vector<8x128xf32>
    %cst_104 = arith.constant 1.000000e+00 : f32
    %409 = vector.broadcast %cst_104 : f32 to vector<8x128xf32>
    %410 = arith.addf %409, %408 : vector<8x128xf32>
    %411 = arith.divf %409, %410 : vector<8x128xf32>
    %412 = vector.extract_strided_slice %393 {offsets = [0, 256], sizes = [8, 128], strides = [1, 1]} : vector<8x384xf32> to vector<8x128xf32>
    %413 = vector.extract_strided_slice %395 {offsets = [0, 256], sizes = [8, 128], strides = [1, 1]} : vector<8x384xf32> to vector<8x128xf32>
    %414 = arith.addf %413, %308 : vector<8x128xf32>
    %415 = arith.mulf %403, %414 : vector<8x128xf32>
    %416 = arith.addf %412, %415 : vector<8x128xf32>
    %417 = math.tanh %416 : vector<8x128xf32>
    %418 = arith.subf %384, %417 : vector<8x128xf32>
    %419 = arith.mulf %411, %418 : vector<8x128xf32>
    %420 = arith.addf %417, %419 : vector<8x128xf32>
    %421 = arith.addi %311, %391 : i32
    %c0_105 = arith.constant 0 : index
    %422 = arith.index_cast %421 : i32 to index
    %c0_106 = arith.constant 0 : index
    %423 = vector.load %arg7[%c0_105, %422, %c0_106] : memref<1x64x128xf32, #tpu.memory_space<vmem>>, vector<1x8x128xf32>
    %424 = vector.shape_cast %423 : vector<1x8x128xf32> to vector<8x128xf32>
    %425 = vector.shape_cast %420 : vector<8x128xf32> to vector<1x8x128xf32>
    tpu.vector_store %arg7[%c0_105, %422, %c0_106], %425 {strides = array<i32>} : memref<1x64x128xf32, #tpu.memory_space<vmem>>, vector<1x8x128xf32>,
    %c3_i32_107 = arith.constant 3 : i32
    %c8_i32_108 = arith.constant 8 : i32
    %426 = arith.muli %c3_i32_107, %c8_i32_108 : i32
    %427 = tpu.assume_multiple %426, 8 : i32
    %428 = arith.index_cast %427 : i32 to index
    %c0_109 = arith.constant 0 : index
    %429 = vector.load %arg9[%428, %c0_109] : memref<64x384xf32, #tpu.memory_space<vmem>>, vector<8x384xf32>
    %430 = arith.truncf %420 : vector<8x128xf32> to vector<8x128xbf16>
    %cst_110 = arith.constant dense<0.000000e+00> : vector<8x384xf32>
    %431 = tpu.matmul %430, %302, %cst_110 {dimension_numbers = #tpu.dot_dimension_numbers<[1], [0], [0], [1], [0, 0, 1, 1], [], []>} : vector<8x128xbf16>, vector<128x384xbf16>, vector<8x384xf32> -> vector<8x384xf32>
    %432 = vector.extract_strided_slice %429 {offsets = [0, 0], sizes = [8, 128], strides = [1, 1]} : vector<8x384xf32> to vector<8x128xf32>
    %433 = vector.extract_strided_slice %431 {offsets = [0, 0], sizes = [8, 128], strides = [1, 1]} : vector<8x384xf32> to vector<8x128xf32>
    %434 = arith.addf %432, %433 : vector<8x128xf32>
    %435 = arith.negf %434 : vector<8x128xf32>
    %436 = math.exp %435 : vector<8x128xf32>
    %cst_111 = arith.constant 1.000000e+00 : f32
    %437 = vector.broadcast %cst_111 : f32 to vector<8x128xf32>
    %438 = arith.addf %437, %436 : vector<8x128xf32>
    %439 = arith.divf %437, %438 : vector<8x128xf32>
    %440 = vector.extract_strided_slice %429 {offsets = [0, 128], sizes = [8, 128], strides = [1, 1]} : vector<8x384xf32> to vector<8x128xf32>
    %441 = vector.extract_strided_slice %431 {offsets = [0, 128], sizes = [8, 128], strides = [1, 1]} : vector<8x384xf32> to vector<8x128xf32>
    %442 = arith.addf %440, %441 : vector<8x128xf32>
    %443 = arith.negf %442 : vector<8x128xf32>
    %444 = math.exp %443 : vector<8x128xf32>
    %cst_112 = arith.constant 1.000000e+00 : f32
    %445 = vector.broadcast %cst_112 : f32 to vector<8x128xf32>
    %446 = arith.addf %445, %444 : vector<8x128xf32>
    %447 = arith.divf %445, %446 : vector<8x128xf32>
    %448 = vector.extract_strided_slice %429 {offsets = [0, 256], sizes = [8, 128], strides = [1, 1]} : vector<8x384xf32> to vector<8x128xf32>
    %449 = vector.extract_strided_slice %431 {offsets = [0, 256], sizes = [8, 128], strides = [1, 1]} : vector<8x384xf32> to vector<8x128xf32>
    %450 = arith.addf %449, %308 : vector<8x128xf32>
    %451 = arith.mulf %439, %450 : vector<8x128xf32>
    %452 = arith.addf %448, %451 : vector<8x128xf32>
    %453 = math.tanh %452 : vector<8x128xf32>
    %454 = arith.subf %420, %453 : vector<8x128xf32>
    %455 = arith.mulf %447, %454 : vector<8x128xf32>
    %456 = arith.addf %453, %455 : vector<8x128xf32>
    %457 = arith.addi %311, %427 : i32
    %c0_113 = arith.constant 0 : index
    %458 = arith.index_cast %457 : i32 to index
    %c0_114 = arith.constant 0 : index
    %459 = vector.load %arg7[%c0_113, %458, %c0_114] : memref<1x64x128xf32, #tpu.memory_space<vmem>>, vector<1x8x128xf32>
    %460 = vector.shape_cast %459 : vector<1x8x128xf32> to vector<8x128xf32>
    %461 = vector.shape_cast %456 : vector<8x128xf32> to vector<1x8x128xf32>
    tpu.vector_store %arg7[%c0_113, %458, %c0_114], %461 {strides = array<i32>} : memref<1x64x128xf32, #tpu.memory_space<vmem>>, vector<1x8x128xf32>,
    %c4_i32_115 = arith.constant 4 : i32
    %c8_i32_116 = arith.constant 8 : i32
    %462 = arith.muli %c4_i32_115, %c8_i32_116 : i32
    %463 = tpu.assume_multiple %462, 8 : i32
    %464 = arith.index_cast %463 : i32 to index
    %c0_117 = arith.constant 0 : index
    %465 = vector.load %arg9[%464, %c0_117] : memref<64x384xf32, #tpu.memory_space<vmem>>, vector<8x384xf32>
    %466 = arith.truncf %456 : vector<8x128xf32> to vector<8x128xbf16>
    %cst_118 = arith.constant dense<0.000000e+00> : vector<8x384xf32>
    %467 = tpu.matmul %466, %302, %cst_118 {dimension_numbers = #tpu.dot_dimension_numbers<[1], [0], [0], [1], [0, 0, 1, 1], [], []>} : vector<8x128xbf16>, vector<128x384xbf16>, vector<8x384xf32> -> vector<8x384xf32>
    %468 = vector.extract_strided_slice %465 {offsets = [0, 0], sizes = [8, 128], strides = [1, 1]} : vector<8x384xf32> to vector<8x128xf32>
    %469 = vector.extract_strided_slice %467 {offsets = [0, 0], sizes = [8, 128], strides = [1, 1]} : vector<8x384xf32> to vector<8x128xf32>
    %470 = arith.addf %468, %469 : vector<8x128xf32>
    %471 = arith.negf %470 : vector<8x128xf32>
    %472 = math.exp %471 : vector<8x128xf32>
    %cst_119 = arith.constant 1.000000e+00 : f32
    %473 = vector.broadcast %cst_119 : f32 to vector<8x128xf32>
    %474 = arith.addf %473, %472 : vector<8x128xf32>
    %475 = arith.divf %473, %474 : vector<8x128xf32>
    %476 = vector.extract_strided_slice %465 {offsets = [0, 128], sizes = [8, 128], strides = [1, 1]} : vector<8x384xf32> to vector<8x128xf32>
    %477 = vector.extract_strided_slice %467 {offsets = [0, 128], sizes = [8, 128], strides = [1, 1]} : vector<8x384xf32> to vector<8x128xf32>
    %478 = arith.addf %476, %477 : vector<8x128xf32>
    %479 = arith.negf %478 : vector<8x128xf32>
    %480 = math.exp %479 : vector<8x128xf32>
    %cst_120 = arith.constant 1.000000e+00 : f32
    %481 = vector.broadcast %cst_120 : f32 to vector<8x128xf32>
    %482 = arith.addf %481, %480 : vector<8x128xf32>
    %483 = arith.divf %481, %482 : vector<8x128xf32>
    %484 = vector.extract_strided_slice %465 {offsets = [0, 256], sizes = [8, 128], strides = [1, 1]} : vector<8x384xf32> to vector<8x128xf32>
    %485 = vector.extract_strided_slice %467 {offsets = [0, 256], sizes = [8, 128], strides = [1, 1]} : vector<8x384xf32> to vector<8x128xf32>
    %486 = arith.addf %485, %308 : vector<8x128xf32>
    %487 = arith.mulf %475, %486 : vector<8x128xf32>
    %488 = arith.addf %484, %487 : vector<8x128xf32>
    %489 = math.tanh %488 : vector<8x128xf32>
    %490 = arith.subf %456, %489 : vector<8x128xf32>
    %491 = arith.mulf %483, %490 : vector<8x128xf32>
    %492 = arith.addf %489, %491 : vector<8x128xf32>
    %493 = arith.addi %311, %463 : i32
    %c0_121 = arith.constant 0 : index
    %494 = arith.index_cast %493 : i32 to index
    %c0_122 = arith.constant 0 : index
    %495 = vector.load %arg7[%c0_121, %494, %c0_122] : memref<1x64x128xf32, #tpu.memory_space<vmem>>, vector<1x8x128xf32>
    %496 = vector.shape_cast %495 : vector<1x8x128xf32> to vector<8x128xf32>
    %497 = vector.shape_cast %492 : vector<8x128xf32> to vector<1x8x128xf32>
    tpu.vector_store %arg7[%c0_121, %494, %c0_122], %497 {strides = array<i32>} : memref<1x64x128xf32, #tpu.memory_space<vmem>>, vector<1x8x128xf32>,
    %c5_i32_123 = arith.constant 5 : i32
    %c8_i32_124 = arith.constant 8 : i32
    %498 = arith.muli %c5_i32_123, %c8_i32_124 : i32
    %499 = tpu.assume_multiple %498, 8 : i32
    %500 = arith.index_cast %499 : i32 to index
    %c0_125 = arith.constant 0 : index
    %501 = vector.load %arg9[%500, %c0_125] : memref<64x384xf32, #tpu.memory_space<vmem>>, vector<8x384xf32>
    %502 = arith.truncf %492 : vector<8x128xf32> to vector<8x128xbf16>
    %cst_126 = arith.constant dense<0.000000e+00> : vector<8x384xf32>
    %503 = tpu.matmul %502, %302, %cst_126 {dimension_numbers = #tpu.dot_dimension_numbers<[1], [0], [0], [1], [0, 0, 1, 1], [], []>} : vector<8x128xbf16>, vector<128x384xbf16>, vector<8x384xf32> -> vector<8x384xf32>
    %504 = vector.extract_strided_slice %501 {offsets = [0, 0], sizes = [8, 128], strides = [1, 1]} : vector<8x384xf32> to vector<8x128xf32>
    %505 = vector.extract_strided_slice %503 {offsets = [0, 0], sizes = [8, 128], strides = [1, 1]} : vector<8x384xf32> to vector<8x128xf32>
    %506 = arith.addf %504, %505 : vector<8x128xf32>
    %507 = arith.negf %506 : vector<8x128xf32>
    %508 = math.exp %507 : vector<8x128xf32>
    %cst_127 = arith.constant 1.000000e+00 : f32
    %509 = vector.broadcast %cst_127 : f32 to vector<8x128xf32>
    %510 = arith.addf %509, %508 : vector<8x128xf32>
    %511 = arith.divf %509, %510 : vector<8x128xf32>
    %512 = vector.extract_strided_slice %501 {offsets = [0, 128], sizes = [8, 128], strides = [1, 1]} : vector<8x384xf32> to vector<8x128xf32>
    %513 = vector.extract_strided_slice %503 {offsets = [0, 128], sizes = [8, 128], strides = [1, 1]} : vector<8x384xf32> to vector<8x128xf32>
    %514 = arith.addf %512, %513 : vector<8x128xf32>
    %515 = arith.negf %514 : vector<8x128xf32>
    %516 = math.exp %515 : vector<8x128xf32>
    %cst_128 = arith.constant 1.000000e+00 : f32
    %517 = vector.broadcast %cst_128 : f32 to vector<8x128xf32>
    %518 = arith.addf %517, %516 : vector<8x128xf32>
    %519 = arith.divf %517, %518 : vector<8x128xf32>
    %520 = vector.extract_strided_slice %501 {offsets = [0, 256], sizes = [8, 128], strides = [1, 1]} : vector<8x384xf32> to vector<8x128xf32>
    %521 = vector.extract_strided_slice %503 {offsets = [0, 256], sizes = [8, 128], strides = [1, 1]} : vector<8x384xf32> to vector<8x128xf32>
    %522 = arith.addf %521, %308 : vector<8x128xf32>
    %523 = arith.mulf %511, %522 : vector<8x128xf32>
    %524 = arith.addf %520, %523 : vector<8x128xf32>
    %525 = math.tanh %524 : vector<8x128xf32>
    %526 = arith.subf %492, %525 : vector<8x128xf32>
    %527 = arith.mulf %519, %526 : vector<8x128xf32>
    %528 = arith.addf %525, %527 : vector<8x128xf32>
    %529 = arith.addi %311, %499 : i32
    %c0_129 = arith.constant 0 : index
    %530 = arith.index_cast %529 : i32 to index
    %c0_130 = arith.constant 0 : index
    %531 = vector.load %arg7[%c0_129, %530, %c0_130] : memref<1x64x128xf32, #tpu.memory_space<vmem>>, vector<1x8x128xf32>
    %532 = vector.shape_cast %531 : vector<1x8x128xf32> to vector<8x128xf32>
    %533 = vector.shape_cast %528 : vector<8x128xf32> to vector<1x8x128xf32>
    tpu.vector_store %arg7[%c0_129, %530, %c0_130], %533 {strides = array<i32>} : memref<1x64x128xf32, #tpu.memory_space<vmem>>, vector<1x8x128xf32>,
    %c6_i32_131 = arith.constant 6 : i32
    %c8_i32_132 = arith.constant 8 : i32
    %534 = arith.muli %c6_i32_131, %c8_i32_132 : i32
    %535 = tpu.assume_multiple %534, 8 : i32
    %536 = arith.index_cast %535 : i32 to index
    %c0_133 = arith.constant 0 : index
    %537 = vector.load %arg9[%536, %c0_133] : memref<64x384xf32, #tpu.memory_space<vmem>>, vector<8x384xf32>
    %538 = arith.truncf %528 : vector<8x128xf32> to vector<8x128xbf16>
    %cst_134 = arith.constant dense<0.000000e+00> : vector<8x384xf32>
    %539 = tpu.matmul %538, %302, %cst_134 {dimension_numbers = #tpu.dot_dimension_numbers<[1], [0], [0], [1], [0, 0, 1, 1], [], []>} : vector<8x128xbf16>, vector<128x384xbf16>, vector<8x384xf32> -> vector<8x384xf32>
    %540 = vector.extract_strided_slice %537 {offsets = [0, 0], sizes = [8, 128], strides = [1, 1]} : vector<8x384xf32> to vector<8x128xf32>
    %541 = vector.extract_strided_slice %539 {offsets = [0, 0], sizes = [8, 128], strides = [1, 1]} : vector<8x384xf32> to vector<8x128xf32>
    %542 = arith.addf %540, %541 : vector<8x128xf32>
    %543 = arith.negf %542 : vector<8x128xf32>
    %544 = math.exp %543 : vector<8x128xf32>
    %cst_135 = arith.constant 1.000000e+00 : f32
    %545 = vector.broadcast %cst_135 : f32 to vector<8x128xf32>
    %546 = arith.addf %545, %544 : vector<8x128xf32>
    %547 = arith.divf %545, %546 : vector<8x128xf32>
    %548 = vector.extract_strided_slice %537 {offsets = [0, 128], sizes = [8, 128], strides = [1, 1]} : vector<8x384xf32> to vector<8x128xf32>
    %549 = vector.extract_strided_slice %539 {offsets = [0, 128], sizes = [8, 128], strides = [1, 1]} : vector<8x384xf32> to vector<8x128xf32>
    %550 = arith.addf %548, %549 : vector<8x128xf32>
    %551 = arith.negf %550 : vector<8x128xf32>
    %552 = math.exp %551 : vector<8x128xf32>
    %cst_136 = arith.constant 1.000000e+00 : f32
    %553 = vector.broadcast %cst_136 : f32 to vector<8x128xf32>
    %554 = arith.addf %553, %552 : vector<8x128xf32>
    %555 = arith.divf %553, %554 : vector<8x128xf32>
    %556 = vector.extract_strided_slice %537 {offsets = [0, 256], sizes = [8, 128], strides = [1, 1]} : vector<8x384xf32> to vector<8x128xf32>
    %557 = vector.extract_strided_slice %539 {offsets = [0, 256], sizes = [8, 128], strides = [1, 1]} : vector<8x384xf32> to vector<8x128xf32>
    %558 = arith.addf %557, %308 : vector<8x128xf32>
    %559 = arith.mulf %547, %558 : vector<8x128xf32>
    %560 = arith.addf %556, %559 : vector<8x128xf32>
    %561 = math.tanh %560 : vector<8x128xf32>
    %562 = arith.subf %528, %561 : vector<8x128xf32>
    %563 = arith.mulf %555, %562 : vector<8x128xf32>
    %564 = arith.addf %561, %563 : vector<8x128xf32>
    %565 = arith.addi %311, %535 : i32
    %c0_137 = arith.constant 0 : index
    %566 = arith.index_cast %565 : i32 to index
    %c0_138 = arith.constant 0 : index
    %567 = vector.load %arg7[%c0_137, %566, %c0_138] : memref<1x64x128xf32, #tpu.memory_space<vmem>>, vector<1x8x128xf32>
    %568 = vector.shape_cast %567 : vector<1x8x128xf32> to vector<8x128xf32>
    %569 = vector.shape_cast %564 : vector<8x128xf32> to vector<1x8x128xf32>
    tpu.vector_store %arg7[%c0_137, %566, %c0_138], %569 {strides = array<i32>} : memref<1x64x128xf32, #tpu.memory_space<vmem>>, vector<1x8x128xf32>,
    %c7_i32_139 = arith.constant 7 : i32
    %c8_i32_140 = arith.constant 8 : i32
    %570 = arith.muli %c7_i32_139, %c8_i32_140 : i32
    %571 = tpu.assume_multiple %570, 8 : i32
    %572 = arith.index_cast %571 : i32 to index
    %c0_141 = arith.constant 0 : index
    %573 = vector.load %arg9[%572, %c0_141] : memref<64x384xf32, #tpu.memory_space<vmem>>, vector<8x384xf32>
    %574 = arith.truncf %564 : vector<8x128xf32> to vector<8x128xbf16>
    %cst_142 = arith.constant dense<0.000000e+00> : vector<8x384xf32>
    %575 = tpu.matmul %574, %302, %cst_142 {dimension_numbers = #tpu.dot_dimension_numbers<[1], [0], [0], [1], [0, 0, 1, 1], [], []>} : vector<8x128xbf16>, vector<128x384xbf16>, vector<8x384xf32> -> vector<8x384xf32>
    %576 = vector.extract_strided_slice %573 {offsets = [0, 0], sizes = [8, 128], strides = [1, 1]} : vector<8x384xf32> to vector<8x128xf32>
    %577 = vector.extract_strided_slice %575 {offsets = [0, 0], sizes = [8, 128], strides = [1, 1]} : vector<8x384xf32> to vector<8x128xf32>
    %578 = arith.addf %576, %577 : vector<8x128xf32>
    %579 = arith.negf %578 : vector<8x128xf32>
    %580 = math.exp %579 : vector<8x128xf32>
    %cst_143 = arith.constant 1.000000e+00 : f32
    %581 = vector.broadcast %cst_143 : f32 to vector<8x128xf32>
    %582 = arith.addf %581, %580 : vector<8x128xf32>
    %583 = arith.divf %581, %582 : vector<8x128xf32>
    %584 = vector.extract_strided_slice %573 {offsets = [0, 128], sizes = [8, 128], strides = [1, 1]} : vector<8x384xf32> to vector<8x128xf32>
    %585 = vector.extract_strided_slice %575 {offsets = [0, 128], sizes = [8, 128], strides = [1, 1]} : vector<8x384xf32> to vector<8x128xf32>
    %586 = arith.addf %584, %585 : vector<8x128xf32>
    %587 = arith.negf %586 : vector<8x128xf32>
    %588 = math.exp %587 : vector<8x128xf32>
    %cst_144 = arith.constant 1.000000e+00 : f32
    %589 = vector.broadcast %cst_144 : f32 to vector<8x128xf32>
    %590 = arith.addf %589, %588 : vector<8x128xf32>
    %591 = arith.divf %589, %590 : vector<8x128xf32>
    %592 = vector.extract_strided_slice %573 {offsets = [0, 256], sizes = [8, 128], strides = [1, 1]} : vector<8x384xf32> to vector<8x128xf32>
    %593 = vector.extract_strided_slice %575 {offsets = [0, 256], sizes = [8, 128], strides = [1, 1]} : vector<8x384xf32> to vector<8x128xf32>
    %594 = arith.addf %593, %308 : vector<8x128xf32>
    %595 = arith.mulf %583, %594 : vector<8x128xf32>
    %596 = arith.addf %592, %595 : vector<8x128xf32>
    %597 = math.tanh %596 : vector<8x128xf32>
    %598 = arith.subf %564, %597 : vector<8x128xf32>
    %599 = arith.mulf %591, %598 : vector<8x128xf32>
    %600 = arith.addf %597, %599 : vector<8x128xf32>
    %601 = arith.addi %311, %571 : i32
    %c0_145 = arith.constant 0 : index
    %602 = arith.index_cast %601 : i32 to index
    %c0_146 = arith.constant 0 : index
    %603 = vector.load %arg7[%c0_145, %602, %c0_146] : memref<1x64x128xf32, #tpu.memory_space<vmem>>, vector<1x8x128xf32>
    %604 = vector.shape_cast %603 : vector<1x8x128xf32> to vector<8x128xf32>
    %605 = vector.shape_cast %600 : vector<8x128xf32> to vector<1x8x128xf32>
    tpu.vector_store %arg7[%c0_145, %602, %c0_146], %605 {strides = array<i32>} : memref<1x64x128xf32, #tpu.memory_space<vmem>>, vector<1x8x128xf32>,
    %c8_i32_147 = arith.constant 8 : i32
    %c1_i32_148 = arith.constant 1 : i32
    return
  }
  func.func @transform_0(%arg0: i32) -> (i32, i32, i32) {
    %c0_i32 = arith.constant 0 : i32
    %c0_i32_0 = arith.constant 0 : i32
    %c0_i32_1 = arith.constant 0 : i32
    return %arg0, %c0_i32, %c0_i32_0 : i32, i32, i32
  }
  func.func @transform_1(%arg0: i32) -> (i32, i32) {
    %c0_i32 = arith.constant 0 : i32
    %c0_i32_0 = arith.constant 0 : i32
    %c0_i32_1 = arith.constant 0 : i32
    return %c0_i32, %c0_i32_0 : i32, i32
  }
  func.func @transform_2(%arg0: i32) -> (i32, i32, i32) {
    %c0_i32 = arith.constant 0 : i32
    %c0_i32_0 = arith.constant 0 : i32
    %c0_i32_1 = arith.constant 0 : i32
    %c0_i32_2 = arith.constant 0 : i32
    return %c0_i32, %c0_i32_0, %c0_i32_1 : i32, i32, i32
  }
  func.func @transform_3(%arg0: i32) -> (i32, i32, i32) {
    %c0_i32 = arith.constant 0 : i32
    %c0_i32_0 = arith.constant 0 : i32
    %c0_i32_1 = arith.constant 0 : i32
    %c0_i32_2 = arith.constant 0 : i32
    return %c0_i32, %c0_i32_0, %c0_i32_1 : i32, i32, i32
  }
  func.func @transform_4(%arg0: i32) -> (i32, i32, i32) {
    %c0_i32 = arith.constant 0 : i32
    %c0_i32_0 = arith.constant 0 : i32
    %c0_i32_1 = arith.constant 0 : i32
    %c0_i32_2 = arith.constant 0 : i32
    return %c0_i32, %c0_i32_0, %c0_i32_1 : i32, i32, i32
  }
  func.func @transform_5(%arg0: i32) -> (i32, i32, i32) {
    %c0_i32 = arith.constant 0 : i32
    %c0_i32_0 = arith.constant 0 : i32
    %c0_i32_1 = arith.constant 0 : i32
    %c0_i32_2 = arith.constant 0 : i32
    return %c0_i32, %c0_i32_0, %c0_i32_1 : i32, i32, i32
  }
  func.func @transform_6(%arg0: i32) -> (i32, i32, i32) {
    %c0_i32 = arith.constant 0 : i32
    %c0_i32_0 = arith.constant 0 : i32
    %c0_i32_1 = arith.constant 0 : i32
    return %arg0, %c0_i32, %c0_i32_0 : i32, i32, i32
  }
}

module attributes {stable_mosaic.version = 11 : i64} {
  func.func @_gru_stack_kernel(%arg0: i32, %arg1: memref<1x64x128xbf16, #tpu.memory_space<vmem>>, %arg2: memref<128x384xbf16, #tpu.memory_space<vmem>>, %arg3: memref<1x128x384xbf16, #tpu.memory_space<vmem>>, %arg4: memref<2x128x384xbf16, #tpu.memory_space<vmem>>, %arg5: memref<2x1x384xf32, #tpu.memory_space<vmem>>, %arg6: memref<2x1x128xf32, #tpu.memory_space<vmem>>, %arg7: memref<1x64x128xf32, #tpu.memory_space<vmem>>, %arg8: memref<64x128xbf16, #tpu.memory_space<vmem>>, %arg9: memref<64x384xf32, #tpu.memory_space<vmem>>, %arg10: memref<8x128xf32, #tpu.memory_space<vmem>>) attributes {dimension_semantics = [#tpu.dimension_semantics<parallel>], iteration_bounds = array<i64: 1>, scalar_prefetch = 0 : i64, scratch_operands = 3 : i64, tpu.core_type = #tpu.core_type<tc>, window_params = [{transform_indices = @transform_0, window_bounds = array<i64: 1, 64, 128>}, {pipeline_mode = #tpu.pipeline_mode<synchronous>, transform_indices = @transform_1, window_bounds = array<i64: 128, 384>}, {pipeline_mode = #tpu.pipeline_mode<synchronous>, transform_indices = @transform_2, window_bounds = array<i64: 1, 128, 384>}, {pipeline_mode = #tpu.pipeline_mode<synchronous>, transform_indices = @transform_3, window_bounds = array<i64: 2, 128, 384>}, {pipeline_mode = #tpu.pipeline_mode<synchronous>, transform_indices = @transform_4, window_bounds = array<i64: 2, 1, 384>}, {pipeline_mode = #tpu.pipeline_mode<synchronous>, transform_indices = @transform_5, window_bounds = array<i64: 2, 1, 128>}, {transform_indices = @transform_6, window_bounds = array<i64: 1, 64, 128>}]} {
    %c0 = arith.constant 0 : index
    %c0_0 = arith.constant 0 : index
    %0 = vector.load %arg2[%c0, %c0_0] : memref<128x384xbf16, #tpu.memory_space<vmem>>, vector<128x384xbf16>
    %c0_1 = arith.constant 0 : index
    %c0_2 = arith.constant 0 : index
    %c0_3 = arith.constant 0 : index
    %1 = vector.load %arg4[%c0_1, %c0_2, %c0_3] : memref<2x128x384xbf16, #tpu.memory_space<vmem>>, vector<1x128x384xbf16>
    %2 = vector.shape_cast %1 : vector<1x128x384xbf16> to vector<128x384xbf16>
    %c0_4 = arith.constant 0 : index
    %c0_5 = arith.constant 0 : index
    %c0_6 = arith.constant 0 : index
    %3 = vector.load %arg5[%c0_4, %c0_5, %c0_6] : memref<2x1x384xf32, #tpu.memory_space<vmem>>, vector<1x1x384xf32>
    %4 = vector.shape_cast %3 : vector<1x1x384xf32> to vector<1x384xf32>
    %c0_7 = arith.constant 0 : index
    %c0_8 = arith.constant 0 : index
    %c0_9 = arith.constant 0 : index
    %5 = vector.load %arg6[%c0_7, %c0_8, %c0_9] : memref<2x1x128xf32, #tpu.memory_space<vmem>>, vector<1x1x128xf32>
    %6 = vector.shape_cast %5 : vector<1x1x128xf32> to vector<1x128xf32>
    %7 = vector.shape_cast %6 : vector<1x128xf32> to vector<1x128xf32>
    %8 = vector.broadcast %7 : vector<1x128xf32> to vector<8x128xf32>
    %cst = arith.constant 0.000000e+00 : f32
    %9 = vector.broadcast %cst : f32 to vector<8x128xf32>
    %c0_i32 = arith.constant 0 : i32
    %c64_i32 = arith.constant 64 : i32
    %10 = arith.muli %c0_i32, %c64_i32 : i32
    %11 = tpu.assume_multiple %10, 8 : i32
    %c0_10 = arith.constant 0 : index
    %12 = arith.index_cast %11 : i32 to index
    %c0_11 = arith.constant 0 : index
    %13 = vector.load %arg1[%c0_10, %12, %c0_11] : memref<1x64x128xbf16, #tpu.memory_space<vmem>>, vector<1x64x128xbf16>
    %14 = vector.shape_cast %13 : vector<1x64x128xbf16> to vector<64x128xbf16>
    %cst_12 = arith.constant dense<0.000000e+00> : vector<64x384xf32>
    %15 = tpu.matmul %14, %0, %cst_12 {dimension_numbers = #tpu.dot_dimension_numbers<[1], [0], [0], [1], [0, 0, 1, 1], [], []>} : vector<64x128xbf16>, vector<128x384xbf16>, vector<64x384xf32> -> vector<64x384xf32>
    %16 = vector.broadcast %4 : vector<1x384xf32> to vector<64x384xf32>
    %17 = arith.addf %15, %16 : vector<64x384xf32>
    %c0_13 = arith.constant 0 : index
    %c0_14 = arith.constant 0 : index
    %18 = vector.load %arg9[%c0_13, %c0_14] : memref<64x384xf32, #tpu.memory_space<vmem>>, vector<64x384xf32>
    tpu.vector_store %arg9[%c0_13, %c0_14], %17 {strides = array<i32>} : memref<64x384xf32, #tpu.memory_space<vmem>>, vector<64x384xf32>,
    %c0_i32_15 = arith.constant 0 : i32
    %c8_i32 = arith.constant 8 : i32
    %19 = arith.muli %c0_i32_15, %c8_i32 : i32
    %20 = tpu.assume_multiple %19, 8 : i32
    %21 = arith.index_cast %20 : i32 to index
    %c0_16 = arith.constant 0 : index
    %22 = vector.load %arg9[%21, %c0_16] : memref<64x384xf32, #tpu.memory_space<vmem>>, vector<8x384xf32>
    %23 = arith.truncf %9 : vector<8x128xf32> to vector<8x128xbf16>
    %cst_17 = arith.constant dense<0.000000e+00> : vector<8x384xf32>
    %24 = tpu.matmul %23, %2, %cst_17 {dimension_numbers = #tpu.dot_dimension_numbers<[1], [0], [0], [1], [0, 0, 1, 1], [], []>} : vector<8x128xbf16>, vector<128x384xbf16>, vector<8x384xf32> -> vector<8x384xf32>
    %25 = vector.extract_strided_slice %22 {offsets = [0, 0], sizes = [8, 128], strides = [1, 1]} : vector<8x384xf32> to vector<8x128xf32>
    %26 = vector.extract_strided_slice %24 {offsets = [0, 0], sizes = [8, 128], strides = [1, 1]} : vector<8x384xf32> to vector<8x128xf32>
    %27 = arith.addf %25, %26 : vector<8x128xf32>
    %28 = arith.negf %27 : vector<8x128xf32>
    %29 = math.exp %28 : vector<8x128xf32>
    %cst_18 = arith.constant 1.000000e+00 : f32
    %30 = vector.broadcast %cst_18 : f32 to vector<8x128xf32>
    %31 = arith.addf %30, %29 : vector<8x128xf32>
    %32 = arith.divf %30, %31 : vector<8x128xf32>
    %33 = vector.extract_strided_slice %22 {offsets = [0, 128], sizes = [8, 128], strides = [1, 1]} : vector<8x384xf32> to vector<8x128xf32>
    %34 = vector.extract_strided_slice %24 {offsets = [0, 128], sizes = [8, 128], strides = [1, 1]} : vector<8x384xf32> to vector<8x128xf32>
    %35 = arith.addf %33, %34 : vector<8x128xf32>
    %36 = arith.negf %35 : vector<8x128xf32>
    %37 = math.exp %36 : vector<8x128xf32>
    %cst_19 = arith.constant 1.000000e+00 : f32
    %38 = vector.broadcast %cst_19 : f32 to vector<8x128xf32>
    %39 = arith.addf %38, %37 : vector<8x128xf32>
    %40 = arith.divf %38, %39 : vector<8x128xf32>
    %41 = vector.extract_strided_slice %22 {offsets = [0, 256], sizes = [8, 128], strides = [1, 1]} : vector<8x384xf32> to vector<8x128xf32>
    %42 = vector.extract_strided_slice %24 {offsets = [0, 256], sizes = [8, 128], strides = [1, 1]} : vector<8x384xf32> to vector<8x128xf32>
    %43 = arith.addf %42, %8 : vector<8x128xf32>
    %44 = arith.mulf %32, %43 : vector<8x128xf32>
    %45 = arith.addf %41, %44 : vector<8x128xf32>
    %46 = math.tanh %45 : vector<8x128xf32>
    %47 = arith.subf %9, %46 : vector<8x128xf32>
    %48 = arith.mulf %40, %47 : vector<8x128xf32>
    %49 = arith.addf %46, %48 : vector<8x128xf32>
    %50 = arith.addi %11, %20 : i32
    %51 = arith.truncf %49 : vector<8x128xf32> to vector<8x128xbf16>
    %52 = arith.index_cast %50 : i32 to index
    %c0_20 = arith.constant 0 : index
    %53 = vector.load %arg8[%52, %c0_20] : memref<64x128xbf16, #tpu.memory_space<vmem>>, vector<8x128xbf16>
    tpu.vector_store %arg8[%52, %c0_20], %51 {strides = array<i32>} : memref<64x128xbf16, #tpu.memory_space<vmem>>, vector<8x128xbf16>,
    %c1_i32 = arith.constant 1 : i32
    %c8_i32_21 = arith.constant 8 : i32
    %54 = arith.muli %c1_i32, %c8_i32_21 : i32
    %55 = tpu.assume_multiple %54, 8 : i32
    %56 = arith.index_cast %55 : i32 to index
    %c0_22 = arith.constant 0 : index
    %57 = vector.load %arg9[%56, %c0_22] : memref<64x384xf32, #tpu.memory_space<vmem>>, vector<8x384xf32>
    %58 = arith.truncf %49 : vector<8x128xf32> to vector<8x128xbf16>
    %cst_23 = arith.constant dense<0.000000e+00> : vector<8x384xf32>
    %59 = tpu.matmul %58, %2, %cst_23 {dimension_numbers = #tpu.dot_dimension_numbers<[1], [0], [0], [1], [0, 0, 1, 1], [], []>} : vector<8x128xbf16>, vector<128x384xbf16>, vector<8x384xf32> -> vector<8x384xf32>
    %60 = vector.extract_strided_slice %57 {offsets = [0, 0], sizes = [8, 128], strides = [1, 1]} : vector<8x384xf32> to vector<8x128xf32>
    %61 = vector.extract_strided_slice %59 {offsets = [0, 0], sizes = [8, 128], strides = [1, 1]} : vector<8x384xf32> to vector<8x128xf32>
    %62 = arith.addf %60, %61 : vector<8x128xf32>
    %63 = arith.negf %62 : vector<8x128xf32>
    %64 = math.exp %63 : vector<8x128xf32>
    %cst_24 = arith.constant 1.000000e+00 : f32
    %65 = vector.broadcast %cst_24 : f32 to vector<8x128xf32>
    %66 = arith.addf %65, %64 : vector<8x128xf32>
    %67 = arith.divf %65, %66 : vector<8x128xf32>
    %68 = vector.extract_strided_slice %57 {offsets = [0, 128], sizes = [8, 128], strides = [1, 1]} : vector<8x384xf32> to vector<8x128xf32>
    %69 = vector.extract_strided_slice %59 {offsets = [0, 128], sizes = [8, 128], strides = [1, 1]} : vector<8x384xf32> to vector<8x128xf32>
    %70 = arith.addf %68, %69 : vector<8x128xf32>
    %71 = arith.negf %70 : vector<8x128xf32>
    %72 = math.exp %71 : vector<8x128xf32>
    %cst_25 = arith.constant 1.000000e+00 : f32
    %73 = vector.broadcast %cst_25 : f32 to vector<8x128xf32>
    %74 = arith.addf %73, %72 : vector<8x128xf32>
    %75 = arith.divf %73, %74 : vector<8x128xf32>
    %76 = vector.extract_strided_slice %57 {offsets = [0, 256], sizes = [8, 128], strides = [1, 1]} : vector<8x384xf32> to vector<8x128xf32>
    %77 = vector.extract_strided_slice %59 {offsets = [0, 256], sizes = [8, 128], strides = [1, 1]} : vector<8x384xf32> to vector<8x128xf32>
    %78 = arith.addf %77, %8 : vector<8x128xf32>
    %79 = arith.mulf %67, %78 : vector<8x128xf32>
    %80 = arith.addf %76, %79 : vector<8x128xf32>
    %81 = math.tanh %80 : vector<8x128xf32>
    %82 = arith.subf %49, %81 : vector<8x128xf32>
    %83 = arith.mulf %75, %82 : vector<8x128xf32>
    %84 = arith.addf %81, %83 : vector<8x128xf32>
    %85 = arith.addi %11, %55 : i32
    %86 = arith.truncf %84 : vector<8x128xf32> to vector<8x128xbf16>
    %87 = arith.index_cast %85 : i32 to index
    %c0_26 = arith.constant 0 : index
    %88 = vector.load %arg8[%87, %c0_26] : memref<64x128xbf16, #tpu.memory_space<vmem>>, vector<8x128xbf16>
    tpu.vector_store %arg8[%87, %c0_26], %86 {strides = array<i32>} : memref<64x128xbf16, #tpu.memory_space<vmem>>, vector<8x128xbf16>,
    %c2_i32 = arith.constant 2 : i32
    %c8_i32_27 = arith.constant 8 : i32
    %89 = arith.muli %c2_i32, %c8_i32_27 : i32
    %90 = tpu.assume_multiple %89, 8 : i32
    %91 = arith.index_cast %90 : i32 to index
    %c0_28 = arith.constant 0 : index
    %92 = vector.load %arg9[%91, %c0_28] : memref<64x384xf32, #tpu.memory_space<vmem>>, vector<8x384xf32>
    %93 = arith.truncf %84 : vector<8x128xf32> to vector<8x128xbf16>
    %cst_29 = arith.constant dense<0.000000e+00> : vector<8x384xf32>
    %94 = tpu.matmul %93, %2, %cst_29 {dimension_numbers = #tpu.dot_dimension_numbers<[1], [0], [0], [1], [0, 0, 1, 1], [], []>} : vector<8x128xbf16>, vector<128x384xbf16>, vector<8x384xf32> -> vector<8x384xf32>
    %95 = vector.extract_strided_slice %92 {offsets = [0, 0], sizes = [8, 128], strides = [1, 1]} : vector<8x384xf32> to vector<8x128xf32>
    %96 = vector.extract_strided_slice %94 {offsets = [0, 0], sizes = [8, 128], strides = [1, 1]} : vector<8x384xf32> to vector<8x128xf32>
    %97 = arith.addf %95, %96 : vector<8x128xf32>
    %98 = arith.negf %97 : vector<8x128xf32>
    %99 = math.exp %98 : vector<8x128xf32>
    %cst_30 = arith.constant 1.000000e+00 : f32
    %100 = vector.broadcast %cst_30 : f32 to vector<8x128xf32>
    %101 = arith.addf %100, %99 : vector<8x128xf32>
    %102 = arith.divf %100, %101 : vector<8x128xf32>
    %103 = vector.extract_strided_slice %92 {offsets = [0, 128], sizes = [8, 128], strides = [1, 1]} : vector<8x384xf32> to vector<8x128xf32>
    %104 = vector.extract_strided_slice %94 {offsets = [0, 128], sizes = [8, 128], strides = [1, 1]} : vector<8x384xf32> to vector<8x128xf32>
    %105 = arith.addf %103, %104 : vector<8x128xf32>
    %106 = arith.negf %105 : vector<8x128xf32>
    %107 = math.exp %106 : vector<8x128xf32>
    %cst_31 = arith.constant 1.000000e+00 : f32
    %108 = vector.broadcast %cst_31 : f32 to vector<8x128xf32>
    %109 = arith.addf %108, %107 : vector<8x128xf32>
    %110 = arith.divf %108, %109 : vector<8x128xf32>
    %111 = vector.extract_strided_slice %92 {offsets = [0, 256], sizes = [8, 128], strides = [1, 1]} : vector<8x384xf32> to vector<8x128xf32>
    %112 = vector.extract_strided_slice %94 {offsets = [0, 256], sizes = [8, 128], strides = [1, 1]} : vector<8x384xf32> to vector<8x128xf32>
    %113 = arith.addf %112, %8 : vector<8x128xf32>
    %114 = arith.mulf %102, %113 : vector<8x128xf32>
    %115 = arith.addf %111, %114 : vector<8x128xf32>
    %116 = math.tanh %115 : vector<8x128xf32>
    %117 = arith.subf %84, %116 : vector<8x128xf32>
    %118 = arith.mulf %110, %117 : vector<8x128xf32>
    %119 = arith.addf %116, %118 : vector<8x128xf32>
    %120 = arith.addi %11, %90 : i32
    %121 = arith.truncf %119 : vector<8x128xf32> to vector<8x128xbf16>
    %122 = arith.index_cast %120 : i32 to index
    %c0_32 = arith.constant 0 : index
    %123 = vector.load %arg8[%122, %c0_32] : memref<64x128xbf16, #tpu.memory_space<vmem>>, vector<8x128xbf16>
    tpu.vector_store %arg8[%122, %c0_32], %121 {strides = array<i32>} : memref<64x128xbf16, #tpu.memory_space<vmem>>, vector<8x128xbf16>,
    %c3_i32 = arith.constant 3 : i32
    %c8_i32_33 = arith.constant 8 : i32
    %124 = arith.muli %c3_i32, %c8_i32_33 : i32
    %125 = tpu.assume_multiple %124, 8 : i32
    %126 = arith.index_cast %125 : i32 to index
    %c0_34 = arith.constant 0 : index
    %127 = vector.load %arg9[%126, %c0_34] : memref<64x384xf32, #tpu.memory_space<vmem>>, vector<8x384xf32>
    %128 = arith.truncf %119 : vector<8x128xf32> to vector<8x128xbf16>
    %cst_35 = arith.constant dense<0.000000e+00> : vector<8x384xf32>
    %129 = tpu.matmul %128, %2, %cst_35 {dimension_numbers = #tpu.dot_dimension_numbers<[1], [0], [0], [1], [0, 0, 1, 1], [], []>} : vector<8x128xbf16>, vector<128x384xbf16>, vector<8x384xf32> -> vector<8x384xf32>
    %130 = vector.extract_strided_slice %127 {offsets = [0, 0], sizes = [8, 128], strides = [1, 1]} : vector<8x384xf32> to vector<8x128xf32>
    %131 = vector.extract_strided_slice %129 {offsets = [0, 0], sizes = [8, 128], strides = [1, 1]} : vector<8x384xf32> to vector<8x128xf32>
    %132 = arith.addf %130, %131 : vector<8x128xf32>
    %133 = arith.negf %132 : vector<8x128xf32>
    %134 = math.exp %133 : vector<8x128xf32>
    %cst_36 = arith.constant 1.000000e+00 : f32
    %135 = vector.broadcast %cst_36 : f32 to vector<8x128xf32>
    %136 = arith.addf %135, %134 : vector<8x128xf32>
    %137 = arith.divf %135, %136 : vector<8x128xf32>
    %138 = vector.extract_strided_slice %127 {offsets = [0, 128], sizes = [8, 128], strides = [1, 1]} : vector<8x384xf32> to vector<8x128xf32>
    %139 = vector.extract_strided_slice %129 {offsets = [0, 128], sizes = [8, 128], strides = [1, 1]} : vector<8x384xf32> to vector<8x128xf32>
    %140 = arith.addf %138, %139 : vector<8x128xf32>
    %141 = arith.negf %140 : vector<8x128xf32>
    %142 = math.exp %141 : vector<8x128xf32>
    %cst_37 = arith.constant 1.000000e+00 : f32
    %143 = vector.broadcast %cst_37 : f32 to vector<8x128xf32>
    %144 = arith.addf %143, %142 : vector<8x128xf32>
    %145 = arith.divf %143, %144 : vector<8x128xf32>
    %146 = vector.extract_strided_slice %127 {offsets = [0, 256], sizes = [8, 128], strides = [1, 1]} : vector<8x384xf32> to vector<8x128xf32>
    %147 = vector.extract_strided_slice %129 {offsets = [0, 256], sizes = [8, 128], strides = [1, 1]} : vector<8x384xf32> to vector<8x128xf32>
    %148 = arith.addf %147, %8 : vector<8x128xf32>
    %149 = arith.mulf %137, %148 : vector<8x128xf32>
    %150 = arith.addf %146, %149 : vector<8x128xf32>
    %151 = math.tanh %150 : vector<8x128xf32>
    %152 = arith.subf %119, %151 : vector<8x128xf32>
    %153 = arith.mulf %145, %152 : vector<8x128xf32>
    %154 = arith.addf %151, %153 : vector<8x128xf32>
    %155 = arith.addi %11, %125 : i32
    %156 = arith.truncf %154 : vector<8x128xf32> to vector<8x128xbf16>
    %157 = arith.index_cast %155 : i32 to index
    %c0_38 = arith.constant 0 : index
    %158 = vector.load %arg8[%157, %c0_38] : memref<64x128xbf16, #tpu.memory_space<vmem>>, vector<8x128xbf16>
    tpu.vector_store %arg8[%157, %c0_38], %156 {strides = array<i32>} : memref<64x128xbf16, #tpu.memory_space<vmem>>, vector<8x128xbf16>,
    %c4_i32 = arith.constant 4 : i32
    %c8_i32_39 = arith.constant 8 : i32
    %159 = arith.muli %c4_i32, %c8_i32_39 : i32
    %160 = tpu.assume_multiple %159, 8 : i32
    %161 = arith.index_cast %160 : i32 to index
    %c0_40 = arith.constant 0 : index
    %162 = vector.load %arg9[%161, %c0_40] : memref<64x384xf32, #tpu.memory_space<vmem>>, vector<8x384xf32>
    %163 = arith.truncf %154 : vector<8x128xf32> to vector<8x128xbf16>
    %cst_41 = arith.constant dense<0.000000e+00> : vector<8x384xf32>
    %164 = tpu.matmul %163, %2, %cst_41 {dimension_numbers = #tpu.dot_dimension_numbers<[1], [0], [0], [1], [0, 0, 1, 1], [], []>} : vector<8x128xbf16>, vector<128x384xbf16>, vector<8x384xf32> -> vector<8x384xf32>
    %165 = vector.extract_strided_slice %162 {offsets = [0, 0], sizes = [8, 128], strides = [1, 1]} : vector<8x384xf32> to vector<8x128xf32>
    %166 = vector.extract_strided_slice %164 {offsets = [0, 0], sizes = [8, 128], strides = [1, 1]} : vector<8x384xf32> to vector<8x128xf32>
    %167 = arith.addf %165, %166 : vector<8x128xf32>
    %168 = arith.negf %167 : vector<8x128xf32>
    %169 = math.exp %168 : vector<8x128xf32>
    %cst_42 = arith.constant 1.000000e+00 : f32
    %170 = vector.broadcast %cst_42 : f32 to vector<8x128xf32>
    %171 = arith.addf %170, %169 : vector<8x128xf32>
    %172 = arith.divf %170, %171 : vector<8x128xf32>
    %173 = vector.extract_strided_slice %162 {offsets = [0, 128], sizes = [8, 128], strides = [1, 1]} : vector<8x384xf32> to vector<8x128xf32>
    %174 = vector.extract_strided_slice %164 {offsets = [0, 128], sizes = [8, 128], strides = [1, 1]} : vector<8x384xf32> to vector<8x128xf32>
    %175 = arith.addf %173, %174 : vector<8x128xf32>
    %176 = arith.negf %175 : vector<8x128xf32>
    %177 = math.exp %176 : vector<8x128xf32>
    %cst_43 = arith.constant 1.000000e+00 : f32
    %178 = vector.broadcast %cst_43 : f32 to vector<8x128xf32>
    %179 = arith.addf %178, %177 : vector<8x128xf32>
    %180 = arith.divf %178, %179 : vector<8x128xf32>
    %181 = vector.extract_strided_slice %162 {offsets = [0, 256], sizes = [8, 128], strides = [1, 1]} : vector<8x384xf32> to vector<8x128xf32>
    %182 = vector.extract_strided_slice %164 {offsets = [0, 256], sizes = [8, 128], strides = [1, 1]} : vector<8x384xf32> to vector<8x128xf32>
    %183 = arith.addf %182, %8 : vector<8x128xf32>
    %184 = arith.mulf %172, %183 : vector<8x128xf32>
    %185 = arith.addf %181, %184 : vector<8x128xf32>
    %186 = math.tanh %185 : vector<8x128xf32>
    %187 = arith.subf %154, %186 : vector<8x128xf32>
    %188 = arith.mulf %180, %187 : vector<8x128xf32>
    %189 = arith.addf %186, %188 : vector<8x128xf32>
    %190 = arith.addi %11, %160 : i32
    %191 = arith.truncf %189 : vector<8x128xf32> to vector<8x128xbf16>
    %192 = arith.index_cast %190 : i32 to index
    %c0_44 = arith.constant 0 : index
    %193 = vector.load %arg8[%192, %c0_44] : memref<64x128xbf16, #tpu.memory_space<vmem>>, vector<8x128xbf16>
    tpu.vector_store %arg8[%192, %c0_44], %191 {strides = array<i32>} : memref<64x128xbf16, #tpu.memory_space<vmem>>, vector<8x128xbf16>,
    %c5_i32 = arith.constant 5 : i32
    %c8_i32_45 = arith.constant 8 : i32
    %194 = arith.muli %c5_i32, %c8_i32_45 : i32
    %195 = tpu.assume_multiple %194, 8 : i32
    %196 = arith.index_cast %195 : i32 to index
    %c0_46 = arith.constant 0 : index
    %197 = vector.load %arg9[%196, %c0_46] : memref<64x384xf32, #tpu.memory_space<vmem>>, vector<8x384xf32>
    %198 = arith.truncf %189 : vector<8x128xf32> to vector<8x128xbf16>
    %cst_47 = arith.constant dense<0.000000e+00> : vector<8x384xf32>
    %199 = tpu.matmul %198, %2, %cst_47 {dimension_numbers = #tpu.dot_dimension_numbers<[1], [0], [0], [1], [0, 0, 1, 1], [], []>} : vector<8x128xbf16>, vector<128x384xbf16>, vector<8x384xf32> -> vector<8x384xf32>
    %200 = vector.extract_strided_slice %197 {offsets = [0, 0], sizes = [8, 128], strides = [1, 1]} : vector<8x384xf32> to vector<8x128xf32>
    %201 = vector.extract_strided_slice %199 {offsets = [0, 0], sizes = [8, 128], strides = [1, 1]} : vector<8x384xf32> to vector<8x128xf32>
    %202 = arith.addf %200, %201 : vector<8x128xf32>
    %203 = arith.negf %202 : vector<8x128xf32>
    %204 = math.exp %203 : vector<8x128xf32>
    %cst_48 = arith.constant 1.000000e+00 : f32
    %205 = vector.broadcast %cst_48 : f32 to vector<8x128xf32>
    %206 = arith.addf %205, %204 : vector<8x128xf32>
    %207 = arith.divf %205, %206 : vector<8x128xf32>
    %208 = vector.extract_strided_slice %197 {offsets = [0, 128], sizes = [8, 128], strides = [1, 1]} : vector<8x384xf32> to vector<8x128xf32>
    %209 = vector.extract_strided_slice %199 {offsets = [0, 128], sizes = [8, 128], strides = [1, 1]} : vector<8x384xf32> to vector<8x128xf32>
    %210 = arith.addf %208, %209 : vector<8x128xf32>
    %211 = arith.negf %210 : vector<8x128xf32>
    %212 = math.exp %211 : vector<8x128xf32>
    %cst_49 = arith.constant 1.000000e+00 : f32
    %213 = vector.broadcast %cst_49 : f32 to vector<8x128xf32>
    %214 = arith.addf %213, %212 : vector<8x128xf32>
    %215 = arith.divf %213, %214 : vector<8x128xf32>
    %216 = vector.extract_strided_slice %197 {offsets = [0, 256], sizes = [8, 128], strides = [1, 1]} : vector<8x384xf32> to vector<8x128xf32>
    %217 = vector.extract_strided_slice %199 {offsets = [0, 256], sizes = [8, 128], strides = [1, 1]} : vector<8x384xf32> to vector<8x128xf32>
    %218 = arith.addf %217, %8 : vector<8x128xf32>
    %219 = arith.mulf %207, %218 : vector<8x128xf32>
    %220 = arith.addf %216, %219 : vector<8x128xf32>
    %221 = math.tanh %220 : vector<8x128xf32>
    %222 = arith.subf %189, %221 : vector<8x128xf32>
    %223 = arith.mulf %215, %222 : vector<8x128xf32>
    %224 = arith.addf %221, %223 : vector<8x128xf32>
    %225 = arith.addi %11, %195 : i32
    %226 = arith.truncf %224 : vector<8x128xf32> to vector<8x128xbf16>
    %227 = arith.index_cast %225 : i32 to index
    %c0_50 = arith.constant 0 : index
    %228 = vector.load %arg8[%227, %c0_50] : memref<64x128xbf16, #tpu.memory_space<vmem>>, vector<8x128xbf16>
    tpu.vector_store %arg8[%227, %c0_50], %226 {strides = array<i32>} : memref<64x128xbf16, #tpu.memory_space<vmem>>, vector<8x128xbf16>,
    %c6_i32 = arith.constant 6 : i32
    %c8_i32_51 = arith.constant 8 : i32
    %229 = arith.muli %c6_i32, %c8_i32_51 : i32
    %230 = tpu.assume_multiple %229, 8 : i32
    %231 = arith.index_cast %230 : i32 to index
    %c0_52 = arith.constant 0 : index
    %232 = vector.load %arg9[%231, %c0_52] : memref<64x384xf32, #tpu.memory_space<vmem>>, vector<8x384xf32>
    %233 = arith.truncf %224 : vector<8x128xf32> to vector<8x128xbf16>
    %cst_53 = arith.constant dense<0.000000e+00> : vector<8x384xf32>
    %234 = tpu.matmul %233, %2, %cst_53 {dimension_numbers = #tpu.dot_dimension_numbers<[1], [0], [0], [1], [0, 0, 1, 1], [], []>} : vector<8x128xbf16>, vector<128x384xbf16>, vector<8x384xf32> -> vector<8x384xf32>
    %235 = vector.extract_strided_slice %232 {offsets = [0, 0], sizes = [8, 128], strides = [1, 1]} : vector<8x384xf32> to vector<8x128xf32>
    %236 = vector.extract_strided_slice %234 {offsets = [0, 0], sizes = [8, 128], strides = [1, 1]} : vector<8x384xf32> to vector<8x128xf32>
    %237 = arith.addf %235, %236 : vector<8x128xf32>
    %238 = arith.negf %237 : vector<8x128xf32>
    %239 = math.exp %238 : vector<8x128xf32>
    %cst_54 = arith.constant 1.000000e+00 : f32
    %240 = vector.broadcast %cst_54 : f32 to vector<8x128xf32>
    %241 = arith.addf %240, %239 : vector<8x128xf32>
    %242 = arith.divf %240, %241 : vector<8x128xf32>
    %243 = vector.extract_strided_slice %232 {offsets = [0, 128], sizes = [8, 128], strides = [1, 1]} : vector<8x384xf32> to vector<8x128xf32>
    %244 = vector.extract_strided_slice %234 {offsets = [0, 128], sizes = [8, 128], strides = [1, 1]} : vector<8x384xf32> to vector<8x128xf32>
    %245 = arith.addf %243, %244 : vector<8x128xf32>
    %246 = arith.negf %245 : vector<8x128xf32>
    %247 = math.exp %246 : vector<8x128xf32>
    %cst_55 = arith.constant 1.000000e+00 : f32
    %248 = vector.broadcast %cst_55 : f32 to vector<8x128xf32>
    %249 = arith.addf %248, %247 : vector<8x128xf32>
    %250 = arith.divf %248, %249 : vector<8x128xf32>
    %251 = vector.extract_strided_slice %232 {offsets = [0, 256], sizes = [8, 128], strides = [1, 1]} : vector<8x384xf32> to vector<8x128xf32>
    %252 = vector.extract_strided_slice %234 {offsets = [0, 256], sizes = [8, 128], strides = [1, 1]} : vector<8x384xf32> to vector<8x128xf32>
    %253 = arith.addf %252, %8 : vector<8x128xf32>
    %254 = arith.mulf %242, %253 : vector<8x128xf32>
    %255 = arith.addf %251, %254 : vector<8x128xf32>
    %256 = math.tanh %255 : vector<8x128xf32>
    %257 = arith.subf %224, %256 : vector<8x128xf32>
    %258 = arith.mulf %250, %257 : vector<8x128xf32>
    %259 = arith.addf %256, %258 : vector<8x128xf32>
    %260 = arith.addi %11, %230 : i32
    %261 = arith.truncf %259 : vector<8x128xf32> to vector<8x128xbf16>
    %262 = arith.index_cast %260 : i32 to index
    %c0_56 = arith.constant 0 : index
    %263 = vector.load %arg8[%262, %c0_56] : memref<64x128xbf16, #tpu.memory_space<vmem>>, vector<8x128xbf16>
    tpu.vector_store %arg8[%262, %c0_56], %261 {strides = array<i32>} : memref<64x128xbf16, #tpu.memory_space<vmem>>, vector<8x128xbf16>,
    %c7_i32 = arith.constant 7 : i32
    %c8_i32_57 = arith.constant 8 : i32
    %264 = arith.muli %c7_i32, %c8_i32_57 : i32
    %265 = tpu.assume_multiple %264, 8 : i32
    %266 = arith.index_cast %265 : i32 to index
    %c0_58 = arith.constant 0 : index
    %267 = vector.load %arg9[%266, %c0_58] : memref<64x384xf32, #tpu.memory_space<vmem>>, vector<8x384xf32>
    %268 = arith.truncf %259 : vector<8x128xf32> to vector<8x128xbf16>
    %cst_59 = arith.constant dense<0.000000e+00> : vector<8x384xf32>
    %269 = tpu.matmul %268, %2, %cst_59 {dimension_numbers = #tpu.dot_dimension_numbers<[1], [0], [0], [1], [0, 0, 1, 1], [], []>} : vector<8x128xbf16>, vector<128x384xbf16>, vector<8x384xf32> -> vector<8x384xf32>
    %270 = vector.extract_strided_slice %267 {offsets = [0, 0], sizes = [8, 128], strides = [1, 1]} : vector<8x384xf32> to vector<8x128xf32>
    %271 = vector.extract_strided_slice %269 {offsets = [0, 0], sizes = [8, 128], strides = [1, 1]} : vector<8x384xf32> to vector<8x128xf32>
    %272 = arith.addf %270, %271 : vector<8x128xf32>
    %273 = arith.negf %272 : vector<8x128xf32>
    %274 = math.exp %273 : vector<8x128xf32>
    %cst_60 = arith.constant 1.000000e+00 : f32
    %275 = vector.broadcast %cst_60 : f32 to vector<8x128xf32>
    %276 = arith.addf %275, %274 : vector<8x128xf32>
    %277 = arith.divf %275, %276 : vector<8x128xf32>
    %278 = vector.extract_strided_slice %267 {offsets = [0, 128], sizes = [8, 128], strides = [1, 1]} : vector<8x384xf32> to vector<8x128xf32>
    %279 = vector.extract_strided_slice %269 {offsets = [0, 128], sizes = [8, 128], strides = [1, 1]} : vector<8x384xf32> to vector<8x128xf32>
    %280 = arith.addf %278, %279 : vector<8x128xf32>
    %281 = arith.negf %280 : vector<8x128xf32>
    %282 = math.exp %281 : vector<8x128xf32>
    %cst_61 = arith.constant 1.000000e+00 : f32
    %283 = vector.broadcast %cst_61 : f32 to vector<8x128xf32>
    %284 = arith.addf %283, %282 : vector<8x128xf32>
    %285 = arith.divf %283, %284 : vector<8x128xf32>
    %286 = vector.extract_strided_slice %267 {offsets = [0, 256], sizes = [8, 128], strides = [1, 1]} : vector<8x384xf32> to vector<8x128xf32>
    %287 = vector.extract_strided_slice %269 {offsets = [0, 256], sizes = [8, 128], strides = [1, 1]} : vector<8x384xf32> to vector<8x128xf32>
    %288 = arith.addf %287, %8 : vector<8x128xf32>
    %289 = arith.mulf %277, %288 : vector<8x128xf32>
    %290 = arith.addf %286, %289 : vector<8x128xf32>
    %291 = math.tanh %290 : vector<8x128xf32>
    %292 = arith.subf %259, %291 : vector<8x128xf32>
    %293 = arith.mulf %285, %292 : vector<8x128xf32>
    %294 = arith.addf %291, %293 : vector<8x128xf32>
    %295 = arith.addi %11, %265 : i32
    %296 = arith.truncf %294 : vector<8x128xf32> to vector<8x128xbf16>
    %297 = arith.index_cast %295 : i32 to index
    %c0_62 = arith.constant 0 : index
    %298 = vector.load %arg8[%297, %c0_62] : memref<64x128xbf16, #tpu.memory_space<vmem>>, vector<8x128xbf16>
    tpu.vector_store %arg8[%297, %c0_62], %296 {strides = array<i32>} : memref<64x128xbf16, #tpu.memory_space<vmem>>, vector<8x128xbf16>,
    %c8_i32_63 = arith.constant 8 : i32
    %c1_i32_64 = arith.constant 1 : i32
    %c0_65 = arith.constant 0 : index
    %c0_66 = arith.constant 0 : index
    %c0_67 = arith.constant 0 : index
    %299 = vector.load %arg3[%c0_65, %c0_66, %c0_67] : memref<1x128x384xbf16, #tpu.memory_space<vmem>>, vector<1x128x384xbf16>
    %300 = vector.shape_cast %299 : vector<1x128x384xbf16> to vector<128x384xbf16>
    %c1 = arith.constant 1 : index
    %c0_68 = arith.constant 0 : index
    %c0_69 = arith.constant 0 : index
    %301 = vector.load %arg4[%c1, %c0_68, %c0_69] : memref<2x128x384xbf16, #tpu.memory_space<vmem>>, vector<1x128x384xbf16>
    %302 = vector.shape_cast %301 : vector<1x128x384xbf16> to vector<128x384xbf16>
    %c1_70 = arith.constant 1 : index
    %c0_71 = arith.constant 0 : index
    %c0_72 = arith.constant 0 : index
    %303 = vector.load %arg5[%c1_70, %c0_71, %c0_72] : memref<2x1x384xf32, #tpu.memory_space<vmem>>, vector<1x1x384xf32>
    %304 = vector.shape_cast %303 : vector<1x1x384xf32> to vector<1x384xf32>
    %c1_73 = arith.constant 1 : index
    %c0_74 = arith.constant 0 : index
    %c0_75 = arith.constant 0 : index
    %305 = vector.load %arg6[%c1_73, %c0_74, %c0_75] : memref<2x1x128xf32, #tpu.memory_space<vmem>>, vector<1x1x128xf32>
    %306 = vector.shape_cast %305 : vector<1x1x128xf32> to vector<1x128xf32>
    %307 = vector.shape_cast %306 : vector<1x128xf32> to vector<1x128xf32>
    %308 = vector.broadcast %307 : vector<1x128xf32> to vector<8x128xf32>
    %cst_76 = arith.constant 0.000000e+00 : f32
    %309 = vector.broadcast %cst_76 : f32 to vector<8x128xf32>
    %c0_i32_77 = arith.constant 0 : i32
    %c64_i32_78 = arith.constant 64 : i32
    %310 = arith.muli %c0_i32_77, %c64_i32_78 : i32
    %311 = tpu.assume_multiple %310, 8 : i32
    %312 = arith.index_cast %311 : i32 to index
    %c0_79 = arith.constant 0 : index
    %313 = vector.load %arg8[%312, %c0_79] : memref<64x128xbf16, #tpu.memory_space<vmem>>, vector<64x128xbf16>
    %cst_80 = arith.constant dense<0.000000e+00> : vector<64x384xf32>
    %314 = tpu.matmul %313, %300, %cst_80 {dimension_numbers = #tpu.dot_dimension_numbers<[1], [0], [0], [1], [0, 0, 1, 1], [], []>} : vector<64x128xbf16>, vector<128x384xbf16>, vector<64x384xf32> -> vector<64x384xf32>
    %315 = vector.broadcast %304 : vector<1x384xf32> to vector<64x384xf32>
    %316 = arith.addf %314, %315 : vector<64x384xf32>
    %c0_81 = arith.constant 0 : index
    %c0_82 = arith.constant 0 : index
    %317 = vector.load %arg9[%c0_81, %c0_82] : memref<64x384xf32, #tpu.memory_space<vmem>>, vector<64x384xf32>
    tpu.vector_store %arg9[%c0_81, %c0_82], %316 {strides = array<i32>} : memref<64x384xf32, #tpu.memory_space<vmem>>, vector<64x384xf32>,
    %c0_i32_83 = arith.constant 0 : i32
    %c8_i32_84 = arith.constant 8 : i32
    %318 = arith.muli %c0_i32_83, %c8_i32_84 : i32
    %319 = tpu.assume_multiple %318, 8 : i32
    %320 = arith.index_cast %319 : i32 to index
    %c0_85 = arith.constant 0 : index
    %321 = vector.load %arg9[%320, %c0_85] : memref<64x384xf32, #tpu.memory_space<vmem>>, vector<8x384xf32>
    %322 = arith.truncf %309 : vector<8x128xf32> to vector<8x128xbf16>
    %cst_86 = arith.constant dense<0.000000e+00> : vector<8x384xf32>
    %323 = tpu.matmul %322, %302, %cst_86 {dimension_numbers = #tpu.dot_dimension_numbers<[1], [0], [0], [1], [0, 0, 1, 1], [], []>} : vector<8x128xbf16>, vector<128x384xbf16>, vector<8x384xf32> -> vector<8x384xf32>
    %324 = vector.extract_strided_slice %321 {offsets = [0, 0], sizes = [8, 128], strides = [1, 1]} : vector<8x384xf32> to vector<8x128xf32>
    %325 = vector.extract_strided_slice %323 {offsets = [0, 0], sizes = [8, 128], strides = [1, 1]} : vector<8x384xf32> to vector<8x128xf32>
    %326 = arith.addf %324, %325 : vector<8x128xf32>
    %327 = arith.negf %326 : vector<8x128xf32>
    %328 = math.exp %327 : vector<8x128xf32>
    %cst_87 = arith.constant 1.000000e+00 : f32
    %329 = vector.broadcast %cst_87 : f32 to vector<8x128xf32>
    %330 = arith.addf %329, %328 : vector<8x128xf32>
    %331 = arith.divf %329, %330 : vector<8x128xf32>
    %332 = vector.extract_strided_slice %321 {offsets = [0, 128], sizes = [8, 128], strides = [1, 1]} : vector<8x384xf32> to vector<8x128xf32>
    %333 = vector.extract_strided_slice %323 {offsets = [0, 128], sizes = [8, 128], strides = [1, 1]} : vector<8x384xf32> to vector<8x128xf32>
    %334 = arith.addf %332, %333 : vector<8x128xf32>
    %335 = arith.negf %334 : vector<8x128xf32>
    %336 = math.exp %335 : vector<8x128xf32>
    %cst_88 = arith.constant 1.000000e+00 : f32
    %337 = vector.broadcast %cst_88 : f32 to vector<8x128xf32>
    %338 = arith.addf %337, %336 : vector<8x128xf32>
    %339 = arith.divf %337, %338 : vector<8x128xf32>
    %340 = vector.extract_strided_slice %321 {offsets = [0, 256], sizes = [8, 128], strides = [1, 1]} : vector<8x384xf32> to vector<8x128xf32>
    %341 = vector.extract_strided_slice %323 {offsets = [0, 256], sizes = [8, 128], strides = [1, 1]} : vector<8x384xf32> to vector<8x128xf32>
    %342 = arith.addf %341, %308 : vector<8x128xf32>
    %343 = arith.mulf %331, %342 : vector<8x128xf32>
    %344 = arith.addf %340, %343 : vector<8x128xf32>
    %345 = math.tanh %344 : vector<8x128xf32>
    %346 = arith.subf %309, %345 : vector<8x128xf32>
    %347 = arith.mulf %339, %346 : vector<8x128xf32>
    %348 = arith.addf %345, %347 : vector<8x128xf32>
    %349 = arith.addi %311, %319 : i32
    %c0_89 = arith.constant 0 : index
    %350 = arith.index_cast %349 : i32 to index
    %c0_90 = arith.constant 0 : index
    %351 = vector.load %arg7[%c0_89, %350, %c0_90] : memref<1x64x128xf32, #tpu.memory_space<vmem>>, vector<1x8x128xf32>
    %352 = vector.shape_cast %351 : vector<1x8x128xf32> to vector<8x128xf32>
    %353 = vector.shape_cast %348 : vector<8x128xf32> to vector<1x8x128xf32>
    tpu.vector_store %arg7[%c0_89, %350, %c0_90], %353 {strides = array<i32>} : memref<1x64x128xf32, #tpu.memory_space<vmem>>, vector<1x8x128xf32>,
    %c1_i32_91 = arith.constant 1 : i32
    %c8_i32_92 = arith.constant 8 : i32
    %354 = arith.muli %c1_i32_91, %c8_i32_92 : i32
    %355 = tpu.assume_multiple %354, 8 : i32
    %356 = arith.index_cast %355 : i32 to index
    %c0_93 = arith.constant 0 : index
    %357 = vector.load %arg9[%356, %c0_93] : memref<64x384xf32, #tpu.memory_space<vmem>>, vector<8x384xf32>
    %358 = arith.truncf %348 : vector<8x128xf32> to vector<8x128xbf16>
    %cst_94 = arith.constant dense<0.000000e+00> : vector<8x384xf32>
    %359 = tpu.matmul %358, %302, %cst_94 {dimension_numbers = #tpu.dot_dimension_numbers<[1], [0], [0], [1], [0, 0, 1, 1], [], []>} : vector<8x128xbf16>, vector<128x384xbf16>, vector<8x384xf32> -> vector<8x384xf32>
    %360 = vector.extract_strided_slice %357 {offsets = [0, 0], sizes = [8, 128], strides = [1, 1]} : vector<8x384xf32> to vector<8x128xf32>
    %361 = vector.extract_strided_slice %359 {offsets = [0, 0], sizes = [8, 128], strides = [1, 1]} : vector<8x384xf32> to vector<8x128xf32>
    %362 = arith.addf %360, %361 : vector<8x128xf32>
    %363 = arith.negf %362 : vector<8x128xf32>
    %364 = math.exp %363 : vector<8x128xf32>
    %cst_95 = arith.constant 1.000000e+00 : f32
    %365 = vector.broadcast %cst_95 : f32 to vector<8x128xf32>
    %366 = arith.addf %365, %364 : vector<8x128xf32>
    %367 = arith.divf %365, %366 : vector<8x128xf32>
    %368 = vector.extract_strided_slice %357 {offsets = [0, 128], sizes = [8, 128], strides = [1, 1]} : vector<8x384xf32> to vector<8x128xf32>
    %369 = vector.extract_strided_slice %359 {offsets = [0, 128], sizes = [8, 128], strides = [1, 1]} : vector<8x384xf32> to vector<8x128xf32>
    %370 = arith.addf %368, %369 : vector<8x128xf32>
    %371 = arith.negf %370 : vector<8x128xf32>
    %372 = math.exp %371 : vector<8x128xf32>
    %cst_96 = arith.constant 1.000000e+00 : f32
    %373 = vector.broadcast %cst_96 : f32 to vector<8x128xf32>
    %374 = arith.addf %373, %372 : vector<8x128xf32>
    %375 = arith.divf %373, %374 : vector<8x128xf32>
    %376 = vector.extract_strided_slice %357 {offsets = [0, 256], sizes = [8, 128], strides = [1, 1]} : vector<8x384xf32> to vector<8x128xf32>
    %377 = vector.extract_strided_slice %359 {offsets = [0, 256], sizes = [8, 128], strides = [1, 1]} : vector<8x384xf32> to vector<8x128xf32>
    %378 = arith.addf %377, %308 : vector<8x128xf32>
    %379 = arith.mulf %367, %378 : vector<8x128xf32>
    %380 = arith.addf %376, %379 : vector<8x128xf32>
    %381 = math.tanh %380 : vector<8x128xf32>
    %382 = arith.subf %348, %381 : vector<8x128xf32>
    %383 = arith.mulf %375, %382 : vector<8x128xf32>
    %384 = arith.addf %381, %383 : vector<8x128xf32>
    %385 = arith.addi %311, %355 : i32
    %c0_97 = arith.constant 0 : index
    %386 = arith.index_cast %385 : i32 to index
    %c0_98 = arith.constant 0 : index
    %387 = vector.load %arg7[%c0_97, %386, %c0_98] : memref<1x64x128xf32, #tpu.memory_space<vmem>>, vector<1x8x128xf32>
    %388 = vector.shape_cast %387 : vector<1x8x128xf32> to vector<8x128xf32>
    %389 = vector.shape_cast %384 : vector<8x128xf32> to vector<1x8x128xf32>
    tpu.vector_store %arg7[%c0_97, %386, %c0_98], %389 {strides = array<i32>} : memref<1x64x128xf32, #tpu.memory_space<vmem>>, vector<1x8x128xf32>,
    %c2_i32_99 = arith.constant 2 : i32
    %c8_i32_100 = arith.constant 8 : i32
    %390 = arith.muli %c2_i32_99, %c8_i32_100 : i32
    %391 = tpu.assume_multiple %390, 8 : i32
    %392 = arith.index_cast %391 : i32 to index
    %c0_101 = arith.constant 0 : index
    %393 = vector.load %arg9[%392, %c0_101] : memref<64x384xf32, #tpu.memory_space<vmem>>, vector<8x384xf32>
    %394 = arith.truncf %384 : vector<8x128xf32> to vector<8x128xbf16>
    %cst_102 = arith.constant dense<0.000000e+00> : vector<8x384xf32>
    %395 = tpu.matmul %394, %302, %cst_102 {dimension_numbers = #tpu.dot_dimension_numbers<[1], [0], [0], [1], [0, 0, 1, 1], [], []>} : vector<8x128xbf16>, vector<128x384xbf16>, vector<8x384xf32> -> vector<8x384xf32>
    %396 = vector.extract_strided_slice %393 {offsets = [0, 0], sizes = [8, 128], strides = [1, 1]} : vector<8x384xf32> to vector<8x128xf32>
    %397 = vector.extract_strided_slice %395 {offsets = [0, 0], sizes = [8, 128], strides = [1, 1]} : vector<8x384xf32> to vector<8x128xf32>
    %398 = arith.addf %396, %397 : vector<8x128xf32>
    %399 = arith.negf %398 : vector<8x128xf32>
    %400 = math.exp %399 : vector<8x128xf32>
    %cst_103 = arith.constant 1.000000e+00 : f32
    %401 = vector.broadcast %cst_103 : f32 to vector<8x128xf32>
    %402 = arith.addf %401, %400 : vector<8x128xf32>
    %403 = arith.divf %401, %402 : vector<8x128xf32>
    %404 = vector.extract_strided_slice %393 {offsets = [0, 128], sizes = [8, 128], strides = [1, 1]} : vector<8x384xf32> to vector<8x128xf32>
    %405 = vector.extract_strided_slice %395 {offsets = [0, 128], sizes = [8, 128], strides = [1, 1]} : vector<8x384xf32> to vector<8x128xf32>
    %406 = arith.addf %404, %405 : vector<8x128xf32>
    %407 = arith.negf %406 : vector<8x128xf32>
    %408 = math.exp %407 : vector<8x128xf32>
    %cst_104 = arith.constant 1.000000e+00 : f32
    %409 = vector.broadcast %cst_104 : f32 to vector<8x128xf32>
    %410 = arith.addf %409, %408 : vector<8x128xf32>
    %411 = arith.divf %409, %410 : vector<8x128xf32>
    %412 = vector.extract_strided_slice %393 {offsets = [0, 256], sizes = [8, 128], strides = [1, 1]} : vector<8x384xf32> to vector<8x128xf32>
    %413 = vector.extract_strided_slice %395 {offsets = [0, 256], sizes = [8, 128], strides = [1, 1]} : vector<8x384xf32> to vector<8x128xf32>
    %414 = arith.addf %413, %308 : vector<8x128xf32>
    %415 = arith.mulf %403, %414 : vector<8x128xf32>
    %416 = arith.addf %412, %415 : vector<8x128xf32>
    %417 = math.tanh %416 : vector<8x128xf32>
    %418 = arith.subf %384, %417 : vector<8x128xf32>
    %419 = arith.mulf %411, %418 : vector<8x128xf32>
    %420 = arith.addf %417, %419 : vector<8x128xf32>
    %421 = arith.addi %311, %391 : i32
    %c0_105 = arith.constant 0 : index
    %422 = arith.index_cast %421 : i32 to index
    %c0_106 = arith.constant 0 : index
    %423 = vector.load %arg7[%c0_105, %422, %c0_106] : memref<1x64x128xf32, #tpu.memory_space<vmem>>, vector<1x8x128xf32>
    %424 = vector.shape_cast %423 : vector<1x8x128xf32> to vector<8x128xf32>
    %425 = vector.shape_cast %420 : vector<8x128xf32> to vector<1x8x128xf32>
    tpu.vector_store %arg7[%c0_105, %422, %c0_106], %425 {strides = array<i32>} : memref<1x64x128xf32, #tpu.memory_space<vmem>>, vector<1x8x128xf32>,
    %c3_i32_107 = arith.constant 3 : i32
    %c8_i32_108 = arith.constant 8 : i32
    %426 = arith.muli %c3_i32_107, %c8_i32_108 : i32
    %427 = tpu.assume_multiple %426, 8 : i32
    %428 = arith.index_cast %427 : i32 to index
    %c0_109 = arith.constant 0 : index
    %429 = vector.load %arg9[%428, %c0_109] : memref<64x384xf32, #tpu.memory_space<vmem>>, vector<8x384xf32>
    %430 = arith.truncf %420 : vector<8x128xf32> to vector<8x128xbf16>
    %cst_110 = arith.constant dense<0.000000e+00> : vector<8x384xf32>
    %431 = tpu.matmul %430, %302, %cst_110 {dimension_numbers = #tpu.dot_dimension_numbers<[1], [0], [0], [1], [0, 0, 1, 1], [], []>} : vector<8x128xbf16>, vector<128x384xbf16>, vector<8x384xf32> -> vector<8x384xf32>
    %432 = vector.extract_strided_slice %429 {offsets = [0, 0], sizes = [8, 128], strides = [1, 1]} : vector<8x384xf32> to vector<8x128xf32>
    %433 = vector.extract_strided_slice %431 {offsets = [0, 0], sizes = [8, 128], strides = [1, 1]} : vector<8x384xf32> to vector<8x128xf32>
    %434 = arith.addf %432, %433 : vector<8x128xf32>
    %435 = arith.negf %434 : vector<8x128xf32>
    %436 = math.exp %435 : vector<8x128xf32>
    %cst_111 = arith.constant 1.000000e+00 : f32
    %437 = vector.broadcast %cst_111 : f32 to vector<8x128xf32>
    %438 = arith.addf %437, %436 : vector<8x128xf32>
    %439 = arith.divf %437, %438 : vector<8x128xf32>
    %440 = vector.extract_strided_slice %429 {offsets = [0, 128], sizes = [8, 128], strides = [1, 1]} : vector<8x384xf32> to vector<8x128xf32>
    %441 = vector.extract_strided_slice %431 {offsets = [0, 128], sizes = [8, 128], strides = [1, 1]} : vector<8x384xf32> to vector<8x128xf32>
    %442 = arith.addf %440, %441 : vector<8x128xf32>
    %443 = arith.negf %442 : vector<8x128xf32>
    %444 = math.exp %443 : vector<8x128xf32>
    %cst_112 = arith.constant 1.000000e+00 : f32
    %445 = vector.broadcast %cst_112 : f32 to vector<8x128xf32>
    %446 = arith.addf %445, %444 : vector<8x128xf32>
    %447 = arith.divf %445, %446 : vector<8x128xf32>
    %448 = vector.extract_strided_slice %429 {offsets = [0, 256], sizes = [8, 128], strides = [1, 1]} : vector<8x384xf32> to vector<8x128xf32>
    %449 = vector.extract_strided_slice %431 {offsets = [0, 256], sizes = [8, 128], strides = [1, 1]} : vector<8x384xf32> to vector<8x128xf32>
    %450 = arith.addf %449, %308 : vector<8x128xf32>
    %451 = arith.mulf %439, %450 : vector<8x128xf32>
    %452 = arith.addf %448, %451 : vector<8x128xf32>
    %453 = math.tanh %452 : vector<8x128xf32>
    %454 = arith.subf %420, %453 : vector<8x128xf32>
    %455 = arith.mulf %447, %454 : vector<8x128xf32>
    %456 = arith.addf %453, %455 : vector<8x128xf32>
    %457 = arith.addi %311, %427 : i32
    %c0_113 = arith.constant 0 : index
    %458 = arith.index_cast %457 : i32 to index
    %c0_114 = arith.constant 0 : index
    %459 = vector.load %arg7[%c0_113, %458, %c0_114] : memref<1x64x128xf32, #tpu.memory_space<vmem>>, vector<1x8x128xf32>
    %460 = vector.shape_cast %459 : vector<1x8x128xf32> to vector<8x128xf32>
    %461 = vector.shape_cast %456 : vector<8x128xf32> to vector<1x8x128xf32>
    tpu.vector_store %arg7[%c0_113, %458, %c0_114], %461 {strides = array<i32>} : memref<1x64x128xf32, #tpu.memory_space<vmem>>, vector<1x8x128xf32>,
    %c4_i32_115 = arith.constant 4 : i32
    %c8_i32_116 = arith.constant 8 : i32
    %462 = arith.muli %c4_i32_115, %c8_i32_116 : i32
    %463 = tpu.assume_multiple %462, 8 : i32
    %464 = arith.index_cast %463 : i32 to index
    %c0_117 = arith.constant 0 : index
    %465 = vector.load %arg9[%464, %c0_117] : memref<64x384xf32, #tpu.memory_space<vmem>>, vector<8x384xf32>
    %466 = arith.truncf %456 : vector<8x128xf32> to vector<8x128xbf16>
    %cst_118 = arith.constant dense<0.000000e+00> : vector<8x384xf32>
    %467 = tpu.matmul %466, %302, %cst_118 {dimension_numbers = #tpu.dot_dimension_numbers<[1], [0], [0], [1], [0, 0, 1, 1], [], []>} : vector<8x128xbf16>, vector<128x384xbf16>, vector<8x384xf32> -> vector<8x384xf32>
    %468 = vector.extract_strided_slice %465 {offsets = [0, 0], sizes = [8, 128], strides = [1, 1]} : vector<8x384xf32> to vector<8x128xf32>
    %469 = vector.extract_strided_slice %467 {offsets = [0, 0], sizes = [8, 128], strides = [1, 1]} : vector<8x384xf32> to vector<8x128xf32>
    %470 = arith.addf %468, %469 : vector<8x128xf32>
    %471 = arith.negf %470 : vector<8x128xf32>
    %472 = math.exp %471 : vector<8x128xf32>
    %cst_119 = arith.constant 1.000000e+00 : f32
    %473 = vector.broadcast %cst_119 : f32 to vector<8x128xf32>
    %474 = arith.addf %473, %472 : vector<8x128xf32>
    %475 = arith.divf %473, %474 : vector<8x128xf32>
    %476 = vector.extract_strided_slice %465 {offsets = [0, 128], sizes = [8, 128], strides = [1, 1]} : vector<8x384xf32> to vector<8x128xf32>
    %477 = vector.extract_strided_slice %467 {offsets = [0, 128], sizes = [8, 128], strides = [1, 1]} : vector<8x384xf32> to vector<8x128xf32>
    %478 = arith.addf %476, %477 : vector<8x128xf32>
    %479 = arith.negf %478 : vector<8x128xf32>
    %480 = math.exp %479 : vector<8x128xf32>
    %cst_120 = arith.constant 1.000000e+00 : f32
    %481 = vector.broadcast %cst_120 : f32 to vector<8x128xf32>
    %482 = arith.addf %481, %480 : vector<8x128xf32>
    %483 = arith.divf %481, %482 : vector<8x128xf32>
    %484 = vector.extract_strided_slice %465 {offsets = [0, 256], sizes = [8, 128], strides = [1, 1]} : vector<8x384xf32> to vector<8x128xf32>
    %485 = vector.extract_strided_slice %467 {offsets = [0, 256], sizes = [8, 128], strides = [1, 1]} : vector<8x384xf32> to vector<8x128xf32>
    %486 = arith.addf %485, %308 : vector<8x128xf32>
    %487 = arith.mulf %475, %486 : vector<8x128xf32>
    %488 = arith.addf %484, %487 : vector<8x128xf32>
    %489 = math.tanh %488 : vector<8x128xf32>
    %490 = arith.subf %456, %489 : vector<8x128xf32>
    %491 = arith.mulf %483, %490 : vector<8x128xf32>
    %492 = arith.addf %489, %491 : vector<8x128xf32>
    %493 = arith.addi %311, %463 : i32
    %c0_121 = arith.constant 0 : index
    %494 = arith.index_cast %493 : i32 to index
    %c0_122 = arith.constant 0 : index
    %495 = vector.load %arg7[%c0_121, %494, %c0_122] : memref<1x64x128xf32, #tpu.memory_space<vmem>>, vector<1x8x128xf32>
    %496 = vector.shape_cast %495 : vector<1x8x128xf32> to vector<8x128xf32>
    %497 = vector.shape_cast %492 : vector<8x128xf32> to vector<1x8x128xf32>
    tpu.vector_store %arg7[%c0_121, %494, %c0_122], %497 {strides = array<i32>} : memref<1x64x128xf32, #tpu.memory_space<vmem>>, vector<1x8x128xf32>,
    %c5_i32_123 = arith.constant 5 : i32
    %c8_i32_124 = arith.constant 8 : i32
    %498 = arith.muli %c5_i32_123, %c8_i32_124 : i32
    %499 = tpu.assume_multiple %498, 8 : i32
    %500 = arith.index_cast %499 : i32 to index
    %c0_125 = arith.constant 0 : index
    %501 = vector.load %arg9[%500, %c0_125] : memref<64x384xf32, #tpu.memory_space<vmem>>, vector<8x384xf32>
    %502 = arith.truncf %492 : vector<8x128xf32> to vector<8x128xbf16>
    %cst_126 = arith.constant dense<0.000000e+00> : vector<8x384xf32>
    %503 = tpu.matmul %502, %302, %cst_126 {dimension_numbers = #tpu.dot_dimension_numbers<[1], [0], [0], [1], [0, 0, 1, 1], [], []>} : vector<8x128xbf16>, vector<128x384xbf16>, vector<8x384xf32> -> vector<8x384xf32>
    %504 = vector.extract_strided_slice %501 {offsets = [0, 0], sizes = [8, 128], strides = [1, 1]} : vector<8x384xf32> to vector<8x128xf32>
    %505 = vector.extract_strided_slice %503 {offsets = [0, 0], sizes = [8, 128], strides = [1, 1]} : vector<8x384xf32> to vector<8x128xf32>
    %506 = arith.addf %504, %505 : vector<8x128xf32>
    %507 = arith.negf %506 : vector<8x128xf32>
    %508 = math.exp %507 : vector<8x128xf32>
    %cst_127 = arith.constant 1.000000e+00 : f32
    %509 = vector.broadcast %cst_127 : f32 to vector<8x128xf32>
    %510 = arith.addf %509, %508 : vector<8x128xf32>
    %511 = arith.divf %509, %510 : vector<8x128xf32>
    %512 = vector.extract_strided_slice %501 {offsets = [0, 128], sizes = [8, 128], strides = [1, 1]} : vector<8x384xf32> to vector<8x128xf32>
    %513 = vector.extract_strided_slice %503 {offsets = [0, 128], sizes = [8, 128], strides = [1, 1]} : vector<8x384xf32> to vector<8x128xf32>
    %514 = arith.addf %512, %513 : vector<8x128xf32>
    %515 = arith.negf %514 : vector<8x128xf32>
    %516 = math.exp %515 : vector<8x128xf32>
    %cst_128 = arith.constant 1.000000e+00 : f32
    %517 = vector.broadcast %cst_128 : f32 to vector<8x128xf32>
    %518 = arith.addf %517, %516 : vector<8x128xf32>
    %519 = arith.divf %517, %518 : vector<8x128xf32>
    %520 = vector.extract_strided_slice %501 {offsets = [0, 256], sizes = [8, 128], strides = [1, 1]} : vector<8x384xf32> to vector<8x128xf32>
    %521 = vector.extract_strided_slice %503 {offsets = [0, 256], sizes = [8, 128], strides = [1, 1]} : vector<8x384xf32> to vector<8x128xf32>
    %522 = arith.addf %521, %308 : vector<8x128xf32>
    %523 = arith.mulf %511, %522 : vector<8x128xf32>
    %524 = arith.addf %520, %523 : vector<8x128xf32>
    %525 = math.tanh %524 : vector<8x128xf32>
    %526 = arith.subf %492, %525 : vector<8x128xf32>
    %527 = arith.mulf %519, %526 : vector<8x128xf32>
    %528 = arith.addf %525, %527 : vector<8x128xf32>
    %529 = arith.addi %311, %499 : i32
    %c0_129 = arith.constant 0 : index
    %530 = arith.index_cast %529 : i32 to index
    %c0_130 = arith.constant 0 : index
    %531 = vector.load %arg7[%c0_129, %530, %c0_130] : memref<1x64x128xf32, #tpu.memory_space<vmem>>, vector<1x8x128xf32>
    %532 = vector.shape_cast %531 : vector<1x8x128xf32> to vector<8x128xf32>
    %533 = vector.shape_cast %528 : vector<8x128xf32> to vector<1x8x128xf32>
    tpu.vector_store %arg7[%c0_129, %530, %c0_130], %533 {strides = array<i32>} : memref<1x64x128xf32, #tpu.memory_space<vmem>>, vector<1x8x128xf32>,
    %c6_i32_131 = arith.constant 6 : i32
    %c8_i32_132 = arith.constant 8 : i32
    %534 = arith.muli %c6_i32_131, %c8_i32_132 : i32
    %535 = tpu.assume_multiple %534, 8 : i32
    %536 = arith.index_cast %535 : i32 to index
    %c0_133 = arith.constant 0 : index
    %537 = vector.load %arg9[%536, %c0_133] : memref<64x384xf32, #tpu.memory_space<vmem>>, vector<8x384xf32>
    %538 = arith.truncf %528 : vector<8x128xf32> to vector<8x128xbf16>
    %cst_134 = arith.constant dense<0.000000e+00> : vector<8x384xf32>
    %539 = tpu.matmul %538, %302, %cst_134 {dimension_numbers = #tpu.dot_dimension_numbers<[1], [0], [0], [1], [0, 0, 1, 1], [], []>} : vector<8x128xbf16>, vector<128x384xbf16>, vector<8x384xf32> -> vector<8x384xf32>
    %540 = vector.extract_strided_slice %537 {offsets = [0, 0], sizes = [8, 128], strides = [1, 1]} : vector<8x384xf32> to vector<8x128xf32>
    %541 = vector.extract_strided_slice %539 {offsets = [0, 0], sizes = [8, 128], strides = [1, 1]} : vector<8x384xf32> to vector<8x128xf32>
    %542 = arith.addf %540, %541 : vector<8x128xf32>
    %543 = arith.negf %542 : vector<8x128xf32>
    %544 = math.exp %543 : vector<8x128xf32>
    %cst_135 = arith.constant 1.000000e+00 : f32
    %545 = vector.broadcast %cst_135 : f32 to vector<8x128xf32>
    %546 = arith.addf %545, %544 : vector<8x128xf32>
    %547 = arith.divf %545, %546 : vector<8x128xf32>
    %548 = vector.extract_strided_slice %537 {offsets = [0, 128], sizes = [8, 128], strides = [1, 1]} : vector<8x384xf32> to vector<8x128xf32>
    %549 = vector.extract_strided_slice %539 {offsets = [0, 128], sizes = [8, 128], strides = [1, 1]} : vector<8x384xf32> to vector<8x128xf32>
    %550 = arith.addf %548, %549 : vector<8x128xf32>
    %551 = arith.negf %550 : vector<8x128xf32>
    %552 = math.exp %551 : vector<8x128xf32>
    %cst_136 = arith.constant 1.000000e+00 : f32
    %553 = vector.broadcast %cst_136 : f32 to vector<8x128xf32>
    %554 = arith.addf %553, %552 : vector<8x128xf32>
    %555 = arith.divf %553, %554 : vector<8x128xf32>
    %556 = vector.extract_strided_slice %537 {offsets = [0, 256], sizes = [8, 128], strides = [1, 1]} : vector<8x384xf32> to vector<8x128xf32>
    %557 = vector.extract_strided_slice %539 {offsets = [0, 256], sizes = [8, 128], strides = [1, 1]} : vector<8x384xf32> to vector<8x128xf32>
    %558 = arith.addf %557, %308 : vector<8x128xf32>
    %559 = arith.mulf %547, %558 : vector<8x128xf32>
    %560 = arith.addf %556, %559 : vector<8x128xf32>
    %561 = math.tanh %560 : vector<8x128xf32>
    %562 = arith.subf %528, %561 : vector<8x128xf32>
    %563 = arith.mulf %555, %562 : vector<8x128xf32>
    %564 = arith.addf %561, %563 : vector<8x128xf32>
    %565 = arith.addi %311, %535 : i32
    %c0_137 = arith.constant 0 : index
    %566 = arith.index_cast %565 : i32 to index
    %c0_138 = arith.constant 0 : index
    %567 = vector.load %arg7[%c0_137, %566, %c0_138] : memref<1x64x128xf32, #tpu.memory_space<vmem>>, vector<1x8x128xf32>
    %568 = vector.shape_cast %567 : vector<1x8x128xf32> to vector<8x128xf32>
    %569 = vector.shape_cast %564 : vector<8x128xf32> to vector<1x8x128xf32>
    tpu.vector_store %arg7[%c0_137, %566, %c0_138], %569 {strides = array<i32>} : memref<1x64x128xf32, #tpu.memory_space<vmem>>, vector<1x8x128xf32>,
    %c7_i32_139 = arith.constant 7 : i32
    %c8_i32_140 = arith.constant 8 : i32
    %570 = arith.muli %c7_i32_139, %c8_i32_140 : i32
    %571 = tpu.assume_multiple %570, 8 : i32
    %572 = arith.index_cast %571 : i32 to index
    %c0_141 = arith.constant 0 : index
    %573 = vector.load %arg9[%572, %c0_141] : memref<64x384xf32, #tpu.memory_space<vmem>>, vector<8x384xf32>
    %574 = arith.truncf %564 : vector<8x128xf32> to vector<8x128xbf16>
    %cst_142 = arith.constant dense<0.000000e+00> : vector<8x384xf32>
    %575 = tpu.matmul %574, %302, %cst_142 {dimension_numbers = #tpu.dot_dimension_numbers<[1], [0], [0], [1], [0, 0, 1, 1], [], []>} : vector<8x128xbf16>, vector<128x384xbf16>, vector<8x384xf32> -> vector<8x384xf32>
    %576 = vector.extract_strided_slice %573 {offsets = [0, 0], sizes = [8, 128], strides = [1, 1]} : vector<8x384xf32> to vector<8x128xf32>
    %577 = vector.extract_strided_slice %575 {offsets = [0, 0], sizes = [8, 128], strides = [1, 1]} : vector<8x384xf32> to vector<8x128xf32>
    %578 = arith.addf %576, %577 : vector<8x128xf32>
    %579 = arith.negf %578 : vector<8x128xf32>
    %580 = math.exp %579 : vector<8x128xf32>
    %cst_143 = arith.constant 1.000000e+00 : f32
    %581 = vector.broadcast %cst_143 : f32 to vector<8x128xf32>
    %582 = arith.addf %581, %580 : vector<8x128xf32>
    %583 = arith.divf %581, %582 : vector<8x128xf32>
    %584 = vector.extract_strided_slice %573 {offsets = [0, 128], sizes = [8, 128], strides = [1, 1]} : vector<8x384xf32> to vector<8x128xf32>
    %585 = vector.extract_strided_slice %575 {offsets = [0, 128], sizes = [8, 128], strides = [1, 1]} : vector<8x384xf32> to vector<8x128xf32>
    %586 = arith.addf %584, %585 : vector<8x128xf32>
    %587 = arith.negf %586 : vector<8x128xf32>
    %588 = math.exp %587 : vector<8x128xf32>
    %cst_144 = arith.constant 1.000000e+00 : f32
    %589 = vector.broadcast %cst_144 : f32 to vector<8x128xf32>
    %590 = arith.addf %589, %588 : vector<8x128xf32>
    %591 = arith.divf %589, %590 : vector<8x128xf32>
    %592 = vector.extract_strided_slice %573 {offsets = [0, 256], sizes = [8, 128], strides = [1, 1]} : vector<8x384xf32> to vector<8x128xf32>
    %593 = vector.extract_strided_slice %575 {offsets = [0, 256], sizes = [8, 128], strides = [1, 1]} : vector<8x384xf32> to vector<8x128xf32>
    %594 = arith.addf %593, %308 : vector<8x128xf32>
    %595 = arith.mulf %583, %594 : vector<8x128xf32>
    %596 = arith.addf %592, %595 : vector<8x128xf32>
    %597 = math.tanh %596 : vector<8x128xf32>
    %598 = arith.subf %564, %597 : vector<8x128xf32>
    %599 = arith.mulf %591, %598 : vector<8x128xf32>
    %600 = arith.addf %597, %599 : vector<8x128xf32>
    %601 = arith.addi %311, %571 : i32
    %c0_145 = arith.constant 0 : index
    %602 = arith.index_cast %601 : i32 to index
    %c0_146 = arith.constant 0 : index
    %603 = vector.load %arg7[%c0_145, %602, %c0_146] : memref<1x64x128xf32, #tpu.memory_space<vmem>>, vector<1x8x128xf32>
    %604 = vector.shape_cast %603 : vector<1x8x128xf32> to vector<8x128xf32>
    %605 = vector.shape_cast %600 : vector<8x128xf32> to vector<1x8x128xf32>
    tpu.vector_store %arg7[%c0_145, %602, %c0_146], %605 {strides = array<i32>} : memref<1x64x128xf32, #tpu.memory_space<vmem>>, vector<1x8x128xf32>,
    %c8_i32_147 = arith.constant 8 : i32
    %c1_i32_148 = arith.constant 1 : i32
    return
  }
  func.func @transform_0(%arg0: i32) -> (i32, i32, i32) {
    %c0_i32 = arith.constant 0 : i32
    %c0_i32_0 = arith.constant 0 : i32
    %c0_i32_1 = arith.constant 0 : i32
    return %arg0, %c0_i32, %c0_i32_0 : i32, i32, i32
  }
  func.func @transform_1(%arg0: i32) -> (i32, i32) {
    %c0_i32 = arith.constant 0 : i32
    %c0_i32_0 = arith.constant 0 : i32
    %c0_i32_1 = arith.constant 0 : i32
    return %c0_i32, %c0_i32_0 : i32, i32
  }
  func.func @transform_2(%arg0: i32) -> (i32, i32, i32) {
    %c0_i32 = arith.constant 0 : i32
    %c0_i32_0 = arith.constant 0 : i32
    %c0_i32_1 = arith.constant 0 : i32
    %c0_i32_2 = arith.constant 0 : i32
    return %c0_i32, %c0_i32_0, %c0_i32_1 : i32, i32, i32
  }
  func.func @transform_3(%arg0: i32) -> (i32, i32, i32) {
    %c0_i32 = arith.constant 0 : i32
    %c0_i32_0 = arith.constant 0 : i32
    %c0_i32_1 = arith.constant 0 : i32
    %c0_i32_2 = arith.constant 0 : i32
    return %c0_i32, %c0_i32_0, %c0_i32_1 : i32, i32, i32
  }
  func.func @transform_4(%arg0: i32) -> (i32, i32, i32) {
    %c0_i32 = arith.constant 0 : i32
    %c0_i32_0 = arith.constant 0 : i32
    %c0_i32_1 = arith.constant 0 : i32
    %c0_i32_2 = arith.constant 0 : i32
    return %c0_i32, %c0_i32_0, %c0_i32_1 : i32, i32, i32
  }
  func.func @transform_5(%arg0: i32) -> (i32, i32, i32) {
    %c0_i32 = arith.constant 0 : i32
    %c0_i32_0 = arith.constant 0 : i32
    %c0_i32_1 = arith.constant 0 : i32
    %c0_i32_2 = arith.constant 0 : i32
    return %c0_i32, %c0_i32_0, %c0_i32_1 : i32, i32, i32
  }
  func.func @transform_6(%arg0: i32) -> (i32, i32, i32) {
    %c0_i32 = arith.constant 0 : i32
    %c0_i32_0 = arith.constant 0 : i32
    %c0_i32_1 = arith.constant 0 : i32
    return %arg0, %c0_i32, %c0_i32_0 : i32, i32, i32
  }
}

</mosaic_0001>

<llo_original>
// kernel: gru_net_forward.1
$region0: #{gru_net_forward.1}
  #allocation0 [shape = 'u32[]', space=smem, size = 0x4, offset = 0x4, fixed_abs, tag = 'smem constant byte address 0x4 - core index']
  #allocation1 [shape = 'u32[72,128]{1,0:T(1,128)}', space=vmem, size = 0x9000, scoped, tag = 'internal scratch']
  #allocation2 [shape = 'bf16[64,128]{1,0:T(8,128)(2,1)}', space=vmem, size = 0x4000, scoped, tag = 'scratch operand']
  #allocation3 [shape = 'f32[64,384]{1,0:T(8,128)}', space=vmem, size = 0x18000, scoped, tag = 'scratch operand']
  #allocation4 [shape = 'f32[8,128]{1,0:T(8,128)}', space=vmem, size = 0x1000, scoped, tag = 'scratch operand']
  %s0 = inlined_call_operand.vmem [shape: bf16[1,64,128], index: 0, kind: input, shape index: {}]
  %s1 = inlined_call_operand.vmem [shape: bf16[128,384], index: 1, kind: input, shape index: {}]
  %s2 = inlined_call_operand.vmem [shape: bf16[1,128,384], index: 2, kind: input, shape index: {}]
  %s3 = inlined_call_operand.vmem [shape: bf16[2,128,384], index: 3, kind: input, shape index: {}]
  %s4 = inlined_call_operand.vmem [shape: f32[2,1,384], index: 4, kind: input, shape index: {}]
  %s5 = inlined_call_operand.vmem [shape: f32[2,1,128], index: 5, kind: input, shape index: {}]
  %s6 = inlined_call_operand.vmem [shape: f32[1,64,128], index: 6, kind: output, shape index: {}]
  %s7 = sld [smem:[#allocation0]]
  $region34: #{gru_net_forward.1} parent=0
    _
  %s9 = ssub.s32 1, %s7
  %s10 = scalar_select 0, %s9, %s7
  // Predicated region
  $region2: #{gru_net_forward.1} parent=0 // pred_check
    _
  $region3: #{gru_net_forward.1} parent=0 // pred_check_branch
    %12 = sbr.rel (0) target = $region5
  $region4: #{gru_net_forward.1} parent=0 // pred_region
    _
  $region5: #{gru_net_forward.1} parent=0 // pred_fallthru
    _
  // Predicated region
  $region6: #{gru_net_forward.1} parent=0 // pred_check
    _
  $region7: #{gru_net_forward.1} parent=0 // pred_check_branch
    %14 = sbr.rel (0) target = $region9
  $region8: #{gru_net_forward.1} parent=0 // pred_region
    _
  $region9: #{gru_net_forward.1} parent=0 // pred_fallthru
    _
  // Predicated region
  $region10: #{gru_net_forward.1} parent=0 // pred_check
    _
  $region11: #{gru_net_forward.1} parent=0 // pred_check_branch
    %16 = sbr.rel (0) target = $region13
  $region12: #{gru_net_forward.1} parent=0 // pred_region
    _
  $region13: #{gru_net_forward.1} parent=0 // pred_fallthru
    _
  // Predicated region
  $region14: #{gru_net_forward.1} parent=0 // pred_check
    _
  $region15: #{gru_net_forward.1} parent=0 // pred_check_branch
    %18 = sbr.rel (0) target = $region17
  $region16: #{gru_net_forward.1} parent=0 // pred_region
    _
  $region17: #{gru_net_forward.1} parent=0 // pred_fallthru
    _
  // Predicated region
  $region18: #{gru_net_forward.1} parent=0 // pred_check
    _
  $region19: #{gru_net_forward.1} parent=0 // pred_check_branch
    %20 = sbr.rel (0) target = $region21
  $region20: #{gru_net_forward.1} parent=0 // pred_region
    _
  $region21: #{gru_net_forward.1} parent=0 // pred_fallthru
    _
  // Predicated region
  $region22: #{gru_net_forward.1} parent=0 // pred_check
    _
  $region23: #{gru_net_forward.1} parent=0 // pred_check_branch
    %22 = sbr.rel (0) target = $region25
  $region24: #{gru_net_forward.1} parent=0 // pred_region
    _
  $region25: #{gru_net_forward.1} parent=0 // pred_fallthru
    _
  %v24 = vld [vmem:[%s1] sm:$0xff]
  %v25 = vld [vmem:[%s1 + $0x8] sm:$0xf]
  %v26 = vld [vmem:[%s1 + $0xc] sm:$0xff]
  %v27 = vld [vmem:[%s1 + $0x14] sm:$0xf]
  %v28 = vld [vmem:[%s1 + $0x18] sm:$0xff]
  %v29 = vld [vmem:[%s1 + $0x20] sm:$0xf]
  %v30 = vld [vmem:[%s1 + $0x24] sm:$0xff]
  %v31 = vld [vmem:[%s1 + $0x2c] sm:$0xf]
  %v32 = vld [vmem:[%s1 + $0x30] sm:$0xff]
  %v33 = vld [vmem:[%s1 + $0x38] sm:$0xf]
  %v34 = vld [vmem:[%s1 + $0x3c] sm:$0xff]
  %v35 = vld [vmem:[%s1 + $0x44] sm:$0xf]
  %v36 = vld [vmem:[%s1 + $0x48] sm:$0xff]
  %v37 = vld [vmem:[%s1 + $0x50] sm:$0xf]
  %v38 = vld [vmem:[%s1 + $0x54] sm:$0xff]
  %v39 = vld [vmem:[%s1 + $0x5c] sm:$0xf]
  %v40 = vld [vmem:[%s1 + $0x60] sm:$0xff]
  %v41 = vld [vmem:[%s1 + $0x68] sm:$0xf]
  %v42 = vld [vmem:[%s1 + $0x6c] sm:$0xff]
  %v43 = vld [vmem:[%s1 + $0x74] sm:$0xf]
  %v44 = vld [vmem:[%s1 + $0x78] sm:$0xff]
  %v45 = vld [vmem:[%s1 + $0x80] sm:$0xf]
  %v46 = vld [vmem:[%s1 + $0x84] sm:$0xff]
  %v47 = vld [vmem:[%s1 + $0x8c] sm:$0xf]
  %v48 = vld [vmem:[%s1 + $0x90] sm:$0xff]
  %v49 = vld [vmem:[%s1 + $0x98] sm:$0xf]
  %v50 = vld [vmem:[%s1 + $0x9c] sm:$0xff]
  %v51 = vld [vmem:[%s1 + $0xa4] sm:$0xf]
  %v52 = vld [vmem:[%s1 + $0xa8] sm:$0xff]
  %v53 = vld [vmem:[%s1 + $0xb0] sm:$0xf]
  %v54 = vld [vmem:[%s1 + $0xb4] sm:$0xff]
  %v55 = vld [vmem:[%s1 + $0xbc] sm:$0xf]
  %v56 = vld [vmem:[%s3] sm:$0xff]
  %v57 = vld [vmem:[%s3 + $0x8] sm:$0xf]
  %v58 = vld [vmem:[%s3 + $0xc] sm:$0xff]
  %v59 = vld [vmem:[%s3 + $0x14] sm:$0xf]
  %v60 = vld [vmem:[%s3 + $0x18] sm:$0xff]
  %v61 = vld [vmem:[%s3 + $0x20] sm:$0xf]
  %v62 = vld [vmem:[%s3 + $0x24] sm:$0xff]
  %v63 = vld [vmem:[%s3 + $0x2c] sm:$0xf]
  %v64 = vld [vmem:[%s3 + $0x30] sm:$0xff]
  %v65 = vld [vmem:[%s3 + $0x38] sm:$0xf]
  %v66 = vld [vmem:[%s3 + $0x3c] sm:$0xff]
  %v67 = vld [vmem:[%s3 + $0x44] sm:$0xf]
  %v68 = vld [vmem:[%s3 + $0x48] sm:$0xff]
  %v69 = vld [vmem:[%s3 + $0x50] sm:$0xf]
  %v70 = vld [vmem:[%s3 + $0x54] sm:$0xff]
  %v71 = vld [vmem:[%s3 + $0x5c] sm:$0xf]
  %v72 = vld [vmem:[%s3 + $0x60] sm:$0xff]
  %v73 = vld [vmem:[%s3 + $0x68] sm:$0xf]
  %v74 = vld [vmem:[%s3 + $0x6c] sm:$0xff]
  %v75 = vld [vmem:[%s3 + $0x74] sm:$0xf]
  %v76 = vld [vmem:[%s3 + $0x78] sm:$0xff]
  %v77 = vld [vmem:[%s3 + $0x80] sm:$0xf]
  %v78 = vld [vmem:[%s3 + $0x84] sm:$0xff]
  %v79 = vld [vmem:[%s3 + $0x8c] sm:$0xf]
  %v80 = vld [vmem:[%s3 + $0x90] sm:$0xff]
  %v81 = vld [vmem:[%s3 + $0x98] sm:$0xf]
  %v82 = vld [vmem:[%s3 + $0x9c] sm:$0xff]
  %v83 = vld [vmem:[%s3 + $0xa4] sm:$0xf]
  %v84 = vld [vmem:[%s3 + $0xa8] sm:$0xff]
  %v85 = vld [vmem:[%s3 + $0xb0] sm:$0xf]
  %v86 = vld [vmem:[%s3 + $0xb4] sm:$0xff]
  %v87 = vld [vmem:[%s3 + $0xbc] sm:$0xf]
  %v88 = vld [vmem:[%s4] sm:$0x7]
  %v89 = vld [vmem:[%s5] sm:$0x1]
  %v91 = vperm.slane %v89, 0
  %v93 = vld [vmem:[%s0] sm:$0xf]
  %v94 = vld [vmem:[%s0 + $0x4] sm:$0xf]
  %v95 = vld [vmem:[%s0 + $0x8] sm:$0xf]
  %v96 = vld [vmem:[%s0 + $0xc] sm:$0xf]
  %v97 = vld [vmem:[%s0 + $0x10] sm:$0xf]
  %v98 = vld [vmem:[%s0 + $0x14] sm:$0xf]
  %v99 = vld [vmem:[%s0 + $0x18] sm:$0xf]
  %v100 = vld [vmem:[%s0 + $0x1c] sm:$0xf]
  %v102 = vperm.slane %v88, 0
  %v103 = vperm.slane %v88, 1
  %v104 = vperm.slane %v88, 2
  %v116 = vunpack.c.l.b16 %v93
  %v117 = vunpack.c.l.b16 %v94
  %v118 = vunpack.c.l.b16 %v95
  %v119 = vunpack.c.l.b16 %v96
  %v120 = vunpack.c.l.b16 %v97
  %v121 = vunpack.c.l.b16 %v98
  %v122 = vunpack.c.l.b16 %v99
  %v123 = vunpack.c.l.b16 %v100
  %v124 = vpack.c.b16 %v117, %v116
  %v125 = vpack.c.b16 %v119, %v118
  %v126 = vpack.c.b16 %v121, %v120
  %v127 = vpack.c.b16 %v123, %v122
  %v164 = vunpack.c.l.b16 %v24
  %v165 = vunpack.c.h.b16 %v24
  %v166 = vunpack.c.l.b16 %v25
  %v167 = vunpack.c.l.b16 %v26
  %v168 = vunpack.c.h.b16 %v26
  %v169 = vunpack.c.l.b16 %v27
  %v170 = vunpack.c.l.b16 %v28
  %v171 = vunpack.c.h.b16 %v28
  %v172 = vunpack.c.l.b16 %v29
  %v173 = vunpack.c.l.b16 %v30
  %v174 = vunpack.c.h.b16 %v30
  %v175 = vunpack.c.l.b16 %v31
  %v176 = vunpack.c.l.b16 %v32
  %v177 = vunpack.c.h.b16 %v32
  %v178 = vunpack.c.l.b16 %v33
  %v179 = vunpack.c.l.b16 %v34
  %v180 = vunpack.c.h.b16 %v34
  %v181 = vunpack.c.l.b16 %v35
  %v182 = vunpack.c.l.b16 %v36
  %v183 = vunpack.c.h.b16 %v36
  %v184 = vunpack.c.l.b16 %v37
  %v185 = vunpack.c.l.b16 %v38
  %v186 = vunpack.c.h.b16 %v38
  %v187 = vunpack.c.l.b16 %v39
  %v188 = vunpack.c.l.b16 %v40
  %v189 = vunpack.c.h.b16 %v40
  %v190 = vunpack.c.l.b16 %v41
  %v191 = vunpack.c.l.b16 %v42
  %v192 = vunpack.c.h.b16 %v42
  %v193 = vunpack.c.l.b16 %v43
  %v194 = vunpack.c.l.b16 %v44
  %v195 = vunpack.c.h.b16 %v44
  %v196 = vunpack.c.l.b16 %v45
  %v197 = vunpack.c.l.b16 %v46
  %v198 = vunpack.c.h.b16 %v46
  %v199 = vunpack.c.l.b16 %v47
  %v200 = vunpack.c.l.b16 %v48
  %v201 = vunpack.c.h.b16 %v48
  %v202 = vunpack.c.l.b16 %v49
  %v203 = vunpack.c.l.b16 %v50
  %v204 = vunpack.c.h.b16 %v50
  %v205 = vunpack.c.l.b16 %v51
  %v206 = vunpack.c.l.b16 %v52
  %v207 = vunpack.c.h.b16 %v52
  %v208 = vunpack.c.l.b16 %v53
  %v209 = vunpack.c.l.b16 %v54
  %v210 = vunpack.c.h.b16 %v54
  %v211 = vunpack.c.l.b16 %v55
  %v212 = vpack.c.b16 %v167, %v164
  %v213 = vpack.c.b16 %v168, %v165
  %v214 = vpack.c.b16 %v169, %v166
  %v215 = vpack.c.b16 %v173, %v170
  %v216 = vpack.c.b16 %v174, %v171
  %v217 = vpack.c.b16 %v175, %v172
  %v218 = vpack.c.b16 %v179, %v176
  %v219 = vpack.c.b16 %v180, %v177
  %v220 = vpack.c.b16 %v181, %v178
  %v221 = vpack.c.b16 %v185, %v182
  %v222 = vpack.c.b16 %v186, %v183
  %v223 = vpack.c.b16 %v187, %v184
  %v224 = vpack.c.b16 %v191, %v188
  %v225 = vpack.c.b16 %v192, %v189
  %v226 = vpack.c.b16 %v193, %v190
  %v227 = vpack.c.b16 %v197, %v194
  %v228 = vpack.c.b16 %v198, %v195
  %v229 = vpack.c.b16 %v199, %v196
  %v230 = vpack.c.b16 %v203, %v200
  %v231 = vpack.c.b16 %v204, %v201
  %v232 = vpack.c.b16 %v205, %v202
  %v233 = vpack.c.b16 %v209, %v206
  %v234 = vpack.c.b16 %v210, %v207
  %v235 = vpack.c.b16 %v211, %v208
  %260 = vmatpush.bf16.msra.mxu0 %v233
  %261 = vmatpush.bf16.msra.mxu0 %v230
  %262 = vmatpush.bf16.msra.mxu0 %v227
  %263 = vmatpush.bf16.msra.mxu0 %v224
  %264 = vmatpush.bf16.msra.mxu0 %v221
  %265 = vmatpush.bf16.msra.mxu0 %v218
  %266 = vmatpush.bf16.msra.mxu0 %v215
  %267 = vmatpush.bf16.msra.mxu0 %v212
  %268 = vmatmul.bf16.gmra.mxu0 %v124
  %v269 = vpop.f32.mrf.mxu0
  %v270 = vadd.f32 %v102, %v269
  %v271 = vpop.f32.mrf.mxu0
  %v272 = vadd.f32 %v102, %v271
  %273 = vmatmul.bf16.gmra.mxu0 %v125
  %v274 = vpop.f32.mrf.mxu0
  %v275 = vadd.f32 %v102, %v274
  %v276 = vpop.f32.mrf.mxu0
  %v277 = vadd.f32 %v102, %v276
  %278 = vmatmul.bf16.gmra.mxu0 %v126
  %v279 = vpop.f32.mrf.mxu0
  %v280 = vadd.f32 %v102, %v279
  %v281 = vpop.f32.mrf.mxu0
  %v282 = vadd.f32 %v102, %v281
  %283 = vmatmul.bf16.gmra.mxu0 %v127
  %v284 = vpop.f32.mrf.mxu0
  %v285 = vadd.f32 %v102, %v284
  %v286 = vpop.f32.mrf.mxu0
  %v287 = vadd.f32 %v102, %v286
  %288 = vdwg.mxu0
  %289 = vmatpush.bf16.msra.mxu0 %v234
  %290 = vmatpush.bf16.msra.mxu0 %v231
  %291 = vmatpush.bf16.msra.mxu0 %v228
  %292 = vmatpush.bf16.msra.mxu0 %v225
  %293 = vmatpush.bf16.msra.mxu0 %v222
  %294 = vmatpush.bf16.msra.mxu0 %v219
  %295 = vmatpush.bf16.msra.mxu0 %v216
  %296 = vmatpush.bf16.msra.mxu0 %v213
  %297 = vmatmul.bf16.gmra.mxu0 %v124
  %v298 = vpop.f32.mrf.mxu0
  %v299 = vadd.f32 %v103, %v298
  %v300 = vpop.f32.mrf.mxu0
  %v301 = vadd.f32 %v103, %v300
  %302 = vmatmul.bf16.gmra.mxu0 %v125
  %v303 = vpop.f32.mrf.mxu0
  %v304 = vadd.f32 %v103, %v303
  %v305 = vpop.f32.mrf.mxu0
  %v306 = vadd.f32 %v103, %v305
  %307 = vmatmul.bf16.gmra.mxu0 %v126
  %v308 = vpop.f32.mrf.mxu0
  %v309 = vadd.f32 %v103, %v308
  %v310 = vpop.f32.mrf.mxu0
  %v311 = vadd.f32 %v103, %v310
  %312 = vmatmul.bf16.gmra.mxu0 %v127
  %v313 = vpop.f32.mrf.mxu0
  %v314 = vadd.f32 %v103, %v313
  %v315 = vpop.f32.mrf.mxu0
  %v316 = vadd.f32 %v103, %v315
  %317 = vdwg.mxu0
  %318 = vmatpush.bf16.msra.mxu0 %v235
  %319 = vmatpush.bf16.msra.mxu0 %v232
  %320 = vmatpush.bf16.msra.mxu0 %v229
  %321 = vmatpush.bf16.msra.mxu0 %v226
  %322 = vmatpush.bf16.msra.mxu0 %v223
  %323 = vmatpush.bf16.msra.mxu0 %v220
  %324 = vmatpush.bf16.msra.mxu0 %v217
  %325 = vmatpush.bf16.msra.mxu0 %v214
  %326 = vmatmul.bf16.gmra.mxu0 %v124
  %v327 = vpop.f32.mrf.mxu0
  %v328 = vadd.f32 %v104, %v327
  %v329 = vpop.f32.mrf.mxu0
  %v330 = vadd.f32 %v104, %v329
  %331 = vmatmul.bf16.gmra.mxu0 %v125
  %v332 = vpop.f32.mrf.mxu0
  %v333 = vadd.f32 %v104, %v332
  %v334 = vpop.f32.mrf.mxu0
  %v335 = vadd.f32 %v104, %v334
  %336 = vmatmul.bf16.gmra.mxu0 %v126
  %v337 = vpop.f32.mrf.mxu0
  %v338 = vadd.f32 %v104, %v337
  %v339 = vpop.f32.mrf.mxu0
  %v340 = vadd.f32 %v104, %v339
  %341 = vmatmul.bf16.gmra.mxu0 %v127
  %v342 = vpop.f32.mrf.mxu0
  %v343 = vadd.f32 %v104, %v342
  %v344 = vpop.f32.mrf.mxu0
  %v345 = vadd.f32 %v104, %v344
  %346 = vdwg.mxu0
  %347 = vst [vmem:[#allocation3] sm:$0xff] %v270
  %348 = vst [vmem:[#allocation3 + $0x8] sm:$0xff] %v299
  %349 = vst [vmem:[#allocation3 + $0x10] sm:$0xff] %v328
  %350 = vst [vmem:[#allocation3 + $0x18] sm:$0xff] %v272
  %351 = vst [vmem:[#allocation3 + $0x20] sm:$0xff] %v301
  %352 = vst [vmem:[#allocation3 + $0x28] sm:$0xff] %v330
  %353 = vst [vmem:[#allocation3 + $0x30] sm:$0xff] %v275
  %354 = vst [vmem:[#allocation3 + $0x38] sm:$0xff] %v304
  %355 = vst [vmem:[#allocation3 + $0x40] sm:$0xff] %v333
  %356 = vst [vmem:[#allocation3 + $0x48] sm:$0xff] %v277
  %357 = vst [vmem:[#allocation3 + $0x50] sm:$0xff] %v306
  %358 = vst [vmem:[#allocation3 + $0x58] sm:$0xff] %v335
  %359 = vst [vmem:[#allocation3 + $0x60] sm:$0xff] %v280
  %360 = vst [vmem:[#allocation3 + $0x68] sm:$0xff] %v309
  %361 = vst [vmem:[#allocation3 + $0x70] sm:$0xff] %v338
  %362 = vst [vmem:[#allocation3 + $0x78] sm:$0xff] %v282
  %363 = vst [vmem:[#allocation3 + $0x80] sm:$0xff] %v311
  %364 = vst [vmem:[#allocation3 + $0x88] sm:$0xff] %v340
  %365 = vst [vmem:[#allocation3 + $0x90] sm:$0xff] %v285
  %366 = vst [vmem:[#allocation3 + $0x98] sm:$0xff] %v314
  %367 = vst [vmem:[#allocation3 + $0xa0] sm:$0xff] %v343
  %368 = vst [vmem:[#allocation3 + $0xa8] sm:$0xff] %v287
  %369 = vst [vmem:[#allocation3 + $0xb0] sm:$0xff] %v316
  %370 = vst [vmem:[#allocation3 + $0xb8] sm:$0xff] %v345
  %s371 = smul.u32 0, 3
  %s372 = smul.addr %s371, 8
  %s373 = scalar_lea.vmem [#allocation3], %s372
  %v374 = vld [vmem:[%s373] sm:$0xff]
  %v375 = vld [vmem:[%s373 + $0x8] sm:$0xff]
  %v376 = vld [vmem:[%s373 + $0x10] sm:$0xff]
  %v409 = vunpack.c.l.b16 %v56
  %v410 = vunpack.c.h.b16 %v56
  %v411 = vunpack.c.l.b16 %v57
  %v412 = vunpack.c.l.b16 %v58
  %v413 = vunpack.c.h.b16 %v58
  %v414 = vunpack.c.l.b16 %v59
  %v415 = vunpack.c.l.b16 %v60
  %v416 = vunpack.c.h.b16 %v60
  %v417 = vunpack.c.l.b16 %v61
  %v418 = vunpack.c.l.b16 %v62
  %v419 = vunpack.c.h.b16 %v62
  %v420 = vunpack.c.l.b16 %v63
  %v421 = vunpack.c.l.b16 %v64
  %v422 = vunpack.c.h.b16 %v64
  %v423 = vunpack.c.l.b16 %v65
  %v424 = vunpack.c.l.b16 %v66
  %v425 = vunpack.c.h.b16 %v66
  %v426 = vunpack.c.l.b16 %v67
  %v427 = vunpack.c.l.b16 %v68
  %v428 = vunpack.c.h.b16 %v68
  %v429 = vunpack.c.l.b16 %v69
  %v430 = vunpack.c.l.b16 %v70
  %v431 = vunpack.c.h.b16 %v70
  %v432 = vunpack.c.l.b16 %v71
  %v433 = vunpack.c.l.b16 %v72
  %v434 = vunpack.c.h.b16 %v72
  %v435 = vunpack.c.l.b16 %v73
  %v436 = vunpack.c.l.b16 %v74
  %v437 = vunpack.c.h.b16 %v74
  %v438 = vunpack.c.l.b16 %v75
  %v439 = vunpack.c.l.b16 %v76
  %v440 = vunpack.c.h.b16 %v76
  %v441 = vunpack.c.l.b16 %v77
  %v442 = vunpack.c.l.b16 %v78
  %v443 = vunpack.c.h.b16 %v78
  %v444 = vunpack.c.l.b16 %v79
  %v445 = vunpack.c.l.b16 %v80
  %v446 = vunpack.c.h.b16 %v80
  %v447 = vunpack.c.l.b16 %v81
  %v448 = vunpack.c.l.b16 %v82
  %v449 = vunpack.c.h.b16 %v82
  %v450 = vunpack.c.l.b16 %v83
  %v451 = vunpack.c.l.b16 %v84
  %v452 = vunpack.c.h.b16 %v84
  %v453 = vunpack.c.l.b16 %v85
  %v454 = vunpack.c.l.b16 %v86
  %v455 = vunpack.c.h.b16 %v86
  %v456 = vunpack.c.l.b16 %v87
  %v457 = vpack.c.b16 %v412, %v409
  %v458 = vpack.c.b16 %v413, %v410
  %v459 = vpack.c.b16 %v414, %v411
  %v460 = vpack.c.b16 %v418, %v415
  %v461 = vpack.c.b16 %v419, %v416
  %v462 = vpack.c.b16 %v420, %v417
  %v463 = vpack.c.b16 %v424, %v421
  %v464 = vpack.c.b16 %v425, %v422
  %v465 = vpack.c.b16 %v426, %v423
  %v466 = vpack.c.b16 %v430, %v427
  %v467 = vpack.c.b16 %v431, %v428
  %v468 = vpack.c.b16 %v432, %v429
  %v469 = vpack.c.b16 %v436, %v433
  %v470 = vpack.c.b16 %v437, %v434
  %v471 = vpack.c.b16 %v438, %v435
  %v472 = vpack.c.b16 %v442, %v439
  %v473 = vpack.c.b16 %v443, %v440
  %v474 = vpack.c.b16 %v444, %v441
  %v475 = vpack.c.b16 %v448, %v445
  %v476 = vpack.c.b16 %v449, %v446
  %v477 = vpack.c.b16 %v450, %v447
  %v478 = vpack.c.b16 %v454, %v451
  %v479 = vpack.c.b16 %v455, %v452
  %v480 = vpack.c.b16 %v456, %v453
  %505 = vmatpush.bf16.msra.mxu0 %v478
  %506 = vmatpush.bf16.msra.mxu0 %v475
  %507 = vmatpush.bf16.msra.mxu0 %v472
  %508 = vmatpush.bf16.msra.mxu0 %v469
  %509 = vmatpush.bf16.msra.mxu0 %v466
  %510 = vmatpush.bf16.msra.mxu0 %v463
  %511 = vmatpush.bf16.msra.mxu0 %v460
  %512 = vmatpush.bf16.msra.mxu0 %v457
  %513 = vmatmul.bf16.gmra.mxu0 0
  %v514 = vpop.f32.mrf.mxu0
  %v515 = vadd.f32 0.0, %v514
  %v516 = vpop.f32.mrf.mxu0
  %517 = vdwg.mxu0
  %518 = vmatpush.bf16.msra.mxu0 %v479
  %519 = vmatpush.bf16.msra.mxu0 %v476
  %520 = vmatpush.bf16.msra.mxu0 %v473
  %521 = vmatpush.bf16.msra.mxu0 %v470
  %522 = vmatpush.bf16.msra.mxu0 %v467
  %523 = vmatpush.bf16.msra.mxu0 %v464
  %524 = vmatpush.bf16.msra.mxu0 %v461
  %525 = vmatpush.bf16.msra.mxu0 %v458
  %526 = vmatmul.bf16.gmra.mxu0 0
  %v527 = vpop.f32.mrf.mxu0
  %v528 = vadd.f32 0.0, %v527
  %v529 = vpop.f32.mrf.mxu0
  %530 = vdwg.mxu0
  %531 = vmatpush.bf16.msra.mxu0 %v480
  %532 = vmatpush.bf16.msra.mxu0 %v477
  %533 = vmatpush.bf16.msra.mxu0 %v474
  %534 = vmatpush.bf16.msra.mxu0 %v471
  %535 = vmatpush.bf16.msra.mxu0 %v468
  %536 = vmatpush.bf16.msra.mxu0 %v465
  %537 = vmatpush.bf16.msra.mxu0 %v462
  %538 = vmatpush.bf16.msra.mxu0 %v459
  %539 = vmatmul.bf16.gmra.mxu0 0
  %v540 = vpop.f32.mrf.mxu0
  %v541 = vadd.f32 0.0, %v540
  %v542 = vpop.f32.mrf.mxu0
  %543 = vdwg.mxu0
  %v544 = vadd.f32 %v374, %v515
  %v545 = vxor.u32 %v544, 2147483648
  %v546 = vmul.f32 %v545, 1.442695
  %v547 = vpow.pop %v546
  %v548 = vadd.f32 %v547, 1.0
  %v549 = vrcp.pop %v548
  %v550 = vmul.f32 %v548, %v549
  %v551 = vsub.f32 1.0, %v550
  %v552 = vmul.f32 %v549, %v551
  %v553 = vadd.f32 %v549, %v552
  %vm554 = vweird.f32 %v548
  %vm555 = vweird.f32 %v549
  %vm556 = vmor %vm554, %vm555
  %v557 = vsel %vm556, %v549, %v553
  %v558 = vand.u32 2147483647, %v548
  %vm559 = vcmp.eq.f32.partialorder %v558, 8.507059e+37
  %v560 = vand.u32 %v548, 2147483648
  %v561 = vor.u32 1.1754944e-38, %v560
  %v562 = vsel %vm559, %v561, %v557
  %v563 = vmul.f32 1.0, %v562
  %v564 = vadd.f32 %v375, %v528
  %v565 = vxor.u32 %v564, 2147483648
  %v566 = vmul.f32 %v565, 1.442695
  %v567 = vpow.pop %v566
  %v568 = vadd.f32 %v567, 1.0
  %v569 = vrcp.pop %v568
  %v570 = vmul.f32 %v568, %v569
  %v571 = vsub.f32 1.0, %v570
  %v572 = vmul.f32 %v569, %v571
  %v573 = vadd.f32 %v569, %v572
  %vm574 = vweird.f32 %v568
  %vm575 = vweird.f32 %v569
  %vm576 = vmor %vm574, %vm575
  %v577 = vsel %vm576, %v569, %v573
  %v578 = vand.u32 2147483647, %v568
  %vm579 = vcmp.eq.f32.partialorder %v578, 8.507059e+37
  %v580 = vand.u32 %v568, 2147483648
  %v581 = vor.u32 1.1754944e-38, %v580
  %v582 = vsel %vm579, %v581, %v577
  %v583 = vmul.f32 1.0, %v582
  %v584 = vadd.f32 %v541, %v91
  %v585 = vmul.f32 %v563, %v584
  %v586 = vadd.f32 %v376, %v585
  %v587 = vtanh.pop %v586
  %v588 = vsub.f32 0.0, %v587
  %v589 = vmul.f32 %v583, %v588
  %v590 = vadd.f32 %v587, %v589
  %s591 = sadd.s32 0, 0
  %v592 = vpack.c.bf16 %v590, %v590
  %s593 = sshra.s32 %s591, 3
  %s594 = sand.u32 %s591, 7
  %s595 = smul.addr %s593, 4
  %s596 = scalar_lea.vmem [#allocation2], %s595
  %597 = vst [vmem:[%s596] sm:$0xf] %v592
  %s598 = smul.u32 1, 3
  %s599 = smul.addr %s598, 8
  %s600 = scalar_lea.vmem [#allocation3], %s599
  %v601 = vld [vmem:[%s600] sm:$0xff]
  %v602 = vld [vmem:[%s600 + $0x8] sm:$0xff]
  %v603 = vld [vmem:[%s600 + $0x10] sm:$0xff]
  %604 = vmatpush.bf16.msra.mxu0 %v478
  %605 = vmatpush.bf16.msra.mxu0 %v475
  %606 = vmatpush.bf16.msra.mxu0 %v472
  %607 = vmatpush.bf16.msra.mxu0 %v469
  %608 = vmatpush.bf16.msra.mxu0 %v466
  %609 = vmatpush.bf16.msra.mxu0 %v463
  %610 = vmatpush.bf16.msra.mxu0 %v460
  %611 = vmatpush.bf16.msra.mxu0 %v457
  %612 = vmatmul.bf16.gmra.mxu0 %v592
  %v613 = vpop.f32.mrf.mxu0
  %v614 = vadd.f32 0.0, %v613
  %v615 = vpop.f32.mrf.mxu0
  %616 = vdwg.mxu0
  %617 = vmatpush.bf16.msra.mxu0 %v479
  %618 = vmatpush.bf16.msra.mxu0 %v476
  %619 = vmatpush.bf16.msra.mxu0 %v473
  %620 = vmatpush.bf16.msra.mxu0 %v470
  %621 = vmatpush.bf16.msra.mxu0 %v467
  %622 = vmatpush.bf16.msra.mxu0 %v464
  %623 = vmatpush.bf16.msra.mxu0 %v461
  %624 = vmatpush.bf16.msra.mxu0 %v458
  %625 = vmatmul.bf16.gmra.mxu0 %v592
  %v626 = vpop.f32.mrf.mxu0
  %v627 = vadd.f32 0.0, %v626
  %v628 = vpop.f32.mrf.mxu0
  %629 = vdwg.mxu0
  %630 = vmatpush.bf16.msra.mxu0 %v480
  %631 = vmatpush.bf16.msra.mxu0 %v477
  %632 = vmatpush.bf16.msra.mxu0 %v474
  %633 = vmatpush.bf16.msra.mxu0 %v471
  %634 = vmatpush.bf16.msra.mxu0 %v468
  %635 = vmatpush.bf16.msra.mxu0 %v465
  %636 = vmatpush.bf16.msra.mxu0 %v462
  %637 = vmatpush.bf16.msra.mxu0 %v459
  %638 = vmatmul.bf16.gmra.mxu0 %v592
  %v639 = vpop.f32.mrf.mxu0
  %v640 = vadd.f32 0.0, %v639
  %v641 = vpop.f32.mrf.mxu0
  %642 = vdwg.mxu0
  %v643 = vadd.f32 %v601, %v614
  %v644 = vxor.u32 %v643, 2147483648
  %v645 = vmul.f32 %v644, 1.442695
  %v646 = vpow.pop %v645
  %v647 = vadd.f32 %v646, 1.0
  %v648 = vrcp.pop %v647
  %v649 = vmul.f32 %v647, %v648
  %v650 = vsub.f32 1.0, %v649
  %v651 = vmul.f32 %v648, %v650
  %v652 = vadd.f32 %v648, %v651
  %vm653 = vweird.f32 %v647
  %vm654 = vweird.f32 %v648
  %vm655 = vmor %vm653, %vm654
  %v656 = vsel %vm655, %v648, %v652
  %v657 = vand.u32 2147483647, %v647
  %vm658 = vcmp.eq.f32.partialorder %v657, 8.507059e+37
  %v659 = vand.u32 %v647, 2147483648
  %v660 = vor.u32 1.1754944e-38, %v659
  %v661 = vsel %vm658, %v660, %v656
  %v662 = vmul.f32 1.0, %v661
  %v663 = vadd.f32 %v602, %v627
  %v664 = vxor.u32 %v663, 2147483648
  %v665 = vmul.f32 %v664, 1.442695
  %v666 = vpow.pop %v665
  %v667 = vadd.f32 %v666, 1.0
  %v668 = vrcp.pop %v667
  %v669 = vmul.f32 %v667, %v668
  %v670 = vsub.f32 1.0, %v669
  %v671 = vmul.f32 %v668, %v670
  %v672 = vadd.f32 %v668, %v671
  %vm673 = vweird.f32 %v667
  %vm674 = vweird.f32 %v668
  %vm675 = vmor %vm673, %vm674
  %v676 = vsel %vm675, %v668, %v672
  %v677 = vand.u32 2147483647, %v667
  %vm678 = vcmp.eq.f32.partialorder %v677, 8.507059e+37
  %v679 = vand.u32 %v667, 2147483648
  %v680 = vor.u32 1.1754944e-38, %v679
  %v681 = vsel %vm678, %v680, %v676
  %v682 = vmul.f32 1.0, %v681
  %v683 = vadd.f32 %v640, %v91
  %v684 = vmul.f32 %v662, %v683
  %v685 = vadd.f32 %v603, %v684
  %v686 = vtanh.pop %v685
  %v687 = vsub.f32 %v590, %v686
  %v688 = vmul.f32 %v682, %v687
  %v689 = vadd.f32 %v686, %v688
  %s690 = sadd.s32 0, 8
  %v691 = vpack.c.bf16 %v689, %v689
  %s692 = sshra.s32 %s690, 3
  %s693 = sand.u32 %s690, 7
  %s694 = smul.addr %s692, 4
  %s695 = scalar_lea.vmem [#allocation2], %s694
  %696 = vst [vmem:[%s695] sm:$0xf] %v691
  %s697 = smul.u32 2, 3
  %s698 = smul.addr %s697, 8
  %s699 = scalar_lea.vmem [#allocation3], %s698
  %v700 = vld [vmem:[%s699] sm:$0xff]
  %v701 = vld [vmem:[%s699 + $0x8] sm:$0xff]
  %v702 = vld [vmem:[%s699 + $0x10] sm:$0xff]
  %703 = vmatpush.bf16.msra.mxu0 %v478
  %704 = vmatpush.bf16.msra.mxu0 %v475
  %705 = vmatpush.bf16.msra.mxu0 %v472
  %706 = vmatpush.bf16.msra.mxu0 %v469
  %707 = vmatpush.bf16.msra.mxu0 %v466
  %708 = vmatpush.bf16.msra.mxu0 %v463
  %709 = vmatpush.bf16.msra.mxu0 %v460
  %710 = vmatpush.bf16.msra.mxu0 %v457
  %711 = vmatmul.bf16.gmra.mxu0 %v691
  %v712 = vpop.f32.mrf.mxu0
  %v713 = vadd.f32 0.0, %v712
  %v714 = vpop.f32.mrf.mxu0
  %715 = vdwg.mxu0
  %716 = vmatpush.bf16.msra.mxu0 %v479
  %717 = vmatpush.bf16.msra.mxu0 %v476
  %718 = vmatpush.bf16.msra.mxu0 %v473
  %719 = vmatpush.bf16.msra.mxu0 %v470
  %720 = vmatpush.bf16.msra.mxu0 %v467
  %721 = vmatpush.bf16.msra.mxu0 %v464
  %722 = vmatpush.bf16.msra.mxu0 %v461
  %723 = vmatpush.bf16.msra.mxu0 %v458
  %724 = vmatmul.bf16.gmra.mxu0 %v691
  %v725 = vpop.f32.mrf.mxu0
  %v726 = vadd.f32 0.0, %v725
  %v727 = vpop.f32.mrf.mxu0
  %728 = vdwg.mxu0
  %729 = vmatpush.bf16.msra.mxu0 %v480
  %730 = vmatpush.bf16.msra.mxu0 %v477
  %731 = vmatpush.bf16.msra.mxu0 %v474
  %732 = vmatpush.bf16.msra.mxu0 %v471
  %733 = vmatpush.bf16.msra.mxu0 %v468
  %734 = vmatpush.bf16.msra.mxu0 %v465
  %735 = vmatpush.bf16.msra.mxu0 %v462
  %736 = vmatpush.bf16.msra.mxu0 %v459
  %737 = vmatmul.bf16.gmra.mxu0 %v691
  %v738 = vpop.f32.mrf.mxu0
  %v739 = vadd.f32 0.0, %v738
  %v740 = vpop.f32.mrf.mxu0
  %741 = vdwg.mxu0
  %v742 = vadd.f32 %v700, %v713
  %v743 = vxor.u32 %v742, 2147483648
  %v744 = vmul.f32 %v743, 1.442695
  %v745 = vpow.pop %v744
  %v746 = vadd.f32 %v745, 1.0
  %v747 = vrcp.pop %v746
  %v748 = vmul.f32 %v746, %v747
  %v749 = vsub.f32 1.0, %v748
  %v750 = vmul.f32 %v747, %v749
  %v751 = vadd.f32 %v747, %v750
  %vm752 = vweird.f32 %v746
  %vm753 = vweird.f32 %v747
  %vm754 = vmor %vm752, %vm753
  %v755 = vsel %vm754, %v747, %v751
  %v756 = vand.u32 2147483647, %v746
  %vm757 = vcmp.eq.f32.partialorder %v756, 8.507059e+37
  %v758 = vand.u32 %v746, 2147483648
  %v759 = vor.u32 1.1754944e-38, %v758
  %v760 = vsel %vm757, %v759, %v755
  %v761 = vmul.f32 1.0, %v760
  %v762 = vadd.f32 %v701, %v726
  %v763 = vxor.u32 %v762, 2147483648
  %v764 = vmul.f32 %v763, 1.442695
  %v765 = vpow.pop %v764
  %v766 = vadd.f32 %v765, 1.0
  %v767 = vrcp.pop %v766
  %v768 = vmul.f32 %v766, %v767
  %v769 = vsub.f32 1.0, %v768
  %v770 = vmul.f32 %v767, %v769
  %v771 = vadd.f32 %v767, %v770
  %vm772 = vweird.f32 %v766
  %vm773 = vweird.f32 %v767
  %vm774 = vmor %vm772, %vm773
  %v775 = vsel %vm774, %v767, %v771
  %v776 = vand.u32 2147483647, %v766
  %vm777 = vcmp.eq.f32.partialorder %v776, 8.507059e+37
  %v778 = vand.u32 %v766, 2147483648
  %v779 = vor.u32 1.1754944e-38, %v778
  %v780 = vsel %vm777, %v779, %v775
  %v781 = vmul.f32 1.0, %v780
  %v782 = vadd.f32 %v739, %v91
  %v783 = vmul.f32 %v761, %v782
  %v784 = vadd.f32 %v702, %v783
  %v785 = vtanh.pop %v784
  %v786 = vsub.f32 %v689, %v785
  %v787 = vmul.f32 %v781, %v786
  %v788 = vadd.f32 %v785, %v787
  %s789 = sadd.s32 0, 16
  %v790 = vpack.c.bf16 %v788, %v788
  %s791 = sshra.s32 %s789, 3
  %s792 = sand.u32 %s789, 7
  %s793 = smul.addr %s791, 4
  %s794 = scalar_lea.vmem [#allocation2], %s793
  %795 = vst [vmem:[%s794] sm:$0xf] %v790
  %s796 = smul.u32 3, 3
  %s797 = smul.addr %s796, 8
  %s798 = scalar_lea.vmem [#allocation3], %s797
  %v799 = vld [vmem:[%s798] sm:$0xff]
  %v800 = vld [vmem:[%s798 + $0x8] sm:$0xff]
  %v801 = vld [vmem:[%s798 + $0x10] sm:$0xff]
  %802 = vmatpush.bf16.msra.mxu0 %v478
  %803 = vmatpush.bf16.msra.mxu0 %v475
  %804 = vmatpush.bf16.msra.mxu0 %v472
  %805 = vmatpush.bf16.msra.mxu0 %v469
  %806 = vmatpush.bf16.msra.mxu0 %v466
  %807 = vmatpush.bf16.msra.mxu0 %v463
  %808 = vmatpush.bf16.msra.mxu0 %v460
  %809 = vmatpush.bf16.msra.mxu0 %v457
  %810 = vmatmul.bf16.gmra.mxu0 %v790
  %v811 = vpop.f32.mrf.mxu0
  %v812 = vadd.f32 0.0, %v811
  %v813 = vpop.f32.mrf.mxu0
  %814 = vdwg.mxu0
  %815 = vmatpush.bf16.msra.mxu0 %v479
  %816 = vmatpush.bf16.msra.mxu0 %v476
  %817 = vmatpush.bf16.msra.mxu0 %v473
  %818 = vmatpush.bf16.msra.mxu0 %v470
  %819 = vmatpush.bf16.msra.mxu0 %v467
  %820 = vmatpush.bf16.msra.mxu0 %v464
  %821 = vmatpush.bf16.msra.mxu0 %v461
  %822 = vmatpush.bf16.msra.mxu0 %v458
  %823 = vmatmul.bf16.gmra.mxu0 %v790
  %v824 = vpop.f32.mrf.mxu0
  %v825 = vadd.f32 0.0, %v824
  %v826 = vpop.f32.mrf.mxu0
  %827 = vdwg.mxu0
  %828 = vmatpush.bf16.msra.mxu0 %v480
  %829 = vmatpush.bf16.msra.mxu0 %v477
  %830 = vmatpush.bf16.msra.mxu0 %v474
  %831 = vmatpush.bf16.msra.mxu0 %v471
  %832 = vmatpush.bf16.msra.mxu0 %v468
  %833 = vmatpush.bf16.msra.mxu0 %v465
  %834 = vmatpush.bf16.msra.mxu0 %v462
  %835 = vmatpush.bf16.msra.mxu0 %v459
  %836 = vmatmul.bf16.gmra.mxu0 %v790
  %v837 = vpop.f32.mrf.mxu0
  %v838 = vadd.f32 0.0, %v837
  %v839 = vpop.f32.mrf.mxu0
  %840 = vdwg.mxu0
  %v841 = vadd.f32 %v799, %v812
  %v842 = vxor.u32 %v841, 2147483648
  %v843 = vmul.f32 %v842, 1.442695
  %v844 = vpow.pop %v843
  %v845 = vadd.f32 %v844, 1.0
  %v846 = vrcp.pop %v845
  %v847 = vmul.f32 %v845, %v846
  %v848 = vsub.f32 1.0, %v847
  %v849 = vmul.f32 %v846, %v848
  %v850 = vadd.f32 %v846, %v849
  %vm851 = vweird.f32 %v845
  %vm852 = vweird.f32 %v846
  %vm853 = vmor %vm851, %vm852
  %v854 = vsel %vm853, %v846, %v850
  %v855 = vand.u32 2147483647, %v845
  %vm856 = vcmp.eq.f32.partialorder %v855, 8.507059e+37
  %v857 = vand.u32 %v845, 2147483648
  %v858 = vor.u32 1.1754944e-38, %v857
  %v859 = vsel %vm856, %v858, %v854
  %v860 = vmul.f32 1.0, %v859
  %v861 = vadd.f32 %v800, %v825
  %v862 = vxor.u32 %v861, 2147483648
  %v863 = vmul.f32 %v862, 1.442695
  %v864 = vpow.pop %v863
  %v865 = vadd.f32 %v864, 1.0
  %v866 = vrcp.pop %v865
  %v867 = vmul.f32 %v865, %v866
  %v868 = vsub.f32 1.0, %v867
  %v869 = vmul.f32 %v866, %v868
  %v870 = vadd.f32 %v866, %v869
  %vm871 = vweird.f32 %v865
  %vm872 = vweird.f32 %v866
  %vm873 = vmor %vm871, %vm872
  %v874 = vsel %vm873, %v866, %v870
  %v875 = vand.u32 2147483647, %v865
  %vm876 = vcmp.eq.f32.partialorder %v875, 8.507059e+37
  %v877 = vand.u32 %v865, 2147483648
  %v878 = vor.u32 1.1754944e-38, %v877
  %v879 = vsel %vm876, %v878, %v874
  %v880 = vmul.f32 1.0, %v879
  %v881 = vadd.f32 %v838, %v91
  %v882 = vmul.f32 %v860, %v881
  %v883 = vadd.f32 %v801, %v882
  %v884 = vtanh.pop %v883
  %v885 = vsub.f32 %v788, %v884
  %v886 = vmul.f32 %v880, %v885
  %v887 = vadd.f32 %v884, %v886
  %s888 = sadd.s32 0, 24
  %v889 = vpack.c.bf16 %v887, %v887
  %s890 = sshra.s32 %s888, 3
  %s891 = sand.u32 %s888, 7
  %s892 = smul.addr %s890, 4
  %s893 = scalar_lea.vmem [#allocation2], %s892
  %894 = vst [vmem:[%s893] sm:$0xf] %v889
  %s895 = smul.u32 4, 3
  %s896 = smul.addr %s895, 8
  %s897 = scalar_lea.vmem [#allocation3], %s896
  %v898 = vld [vmem:[%s897] sm:$0xff]
  %v899 = vld [vmem:[%s897 + $0x8] sm:$0xff]
  %v900 = vld [vmem:[%s897 + $0x10] sm:$0xff]
  %901 = vmatpush.bf16.msra.mxu0 %v478
  %902 = vmatpush.bf16.msra.mxu0 %v475
  %903 = vmatpush.bf16.msra.mxu0 %v472
  %904 = vmatpush.bf16.msra.mxu0 %v469
  %905 = vmatpush.bf16.msra.mxu0 %v466
  %906 = vmatpush.bf16.msra.mxu0 %v463
  %907 = vmatpush.bf16.msra.mxu0 %v460
  %908 = vmatpush.bf16.msra.mxu0 %v457
  %909 = vmatmul.bf16.gmra.mxu0 %v889
  %v910 = vpop.f32.mrf.mxu0
  %v911 = vadd.f32 0.0, %v910
  %v912 = vpop.f32.mrf.mxu0
  %913 = vdwg.mxu0
  %914 = vmatpush.bf16.msra.mxu0 %v479
  %915 = vmatpush.bf16.msra.mxu0 %v476
  %916 = vmatpush.bf16.msra.mxu0 %v473
  %917 = vmatpush.bf16.msra.mxu0 %v470
  %918 = vmatpush.bf16.msra.mxu0 %v467
  %919 = vmatpush.bf16.msra.mxu0 %v464
  %920 = vmatpush.bf16.msra.mxu0 %v461
  %921 = vmatpush.bf16.msra.mxu0 %v458
  %922 = vmatmul.bf16.gmra.mxu0 %v889
  %v923 = vpop.f32.mrf.mxu0
  %v924 = vadd.f32 0.0, %v923
  %v925 = vpop.f32.mrf.mxu0
  %926 = vdwg.mxu0
  %927 = vmatpush.bf16.msra.mxu0 %v480
  %928 = vmatpush.bf16.msra.mxu0 %v477
  %929 = vmatpush.bf16.msra.mxu0 %v474
  %930 = vmatpush.bf16.msra.mxu0 %v471
  %931 = vmatpush.bf16.msra.mxu0 %v468
  %932 = vmatpush.bf16.msra.mxu0 %v465
  %933 = vmatpush.bf16.msra.mxu0 %v462
  %934 = vmatpush.bf16.msra.mxu0 %v459
  %935 = vmatmul.bf16.gmra.mxu0 %v889
  %v936 = vpop.f32.mrf.mxu0
  %v937 = vadd.f32 0.0, %v936
  %v938 = vpop.f32.mrf.mxu0
  %939 = vdwg.mxu0
  %v940 = vadd.f32 %v898, %v911
  %v941 = vxor.u32 %v940, 2147483648
  %v942 = vmul.f32 %v941, 1.442695
  %v943 = vpow.pop %v942
  %v944 = vadd.f32 %v943, 1.0
  %v945 = vrcp.pop %v944
  %v946 = vmul.f32 %v944, %v945
  %v947 = vsub.f32 1.0, %v946
  %v948 = vmul.f32 %v945, %v947
  %v949 = vadd.f32 %v945, %v948
  %vm950 = vweird.f32 %v944
  %vm951 = vweird.f32 %v945
  %vm952 = vmor %vm950, %vm951
  %v953 = vsel %vm952, %v945, %v949
  %v954 = vand.u32 2147483647, %v944
  %vm955 = vcmp.eq.f32.partialorder %v954, 8.507059e+37
  %v956 = vand.u32 %v944, 2147483648
  %v957 = vor.u32 1.1754944e-38, %v956
  %v958 = vsel %vm955, %v957, %v953
  %v959 = vmul.f32 1.0, %v958
  %v960 = vadd.f32 %v899, %v924
  %v961 = vxor.u32 %v960, 2147483648
  %v962 = vmul.f32 %v961, 1.442695
  %v963 = vpow.pop %v962
  %v964 = vadd.f32 %v963, 1.0
  %v965 = vrcp.pop %v964
  %v966 = vmul.f32 %v964, %v965
  %v967 = vsub.f32 1.0, %v966
  %v968 = vmul.f32 %v965, %v967
  %v969 = vadd.f32 %v965, %v968
  %vm970 = vweird.f32 %v964
  %vm971 = vweird.f32 %v965
  %vm972 = vmor %vm970, %vm971
  %v973 = vsel %vm972, %v965, %v969
  %v974 = vand.u32 2147483647, %v964
  %vm975 = vcmp.eq.f32.partialorder %v974, 8.507059e+37
  %v976 = vand.u32 %v964, 2147483648
  %v977 = vor.u32 1.1754944e-38, %v976
  %v978 = vsel %vm975, %v977, %v973
  %v979 = vmul.f32 1.0, %v978
  %v980 = vadd.f32 %v937, %v91
  %v981 = vmul.f32 %v959, %v980
  %v982 = vadd.f32 %v900, %v981
  %v983 = vtanh.pop %v982
  %v984 = vsub.f32 %v887, %v983
  %v985 = vmul.f32 %v979, %v984
  %v986 = vadd.f32 %v983, %v985
  %s987 = sadd.s32 0, 32
  %v988 = vpack.c.bf16 %v986, %v986
  %s989 = sshra.s32 %s987, 3
  %s990 = sand.u32 %s987, 7
  %s991 = smul.addr %s989, 4
  %s992 = scalar_lea.vmem [#allocation2], %s991
  %993 = vst [vmem:[%s992] sm:$0xf] %v988
  %s994 = smul.u32 5, 3
  %s995 = smul.addr %s994, 8
  %s996 = scalar_lea.vmem [#allocation3], %s995
  %v997 = vld [vmem:[%s996] sm:$0xff]
  %v998 = vld [vmem:[%s996 + $0x8] sm:$0xff]
  %v999 = vld [vmem:[%s996 + $0x10] sm:$0xff]
  %1000 = vmatpush.bf16.msra.mxu0 %v478
  %1001 = vmatpush.bf16.msra.mxu0 %v475
  %1002 = vmatpush.bf16.msra.mxu0 %v472
  %1003 = vmatpush.bf16.msra.mxu0 %v469
  %1004 = vmatpush.bf16.msra.mxu0 %v466
  %1005 = vmatpush.bf16.msra.mxu0 %v463
  %1006 = vmatpush.bf16.msra.mxu0 %v460
  %1007 = vmatpush.bf16.msra.mxu0 %v457
  %1008 = vmatmul.bf16.gmra.mxu0 %v988
  %v1009 = vpop.f32.mrf.mxu0
  %v1010 = vadd.f32 0.0, %v1009
  %v1011 = vpop.f32.mrf.mxu0
  %1012 = vdwg.mxu0
  %1013 = vmatpush.bf16.msra.mxu0 %v479
  %1014 = vmatpush.bf16.msra.mxu0 %v476
  %1015 = vmatpush.bf16.msra.mxu0 %v473
  %1016 = vmatpush.bf16.msra.mxu0 %v470
  %1017 = vmatpush.bf16.msra.mxu0 %v467
  %1018 = vmatpush.bf16.msra.mxu0 %v464
  %1019 = vmatpush.bf16.msra.mxu0 %v461
  %1020 = vmatpush.bf16.msra.mxu0 %v458
  %1021 = vmatmul.bf16.gmra.mxu0 %v988
  %v1022 = vpop.f32.mrf.mxu0
  %v1023 = vadd.f32 0.0, %v1022
  %v1024 = vpop.f32.mrf.mxu0
  %1025 = vdwg.mxu0
  %1026 = vmatpush.bf16.msra.mxu0 %v480
  %1027 = vmatpush.bf16.msra.mxu0 %v477
  %1028 = vmatpush.bf16.msra.mxu0 %v474
  %1029 = vmatpush.bf16.msra.mxu0 %v471
  %1030 = vmatpush.bf16.msra.mxu0 %v468
  %1031 = vmatpush.bf16.msra.mxu0 %v465
  %1032 = vmatpush.bf16.msra.mxu0 %v462
  %1033 = vmatpush.bf16.msra.mxu0 %v459
  %1034 = vmatmul.bf16.gmra.mxu0 %v988
  %v1035 = vpop.f32.mrf.mxu0
  %v1036 = vadd.f32 0.0, %v1035
  %v1037 = vpop.f32.mrf.mxu0
  %1038 = vdwg.mxu0
  %v1039 = vadd.f32 %v997, %v1010
  %v1040 = vxor.u32 %v1039, 2147483648
  %v1041 = vmul.f32 %v1040, 1.442695
  %v1042 = vpow.pop %v1041
  %v1043 = vadd.f32 %v1042, 1.0
  %v1044 = vrcp.pop %v1043
  %v1045 = vmul.f32 %v1043, %v1044
  %v1046 = vsub.f32 1.0, %v1045
  %v1047 = vmul.f32 %v1044, %v1046
  %v1048 = vadd.f32 %v1044, %v1047
  %vm1049 = vweird.f32 %v1043
  %vm1050 = vweird.f32 %v1044
  %vm1051 = vmor %vm1049, %vm1050
  %v1052 = vsel %vm1051, %v1044, %v1048
  %v1053 = vand.u32 2147483647, %v1043
  %vm1054 = vcmp.eq.f32.partialorder %v1053, 8.507059e+37
  %v1055 = vand.u32 %v1043, 2147483648
  %v1056 = vor.u32 1.1754944e-38, %v1055
  %v1057 = vsel %vm1054, %v1056, %v1052
  %v1058 = vmul.f32 1.0, %v1057
  %v1059 = vadd.f32 %v998, %v1023
  %v1060 = vxor.u32 %v1059, 2147483648
  %v1061 = vmul.f32 %v1060, 1.442695
  %v1062 = vpow.pop %v1061
  %v1063 = vadd.f32 %v1062, 1.0
  %v1064 = vrcp.pop %v1063
  %v1065 = vmul.f32 %v1063, %v1064
  %v1066 = vsub.f32 1.0, %v1065
  %v1067 = vmul.f32 %v1064, %v1066
  %v1068 = vadd.f32 %v1064, %v1067
  %vm1069 = vweird.f32 %v1063
  %vm1070 = vweird.f32 %v1064
  %vm1071 = vmor %vm1069, %vm1070
  %v1072 = vsel %vm1071, %v1064, %v1068
  %v1073 = vand.u32 2147483647, %v1063
  %vm1074 = vcmp.eq.f32.partialorder %v1073, 8.507059e+37
  %v1075 = vand.u32 %v1063, 2147483648
  %v1076 = vor.u32 1.1754944e-38, %v1075
  %v1077 = vsel %vm1074, %v1076, %v1072
  %v1078 = vmul.f32 1.0, %v1077
  %v1079 = vadd.f32 %v1036, %v91
  %v1080 = vmul.f32 %v1058, %v1079
  %v1081 = vadd.f32 %v999, %v1080
  %v1082 = vtanh.pop %v1081
  %v1083 = vsub.f32 %v986, %v1082
  %v1084 = vmul.f32 %v1078, %v1083
  %v1085 = vadd.f32 %v1082, %v1084
  %s1086 = sadd.s32 0, 40
  %v1087 = vpack.c.bf16 %v1085, %v1085
  %s1088 = sshra.s32 %s1086, 3
  %s1089 = sand.u32 %s1086, 7
  %s1090 = smul.addr %s1088, 4
  %s1091 = scalar_lea.vmem [#allocation2], %s1090
  %1092 = vst [vmem:[%s1091] sm:$0xf] %v1087
  %s1093 = smul.u32 6, 3
  %s1094 = smul.addr %s1093, 8
  %s1095 = scalar_lea.vmem [#allocation3], %s1094
  %v1096 = vld [vmem:[%s1095] sm:$0xff]
  %v1097 = vld [vmem:[%s1095 + $0x8] sm:$0xff]
  %v1098 = vld [vmem:[%s1095 + $0x10] sm:$0xff]
  %1099 = vmatpush.bf16.msra.mxu0 %v478
  %1100 = vmatpush.bf16.msra.mxu0 %v475
  %1101 = vmatpush.bf16.msra.mxu0 %v472
  %1102 = vmatpush.bf16.msra.mxu0 %v469
  %1103 = vmatpush.bf16.msra.mxu0 %v466
  %1104 = vmatpush.bf16.msra.mxu0 %v463
  %1105 = vmatpush.bf16.msra.mxu0 %v460
  %1106 = vmatpush.bf16.msra.mxu0 %v457
  %1107 = vmatmul.bf16.gmra.mxu0 %v1087
  %v1108 = vpop.f32.mrf.mxu0
  %v1109 = vadd.f32 0.0, %v1108
  %v1110 = vpop.f32.mrf.mxu0
  %1111 = vdwg.mxu0
  %1112 = vmatpush.bf16.msra.mxu0 %v479
  %1113 = vmatpush.bf16.msra.mxu0 %v476
  %1114 = vmatpush.bf16.msra.mxu0 %v473
  %1115 = vmatpush.bf16.msra.mxu0 %v470
  %1116 = vmatpush.bf16.msra.mxu0 %v467
  %1117 = vmatpush.bf16.msra.mxu0 %v464
  %1118 = vmatpush.bf16.msra.mxu0 %v461
  %1119 = vmatpush.bf16.msra.mxu0 %v458
  %1120 = vmatmul.bf16.gmra.mxu0 %v1087
  %v1121 = vpop.f32.mrf.mxu0
  %v1122 = vadd.f32 0.0, %v1121
  %v1123 = vpop.f32.mrf.mxu0
  %1124 = vdwg.mxu0
  %1125 = vmatpush.bf16.msra.mxu0 %v480
  %1126 = vmatpush.bf16.msra.mxu0 %v477
  %1127 = vmatpush.bf16.msra.mxu0 %v474
  %1128 = vmatpush.bf16.msra.mxu0 %v471
  %1129 = vmatpush.bf16.msra.mxu0 %v468
  %1130 = vmatpush.bf16.msra.mxu0 %v465
  %1131 = vmatpush.bf16.msra.mxu0 %v462
  %1132 = vmatpush.bf16.msra.mxu0 %v459
  %1133 = vmatmul.bf16.gmra.mxu0 %v1087
  %v1134 = vpop.f32.mrf.mxu0
  %v1135 = vadd.f32 0.0, %v1134
  %v1136 = vpop.f32.mrf.mxu0
  %1137 = vdwg.mxu0
  %v1138 = vadd.f32 %v1096, %v1109
  %v1139 = vxor.u32 %v1138, 2147483648
  %v1140 = vmul.f32 %v1139, 1.442695
  %v1141 = vpow.pop %v1140
  %v1142 = vadd.f32 %v1141, 1.0
  %v1143 = vrcp.pop %v1142
  %v1144 = vmul.f32 %v1142, %v1143
  %v1145 = vsub.f32 1.0, %v1144
  %v1146 = vmul.f32 %v1143, %v1145
  %v1147 = vadd.f32 %v1143, %v1146
  %vm1148 = vweird.f32 %v1142
  %vm1149 = vweird.f32 %v1143
  %vm1150 = vmor %vm1148, %vm1149
  %v1151 = vsel %vm1150, %v1143, %v1147
  %v1152 = vand.u32 2147483647, %v1142
  %vm1153 = vcmp.eq.f32.partialorder %v1152, 8.507059e+37
  %v1154 = vand.u32 %v1142, 2147483648
  %v1155 = vor.u32 1.1754944e-38, %v1154
  %v1156 = vsel %vm1153, %v1155, %v1151
  %v1157 = vmul.f32 1.0, %v1156
  %v1158 = vadd.f32 %v1097, %v1122
  %v1159 = vxor.u32 %v1158, 2147483648
  %v1160 = vmul.f32 %v1159, 1.442695
  %v1161 = vpow.pop %v1160
  %v1162 = vadd.f32 %v1161, 1.0
  %v1163 = vrcp.pop %v1162
  %v1164 = vmul.f32 %v1162, %v1163
  %v1165 = vsub.f32 1.0, %v1164
  %v1166 = vmul.f32 %v1163, %v1165
  %v1167 = vadd.f32 %v1163, %v1166
  %vm1168 = vweird.f32 %v1162
  %vm1169 = vweird.f32 %v1163
  %vm1170 = vmor %vm1168, %vm1169
  %v1171 = vsel %vm1170, %v1163, %v1167
  %v1172 = vand.u32 2147483647, %v1162
  %vm1173 = vcmp.eq.f32.partialorder %v1172, 8.507059e+37
  %v1174 = vand.u32 %v1162, 2147483648
  %v1175 = vor.u32 1.1754944e-38, %v1174
  %v1176 = vsel %vm1173, %v1175, %v1171
  %v1177 = vmul.f32 1.0, %v1176
  %v1178 = vadd.f32 %v1135, %v91
  %v1179 = vmul.f32 %v1157, %v1178
  %v1180 = vadd.f32 %v1098, %v1179
  %v1181 = vtanh.pop %v1180
  %v1182 = vsub.f32 %v1085, %v1181
  %v1183 = vmul.f32 %v1177, %v1182
  %v1184 = vadd.f32 %v1181, %v1183
  %s1185 = sadd.s32 0, 48
  %v1186 = vpack.c.bf16 %v1184, %v1184
  %s1187 = sshra.s32 %s1185, 3
  %s1188 = sand.u32 %s1185, 7
  %s1189 = smul.addr %s1187, 4
  %s1190 = scalar_lea.vmem [#allocation2], %s1189
  %1191 = vst [vmem:[%s1190] sm:$0xf] %v1186
  %s1192 = smul.u32 7, 3
  %s1193 = smul.addr %s1192, 8
  %s1194 = scalar_lea.vmem [#allocation3], %s1193
  %v1195 = vld [vmem:[%s1194] sm:$0xff]
  %v1196 = vld [vmem:[%s1194 + $0x8] sm:$0xff]
  %v1197 = vld [vmem:[%s1194 + $0x10] sm:$0xff]
  %1198 = vmatpush.bf16.msra.mxu0 %v478
  %1199 = vmatpush.bf16.msra.mxu0 %v475
  %1200 = vmatpush.bf16.msra.mxu0 %v472
  %1201 = vmatpush.bf16.msra.mxu0 %v469
  %1202 = vmatpush.bf16.msra.mxu0 %v466
  %1203 = vmatpush.bf16.msra.mxu0 %v463
  %1204 = vmatpush.bf16.msra.mxu0 %v460
  %1205 = vmatpush.bf16.msra.mxu0 %v457
  %1206 = vmatmul.bf16.gmra.mxu0 %v1186
  %v1207 = vpop.f32.mrf.mxu0
  %v1208 = vadd.f32 0.0, %v1207
  %v1209 = vpop.f32.mrf.mxu0
  %1210 = vdwg.mxu0
  %1211 = vmatpush.bf16.msra.mxu0 %v479
  %1212 = vmatpush.bf16.msra.mxu0 %v476
  %1213 = vmatpush.bf16.msra.mxu0 %v473
  %1214 = vmatpush.bf16.msra.mxu0 %v470
  %1215 = vmatpush.bf16.msra.mxu0 %v467
  %1216 = vmatpush.bf16.msra.mxu0 %v464
  %1217 = vmatpush.bf16.msra.mxu0 %v461
  %1218 = vmatpush.bf16.msra.mxu0 %v458
  %1219 = vmatmul.bf16.gmra.mxu0 %v1186
  %v1220 = vpop.f32.mrf.mxu0
  %v1221 = vadd.f32 0.0, %v1220
  %v1222 = vpop.f32.mrf.mxu0
  %1223 = vdwg.mxu0
  %1224 = vmatpush.bf16.msra.mxu0 %v480
  %1225 = vmatpush.bf16.msra.mxu0 %v477
  %1226 = vmatpush.bf16.msra.mxu0 %v474
  %1227 = vmatpush.bf16.msra.mxu0 %v471
  %1228 = vmatpush.bf16.msra.mxu0 %v468
  %1229 = vmatpush.bf16.msra.mxu0 %v465
  %1230 = vmatpush.bf16.msra.mxu0 %v462
  %1231 = vmatpush.bf16.msra.mxu0 %v459
  %1232 = vmatmul.bf16.gmra.mxu0 %v1186
  %v1233 = vpop.f32.mrf.mxu0
  %v1234 = vadd.f32 0.0, %v1233
  %v1235 = vpop.f32.mrf.mxu0
  %1236 = vdwg.mxu0
  %v1237 = vadd.f32 %v1195, %v1208
  %v1238 = vxor.u32 %v1237, 2147483648
  %v1239 = vmul.f32 %v1238, 1.442695
  %v1240 = vpow.pop %v1239
  %v1241 = vadd.f32 %v1240, 1.0
  %v1242 = vrcp.pop %v1241
  %v1243 = vmul.f32 %v1241, %v1242
  %v1244 = vsub.f32 1.0, %v1243
  %v1245 = vmul.f32 %v1242, %v1244
  %v1246 = vadd.f32 %v1242, %v1245
  %vm1247 = vweird.f32 %v1241
  %vm1248 = vweird.f32 %v1242
  %vm1249 = vmor %vm1247, %vm1248
  %v1250 = vsel %vm1249, %v1242, %v1246
  %v1251 = vand.u32 2147483647, %v1241
  %vm1252 = vcmp.eq.f32.partialorder %v1251, 8.507059e+37
  %v1253 = vand.u32 %v1241, 2147483648
  %v1254 = vor.u32 1.1754944e-38, %v1253
  %v1255 = vsel %vm1252, %v1254, %v1250
  %v1256 = vmul.f32 1.0, %v1255
  %v1257 = vadd.f32 %v1196, %v1221
  %v1258 = vxor.u32 %v1257, 2147483648
  %v1259 = vmul.f32 %v1258, 1.442695
  %v1260 = vpow.pop %v1259
  %v1261 = vadd.f32 %v1260, 1.0
  %v1262 = vrcp.pop %v1261
  %v1263 = vmul.f32 %v1261, %v1262
  %v1264 = vsub.f32 1.0, %v1263
  %v1265 = vmul.f32 %v1262, %v1264
  %v1266 = vadd.f32 %v1262, %v1265
  %vm1267 = vweird.f32 %v1261
  %vm1268 = vweird.f32 %v1262
  %vm1269 = vmor %vm1267, %vm1268
  %v1270 = vsel %vm1269, %v1262, %v1266
  %v1271 = vand.u32 2147483647, %v1261
  %vm1272 = vcmp.eq.f32.partialorder %v1271, 8.507059e+37
  %v1273 = vand.u32 %v1261, 2147483648
  %v1274 = vor.u32 1.1754944e-38, %v1273
  %v1275 = vsel %vm1272, %v1274, %v1270
  %v1276 = vmul.f32 1.0, %v1275
  %v1277 = vadd.f32 %v1234, %v91
  %v1278 = vmul.f32 %v1256, %v1277
  %v1279 = vadd.f32 %v1197, %v1278
  %v1280 = vtanh.pop %v1279
  %v1281 = vsub.f32 %v1184, %v1280
  %v1282 = vmul.f32 %v1276, %v1281
  %v1283 = vadd.f32 %v1280, %v1282
  %s1284 = sadd.s32 0, 56
  %v1285 = vpack.c.bf16 %v1283, %v1283
  %s1286 = sshra.s32 %s1284, 3
  %s1287 = sand.u32 %s1284, 7
  %s1288 = smul.addr %s1286, 4
  %s1289 = scalar_lea.vmem [#allocation2], %s1288
  %1290 = vst [vmem:[%s1289] sm:$0xf] %v1285
  %v1291 = vld [vmem:[%s2] sm:$0xff]
  %v1292 = vld [vmem:[%s2 + $0x8] sm:$0xf]
  %v1293 = vld [vmem:[%s2 + $0xc] sm:$0xff]
  %v1294 = vld [vmem:[%s2 + $0x14] sm:$0xf]
  %v1295 = vld [vmem:[%s2 + $0x18] sm:$0xff]
  %v1296 = vld [vmem:[%s2 + $0x20] sm:$0xf]
  %v1297 = vld [vmem:[%s2 + $0x24] sm:$0xff]
  %v1298 = vld [vmem:[%s2 + $0x2c] sm:$0xf]
  %v1299 = vld [vmem:[%s2 + $0x30] sm:$0xff]
  %v1300 = vld [vmem:[%s2 + $0x38] sm:$0xf]
  %v1301 = vld [vmem:[%s2 + $0x3c] sm:$0xff]
  %v1302 = vld [vmem:[%s2 + $0x44] sm:$0xf]
  %v1303 = vld [vmem:[%s2 + $0x48] sm:$0xff]
  %v1304 = vld [vmem:[%s2 + $0x50] sm:$0xf]
  %v1305 = vld [vmem:[%s2 + $0x54] sm:$0xff]
  %v1306 = vld [vmem:[%s2 + $0x5c] sm:$0xf]
  %v1307 = vld [vmem:[%s2 + $0x60] sm:$0xff]
  %v1308 = vld [vmem:[%s2 + $0x68] sm:$0xf]
  %v1309 = vld [vmem:[%s2 + $0x6c] sm:$0xff]
  %v1310 = vld [vmem:[%s2 + $0x74] sm:$0xf]
  %v1311 = vld [vmem:[%s2 + $0x78] sm:$0xff]
  %v1312 = vld [vmem:[%s2 + $0x80] sm:$0xf]
  %v1313 = vld [vmem:[%s2 + $0x84] sm:$0xff]
  %v1314 = vld [vmem:[%s2 + $0x8c] sm:$0xf]
  %v1315 = vld [vmem:[%s2 + $0x90] sm:$0xff]
  %v1316 = vld [vmem:[%s2 + $0x98] sm:$0xf]
  %v1317 = vld [vmem:[%s2 + $0x9c] sm:$0xff]
  %v1318 = vld [vmem:[%s2 + $0xa4] sm:$0xf]
  %v1319 = vld [vmem:[%s2 + $0xa8] sm:$0xff]
  %v1320 = vld [vmem:[%s2 + $0xb0] sm:$0xf]
  %v1321 = vld [vmem:[%s2 + $0xb4] sm:$0xff]
  %v1322 = vld [vmem:[%s2 + $0xbc] sm:$0xf]
  %s1323 = scalar_lea.vmem %s3, 192
  %v1324 = vld [vmem:[%s1323] sm:$0xff]
  %v1325 = vld [vmem:[%s1323 + $0x8] sm:$0xf]
  %v1326 = vld [vmem:[%s1323 + $0xc] sm:$0xff]
  %v1327 = vld [vmem:[%s1323 + $0x14] sm:$0xf]
  %v1328 = vld [vmem:[%s1323 + $0x18] sm:$0xff]
  %v1329 = vld [vmem:[%s1323 + $0x20] sm:$0xf]
  %v1330 = vld [vmem:[%s1323 + $0x24] sm:$0xff]
  %v1331 = vld [vmem:[%s1323 + $0x2c] sm:$0xf]
  %v1332 = vld [vmem:[%s1323 + $0x30] sm:$0xff]
  %v1333 = vld [vmem:[%s1323 + $0x38] sm:$0xf]
  %v1334 = vld [vmem:[%s1323 + $0x3c] sm:$0xff]
  %v1335 = vld [vmem:[%s1323 + $0x44] sm:$0xf]
  %v1336 = vld [vmem:[%s1323 + $0x48] sm:$0xff]
  %v1337 = vld [vmem:[%s1323 + $0x50] sm:$0xf]
  %v1338 = vld [vmem:[%s1323 + $0x54] sm:$0xff]
  %v1339 = vld [vmem:[%s1323 + $0x5c] sm:$0xf]
  %v1340 = vld [vmem:[%s1323 + $0x60] sm:$0xff]
  %v1341 = vld [vmem:[%s1323 + $0x68] sm:$0xf]
  %v1342 = vld [vmem:[%s1323 + $0x6c] sm:$0xff]
  %v1343 = vld [vmem:[%s1323 + $0x74] sm:$0xf]
  %v1344 = vld [vmem:[%s1323 + $0x78] sm:$0xff]
  %v1345 = vld [vmem:[%s1323 + $0x80] sm:$0xf]
  %v1346 = vld [vmem:[%s1323 + $0x84] sm:$0xff]
  %v1347 = vld [vmem:[%s1323 + $0x8c] sm:$0xf]
  %v1348 = vld [vmem:[%s1323 + $0x90] sm:$0xff]
  %v1349 = vld [vmem:[%s1323 + $0x98] sm:$0xf]
  %v1350 = vld [vmem:[%s1323 + $0x9c] sm:$0xff]
  %v1351 = vld [vmem:[%s1323 + $0xa4] sm:$0xf]
  %v1352 = vld [vmem:[%s1323 + $0xa8] sm:$0xff]
  %v1353 = vld [vmem:[%s1323 + $0xb0] sm:$0xf]
  %v1354 = vld [vmem:[%s1323 + $0xb4] sm:$0xff]
  %v1355 = vld [vmem:[%s1323 + $0xbc] sm:$0xf]
  %s1356 = scalar_lea.vmem %s4, 3
  %v1357 = vld [vmem:[%s1356] sm:$0x7]
  %s1358 = scalar_lea.vmem %s5, 1
  %v1359 = vld [vmem:[%s1358] sm:$0x1]
  %v1361 = vperm.slane %v1359, 0
  %v1363 = vld [vmem:[#allocation2] sm:$0xf]
  %v1364 = vld [vmem:[#allocation2 + $0x4] sm:$0xf]
  %v1365 = vld [vmem:[#allocation2 + $0x8] sm:$0xf]
  %v1366 = vld [vmem:[#allocation2 + $0xc] sm:$0xf]
  %v1367 = vld [vmem:[#allocation2 + $0x10] sm:$0xf]
  %v1368 = vld [vmem:[#allocation2 + $0x14] sm:$0xf]
  %v1369 = vld [vmem:[#allocation2 + $0x18] sm:$0xf]
  %v1370 = vld [vmem:[#allocation2 + $0x1c] sm:$0xf]
  %v1372 = vperm.slane %v1357, 0
  %v1373 = vperm.slane %v1357, 1
  %v1374 = vperm.slane %v1357, 2
  %v1386 = vunpack.c.l.b16 %v1363
  %v1387 = vunpack.c.l.b16 %v1364
  %v1388 = vunpack.c.l.b16 %v1365
  %v1389 = vunpack.c.l.b16 %v1366
  %v1390 = vunpack.c.l.b16 %v1367
  %v1391 = vunpack.c.l.b16 %v1368
  %v1392 = vunpack.c.l.b16 %v1369
  %v1393 = vunpack.c.l.b16 %v1370
  %v1394 = vpack.c.b16 %v1387, %v1386
  %v1395 = vpack.c.b16 %v1389, %v1388
  %v1396 = vpack.c.b16 %v1391, %v1390
  %v1397 = vpack.c.b16 %v1393, %v1392
  %v1434 = vunpack.c.l.b16 %v1291
  %v1435 = vunpack.c.h.b16 %v1291
  %v1436 = vunpack.c.l.b16 %v1292
  %v1437 = vunpack.c.l.b16 %v1293
  %v1438 = vunpack.c.h.b16 %v1293
  %v1439 = vunpack.c.l.b16 %v1294
  %v1440 = vunpack.c.l.b16 %v1295
  %v1441 = vunpack.c.h.b16 %v1295
  %v1442 = vunpack.c.l.b16 %v1296
  %v1443 = vunpack.c.l.b16 %v1297
  %v1444 = vunpack.c.h.b16 %v1297
  %v1445 = vunpack.c.l.b16 %v1298
  %v1446 = vunpack.c.l.b16 %v1299
  %v1447 = vunpack.c.h.b16 %v1299
  %v1448 = vunpack.c.l.b16 %v1300
  %v1449 = vunpack.c.l.b16 %v1301
  %v1450 = vunpack.c.h.b16 %v1301
  %v1451 = vunpack.c.l.b16 %v1302
  %v1452 = vunpack.c.l.b16 %v1303
  %v1453 = vunpack.c.h.b16 %v1303
  %v1454 = vunpack.c.l.b16 %v1304
  %v1455 = vunpack.c.l.b16 %v1305
  %v1456 = vunpack.c.h.b16 %v1305
  %v1457 = vunpack.c.l.b16 %v1306
  %v1458 = vunpack.c.l.b16 %v1307
  %v1459 = vunpack.c.h.b16 %v1307
  %v1460 = vunpack.c.l.b16 %v1308
  %v1461 = vunpack.c.l.b16 %v1309
  %v1462 = vunpack.c.h.b16 %v1309
  %v1463 = vunpack.c.l.b16 %v1310
  %v1464 = vunpack.c.l.b16 %v1311
  %v1465 = vunpack.c.h.b16 %v1311
  %v1466 = vunpack.c.l.b16 %v1312
  %v1467 = vunpack.c.l.b16 %v1313
  %v1468 = vunpack.c.h.b16 %v1313
  %v1469 = vunpack.c.l.b16 %v1314
  %v1470 = vunpack.c.l.b16 %v1315
  %v1471 = vunpack.c.h.b16 %v1315
  %v1472 = vunpack.c.l.b16 %v1316
  %v1473 = vunpack.c.l.b16 %v1317
  %v1474 = vunpack.c.h.b16 %v1317
  %v1475 = vunpack.c.l.b16 %v1318
  %v1476 = vunpack.c.l.b16 %v1319
  %v1477 = vunpack.c.h.b16 %v1319
  %v1478 = vunpack.c.l.b16 %v1320
  %v1479 = vunpack.c.l.b16 %v1321
  %v1480 = vunpack.c.h.b16 %v1321
  %v1481 = vunpack.c.l.b16 %v1322
  %v1482 = vpack.c.b16 %v1437, %v1434
  %v1483 = vpack.c.b16 %v1438, %v1435
  %v1484 = vpack.c.b16 %v1439, %v1436
  %v1485 = vpack.c.b16 %v1443, %v1440
  %v1486 = vpack.c.b16 %v1444, %v1441
  %v1487 = vpack.c.b16 %v1445, %v1442
  %v1488 = vpack.c.b16 %v1449, %v1446
  %v1489 = vpack.c.b16 %v1450, %v1447
  %v1490 = vpack.c.b16 %v1451, %v1448
  %v1491 = vpack.c.b16 %v1455, %v1452
  %v1492 = vpack.c.b16 %v1456, %v1453
  %v1493 = vpack.c.b16 %v1457, %v1454
  %v1494 = vpack.c.b16 %v1461, %v1458
  %v1495 = vpack.c.b16 %v1462, %v1459
  %v1496 = vpack.c.b16 %v1463, %v1460
  %v1497 = vpack.c.b16 %v1467, %v1464
  %v1498 = vpack.c.b16 %v1468, %v1465
  %v1499 = vpack.c.b16 %v1469, %v1466
  %v1500 = vpack.c.b16 %v1473, %v1470
  %v1501 = vpack.c.b16 %v1474, %v1471
  %v1502 = vpack.c.b16 %v1475, %v1472
  %v1503 = vpack.c.b16 %v1479, %v1476
  %v1504 = vpack.c.b16 %v1480, %v1477
  %v1505 = vpack.c.b16 %v1481, %v1478
  %1530 = vmatpush.bf16.msra.mxu0 %v1503
  %1531 = vmatpush.bf16.msra.mxu0 %v1500
  %1532 = vmatpush.bf16.msra.mxu0 %v1497
  %1533 = vmatpush.bf16.msra.mxu0 %v1494
  %1534 = vmatpush.bf16.msra.mxu0 %v1491
  %1535 = vmatpush.bf16.msra.mxu0 %v1488
  %1536 = vmatpush.bf16.msra.mxu0 %v1485
  %1537 = vmatpush.bf16.msra.mxu0 %v1482
  %1538 = vmatmul.bf16.gmra.mxu0 %v1394
  %v1539 = vpop.f32.mrf.mxu0
  %v1540 = vadd.f32 %v1372, %v1539
  %v1541 = vpop.f32.mrf.mxu0
  %v1542 = vadd.f32 %v1372, %v1541
  %1543 = vmatmul.bf16.gmra.mxu0 %v1395
  %v1544 = vpop.f32.mrf.mxu0
  %v1545 = vadd.f32 %v1372, %v1544
  %v1546 = vpop.f32.mrf.mxu0
  %v1547 = vadd.f32 %v1372, %v1546
  %1548 = vmatmul.bf16.gmra.mxu0 %v1396
  %v1549 = vpop.f32.mrf.mxu0
  %v1550 = vadd.f32 %v1372, %v1549
  %v1551 = vpop.f32.mrf.mxu0
  %v1552 = vadd.f32 %v1372, %v1551
  %1553 = vmatmul.bf16.gmra.mxu0 %v1397
  %v1554 = vpop.f32.mrf.mxu0
  %v1555 = vadd.f32 %v1372, %v1554
  %v1556 = vpop.f32.mrf.mxu0
  %v1557 = vadd.f32 %v1372, %v1556
  %1558 = vdwg.mxu0
  %1559 = vmatpush.bf16.msra.mxu0 %v1504
  %1560 = vmatpush.bf16.msra.mxu0 %v1501
  %1561 = vmatpush.bf16.msra.mxu0 %v1498
  %1562 = vmatpush.bf16.msra.mxu0 %v1495
  %1563 = vmatpush.bf16.msra.mxu0 %v1492
  %1564 = vmatpush.bf16.msra.mxu0 %v1489
  %1565 = vmatpush.bf16.msra.mxu0 %v1486
  %1566 = vmatpush.bf16.msra.mxu0 %v1483
  %1567 = vmatmul.bf16.gmra.mxu0 %v1394
  %v1568 = vpop.f32.mrf.mxu0
  %v1569 = vadd.f32 %v1373, %v1568
  %v1570 = vpop.f32.mrf.mxu0
  %v1571 = vadd.f32 %v1373, %v1570
  %1572 = vmatmul.bf16.gmra.mxu0 %v1395
  %v1573 = vpop.f32.mrf.mxu0
  %v1574 = vadd.f32 %v1373, %v1573
  %v1575 = vpop.f32.mrf.mxu0
  %v1576 = vadd.f32 %v1373, %v1575
  %1577 = vmatmul.bf16.gmra.mxu0 %v1396
  %v1578 = vpop.f32.mrf.mxu0
  %v1579 = vadd.f32 %v1373, %v1578
  %v1580 = vpop.f32.mrf.mxu0
  %v1581 = vadd.f32 %v1373, %v1580
  %1582 = vmatmul.bf16.gmra.mxu0 %v1397
  %v1583 = vpop.f32.mrf.mxu0
  %v1584 = vadd.f32 %v1373, %v1583
  %v1585 = vpop.f32.mrf.mxu0
  %v1586 = vadd.f32 %v1373, %v1585
  %1587 = vdwg.mxu0
  %1588 = vmatpush.bf16.msra.mxu0 %v1505
  %1589 = vmatpush.bf16.msra.mxu0 %v1502
  %1590 = vmatpush.bf16.msra.mxu0 %v1499
  %1591 = vmatpush.bf16.msra.mxu0 %v1496
  %1592 = vmatpush.bf16.msra.mxu0 %v1493
  %1593 = vmatpush.bf16.msra.mxu0 %v1490
  %1594 = vmatpush.bf16.msra.mxu0 %v1487
  %1595 = vmatpush.bf16.msra.mxu0 %v1484
  %1596 = vmatmul.bf16.gmra.mxu0 %v1394
  %v1597 = vpop.f32.mrf.mxu0
  %v1598 = vadd.f32 %v1374, %v1597
  %v1599 = vpop.f32.mrf.mxu0
  %v1600 = vadd.f32 %v1374, %v1599
  %1601 = vmatmul.bf16.gmra.mxu0 %v1395
  %v1602 = vpop.f32.mrf.mxu0
  %v1603 = vadd.f32 %v1374, %v1602
  %v1604 = vpop.f32.mrf.mxu0
  %v1605 = vadd.f32 %v1374, %v1604
  %1606 = vmatmul.bf16.gmra.mxu0 %v1396
  %v1607 = vpop.f32.mrf.mxu0
  %v1608 = vadd.f32 %v1374, %v1607
  %v1609 = vpop.f32.mrf.mxu0
  %v1610 = vadd.f32 %v1374, %v1609
  %1611 = vmatmul.bf16.gmra.mxu0 %v1397
  %v1612 = vpop.f32.mrf.mxu0
  %v1613 = vadd.f32 %v1374, %v1612
  %v1614 = vpop.f32.mrf.mxu0
  %v1615 = vadd.f32 %v1374, %v1614
  %1616 = vdwg.mxu0
  %1617 = vst [vmem:[#allocation3] sm:$0xff] %v1540
  %1618 = vst [vmem:[#allocation3 + $0x8] sm:$0xff] %v1569
  %1619 = vst [vmem:[#allocation3 + $0x10] sm:$0xff] %v1598
  %1620 = vst [vmem:[#allocation3 + $0x18] sm:$0xff] %v1542
  %1621 = vst [vmem:[#allocation3 + $0x20] sm:$0xff] %v1571
  %1622 = vst [vmem:[#allocation3 + $0x28] sm:$0xff] %v1600
  %1623 = vst [vmem:[#allocation3 + $0x30] sm:$0xff] %v1545
  %1624 = vst [vmem:[#allocation3 + $0x38] sm:$0xff] %v1574
  %1625 = vst [vmem:[#allocation3 + $0x40] sm:$0xff] %v1603
  %1626 = vst [vmem:[#allocation3 + $0x48] sm:$0xff] %v1547
  %1627 = vst [vmem:[#allocation3 + $0x50] sm:$0xff] %v1576
  %1628 = vst [vmem:[#allocation3 + $0x58] sm:$0xff] %v1605
  %1629 = vst [vmem:[#allocation3 + $0x60] sm:$0xff] %v1550
  %1630 = vst [vmem:[#allocation3 + $0x68] sm:$0xff] %v1579
  %1631 = vst [vmem:[#allocation3 + $0x70] sm:$0xff] %v1608
  %1632 = vst [vmem:[#allocation3 + $0x78] sm:$0xff] %v1552
  %1633 = vst [vmem:[#allocation3 + $0x80] sm:$0xff] %v1581
  %1634 = vst [vmem:[#allocation3 + $0x88] sm:$0xff] %v1610
  %1635 = vst [vmem:[#allocation3 + $0x90] sm:$0xff] %v1555
  %1636 = vst [vmem:[#allocation3 + $0x98] sm:$0xff] %v1584
  %1637 = vst [vmem:[#allocation3 + $0xa0] sm:$0xff] %v1613
  %1638 = vst [vmem:[#allocation3 + $0xa8] sm:$0xff] %v1557
  %1639 = vst [vmem:[#allocation3 + $0xb0] sm:$0xff] %v1586
  %1640 = vst [vmem:[#allocation3 + $0xb8] sm:$0xff] %v1615
  %v1641 = vld [vmem:[%s373] sm:$0xff]
  %v1642 = vld [vmem:[%s373 + $0x8] sm:$0xff]
  %v1643 = vld [vmem:[%s373 + $0x10] sm:$0xff]
  %v1676 = vunpack.c.l.b16 %v1324
  %v1677 = vunpack.c.h.b16 %v1324
  %v1678 = vunpack.c.l.b16 %v1325
  %v1679 = vunpack.c.l.b16 %v1326
  %v1680 = vunpack.c.h.b16 %v1326
  %v1681 = vunpack.c.l.b16 %v1327
  %v1682 = vunpack.c.l.b16 %v1328
  %v1683 = vunpack.c.h.b16 %v1328
  %v1684 = vunpack.c.l.b16 %v1329
  %v1685 = vunpack.c.l.b16 %v1330
  %v1686 = vunpack.c.h.b16 %v1330
  %v1687 = vunpack.c.l.b16 %v1331
  %v1688 = vunpack.c.l.b16 %v1332
  %v1689 = vunpack.c.h.b16 %v1332
  %v1690 = vunpack.c.l.b16 %v1333
  %v1691 = vunpack.c.l.b16 %v1334
  %v1692 = vunpack.c.h.b16 %v1334
  %v1693 = vunpack.c.l.b16 %v1335
  %v1694 = vunpack.c.l.b16 %v1336
  %v1695 = vunpack.c.h.b16 %v1336
  %v1696 = vunpack.c.l.b16 %v1337
  %v1697 = vunpack.c.l.b16 %v1338
  %v1698 = vunpack.c.h.b16 %v1338
  %v1699 = vunpack.c.l.b16 %v1339
  %v1700 = vunpack.c.l.b16 %v1340
  %v1701 = vunpack.c.h.b16 %v1340
  %v1702 = vunpack.c.l.b16 %v1341
  %v1703 = vunpack.c.l.b16 %v1342
  %v1704 = vunpack.c.h.b16 %v1342
  %v1705 = vunpack.c.l.b16 %v1343
  %v1706 = vunpack.c.l.b16 %v1344
  %v1707 = vunpack.c.h.b16 %v1344
  %v1708 = vunpack.c.l.b16 %v1345
  %v1709 = vunpack.c.l.b16 %v1346
  %v1710 = vunpack.c.h.b16 %v1346
  %v1711 = vunpack.c.l.b16 %v1347
  %v1712 = vunpack.c.l.b16 %v1348
  %v1713 = vunpack.c.h.b16 %v1348
  %v1714 = vunpack.c.l.b16 %v1349
  %v1715 = vunpack.c.l.b16 %v1350
  %v1716 = vunpack.c.h.b16 %v1350
  %v1717 = vunpack.c.l.b16 %v1351
  %v1718 = vunpack.c.l.b16 %v1352
  %v1719 = vunpack.c.h.b16 %v1352
  %v1720 = vunpack.c.l.b16 %v1353
  %v1721 = vunpack.c.l.b16 %v1354
  %v1722 = vunpack.c.h.b16 %v1354
  %v1723 = vunpack.c.l.b16 %v1355
  %v1724 = vpack.c.b16 %v1679, %v1676
  %v1725 = vpack.c.b16 %v1680, %v1677
  %v1726 = vpack.c.b16 %v1681, %v1678
  %v1727 = vpack.c.b16 %v1685, %v1682
  %v1728 = vpack.c.b16 %v1686, %v1683
  %v1729 = vpack.c.b16 %v1687, %v1684
  %v1730 = vpack.c.b16 %v1691, %v1688
  %v1731 = vpack.c.b16 %v1692, %v1689
  %v1732 = vpack.c.b16 %v1693, %v1690
  %v1733 = vpack.c.b16 %v1697, %v1694
  %v1734 = vpack.c.b16 %v1698, %v1695
  %v1735 = vpack.c.b16 %v1699, %v1696
  %v1736 = vpack.c.b16 %v1703, %v1700
  %v1737 = vpack.c.b16 %v1704, %v1701
  %v1738 = vpack.c.b16 %v1705, %v1702
  %v1739 = vpack.c.b16 %v1709, %v1706
  %v1740 = vpack.c.b16 %v1710, %v1707
  %v1741 = vpack.c.b16 %v1711, %v1708
  %v1742 = vpack.c.b16 %v1715, %v1712
  %v1743 = vpack.c.b16 %v1716, %v1713
  %v1744 = vpack.c.b16 %v1717, %v1714
  %v1745 = vpack.c.b16 %v1721, %v1718
  %v1746 = vpack.c.b16 %v1722, %v1719
  %v1747 = vpack.c.b16 %v1723, %v1720
  %1772 = vmatpush.bf16.msra.mxu0 %v1745
  %1773 = vmatpush.bf16.msra.mxu0 %v1742
  %1774 = vmatpush.bf16.msra.mxu0 %v1739
  %1775 = vmatpush.bf16.msra.mxu0 %v1736
  %1776 = vmatpush.bf16.msra.mxu0 %v1733
  %1777 = vmatpush.bf16.msra.mxu0 %v1730
  %1778 = vmatpush.bf16.msra.mxu0 %v1727
  %1779 = vmatpush.bf16.msra.mxu0 %v1724
  %1780 = vmatmul.bf16.gmra.mxu0 0
  %v1781 = vpop.f32.mrf.mxu0
  %v1782 = vadd.f32 0.0, %v1781
  %v1783 = vpop.f32.mrf.mxu0
  %1784 = vdwg.mxu0
  %1785 = vmatpush.bf16.msra.mxu0 %v1746
  %1786 = vmatpush.bf16.msra.mxu0 %v1743
  %1787 = vmatpush.bf16.msra.mxu0 %v1740
  %1788 = vmatpush.bf16.msra.mxu0 %v1737
  %1789 = vmatpush.bf16.msra.mxu0 %v1734
  %1790 = vmatpush.bf16.msra.mxu0 %v1731
  %1791 = vmatpush.bf16.msra.mxu0 %v1728
  %1792 = vmatpush.bf16.msra.mxu0 %v1725
  %1793 = vmatmul.bf16.gmra.mxu0 0
  %v1794 = vpop.f32.mrf.mxu0
  %v1795 = vadd.f32 0.0, %v1794
  %v1796 = vpop.f32.mrf.mxu0
  %1797 = vdwg.mxu0
  %1798 = vmatpush.bf16.msra.mxu0 %v1747
  %1799 = vmatpush.bf16.msra.mxu0 %v1744
  %1800 = vmatpush.bf16.msra.mxu0 %v1741
  %1801 = vmatpush.bf16.msra.mxu0 %v1738
  %1802 = vmatpush.bf16.msra.mxu0 %v1735
  %1803 = vmatpush.bf16.msra.mxu0 %v1732
  %1804 = vmatpush.bf16.msra.mxu0 %v1729
  %1805 = vmatpush.bf16.msra.mxu0 %v1726
  %1806 = vmatmul.bf16.gmra.mxu0 0
  %v1807 = vpop.f32.mrf.mxu0
  %v1808 = vadd.f32 0.0, %v1807
  %v1809 = vpop.f32.mrf.mxu0
  %1810 = vdwg.mxu0
  %v1811 = vadd.f32 %v1641, %v1782
  %v1812 = vxor.u32 %v1811, 2147483648
  %v1813 = vmul.f32 %v1812, 1.442695
  %v1814 = vpow.pop %v1813
  %v1815 = vadd.f32 %v1814, 1.0
  %v1816 = vrcp.pop %v1815
  %v1817 = vmul.f32 %v1815, %v1816
  %v1818 = vsub.f32 1.0, %v1817
  %v1819 = vmul.f32 %v1816, %v1818
  %v1820 = vadd.f32 %v1816, %v1819
  %vm1821 = vweird.f32 %v1815
  %vm1822 = vweird.f32 %v1816
  %vm1823 = vmor %vm1821, %vm1822
  %v1824 = vsel %vm1823, %v1816, %v1820
  %v1825 = vand.u32 2147483647, %v1815
  %vm1826 = vcmp.eq.f32.partialorder %v1825, 8.507059e+37
  %v1827 = vand.u32 %v1815, 2147483648
  %v1828 = vor.u32 1.1754944e-38, %v1827
  %v1829 = vsel %vm1826, %v1828, %v1824
  %v1830 = vmul.f32 1.0, %v1829
  %v1831 = vadd.f32 %v1642, %v1795
  %v1832 = vxor.u32 %v1831, 2147483648
  %v1833 = vmul.f32 %v1832, 1.442695
  %v1834 = vpow.pop %v1833
  %v1835 = vadd.f32 %v1834, 1.0
  %v1836 = vrcp.pop %v1835
  %v1837 = vmul.f32 %v1835, %v1836
  %v1838 = vsub.f32 1.0, %v1837
  %v1839 = vmul.f32 %v1836, %v1838
  %v1840 = vadd.f32 %v1836, %v1839
  %vm1841 = vweird.f32 %v1835
  %vm1842 = vweird.f32 %v1836
  %vm1843 = vmor %vm1841, %vm1842
  %v1844 = vsel %vm1843, %v1836, %v1840
  %v1845 = vand.u32 2147483647, %v1835
  %vm1846 = vcmp.eq.f32.partialorder %v1845, 8.507059e+37
  %v1847 = vand.u32 %v1835, 2147483648
  %v1848 = vor.u32 1.1754944e-38, %v1847
  %v1849 = vsel %vm1846, %v1848, %v1844
  %v1850 = vmul.f32 1.0, %v1849
  %v1851 = vadd.f32 %v1808, %v1361
  %v1852 = vmul.f32 %v1830, %v1851
  %v1853 = vadd.f32 %v1643, %v1852
  %v1854 = vtanh.pop %v1853
  %v1855 = vsub.f32 0.0, %v1854
  %v1856 = vmul.f32 %v1850, %v1855
  %v1857 = vadd.f32 %v1854, %v1856
  %s1858 = scalar_lea.vmem %s6, %s591
  %1859 = vst [vmem:[%s1858] sm:$0xff] %v1857
  %v1860 = vld [vmem:[%s600] sm:$0xff]
  %v1861 = vld [vmem:[%s600 + $0x8] sm:$0xff]
  %v1862 = vld [vmem:[%s600 + $0x10] sm:$0xff]
  %v1863 = vpack.c.bf16 %v1857, %v1857
  %1864 = vmatpush.bf16.msra.mxu0 %v1745
  %1865 = vmatpush.bf16.msra.mxu0 %v1742
  %1866 = vmatpush.bf16.msra.mxu0 %v1739
  %1867 = vmatpush.bf16.msra.mxu0 %v1736
  %1868 = vmatpush.bf16.msra.mxu0 %v1733
  %1869 = vmatpush.bf16.msra.mxu0 %v1730
  %1870 = vmatpush.bf16.msra.mxu0 %v1727
  %1871 = vmatpush.bf16.msra.mxu0 %v1724
  %1872 = vmatmul.bf16.gmra.mxu0 %v1863
  %v1873 = vpop.f32.mrf.mxu0
  %v1874 = vadd.f32 0.0, %v1873
  %v1875 = vpop.f32.mrf.mxu0
  %1876 = vdwg.mxu0
  %1877 = vmatpush.bf16.msra.mxu0 %v1746
  %1878 = vmatpush.bf16.msra.mxu0 %v1743
  %1879 = vmatpush.bf16.msra.mxu0 %v1740
  %1880 = vmatpush.bf16.msra.mxu0 %v1737
  %1881 = vmatpush.bf16.msra.mxu0 %v1734
  %1882 = vmatpush.bf16.msra.mxu0 %v1731
  %1883 = vmatpush.bf16.msra.mxu0 %v1728
  %1884 = vmatpush.bf16.msra.mxu0 %v1725
  %1885 = vmatmul.bf16.gmra.mxu0 %v1863
  %v1886 = vpop.f32.mrf.mxu0
  %v1887 = vadd.f32 0.0, %v1886
  %v1888 = vpop.f32.mrf.mxu0
  %1889 = vdwg.mxu0
  %1890 = vmatpush.bf16.msra.mxu0 %v1747
  %1891 = vmatpush.bf16.msra.mxu0 %v1744
  %1892 = vmatpush.bf16.msra.mxu0 %v1741
  %1893 = vmatpush.bf16.msra.mxu0 %v1738
  %1894 = vmatpush.bf16.msra.mxu0 %v1735
  %1895 = vmatpush.bf16.msra.mxu0 %v1732
  %1896 = vmatpush.bf16.msra.mxu0 %v1729
  %1897 = vmatpush.bf16.msra.mxu0 %v1726
  %1898 = vmatmul.bf16.gmra.mxu0 %v1863
  %v1899 = vpop.f32.mrf.mxu0
  %v1900 = vadd.f32 0.0, %v1899
  %v1901 = vpop.f32.mrf.mxu0
  %1902 = vdwg.mxu0
  %v1903 = vadd.f32 %v1860, %v1874
  %v1904 = vxor.u32 %v1903, 2147483648
  %v1905 = vmul.f32 %v1904, 1.442695
  %v1906 = vpow.pop %v1905
  %v1907 = vadd.f32 %v1906, 1.0
  %v1908 = vrcp.pop %v1907
  %v1909 = vmul.f32 %v1907, %v1908
  %v1910 = vsub.f32 1.0, %v1909
  %v1911 = vmul.f32 %v1908, %v1910
  %v1912 = vadd.f32 %v1908, %v1911
  %vm1913 = vweird.f32 %v1907
  %vm1914 = vweird.f32 %v1908
  %vm1915 = vmor %vm1913, %vm1914
  %v1916 = vsel %vm1915, %v1908, %v1912
  %v1917 = vand.u32 2147483647, %v1907
  %vm1918 = vcmp.eq.f32.partialorder %v1917, 8.507059e+37
  %v1919 = vand.u32 %v1907, 2147483648
  %v1920 = vor.u32 1.1754944e-38, %v1919
  %v1921 = vsel %vm1918, %v1920, %v1916
  %v1922 = vmul.f32 1.0, %v1921
  %v1923 = vadd.f32 %v1861, %v1887
  %v1924 = vxor.u32 %v1923, 2147483648
  %v1925 = vmul.f32 %v1924, 1.442695
  %v1926 = vpow.pop %v1925
  %v1927 = vadd.f32 %v1926, 1.0
  %v1928 = vrcp.pop %v1927
  %v1929 = vmul.f32 %v1927, %v1928
  %v1930 = vsub.f32 1.0, %v1929
  %v1931 = vmul.f32 %v1928, %v1930
  %v1932 = vadd.f32 %v1928, %v1931
  %vm1933 = vweird.f32 %v1927
  %vm1934 = vweird.f32 %v1928
  %vm1935 = vmor %vm1933, %vm1934
  %v1936 = vsel %vm1935, %v1928, %v1932
  %v1937 = vand.u32 2147483647, %v1927
  %vm1938 = vcmp.eq.f32.partialorder %v1937, 8.507059e+37
  %v1939 = vand.u32 %v1927, 2147483648
  %v1940 = vor.u32 1.1754944e-38, %v1939
  %v1941 = vsel %vm1938, %v1940, %v1936
  %v1942 = vmul.f32 1.0, %v1941
  %v1943 = vadd.f32 %v1900, %v1361
  %v1944 = vmul.f32 %v1922, %v1943
  %v1945 = vadd.f32 %v1862, %v1944
  %v1946 = vtanh.pop %v1945
  %v1947 = vsub.f32 %v1857, %v1946
  %v1948 = vmul.f32 %v1942, %v1947
  %v1949 = vadd.f32 %v1946, %v1948
  %s1950 = scalar_lea.vmem %s6, %s690
  %1951 = vst [vmem:[%s1950] sm:$0xff] %v1949
  %v1952 = vld [vmem:[%s699] sm:$0xff]
  %v1953 = vld [vmem:[%s699 + $0x8] sm:$0xff]
  %v1954 = vld [vmem:[%s699 + $0x10] sm:$0xff]
  %v1955 = vpack.c.bf16 %v1949, %v1949
  %1956 = vmatpush.bf16.msra.mxu0 %v1745
  %1957 = vmatpush.bf16.msra.mxu0 %v1742
  %1958 = vmatpush.bf16.msra.mxu0 %v1739
  %1959 = vmatpush.bf16.msra.mxu0 %v1736
  %1960 = vmatpush.bf16.msra.mxu0 %v1733
  %1961 = vmatpush.bf16.msra.mxu0 %v1730
  %1962 = vmatpush.bf16.msra.mxu0 %v1727
  %1963 = vmatpush.bf16.msra.mxu0 %v1724
  %1964 = vmatmul.bf16.gmra.mxu0 %v1955
  %v1965 = vpop.f32.mrf.mxu0
  %v1966 = vadd.f32 0.0, %v1965
  %v1967 = vpop.f32.mrf.mxu0
  %1968 = vdwg.mxu0
  %1969 = vmatpush.bf16.msra.mxu0 %v1746
  %1970 = vmatpush.bf16.msra.mxu0 %v1743
  %1971 = vmatpush.bf16.msra.mxu0 %v1740
  %1972 = vmatpush.bf16.msra.mxu0 %v1737
  %1973 = vmatpush.bf16.msra.mxu0 %v1734
  %1974 = vmatpush.bf16.msra.mxu0 %v1731
  %1975 = vmatpush.bf16.msra.mxu0 %v1728
  %1976 = vmatpush.bf16.msra.mxu0 %v1725
  %1977 = vmatmul.bf16.gmra.mxu0 %v1955
  %v1978 = vpop.f32.mrf.mxu0
  %v1979 = vadd.f32 0.0, %v1978
  %v1980 = vpop.f32.mrf.mxu0
  %1981 = vdwg.mxu0
  %1982 = vmatpush.bf16.msra.mxu0 %v1747
  %1983 = vmatpush.bf16.msra.mxu0 %v1744
  %1984 = vmatpush.bf16.msra.mxu0 %v1741
  %1985 = vmatpush.bf16.msra.mxu0 %v1738
  %1986 = vmatpush.bf16.msra.mxu0 %v1735
  %1987 = vmatpush.bf16.msra.mxu0 %v1732
  %1988 = vmatpush.bf16.msra.mxu0 %v1729
  %1989 = vmatpush.bf16.msra.mxu0 %v1726
  %1990 = vmatmul.bf16.gmra.mxu0 %v1955
  %v1991 = vpop.f32.mrf.mxu0
  %v1992 = vadd.f32 0.0, %v1991
  %v1993 = vpop.f32.mrf.mxu0
  %1994 = vdwg.mxu0
  %v1995 = vadd.f32 %v1952, %v1966
  %v1996 = vxor.u32 %v1995, 2147483648
  %v1997 = vmul.f32 %v1996, 1.442695
  %v1998 = vpow.pop %v1997
  %v1999 = vadd.f32 %v1998, 1.0
  %v2000 = vrcp.pop %v1999
  %v2001 = vmul.f32 %v1999, %v2000
  %v2002 = vsub.f32 1.0, %v2001
  %v2003 = vmul.f32 %v2000, %v2002
  %v2004 = vadd.f32 %v2000, %v2003
  %vm2005 = vweird.f32 %v1999
  %vm2006 = vweird.f32 %v2000
  %vm2007 = vmor %vm2005, %vm2006
  %v2008 = vsel %vm2007, %v2000, %v2004
  %v2009 = vand.u32 2147483647, %v1999
  %vm2010 = vcmp.eq.f32.partialorder %v2009, 8.507059e+37
  %v2011 = vand.u32 %v1999, 2147483648
  %v2012 = vor.u32 1.1754944e-38, %v2011
  %v2013 = vsel %vm2010, %v2012, %v2008
  %v2014 = vmul.f32 1.0, %v2013
  %v2015 = vadd.f32 %v1953, %v1979
  %v2016 = vxor.u32 %v2015, 2147483648
  %v2017 = vmul.f32 %v2016, 1.442695
  %v2018 = vpow.pop %v2017
  %v2019 = vadd.f32 %v2018, 1.0
  %v2020 = vrcp.pop %v2019
  %v2021 = vmul.f32 %v2019, %v2020
  %v2022 = vsub.f32 1.0, %v2021
  %v2023 = vmul.f32 %v2020, %v2022
  %v2024 = vadd.f32 %v2020, %v2023
  %vm2025 = vweird.f32 %v2019
  %vm2026 = vweird.f32 %v2020
  %vm2027 = vmor %vm2025, %vm2026
  %v2028 = vsel %vm2027, %v2020, %v2024
  %v2029 = vand.u32 2147483647, %v2019
  %vm2030 = vcmp.eq.f32.partialorder %v2029, 8.507059e+37
  %v2031 = vand.u32 %v2019, 2147483648
  %v2032 = vor.u32 1.1754944e-38, %v2031
  %v2033 = vsel %vm2030, %v2032, %v2028
  %v2034 = vmul.f32 1.0, %v2033
  %v2035 = vadd.f32 %v1992, %v1361
  %v2036 = vmul.f32 %v2014, %v2035
  %v2037 = vadd.f32 %v1954, %v2036
  %v2038 = vtanh.pop %v2037
  %v2039 = vsub.f32 %v1949, %v2038
  %v2040 = vmul.f32 %v2034, %v2039
  %v2041 = vadd.f32 %v2038, %v2040
  %s2042 = scalar_lea.vmem %s6, %s789
  %2043 = vst [vmem:[%s2042] sm:$0xff] %v2041
  %v2044 = vld [vmem:[%s798] sm:$0xff]
  %v2045 = vld [vmem:[%s798 + $0x8] sm:$0xff]
  %v2046 = vld [vmem:[%s798 + $0x10] sm:$0xff]
  %v2047 = vpack.c.bf16 %v2041, %v2041
  %2048 = vmatpush.bf16.msra.mxu0 %v1745
  %2049 = vmatpush.bf16.msra.mxu0 %v1742
  %2050 = vmatpush.bf16.msra.mxu0 %v1739
  %2051 = vmatpush.bf16.msra.mxu0 %v1736
  %2052 = vmatpush.bf16.msra.mxu0 %v1733
  %2053 = vmatpush.bf16.msra.mxu0 %v1730
  %2054 = vmatpush.bf16.msra.mxu0 %v1727
  %2055 = vmatpush.bf16.msra.mxu0 %v1724
  %2056 = vmatmul.bf16.gmra.mxu0 %v2047
  %v2057 = vpop.f32.mrf.mxu0
  %v2058 = vadd.f32 0.0, %v2057
  %v2059 = vpop.f32.mrf.mxu0
  %2060 = vdwg.mxu0
  %2061 = vmatpush.bf16.msra.mxu0 %v1746
  %2062 = vmatpush.bf16.msra.mxu0 %v1743
  %2063 = vmatpush.bf16.msra.mxu0 %v1740
  %2064 = vmatpush.bf16.msra.mxu0 %v1737
  %2065 = vmatpush.bf16.msra.mxu0 %v1734
  %2066 = vmatpush.bf16.msra.mxu0 %v1731
  %2067 = vmatpush.bf16.msra.mxu0 %v1728
  %2068 = vmatpush.bf16.msra.mxu0 %v1725
  %2069 = vmatmul.bf16.gmra.mxu0 %v2047
  %v2070 = vpop.f32.mrf.mxu0
  %v2071 = vadd.f32 0.0, %v2070
  %v2072 = vpop.f32.mrf.mxu0
  %2073 = vdwg.mxu0
  %2074 = vmatpush.bf16.msra.mxu0 %v1747
  %2075 = vmatpush.bf16.msra.mxu0 %v1744
  %2076 = vmatpush.bf16.msra.mxu0 %v1741
  %2077 = vmatpush.bf16.msra.mxu0 %v1738
  %2078 = vmatpush.bf16.msra.mxu0 %v1735
  %2079 = vmatpush.bf16.msra.mxu0 %v1732
  %2080 = vmatpush.bf16.msra.mxu0 %v1729
  %2081 = vmatpush.bf16.msra.mxu0 %v1726
  %2082 = vmatmul.bf16.gmra.mxu0 %v2047
  %v2083 = vpop.f32.mrf.mxu0
  %v2084 = vadd.f32 0.0, %v2083
  %v2085 = vpop.f32.mrf.mxu0
  %2086 = vdwg.mxu0
  %v2087 = vadd.f32 %v2044, %v2058
  %v2088 = vxor.u32 %v2087, 2147483648
  %v2089 = vmul.f32 %v2088, 1.442695
  %v2090 = vpow.pop %v2089
  %v2091 = vadd.f32 %v2090, 1.0
  %v2092 = vrcp.pop %v2091
  %v2093 = vmul.f32 %v2091, %v2092
  %v2094 = vsub.f32 1.0, %v2093
  %v2095 = vmul.f32 %v2092, %v2094
  %v2096 = vadd.f32 %v2092, %v2095
  %vm2097 = vweird.f32 %v2091
  %vm2098 = vweird.f32 %v2092
  %vm2099 = vmor %vm2097, %vm2098
  %v2100 = vsel %vm2099, %v2092, %v2096
  %v2101 = vand.u32 2147483647, %v2091
  %vm2102 = vcmp.eq.f32.partialorder %v2101, 8.507059e+37
  %v2103 = vand.u32 %v2091, 2147483648
  %v2104 = vor.u32 1.1754944e-38, %v2103
  %v2105 = vsel %vm2102, %v2104, %v2100
  %v2106 = vmul.f32 1.0, %v2105
  %v2107 = vadd.f32 %v2045, %v2071
  %v2108 = vxor.u32 %v2107, 2147483648
  %v2109 = vmul.f32 %v2108, 1.442695
  %v2110 = vpow.pop %v2109
  %v2111 = vadd.f32 %v2110, 1.0
  %v2112 = vrcp.pop %v2111
  %v2113 = vmul.f32 %v2111, %v2112
  %v2114 = vsub.f32 1.0, %v2113
  %v2115 = vmul.f32 %v2112, %v2114
  %v2116 = vadd.f32 %v2112, %v2115
  %vm2117 = vweird.f32 %v2111
  %vm2118 = vweird.f32 %v2112
  %vm2119 = vmor %vm2117, %vm2118
  %v2120 = vsel %vm2119, %v2112, %v2116
  %v2121 = vand.u32 2147483647, %v2111
  %vm2122 = vcmp.eq.f32.partialorder %v2121, 8.507059e+37
  %v2123 = vand.u32 %v2111, 2147483648
  %v2124 = vor.u32 1.1754944e-38, %v2123
  %v2125 = vsel %vm2122, %v2124, %v2120
  %v2126 = vmul.f32 1.0, %v2125
  %v2127 = vadd.f32 %v2084, %v1361
  %v2128 = vmul.f32 %v2106, %v2127
  %v2129 = vadd.f32 %v2046, %v2128
  %v2130 = vtanh.pop %v2129
  %v2131 = vsub.f32 %v2041, %v2130
  %v2132 = vmul.f32 %v2126, %v2131
  %v2133 = vadd.f32 %v2130, %v2132
  %s2134 = scalar_lea.vmem %s6, %s888
  %2135 = vst [vmem:[%s2134] sm:$0xff] %v2133
  %v2136 = vld [vmem:[%s897] sm:$0xff]
  %v2137 = vld [vmem:[%s897 + $0x8] sm:$0xff]
  %v2138 = vld [vmem:[%s897 + $0x10] sm:$0xff]
  %v2139 = vpack.c.bf16 %v2133, %v2133
  %2140 = vmatpush.bf16.msra.mxu0 %v1745
  %2141 = vmatpush.bf16.msra.mxu0 %v1742
  %2142 = vmatpush.bf16.msra.mxu0 %v1739
  %2143 = vmatpush.bf16.msra.mxu0 %v1736
  %2144 = vmatpush.bf16.msra.mxu0 %v1733
  %2145 = vmatpush.bf16.msra.mxu0 %v1730
  %2146 = vmatpush.bf16.msra.mxu0 %v1727
  %2147 = vmatpush.bf16.msra.mxu0 %v1724
  %2148 = vmatmul.bf16.gmra.mxu0 %v2139
  %v2149 = vpop.f32.mrf.mxu0
  %v2150 = vadd.f32 0.0, %v2149
  %v2151 = vpop.f32.mrf.mxu0
  %2152 = vdwg.mxu0
  %2153 = vmatpush.bf16.msra.mxu0 %v1746
  %2154 = vmatpush.bf16.msra.mxu0 %v1743
  %2155 = vmatpush.bf16.msra.mxu0 %v1740
  %2156 = vmatpush.bf16.msra.mxu0 %v1737
  %2157 = vmatpush.bf16.msra.mxu0 %v1734
  %2158 = vmatpush.bf16.msra.mxu0 %v1731
  %2159 = vmatpush.bf16.msra.mxu0 %v1728
  %2160 = vmatpush.bf16.msra.mxu0 %v1725
  %2161 = vmatmul.bf16.gmra.mxu0 %v2139
  %v2162 = vpop.f32.mrf.mxu0
  %v2163 = vadd.f32 0.0, %v2162
  %v2164 = vpop.f32.mrf.mxu0
  %2165 = vdwg.mxu0
  %2166 = vmatpush.bf16.msra.mxu0 %v1747
  %2167 = vmatpush.bf16.msra.mxu0 %v1744
  %2168 = vmatpush.bf16.msra.mxu0 %v1741
  %2169 = vmatpush.bf16.msra.mxu0 %v1738
  %2170 = vmatpush.bf16.msra.mxu0 %v1735
  %2171 = vmatpush.bf16.msra.mxu0 %v1732
  %2172 = vmatpush.bf16.msra.mxu0 %v1729
  %2173 = vmatpush.bf16.msra.mxu0 %v1726
  %2174 = vmatmul.bf16.gmra.mxu0 %v2139
  %v2175 = vpop.f32.mrf.mxu0
  %v2176 = vadd.f32 0.0, %v2175
  %v2177 = vpop.f32.mrf.mxu0
  %2178 = vdwg.mxu0
  %v2179 = vadd.f32 %v2136, %v2150
  %v2180 = vxor.u32 %v2179, 2147483648
  %v2181 = vmul.f32 %v2180, 1.442695
  %v2182 = vpow.pop %v2181
  %v2183 = vadd.f32 %v2182, 1.0
  %v2184 = vrcp.pop %v2183
  %v2185 = vmul.f32 %v2183, %v2184
  %v2186 = vsub.f32 1.0, %v2185
  %v2187 = vmul.f32 %v2184, %v2186
  %v2188 = vadd.f32 %v2184, %v2187
  %vm2189 = vweird.f32 %v2183
  %vm2190 = vweird.f32 %v2184
  %vm2191 = vmor %vm2189, %vm2190
  %v2192 = vsel %vm2191, %v2184, %v2188
  %v2193 = vand.u32 2147483647, %v2183
  %vm2194 = vcmp.eq.f32.partialorder %v2193, 8.507059e+37
  %v2195 = vand.u32 %v2183, 2147483648
  %v2196 = vor.u32 1.1754944e-38, %v2195
  %v2197 = vsel %vm2194, %v2196, %v2192
  %v2198 = vmul.f32 1.0, %v2197
  %v2199 = vadd.f32 %v2137, %v2163
  %v2200 = vxor.u32 %v2199, 2147483648
  %v2201 = vmul.f32 %v2200, 1.442695
  %v2202 = vpow.pop %v2201
  %v2203 = vadd.f32 %v2202, 1.0
  %v2204 = vrcp.pop %v2203
  %v2205 = vmul.f32 %v2203, %v2204
  %v2206 = vsub.f32 1.0, %v2205
  %v2207 = vmul.f32 %v2204, %v2206
  %v2208 = vadd.f32 %v2204, %v2207
  %vm2209 = vweird.f32 %v2203
  %vm2210 = vweird.f32 %v2204
  %vm2211 = vmor %vm2209, %vm2210
  %v2212 = vsel %vm2211, %v2204, %v2208
  %v2213 = vand.u32 2147483647, %v2203
  %vm2214 = vcmp.eq.f32.partialorder %v2213, 8.507059e+37
  %v2215 = vand.u32 %v2203, 2147483648
  %v2216 = vor.u32 1.1754944e-38, %v2215
  %v2217 = vsel %vm2214, %v2216, %v2212
  %v2218 = vmul.f32 1.0, %v2217
  %v2219 = vadd.f32 %v2176, %v1361
  %v2220 = vmul.f32 %v2198, %v2219
  %v2221 = vadd.f32 %v2138, %v2220
  %v2222 = vtanh.pop %v2221
  %v2223 = vsub.f32 %v2133, %v2222
  %v2224 = vmul.f32 %v2218, %v2223
  %v2225 = vadd.f32 %v2222, %v2224
  %s2226 = scalar_lea.vmem %s6, %s987
  %2227 = vst [vmem:[%s2226] sm:$0xff] %v2225
  %v2228 = vld [vmem:[%s996] sm:$0xff]
  %v2229 = vld [vmem:[%s996 + $0x8] sm:$0xff]
  %v2230 = vld [vmem:[%s996 + $0x10] sm:$0xff]
  %v2231 = vpack.c.bf16 %v2225, %v2225
  %2232 = vmatpush.bf16.msra.mxu0 %v1745
  %2233 = vmatpush.bf16.msra.mxu0 %v1742
  %2234 = vmatpush.bf16.msra.mxu0 %v1739
  %2235 = vmatpush.bf16.msra.mxu0 %v1736
  %2236 = vmatpush.bf16.msra.mxu0 %v1733
  %2237 = vmatpush.bf16.msra.mxu0 %v1730
  %2238 = vmatpush.bf16.msra.mxu0 %v1727
  %2239 = vmatpush.bf16.msra.mxu0 %v1724
  %2240 = vmatmul.bf16.gmra.mxu0 %v2231
  %v2241 = vpop.f32.mrf.mxu0
  %v2242 = vadd.f32 0.0, %v2241
  %v2243 = vpop.f32.mrf.mxu0
  %2244 = vdwg.mxu0
  %2245 = vmatpush.bf16.msra.mxu0 %v1746
  %2246 = vmatpush.bf16.msra.mxu0 %v1743
  %2247 = vmatpush.bf16.msra.mxu0 %v1740
  %2248 = vmatpush.bf16.msra.mxu0 %v1737
  %2249 = vmatpush.bf16.msra.mxu0 %v1734
  %2250 = vmatpush.bf16.msra.mxu0 %v1731
  %2251 = vmatpush.bf16.msra.mxu0 %v1728
  %2252 = vmatpush.bf16.msra.mxu0 %v1725
  %2253 = vmatmul.bf16.gmra.mxu0 %v2231
  %v2254 = vpop.f32.mrf.mxu0
  %v2255 = vadd.f32 0.0, %v2254
  %v2256 = vpop.f32.mrf.mxu0
  %2257 = vdwg.mxu0
  %2258 = vmatpush.bf16.msra.mxu0 %v1747
  %2259 = vmatpush.bf16.msra.mxu0 %v1744
  %2260 = vmatpush.bf16.msra.mxu0 %v1741
  %2261 = vmatpush.bf16.msra.mxu0 %v1738
  %2262 = vmatpush.bf16.msra.mxu0 %v1735
  %2263 = vmatpush.bf16.msra.mxu0 %v1732
  %2264 = vmatpush.bf16.msra.mxu0 %v1729
  %2265 = vmatpush.bf16.msra.mxu0 %v1726
  %2266 = vmatmul.bf16.gmra.mxu0 %v2231
  %v2267 = vpop.f32.mrf.mxu0
  %v2268 = vadd.f32 0.0, %v2267
  %v2269 = vpop.f32.mrf.mxu0
  %2270 = vdwg.mxu0
  %v2271 = vadd.f32 %v2228, %v2242
  %v2272 = vxor.u32 %v2271, 2147483648
  %v2273 = vmul.f32 %v2272, 1.442695
  %v2274 = vpow.pop %v2273
  %v2275 = vadd.f32 %v2274, 1.0
  %v2276 = vrcp.pop %v2275
  %v2277 = vmul.f32 %v2275, %v2276
  %v2278 = vsub.f32 1.0, %v2277
  %v2279 = vmul.f32 %v2276, %v2278
  %v2280 = vadd.f32 %v2276, %v2279
  %vm2281 = vweird.f32 %v2275
  %vm2282 = vweird.f32 %v2276
  %vm2283 = vmor %vm2281, %vm2282
  %v2284 = vsel %vm2283, %v2276, %v2280
  %v2285 = vand.u32 2147483647, %v2275
  %vm2286 = vcmp.eq.f32.partialorder %v2285, 8.507059e+37
  %v2287 = vand.u32 %v2275, 2147483648
  %v2288 = vor.u32 1.1754944e-38, %v2287
  %v2289 = vsel %vm2286, %v2288, %v2284
  %v2290 = vmul.f32 1.0, %v2289
  %v2291 = vadd.f32 %v2229, %v2255
  %v2292 = vxor.u32 %v2291, 2147483648
  %v2293 = vmul.f32 %v2292, 1.442695
  %v2294 = vpow.pop %v2293
  %v2295 = vadd.f32 %v2294, 1.0
  %v2296 = vrcp.pop %v2295
  %v2297 = vmul.f32 %v2295, %v2296
  %v2298 = vsub.f32 1.0, %v2297
  %v2299 = vmul.f32 %v2296, %v2298
  %v2300 = vadd.f32 %v2296, %v2299
  %vm2301 = vweird.f32 %v2295
  %vm2302 = vweird.f32 %v2296
  %vm2303 = vmor %vm2301, %vm2302
  %v2304 = vsel %vm2303, %v2296, %v2300
  %v2305 = vand.u32 2147483647, %v2295
  %vm2306 = vcmp.eq.f32.partialorder %v2305, 8.507059e+37
  %v2307 = vand.u32 %v2295, 2147483648
  %v2308 = vor.u32 1.1754944e-38, %v2307
  %v2309 = vsel %vm2306, %v2308, %v2304
  %v2310 = vmul.f32 1.0, %v2309
  %v2311 = vadd.f32 %v2268, %v1361
  %v2312 = vmul.f32 %v2290, %v2311
  %v2313 = vadd.f32 %v2230, %v2312
  %v2314 = vtanh.pop %v2313
  %v2315 = vsub.f32 %v2225, %v2314
  %v2316 = vmul.f32 %v2310, %v2315
  %v2317 = vadd.f32 %v2314, %v2316
  %s2318 = scalar_lea.vmem %s6, %s1086
  %2319 = vst [vmem:[%s2318] sm:$0xff] %v2317
  %v2320 = vld [vmem:[%s1095] sm:$0xff]
  %v2321 = vld [vmem:[%s1095 + $0x8] sm:$0xff]
  %v2322 = vld [vmem:[%s1095 + $0x10] sm:$0xff]
  %v2323 = vpack.c.bf16 %v2317, %v2317
  %2324 = vmatpush.bf16.msra.mxu0 %v1745
  %2325 = vmatpush.bf16.msra.mxu0 %v1742
  %2326 = vmatpush.bf16.msra.mxu0 %v1739
  %2327 = vmatpush.bf16.msra.mxu0 %v1736
  %2328 = vmatpush.bf16.msra.mxu0 %v1733
  %2329 = vmatpush.bf16.msra.mxu0 %v1730
  %2330 = vmatpush.bf16.msra.mxu0 %v1727
  %2331 = vmatpush.bf16.msra.mxu0 %v1724
  %2332 = vmatmul.bf16.gmra.mxu0 %v2323
  %v2333 = vpop.f32.mrf.mxu0
  %v2334 = vadd.f32 0.0, %v2333
  %v2335 = vpop.f32.mrf.mxu0
  %2336 = vdwg.mxu0
  %2337 = vmatpush.bf16.msra.mxu0 %v1746
  %2338 = vmatpush.bf16.msra.mxu0 %v1743
  %2339 = vmatpush.bf16.msra.mxu0 %v1740
  %2340 = vmatpush.bf16.msra.mxu0 %v1737
  %2341 = vmatpush.bf16.msra.mxu0 %v1734
  %2342 = vmatpush.bf16.msra.mxu0 %v1731
  %2343 = vmatpush.bf16.msra.mxu0 %v1728
  %2344 = vmatpush.bf16.msra.mxu0 %v1725
  %2345 = vmatmul.bf16.gmra.mxu0 %v2323
  %v2346 = vpop.f32.mrf.mxu0
  %v2347 = vadd.f32 0.0, %v2346
  %v2348 = vpop.f32.mrf.mxu0
  %2349 = vdwg.mxu0
  %2350 = vmatpush.bf16.msra.mxu0 %v1747
  %2351 = vmatpush.bf16.msra.mxu0 %v1744
  %2352 = vmatpush.bf16.msra.mxu0 %v1741
  %2353 = vmatpush.bf16.msra.mxu0 %v1738
  %2354 = vmatpush.bf16.msra.mxu0 %v1735
  %2355 = vmatpush.bf16.msra.mxu0 %v1732
  %2356 = vmatpush.bf16.msra.mxu0 %v1729
  %2357 = vmatpush.bf16.msra.mxu0 %v1726
  %2358 = vmatmul.bf16.gmra.mxu0 %v2323
  %v2359 = vpop.f32.mrf.mxu0
  %v2360 = vadd.f32 0.0, %v2359
  %v2361 = vpop.f32.mrf.mxu0
  %2362 = vdwg.mxu0
  %v2363 = vadd.f32 %v2320, %v2334
  %v2364 = vxor.u32 %v2363, 2147483648
  %v2365 = vmul.f32 %v2364, 1.442695
  %v2366 = vpow.pop %v2365
  %v2367 = vadd.f32 %v2366, 1.0
  %v2368 = vrcp.pop %v2367
  %v2369 = vmul.f32 %v2367, %v2368
  %v2370 = vsub.f32 1.0, %v2369
  %v2371 = vmul.f32 %v2368, %v2370
  %v2372 = vadd.f32 %v2368, %v2371
  %vm2373 = vweird.f32 %v2367
  %vm2374 = vweird.f32 %v2368
  %vm2375 = vmor %vm2373, %vm2374
  %v2376 = vsel %vm2375, %v2368, %v2372
  %v2377 = vand.u32 2147483647, %v2367
  %vm2378 = vcmp.eq.f32.partialorder %v2377, 8.507059e+37
  %v2379 = vand.u32 %v2367, 2147483648
  %v2380 = vor.u32 1.1754944e-38, %v2379
  %v2381 = vsel %vm2378, %v2380, %v2376
  %v2382 = vmul.f32 1.0, %v2381
  %v2383 = vadd.f32 %v2321, %v2347
  %v2384 = vxor.u32 %v2383, 2147483648
  %v2385 = vmul.f32 %v2384, 1.442695
  %v2386 = vpow.pop %v2385
  %v2387 = vadd.f32 %v2386, 1.0
  %v2388 = vrcp.pop %v2387
  %v2389 = vmul.f32 %v2387, %v2388
  %v2390 = vsub.f32 1.0, %v2389
  %v2391 = vmul.f32 %v2388, %v2390
  %v2392 = vadd.f32 %v2388, %v2391
  %vm2393 = vweird.f32 %v2387
  %vm2394 = vweird.f32 %v2388
  %vm2395 = vmor %vm2393, %vm2394
  %v2396 = vsel %vm2395, %v2388, %v2392
  %v2397 = vand.u32 2147483647, %v2387
  %vm2398 = vcmp.eq.f32.partialorder %v2397, 8.507059e+37
  %v2399 = vand.u32 %v2387, 2147483648
  %v2400 = vor.u32 1.1754944e-38, %v2399
  %v2401 = vsel %vm2398, %v2400, %v2396
  %v2402 = vmul.f32 1.0, %v2401
  %v2403 = vadd.f32 %v2360, %v1361
  %v2404 = vmul.f32 %v2382, %v2403
  %v2405 = vadd.f32 %v2322, %v2404
  %v2406 = vtanh.pop %v2405
  %v2407 = vsub.f32 %v2317, %v2406
  %v2408 = vmul.f32 %v2402, %v2407
  %v2409 = vadd.f32 %v2406, %v2408
  %s2410 = scalar_lea.vmem %s6, %s1185
  %2411 = vst [vmem:[%s2410] sm:$0xff] %v2409
  %v2412 = vld [vmem:[%s1194] sm:$0xff]
  %v2413 = vld [vmem:[%s1194 + $0x8] sm:$0xff]
  %v2414 = vld [vmem:[%s1194 + $0x10] sm:$0xff]
  %v2415 = vpack.c.bf16 %v2409, %v2409
  %2416 = vmatpush.bf16.msra.mxu0 %v1745
  %2417 = vmatpush.bf16.msra.mxu0 %v1742
  %2418 = vmatpush.bf16.msra.mxu0 %v1739
  %2419 = vmatpush.bf16.msra.mxu0 %v1736
  %2420 = vmatpush.bf16.msra.mxu0 %v1733
  %2421 = vmatpush.bf16.msra.mxu0 %v1730
  %2422 = vmatpush.bf16.msra.mxu0 %v1727
  %2423 = vmatpush.bf16.msra.mxu0 %v1724
  %2424 = vmatmul.bf16.gmra.mxu0 %v2415
  %v2425 = vpop.f32.mrf.mxu0
  %v2426 = vadd.f32 0.0, %v2425
  %v2427 = vpop.f32.mrf.mxu0
  %2428 = vdwg.mxu0
  %2429 = vmatpush.bf16.msra.mxu0 %v1746
  %2430 = vmatpush.bf16.msra.mxu0 %v1743
  %2431 = vmatpush.bf16.msra.mxu0 %v1740
  %2432 = vmatpush.bf16.msra.mxu0 %v1737
  %2433 = vmatpush.bf16.msra.mxu0 %v1734
  %2434 = vmatpush.bf16.msra.mxu0 %v1731
  %2435 = vmatpush.bf16.msra.mxu0 %v1728
  %2436 = vmatpush.bf16.msra.mxu0 %v1725
  %2437 = vmatmul.bf16.gmra.mxu0 %v2415
  %v2438 = vpop.f32.mrf.mxu0
  %v2439 = vadd.f32 0.0, %v2438
  %v2440 = vpop.f32.mrf.mxu0
  %2441 = vdwg.mxu0
  %2442 = vmatpush.bf16.msra.mxu0 %v1747
  %2443 = vmatpush.bf16.msra.mxu0 %v1744
  %2444 = vmatpush.bf16.msra.mxu0 %v1741
  %2445 = vmatpush.bf16.msra.mxu0 %v1738
  %2446 = vmatpush.bf16.msra.mxu0 %v1735
  %2447 = vmatpush.bf16.msra.mxu0 %v1732
  %2448 = vmatpush.bf16.msra.mxu0 %v1729
  %2449 = vmatpush.bf16.msra.mxu0 %v1726
  %2450 = vmatmul.bf16.gmra.mxu0 %v2415
  %v2451 = vpop.f32.mrf.mxu0
  %v2452 = vadd.f32 0.0, %v2451
  %v2453 = vpop.f32.mrf.mxu0
  %2454 = vdwg.mxu0
  %v2455 = vadd.f32 %v2412, %v2426
  %v2456 = vxor.u32 %v2455, 2147483648
  %v2457 = vmul.f32 %v2456, 1.442695
  %v2458 = vpow.pop %v2457
  %v2459 = vadd.f32 %v2458, 1.0
  %v2460 = vrcp.pop %v2459
  %v2461 = vmul.f32 %v2459, %v2460
  %v2462 = vsub.f32 1.0, %v2461
  %v2463 = vmul.f32 %v2460, %v2462
  %v2464 = vadd.f32 %v2460, %v2463
  %vm2465 = vweird.f32 %v2459
  %vm2466 = vweird.f32 %v2460
  %vm2467 = vmor %vm2465, %vm2466
  %v2468 = vsel %vm2467, %v2460, %v2464
  %v2469 = vand.u32 2147483647, %v2459
  %vm2470 = vcmp.eq.f32.partialorder %v2469, 8.507059e+37
  %v2471 = vand.u32 %v2459, 2147483648
  %v2472 = vor.u32 1.1754944e-38, %v2471
  %v2473 = vsel %vm2470, %v2472, %v2468
  %v2474 = vmul.f32 1.0, %v2473
  %v2475 = vadd.f32 %v2413, %v2439
  %v2476 = vxor.u32 %v2475, 2147483648
  %v2477 = vmul.f32 %v2476, 1.442695
  %v2478 = vpow.pop %v2477
  %v2479 = vadd.f32 %v2478, 1.0
  %v2480 = vrcp.pop %v2479
  %v2481 = vmul.f32 %v2479, %v2480
  %v2482 = vsub.f32 1.0, %v2481
  %v2483 = vmul.f32 %v2480, %v2482
  %v2484 = vadd.f32 %v2480, %v2483
  %vm2485 = vweird.f32 %v2479
  %vm2486 = vweird.f32 %v2480
  %vm2487 = vmor %vm2485, %vm2486
  %v2488 = vsel %vm2487, %v2480, %v2484
  %v2489 = vand.u32 2147483647, %v2479
  %vm2490 = vcmp.eq.f32.partialorder %v2489, 8.507059e+37
  %v2491 = vand.u32 %v2479, 2147483648
  %v2492 = vor.u32 1.1754944e-38, %v2491
  %v2493 = vsel %vm2490, %v2492, %v2488
  %v2494 = vmul.f32 1.0, %v2493
  %v2495 = vadd.f32 %v2452, %v1361
  %v2496 = vmul.f32 %v2474, %v2495
  %v2497 = vadd.f32 %v2414, %v2496
  %v2498 = vtanh.pop %v2497
  %v2499 = vsub.f32 %v2409, %v2498
  %v2500 = vmul.f32 %v2494, %v2499
  %v2501 = vadd.f32 %v2498, %v2500
  %s2502 = scalar_lea.vmem %s6, %s1284
  %2503 = vst [vmem:[%s2502] sm:$0xff] %v2501
  // Predicated region
  $region26: #{gru_net_forward.1} parent=0 // pred_check
    _
  $region27: #{gru_net_forward.1} parent=0 // pred_check_branch
    %2505 = sbr.rel (0) target = $region29
  $region28: #{gru_net_forward.1} parent=0 // pred_region
    _
  $region29: #{gru_net_forward.1} parent=0 // pred_fallthru
    _
  // Predicated region
  $region30: #{gru_net_forward.1} parent=0 // pred_check
    _
  $region31: #{gru_net_forward.1} parent=0 // pred_check_branch
    %2507 = sbr.rel (0) target = $region33
  $region32: #{gru_net_forward.1} parent=0 // pred_region
    _
  $region33: #{gru_net_forward.1} parent=0 // pred_fallthru
    _

// kernel: gru_net_forward.1
$region0: #{gru_net_forward.1}
  #allocation0 [shape = 'u32[]', space=smem, size = 0x4, offset = 0x4, fixed_abs, tag = 'smem constant byte address 0x4 - core index']
  #allocation1 [shape = 'u32[72,128]{1,0:T(1,128)}', space=vmem, size = 0x9000, scoped, tag = 'internal scratch']
  #allocation2 [shape = 'bf16[64,128]{1,0:T(8,128)(2,1)}', space=vmem, size = 0x4000, scoped, tag = 'scratch operand']
  #allocation3 [shape = 'f32[64,384]{1,0:T(8,128)}', space=vmem, size = 0x18000, scoped, tag = 'scratch operand']
  #allocation4 [shape = 'f32[8,128]{1,0:T(8,128)}', space=vmem, size = 0x1000, scoped, tag = 'scratch operand']
  %s0 = inlined_call_operand.vmem [shape: bf16[1,64,128], index: 0, kind: input, shape index: {}]
  %s1 = inlined_call_operand.vmem [shape: bf16[128,384], index: 1, kind: input, shape index: {}]
  %s2 = inlined_call_operand.vmem [shape: bf16[1,128,384], index: 2, kind: input, shape index: {}]
  %s3 = inlined_call_operand.vmem [shape: bf16[2,128,384], index: 3, kind: input, shape index: {}]
  %s4 = inlined_call_operand.vmem [shape: f32[2,1,384], index: 4, kind: input, shape index: {}]
  %s5 = inlined_call_operand.vmem [shape: f32[2,1,128], index: 5, kind: input, shape index: {}]
  %s6 = inlined_call_operand.vmem [shape: f32[1,64,128], index: 6, kind: output, shape index: {}]
  %s7 = sld [smem:[#allocation0]]
  $region34: #{gru_net_forward.1} parent=0
    _
  %s9 = ssub.s32 1, %s7
  %s10 = scalar_select 0, %s9, %s7
  // Predicated region
  $region2: #{gru_net_forward.1} parent=0 // pred_check
    _
  $region3: #{gru_net_forward.1} parent=0 // pred_check_branch
    %12 = sbr.rel (0) target = $region5
  $region4: #{gru_net_forward.1} parent=0 // pred_region
    _
  $region5: #{gru_net_forward.1} parent=0 // pred_fallthru
    _
  // Predicated region
  $region6: #{gru_net_forward.1} parent=0 // pred_check
    _
  $region7: #{gru_net_forward.1} parent=0 // pred_check_branch
    %14 = sbr.rel (0) target = $region9
  $region8: #{gru_net_forward.1} parent=0 // pred_region
    _
  $region9: #{gru_net_forward.1} parent=0 // pred_fallthru
    _
  // Predicated region
  $region10: #{gru_net_forward.1} parent=0 // pred_check
    _
  $region11: #{gru_net_forward.1} parent=0 // pred_check_branch
    %16 = sbr.rel (0) target = $region13
  $region12: #{gru_net_forward.1} parent=0 // pred_region
    _
  $region13: #{gru_net_forward.1} parent=0 // pred_fallthru
    _
  // Predicated region
  $region14: #{gru_net_forward.1} parent=0 // pred_check
    _
  $region15: #{gru_net_forward.1} parent=0 // pred_check_branch
    %18 = sbr.rel (0) target = $region17
  $region16: #{gru_net_forward.1} parent=0 // pred_region
    _
  $region17: #{gru_net_forward.1} parent=0 // pred_fallthru
    _
  // Predicated region
  $region18: #{gru_net_forward.1} parent=0 // pred_check
    _
  $region19: #{gru_net_forward.1} parent=0 // pred_check_branch
    %20 = sbr.rel (0) target = $region21
  $region20: #{gru_net_forward.1} parent=0 // pred_region
    _
  $region21: #{gru_net_forward.1} parent=0 // pred_fallthru
    _
  // Predicated region
  $region22: #{gru_net_forward.1} parent=0 // pred_check
    _
  $region23: #{gru_net_forward.1} parent=0 // pred_check_branch
    %22 = sbr.rel (0) target = $region25
  $region24: #{gru_net_forward.1} parent=0 // pred_region
    _
  $region25: #{gru_net_forward.1} parent=0 // pred_fallthru
    _
  %v24 = vld [vmem:[%s1] sm:$0xff]
  %v25 = vld [vmem:[%s1 + $0x8] sm:$0xf]
  %v26 = vld [vmem:[%s1 + $0xc] sm:$0xff]
  %v27 = vld [vmem:[%s1 + $0x14] sm:$0xf]
  %v28 = vld [vmem:[%s1 + $0x18] sm:$0xff]
  %v29 = vld [vmem:[%s1 + $0x20] sm:$0xf]
  %v30 = vld [vmem:[%s1 + $0x24] sm:$0xff]
  %v31 = vld [vmem:[%s1 + $0x2c] sm:$0xf]
  %v32 = vld [vmem:[%s1 + $0x30] sm:$0xff]
  %v33 = vld [vmem:[%s1 + $0x38] sm:$0xf]
  %v34 = vld [vmem:[%s1 + $0x3c] sm:$0xff]
  %v35 = vld [vmem:[%s1 + $0x44] sm:$0xf]
  %v36 = vld [vmem:[%s1 + $0x48] sm:$0xff]
  %v37 = vld [vmem:[%s1 + $0x50] sm:$0xf]
  %v38 = vld [vmem:[%s1 + $0x54] sm:$0xff]
  %v39 = vld [vmem:[%s1 + $0x5c] sm:$0xf]
  %v40 = vld [vmem:[%s1 + $0x60] sm:$0xff]
  %v41 = vld [vmem:[%s1 + $0x68] sm:$0xf]
  %v42 = vld [vmem:[%s1 + $0x6c] sm:$0xff]
  %v43 = vld [vmem:[%s1 + $0x74] sm:$0xf]
  %v44 = vld [vmem:[%s1 + $0x78] sm:$0xff]
  %v45 = vld [vmem:[%s1 + $0x80] sm:$0xf]
  %v46 = vld [vmem:[%s1 + $0x84] sm:$0xff]
  %v47 = vld [vmem:[%s1 + $0x8c] sm:$0xf]
  %v48 = vld [vmem:[%s1 + $0x90] sm:$0xff]
  %v49 = vld [vmem:[%s1 + $0x98] sm:$0xf]
  %v50 = vld [vmem:[%s1 + $0x9c] sm:$0xff]
  %v51 = vld [vmem:[%s1 + $0xa4] sm:$0xf]
  %v52 = vld [vmem:[%s1 + $0xa8] sm:$0xff]
  %v53 = vld [vmem:[%s1 + $0xb0] sm:$0xf]
  %v54 = vld [vmem:[%s1 + $0xb4] sm:$0xff]
  %v55 = vld [vmem:[%s1 + $0xbc] sm:$0xf]
  %v56 = vld [vmem:[%s3] sm:$0xff]
  %v57 = vld [vmem:[%s3 + $0x8] sm:$0xf]
  %v58 = vld [vmem:[%s3 + $0xc] sm:$0xff]
  %v59 = vld [vmem:[%s3 + $0x14] sm:$0xf]
  %v60 = vld [vmem:[%s3 + $0x18] sm:$0xff]
  %v61 = vld [vmem:[%s3 + $0x20] sm:$0xf]
  %v62 = vld [vmem:[%s3 + $0x24] sm:$0xff]
  %v63 = vld [vmem:[%s3 + $0x2c] sm:$0xf]
  %v64 = vld [vmem:[%s3 + $0x30] sm:$0xff]
  %v65 = vld [vmem:[%s3 + $0x38] sm:$0xf]
  %v66 = vld [vmem:[%s3 + $0x3c] sm:$0xff]
  %v67 = vld [vmem:[%s3 + $0x44] sm:$0xf]
  %v68 = vld [vmem:[%s3 + $0x48] sm:$0xff]
  %v69 = vld [vmem:[%s3 + $0x50] sm:$0xf]
  %v70 = vld [vmem:[%s3 + $0x54] sm:$0xff]
  %v71 = vld [vmem:[%s3 + $0x5c] sm:$0xf]
  %v72 = vld [vmem:[%s3 + $0x60] sm:$0xff]
  %v73 = vld [vmem:[%s3 + $0x68] sm:$0xf]
  %v74 = vld [vmem:[%s3 + $0x6c] sm:$0xff]
  %v75 = vld [vmem:[%s3 + $0x74] sm:$0xf]
  %v76 = vld [vmem:[%s3 + $0x78] sm:$0xff]
  %v77 = vld [vmem:[%s3 + $0x80] sm:$0xf]
  %v78 = vld [vmem:[%s3 + $0x84] sm:$0xff]
  %v79 = vld [vmem:[%s3 + $0x8c] sm:$0xf]
  %v80 = vld [vmem:[%s3 + $0x90] sm:$0xff]
  %v81 = vld [vmem:[%s3 + $0x98] sm:$0xf]
  %v82 = vld [vmem:[%s3 + $0x9c] sm:$0xff]
  %v83 = vld [vmem:[%s3 + $0xa4] sm:$0xf]
  %v84 = vld [vmem:[%s3 + $0xa8] sm:$0xff]
  %v85 = vld [vmem:[%s3 + $0xb0] sm:$0xf]
  %v86 = vld [vmem:[%s3 + $0xb4] sm:$0xff]
  %v87 = vld [vmem:[%s3 + $0xbc] sm:$0xf]
  %v88 = vld [vmem:[%s4] sm:$0x7]
  %v89 = vld [vmem:[%s5] sm:$0x1]
  %v91 = vperm.slane %v89, 0
  %v93 = vld [vmem:[%s0] sm:$0xf]
  %v94 = vld [vmem:[%s0 + $0x4] sm:$0xf]
  %v95 = vld [vmem:[%s0 + $0x8] sm:$0xf]
  %v96 = vld [vmem:[%s0 + $0xc] sm:$0xf]
  %v97 = vld [vmem:[%s0 + $0x10] sm:$0xf]
  %v98 = vld [vmem:[%s0 + $0x14] sm:$0xf]
  %v99 = vld [vmem:[%s0 + $0x18] sm:$0xf]
  %v100 = vld [vmem:[%s0 + $0x1c] sm:$0xf]
  %v102 = vperm.slane %v88, 0
  %v103 = vperm.slane %v88, 1
  %v104 = vperm.slane %v88, 2
  %v116 = vunpack.c.l.b16 %v93
  %v117 = vunpack.c.l.b16 %v94
  %v118 = vunpack.c.l.b16 %v95
  %v119 = vunpack.c.l.b16 %v96
  %v120 = vunpack.c.l.b16 %v97
  %v121 = vunpack.c.l.b16 %v98
  %v122 = vunpack.c.l.b16 %v99
  %v123 = vunpack.c.l.b16 %v100
  %v124 = vpack.c.b16 %v117, %v116
  %v125 = vpack.c.b16 %v119, %v118
  %v126 = vpack.c.b16 %v121, %v120
  %v127 = vpack.c.b16 %v123, %v122
  %v164 = vunpack.c.l.b16 %v24
  %v165 = vunpack.c.h.b16 %v24
  %v166 = vunpack.c.l.b16 %v25
  %v167 = vunpack.c.l.b16 %v26
  %v168 = vunpack.c.h.b16 %v26
  %v169 = vunpack.c.l.b16 %v27
  %v170 = vunpack.c.l.b16 %v28
  %v171 = vunpack.c.h.b16 %v28
  %v172 = vunpack.c.l.b16 %v29
  %v173 = vunpack.c.l.b16 %v30
  %v174 = vunpack.c.h.b16 %v30
  %v175 = vunpack.c.l.b16 %v31
  %v176 = vunpack.c.l.b16 %v32
  %v177 = vunpack.c.h.b16 %v32
  %v178 = vunpack.c.l.b16 %v33
  %v179 = vunpack.c.l.b16 %v34
  %v180 = vunpack.c.h.b16 %v34
  %v181 = vunpack.c.l.b16 %v35
  %v182 = vunpack.c.l.b16 %v36
  %v183 = vunpack.c.h.b16 %v36
  %v184 = vunpack.c.l.b16 %v37
  %v185 = vunpack.c.l.b16 %v38
  %v186 = vunpack.c.h.b16 %v38
  %v187 = vunpack.c.l.b16 %v39
  %v188 = vunpack.c.l.b16 %v40
  %v189 = vunpack.c.h.b16 %v40
  %v190 = vunpack.c.l.b16 %v41
  %v191 = vunpack.c.l.b16 %v42
  %v192 = vunpack.c.h.b16 %v42
  %v193 = vunpack.c.l.b16 %v43
  %v194 = vunpack.c.l.b16 %v44
  %v195 = vunpack.c.h.b16 %v44
  %v196 = vunpack.c.l.b16 %v45
  %v197 = vunpack.c.l.b16 %v46
  %v198 = vunpack.c.h.b16 %v46
  %v199 = vunpack.c.l.b16 %v47
  %v200 = vunpack.c.l.b16 %v48
  %v201 = vunpack.c.h.b16 %v48
  %v202 = vunpack.c.l.b16 %v49
  %v203 = vunpack.c.l.b16 %v50
  %v204 = vunpack.c.h.b16 %v50
  %v205 = vunpack.c.l.b16 %v51
  %v206 = vunpack.c.l.b16 %v52
  %v207 = vunpack.c.h.b16 %v52
  %v208 = vunpack.c.l.b16 %v53
  %v209 = vunpack.c.l.b16 %v54
  %v210 = vunpack.c.h.b16 %v54
  %v211 = vunpack.c.l.b16 %v55
  %v212 = vpack.c.b16 %v167, %v164
  %v213 = vpack.c.b16 %v168, %v165
  %v214 = vpack.c.b16 %v169, %v166
  %v215 = vpack.c.b16 %v173, %v170
  %v216 = vpack.c.b16 %v174, %v171
  %v217 = vpack.c.b16 %v175, %v172
  %v218 = vpack.c.b16 %v179, %v176
  %v219 = vpack.c.b16 %v180, %v177
  %v220 = vpack.c.b16 %v181, %v178
  %v221 = vpack.c.b16 %v185, %v182
  %v222 = vpack.c.b16 %v186, %v183
  %v223 = vpack.c.b16 %v187, %v184
  %v224 = vpack.c.b16 %v191, %v188
  %v225 = vpack.c.b16 %v192, %v189
  %v226 = vpack.c.b16 %v193, %v190
  %v227 = vpack.c.b16 %v197, %v194
  %v228 = vpack.c.b16 %v198, %v195
  %v229 = vpack.c.b16 %v199, %v196
  %v230 = vpack.c.b16 %v203, %v200
  %v231 = vpack.c.b16 %v204, %v201
  %v232 = vpack.c.b16 %v205, %v202
  %v233 = vpack.c.b16 %v209, %v206
  %v234 = vpack.c.b16 %v210, %v207
  %v235 = vpack.c.b16 %v211, %v208
  %260 = vmatpush.bf16.msra.mxu0 %v233
  %261 = vmatpush.bf16.msra.mxu0 %v230
  %262 = vmatpush.bf16.msra.mxu0 %v227
  %263 = vmatpush.bf16.msra.mxu0 %v224
  %264 = vmatpush.bf16.msra.mxu0 %v221
  %265 = vmatpush.bf16.msra.mxu0 %v218
  %266 = vmatpush.bf16.msra.mxu0 %v215
  %267 = vmatpush.bf16.msra.mxu0 %v212
  %268 = vmatmul.bf16.gmra.mxu0 %v124
  %v269 = vpop.f32.mrf.mxu0
  %v270 = vadd.f32 %v102, %v269
  %v271 = vpop.f32.mrf.mxu0
  %v272 = vadd.f32 %v102, %v271
  %273 = vmatmul.bf16.gmra.mxu0 %v125
  %v274 = vpop.f32.mrf.mxu0
  %v275 = vadd.f32 %v102, %v274
  %v276 = vpop.f32.mrf.mxu0
  %v277 = vadd.f32 %v102, %v276
  %278 = vmatmul.bf16.gmra.mxu0 %v126
  %v279 = vpop.f32.mrf.mxu0
  %v280 = vadd.f32 %v102, %v279
  %v281 = vpop.f32.mrf.mxu0
  %v282 = vadd.f32 %v102, %v281
  %283 = vmatmul.bf16.gmra.mxu0 %v127
  %v284 = vpop.f32.mrf.mxu0
  %v285 = vadd.f32 %v102, %v284
  %v286 = vpop.f32.mrf.mxu0
  %v287 = vadd.f32 %v102, %v286
  %288 = vdwg.mxu0
  %289 = vmatpush.bf16.msra.mxu0 %v234
  %290 = vmatpush.bf16.msra.mxu0 %v231
  %291 = vmatpush.bf16.msra.mxu0 %v228
  %292 = vmatpush.bf16.msra.mxu0 %v225
  %293 = vmatpush.bf16.msra.mxu0 %v222
  %294 = vmatpush.bf16.msra.mxu0 %v219
  %295 = vmatpush.bf16.msra.mxu0 %v216
  %296 = vmatpush.bf16.msra.mxu0 %v213
  %297 = vmatmul.bf16.gmra.mxu0 %v124
  %v298 = vpop.f32.mrf.mxu0
  %v299 = vadd.f32 %v103, %v298
  %v300 = vpop.f32.mrf.mxu0
  %v301 = vadd.f32 %v103, %v300
  %302 = vmatmul.bf16.gmra.mxu0 %v125
  %v303 = vpop.f32.mrf.mxu0
  %v304 = vadd.f32 %v103, %v303
  %v305 = vpop.f32.mrf.mxu0
  %v306 = vadd.f32 %v103, %v305
  %307 = vmatmul.bf16.gmra.mxu0 %v126
  %v308 = vpop.f32.mrf.mxu0
  %v309 = vadd.f32 %v103, %v308
  %v310 = vpop.f32.mrf.mxu0
  %v311 = vadd.f32 %v103, %v310
  %312 = vmatmul.bf16.gmra.mxu0 %v127
  %v313 = vpop.f32.mrf.mxu0
  %v314 = vadd.f32 %v103, %v313
  %v315 = vpop.f32.mrf.mxu0
  %v316 = vadd.f32 %v103, %v315
  %317 = vdwg.mxu0
  %318 = vmatpush.bf16.msra.mxu0 %v235
  %319 = vmatpush.bf16.msra.mxu0 %v232
  %320 = vmatpush.bf16.msra.mxu0 %v229
  %321 = vmatpush.bf16.msra.mxu0 %v226
  %322 = vmatpush.bf16.msra.mxu0 %v223
  %323 = vmatpush.bf16.msra.mxu0 %v220
  %324 = vmatpush.bf16.msra.mxu0 %v217
  %325 = vmatpush.bf16.msra.mxu0 %v214
  %326 = vmatmul.bf16.gmra.mxu0 %v124
  %v327 = vpop.f32.mrf.mxu0
  %v328 = vadd.f32 %v104, %v327
  %v329 = vpop.f32.mrf.mxu0
  %v330 = vadd.f32 %v104, %v329
  %331 = vmatmul.bf16.gmra.mxu0 %v125
  %v332 = vpop.f32.mrf.mxu0
  %v333 = vadd.f32 %v104, %v332
  %v334 = vpop.f32.mrf.mxu0
  %v335 = vadd.f32 %v104, %v334
  %336 = vmatmul.bf16.gmra.mxu0 %v126
  %v337 = vpop.f32.mrf.mxu0
  %v338 = vadd.f32 %v104, %v337
  %v339 = vpop.f32.mrf.mxu0
  %v340 = vadd.f32 %v104, %v339
  %341 = vmatmul.bf16.gmra.mxu0 %v127
  %v342 = vpop.f32.mrf.mxu0
  %v343 = vadd.f32 %v104, %v342
  %v344 = vpop.f32.mrf.mxu0
  %v345 = vadd.f32 %v104, %v344
  %346 = vdwg.mxu0
  %347 = vst [vmem:[#allocation3] sm:$0xff] %v270
  %348 = vst [vmem:[#allocation3 + $0x8] sm:$0xff] %v299
  %349 = vst [vmem:[#allocation3 + $0x10] sm:$0xff] %v328
  %350 = vst [vmem:[#allocation3 + $0x18] sm:$0xff] %v272
  %351 = vst [vmem:[#allocation3 + $0x20] sm:$0xff] %v301
  %352 = vst [vmem:[#allocation3 + $0x28] sm:$0xff] %v330
  %353 = vst [vmem:[#allocation3 + $0x30] sm:$0xff] %v275
  %354 = vst [vmem:[#allocation3 + $0x38] sm:$0xff] %v304
  %355 = vst [vmem:[#allocation3 + $0x40] sm:$0xff] %v333
  %356 = vst [vmem:[#allocation3 + $0x48] sm:$0xff] %v277
  %357 = vst [vmem:[#allocation3 + $0x50] sm:$0xff] %v306
  %358 = vst [vmem:[#allocation3 + $0x58] sm:$0xff] %v335
  %359 = vst [vmem:[#allocation3 + $0x60] sm:$0xff] %v280
  %360 = vst [vmem:[#allocation3 + $0x68] sm:$0xff] %v309
  %361 = vst [vmem:[#allocation3 + $0x70] sm:$0xff] %v338
  %362 = vst [vmem:[#allocation3 + $0x78] sm:$0xff] %v282
  %363 = vst [vmem:[#allocation3 + $0x80] sm:$0xff] %v311
  %364 = vst [vmem:[#allocation3 + $0x88] sm:$0xff] %v340
  %365 = vst [vmem:[#allocation3 + $0x90] sm:$0xff] %v285
  %366 = vst [vmem:[#allocation3 + $0x98] sm:$0xff] %v314
  %367 = vst [vmem:[#allocation3 + $0xa0] sm:$0xff] %v343
  %368 = vst [vmem:[#allocation3 + $0xa8] sm:$0xff] %v287
  %369 = vst [vmem:[#allocation3 + $0xb0] sm:$0xff] %v316
  %370 = vst [vmem:[#allocation3 + $0xb8] sm:$0xff] %v345
  %s371 = smul.u32 0, 3
  %s372 = smul.addr %s371, 8
  %s373 = scalar_lea.vmem [#allocation3], %s372
  %v374 = vld [vmem:[%s373] sm:$0xff]
  %v375 = vld [vmem:[%s373 + $0x8] sm:$0xff]
  %v376 = vld [vmem:[%s373 + $0x10] sm:$0xff]
  %v409 = vunpack.c.l.b16 %v56
  %v410 = vunpack.c.h.b16 %v56
  %v411 = vunpack.c.l.b16 %v57
  %v412 = vunpack.c.l.b16 %v58
  %v413 = vunpack.c.h.b16 %v58
  %v414 = vunpack.c.l.b16 %v59
  %v415 = vunpack.c.l.b16 %v60
  %v416 = vunpack.c.h.b16 %v60
  %v417 = vunpack.c.l.b16 %v61
  %v418 = vunpack.c.l.b16 %v62
  %v419 = vunpack.c.h.b16 %v62
  %v420 = vunpack.c.l.b16 %v63
  %v421 = vunpack.c.l.b16 %v64
  %v422 = vunpack.c.h.b16 %v64
  %v423 = vunpack.c.l.b16 %v65
  %v424 = vunpack.c.l.b16 %v66
  %v425 = vunpack.c.h.b16 %v66
  %v426 = vunpack.c.l.b16 %v67
  %v427 = vunpack.c.l.b16 %v68
  %v428 = vunpack.c.h.b16 %v68
  %v429 = vunpack.c.l.b16 %v69
  %v430 = vunpack.c.l.b16 %v70
  %v431 = vunpack.c.h.b16 %v70
  %v432 = vunpack.c.l.b16 %v71
  %v433 = vunpack.c.l.b16 %v72
  %v434 = vunpack.c.h.b16 %v72
  %v435 = vunpack.c.l.b16 %v73
  %v436 = vunpack.c.l.b16 %v74
  %v437 = vunpack.c.h.b16 %v74
  %v438 = vunpack.c.l.b16 %v75
  %v439 = vunpack.c.l.b16 %v76
  %v440 = vunpack.c.h.b16 %v76
  %v441 = vunpack.c.l.b16 %v77
  %v442 = vunpack.c.l.b16 %v78
  %v443 = vunpack.c.h.b16 %v78
  %v444 = vunpack.c.l.b16 %v79
  %v445 = vunpack.c.l.b16 %v80
  %v446 = vunpack.c.h.b16 %v80
  %v447 = vunpack.c.l.b16 %v81
  %v448 = vunpack.c.l.b16 %v82
  %v449 = vunpack.c.h.b16 %v82
  %v450 = vunpack.c.l.b16 %v83
  %v451 = vunpack.c.l.b16 %v84
  %v452 = vunpack.c.h.b16 %v84
  %v453 = vunpack.c.l.b16 %v85
  %v454 = vunpack.c.l.b16 %v86
  %v455 = vunpack.c.h.b16 %v86
  %v456 = vunpack.c.l.b16 %v87
  %v457 = vpack.c.b16 %v412, %v409
  %v458 = vpack.c.b16 %v413, %v410
  %v459 = vpack.c.b16 %v414, %v411
  %v460 = vpack.c.b16 %v418, %v415
  %v461 = vpack.c.b16 %v419, %v416
  %v462 = vpack.c.b16 %v420, %v417
  %v463 = vpack.c.b16 %v424, %v421
  %v464 = vpack.c.b16 %v425, %v422
  %v465 = vpack.c.b16 %v426, %v423
  %v466 = vpack.c.b16 %v430, %v427
  %v467 = vpack.c.b16 %v431, %v428
  %v468 = vpack.c.b16 %v432, %v429
  %v469 = vpack.c.b16 %v436, %v433
  %v470 = vpack.c.b16 %v437, %v434
  %v471 = vpack.c.b16 %v438, %v435
  %v472 = vpack.c.b16 %v442, %v439
  %v473 = vpack.c.b16 %v443, %v440
  %v474 = vpack.c.b16 %v444, %v441
  %v475 = vpack.c.b16 %v448, %v445
  %v476 = vpack.c.b16 %v449, %v446
  %v477 = vpack.c.b16 %v450, %v447
  %v478 = vpack.c.b16 %v454, %v451
  %v479 = vpack.c.b16 %v455, %v452
  %v480 = vpack.c.b16 %v456, %v453
  %505 = vmatpush.bf16.msra.mxu0 %v478
  %506 = vmatpush.bf16.msra.mxu0 %v475
  %507 = vmatpush.bf16.msra.mxu0 %v472
  %508 = vmatpush.bf16.msra.mxu0 %v469
  %509 = vmatpush.bf16.msra.mxu0 %v466
  %510 = vmatpush.bf16.msra.mxu0 %v463
  %511 = vmatpush.bf16.msra.mxu0 %v460
  %512 = vmatpush.bf16.msra.mxu0 %v457
  %513 = vmatmul.bf16.gmra.mxu0 0
  %v514 = vpop.f32.mrf.mxu0
  %v515 = vadd.f32 0.0, %v514
  %v516 = vpop.f32.mrf.mxu0
  %517 = vdwg.mxu0
  %518 = vmatpush.bf16.msra.mxu0 %v479
  %519 = vmatpush.bf16.msra.mxu0 %v476
  %520 = vmatpush.bf16.msra.mxu0 %v473
  %521 = vmatpush.bf16.msra.mxu0 %v470
  %522 = vmatpush.bf16.msra.mxu0 %v467
  %523 = vmatpush.bf16.msra.mxu0 %v464
  %524 = vmatpush.bf16.msra.mxu0 %v461
  %525 = vmatpush.bf16.msra.mxu0 %v458
  %526 = vmatmul.bf16.gmra.mxu0 0
  %v527 = vpop.f32.mrf.mxu0
  %v528 = vadd.f32 0.0, %v527
  %v529 = vpop.f32.mrf.mxu0
  %530 = vdwg.mxu0
  %531 = vmatpush.bf16.msra.mxu0 %v480
  %532 = vmatpush.bf16.msra.mxu0 %v477
  %533 = vmatpush.bf16.msra.mxu0 %v474
  %534 = vmatpush.bf16.msra.mxu0 %v471
  %535 = vmatpush.bf16.msra.mxu0 %v468
  %536 = vmatpush.bf16.msra.mxu0 %v465
  %537 = vmatpush.bf16.msra.mxu0 %v462
  %538 = vmatpush.bf16.msra.mxu0 %v459
  %539 = vmatmul.bf16.gmra.mxu0 0
  %v540 = vpop.f32.mrf.mxu0
  %v541 = vadd.f32 0.0, %v540
  %v542 = vpop.f32.mrf.mxu0
  %543 = vdwg.mxu0
  %v544 = vadd.f32 %v374, %v515
  %v545 = vxor.u32 %v544, 2147483648
  %v546 = vmul.f32 %v545, 1.442695
  %v547 = vpow.pop %v546
  %v548 = vadd.f32 %v547, 1.0
  %v549 = vrcp.pop %v548
  %v550 = vmul.f32 %v548, %v549
  %v551 = vsub.f32 1.0, %v550
  %v552 = vmul.f32 %v549, %v551
  %v553 = vadd.f32 %v549, %v552
  %vm554 = vweird.f32 %v548
  %vm555 = vweird.f32 %v549
  %vm556 = vmor %vm554, %vm555
  %v557 = vsel %vm556, %v549, %v553
  %v558 = vand.u32 2147483647, %v548
  %vm559 = vcmp.eq.f32.partialorder %v558, 8.507059e+37
  %v560 = vand.u32 %v548, 2147483648
  %v561 = vor.u32 1.1754944e-38, %v560
  %v562 = vsel %vm559, %v561, %v557
  %v563 = vmul.f32 1.0, %v562
  %v564 = vadd.f32 %v375, %v528
  %v565 = vxor.u32 %v564, 2147483648
  %v566 = vmul.f32 %v565, 1.442695
  %v567 = vpow.pop %v566
  %v568 = vadd.f32 %v567, 1.0
  %v569 = vrcp.pop %v568
  %v570 = vmul.f32 %v568, %v569
  %v571 = vsub.f32 1.0, %v570
  %v572 = vmul.f32 %v569, %v571
  %v573 = vadd.f32 %v569, %v572
  %vm574 = vweird.f32 %v568
  %vm575 = vweird.f32 %v569
  %vm576 = vmor %vm574, %vm575
  %v577 = vsel %vm576, %v569, %v573
  %v578 = vand.u32 2147483647, %v568
  %vm579 = vcmp.eq.f32.partialorder %v578, 8.507059e+37
  %v580 = vand.u32 %v568, 2147483648
  %v581 = vor.u32 1.1754944e-38, %v580
  %v582 = vsel %vm579, %v581, %v577
  %v583 = vmul.f32 1.0, %v582
  %v584 = vadd.f32 %v541, %v91
  %v585 = vmul.f32 %v563, %v584
  %v586 = vadd.f32 %v376, %v585
  %v587 = vtanh.pop %v586
  %v588 = vsub.f32 0.0, %v587
  %v589 = vmul.f32 %v583, %v588
  %v590 = vadd.f32 %v587, %v589
  %s591 = sadd.s32 0, 0
  %v592 = vpack.c.bf16 %v590, %v590
  %s593 = sshra.s32 %s591, 3
  %s594 = sand.u32 %s591, 7
  %s595 = smul.addr %s593, 4
  %s596 = scalar_lea.vmem [#allocation2], %s595
  %597 = vst [vmem:[%s596] sm:$0xf] %v592
  %s598 = smul.u32 1, 3
  %s599 = smul.addr %s598, 8
  %s600 = scalar_lea.vmem [#allocation3], %s599
  %v601 = vld [vmem:[%s600] sm:$0xff]
  %v602 = vld [vmem:[%s600 + $0x8] sm:$0xff]
  %v603 = vld [vmem:[%s600 + $0x10] sm:$0xff]
  %604 = vmatpush.bf16.msra.mxu0 %v478
  %605 = vmatpush.bf16.msra.mxu0 %v475
  %606 = vmatpush.bf16.msra.mxu0 %v472
  %607 = vmatpush.bf16.msra.mxu0 %v469
  %608 = vmatpush.bf16.msra.mxu0 %v466
  %609 = vmatpush.bf16.msra.mxu0 %v463
  %610 = vmatpush.bf16.msra.mxu0 %v460
  %611 = vmatpush.bf16.msra.mxu0 %v457
  %612 = vmatmul.bf16.gmra.mxu0 %v592
  %v613 = vpop.f32.mrf.mxu0
  %v614 = vadd.f32 0.0, %v613
  %v615 = vpop.f32.mrf.mxu0
  %616 = vdwg.mxu0
  %617 = vmatpush.bf16.msra.mxu0 %v479
  %618 = vmatpush.bf16.msra.mxu0 %v476
  %619 = vmatpush.bf16.msra.mxu0 %v473
  %620 = vmatpush.bf16.msra.mxu0 %v470
  %621 = vmatpush.bf16.msra.mxu0 %v467
  %622 = vmatpush.bf16.msra.mxu0 %v464
  %623 = vmatpush.bf16.msra.mxu0 %v461
  %624 = vmatpush.bf16.msra.mxu0 %v458
  %625 = vmatmul.bf16.gmra.mxu0 %v592
  %v626 = vpop.f32.mrf.mxu0
  %v627 = vadd.f32 0.0, %v626
  %v628 = vpop.f32.mrf.mxu0
  %629 = vdwg.mxu0
  %630 = vmatpush.bf16.msra.mxu0 %v480
  %631 = vmatpush.bf16.msra.mxu0 %v477
  %632 = vmatpush.bf16.msra.mxu0 %v474
  %633 = vmatpush.bf16.msra.mxu0 %v471
  %634 = vmatpush.bf16.msra.mxu0 %v468
  %635 = vmatpush.bf16.msra.mxu0 %v465
  %636 = vmatpush.bf16.msra.mxu0 %v462
  %637 = vmatpush.bf16.msra.mxu0 %v459
  %638 = vmatmul.bf16.gmra.mxu0 %v592
  %v639 = vpop.f32.mrf.mxu0
  %v640 = vadd.f32 0.0, %v639
  %v641 = vpop.f32.mrf.mxu0
  %642 = vdwg.mxu0
  %v643 = vadd.f32 %v601, %v614
  %v644 = vxor.u32 %v643, 2147483648
  %v645 = vmul.f32 %v644, 1.442695
  %v646 = vpow.pop %v645
  %v647 = vadd.f32 %v646, 1.0
  %v648 = vrcp.pop %v647
  %v649 = vmul.f32 %v647, %v648
  %v650 = vsub.f32 1.0, %v649
  %v651 = vmul.f32 %v648, %v650
  %v652 = vadd.f32 %v648, %v651
  %vm653 = vweird.f32 %v647
  %vm654 = vweird.f32 %v648
  %vm655 = vmor %vm653, %vm654
  %v656 = vsel %vm655, %v648, %v652
  %v657 = vand.u32 2147483647, %v647
  %vm658 = vcmp.eq.f32.partialorder %v657, 8.507059e+37
  %v659 = vand.u32 %v647, 2147483648
  %v660 = vor.u32 1.1754944e-38, %v659
  %v661 = vsel %vm658, %v660, %v656
  %v662 = vmul.f32 1.0, %v661
  %v663 = vadd.f32 %v602, %v627
  %v664 = vxor.u32 %v663, 2147483648
  %v665 = vmul.f32 %v664, 1.442695
  %v666 = vpow.pop %v665
  %v667 = vadd.f32 %v666, 1.0
  %v668 = vrcp.pop %v667
  %v669 = vmul.f32 %v667, %v668
  %v670 = vsub.f32 1.0, %v669
  %v671 = vmul.f32 %v668, %v670
  %v672 = vadd.f32 %v668, %v671
  %vm673 = vweird.f32 %v667
  %vm674 = vweird.f32 %v668
  %vm675 = vmor %vm673, %vm674
  %v676 = vsel %vm675, %v668, %v672
  %v677 = vand.u32 2147483647, %v667
  %vm678 = vcmp.eq.f32.partialorder %v677, 8.507059e+37
  %v679 = vand.u32 %v667, 2147483648
  %v680 = vor.u32 1.1754944e-38, %v679
  %v681 = vsel %vm678, %v680, %v676
  %v682 = vmul.f32 1.0, %v681
  %v683 = vadd.f32 %v640, %v91
  %v684 = vmul.f32 %v662, %v683
  %v685 = vadd.f32 %v603, %v684
  %v686 = vtanh.pop %v685
  %v687 = vsub.f32 %v590, %v686
  %v688 = vmul.f32 %v682, %v687
  %v689 = vadd.f32 %v686, %v688
  %s690 = sadd.s32 0, 8
  %v691 = vpack.c.bf16 %v689, %v689
  %s692 = sshra.s32 %s690, 3
  %s693 = sand.u32 %s690, 7
  %s694 = smul.addr %s692, 4
  %s695 = scalar_lea.vmem [#allocation2], %s694
  %696 = vst [vmem:[%s695] sm:$0xf] %v691
  %s697 = smul.u32 2, 3
  %s698 = smul.addr %s697, 8
  %s699 = scalar_lea.vmem [#allocation3], %s698
  %v700 = vld [vmem:[%s699] sm:$0xff]
  %v701 = vld [vmem:[%s699 + $0x8] sm:$0xff]
  %v702 = vld [vmem:[%s699 + $0x10] sm:$0xff]
  %703 = vmatpush.bf16.msra.mxu0 %v478
  %704 = vmatpush.bf16.msra.mxu0 %v475
  %705 = vmatpush.bf16.msra.mxu0 %v472
  %706 = vmatpush.bf16.msra.mxu0 %v469
  %707 = vmatpush.bf16.msra.mxu0 %v466
  %708 = vmatpush.bf16.msra.mxu0 %v463
  %709 = vmatpush.bf16.msra.mxu0 %v460
  %710 = vmatpush.bf16.msra.mxu0 %v457
  %711 = vmatmul.bf16.gmra.mxu0 %v691
  %v712 = vpop.f32.mrf.mxu0
  %v713 = vadd.f32 0.0, %v712
  %v714 = vpop.f32.mrf.mxu0
  %715 = vdwg.mxu0
  %716 = vmatpush.bf16.msra.mxu0 %v479
  %717 = vmatpush.bf16.msra.mxu0 %v476
  %718 = vmatpush.bf16.msra.mxu0 %v473
  %719 = vmatpush.bf16.msra.mxu0 %v470
  %720 = vmatpush.bf16.msra.mxu0 %v467
  %721 = vmatpush.bf16.msra.mxu0 %v464
  %722 = vmatpush.bf16.msra.mxu0 %v461
  %723 = vmatpush.bf16.msra.mxu0 %v458
  %724 = vmatmul.bf16.gmra.mxu0 %v691
  %v725 = vpop.f32.mrf.mxu0
  %v726 = vadd.f32 0.0, %v725
  %v727 = vpop.f32.mrf.mxu0
  %728 = vdwg.mxu0
  %729 = vmatpush.bf16.msra.mxu0 %v480
  %730 = vmatpush.bf16.msra.mxu0 %v477
  %731 = vmatpush.bf16.msra.mxu0 %v474
  %732 = vmatpush.bf16.msra.mxu0 %v471
  %733 = vmatpush.bf16.msra.mxu0 %v468
  %734 = vmatpush.bf16.msra.mxu0 %v465
  %735 = vmatpush.bf16.msra.mxu0 %v462
  %736 = vmatpush.bf16.msra.mxu0 %v459
  %737 = vmatmul.bf16.gmra.mxu0 %v691
  %v738 = vpop.f32.mrf.mxu0
  %v739 = vadd.f32 0.0, %v738
  %v740 = vpop.f32.mrf.mxu0
  %741 = vdwg.mxu0
  %v742 = vadd.f32 %v700, %v713
  %v743 = vxor.u32 %v742, 2147483648
  %v744 = vmul.f32 %v743, 1.442695
  %v745 = vpow.pop %v744
  %v746 = vadd.f32 %v745, 1.0
  %v747 = vrcp.pop %v746
  %v748 = vmul.f32 %v746, %v747
  %v749 = vsub.f32 1.0, %v748
  %v750 = vmul.f32 %v747, %v749
  %v751 = vadd.f32 %v747, %v750
  %vm752 = vweird.f32 %v746
  %vm753 = vweird.f32 %v747
  %vm754 = vmor %vm752, %vm753
  %v755 = vsel %vm754, %v747, %v751
  %v756 = vand.u32 2147483647, %v746
  %vm757 = vcmp.eq.f32.partialorder %v756, 8.507059e+37
  %v758 = vand.u32 %v746, 2147483648
  %v759 = vor.u32 1.1754944e-38, %v758
  %v760 = vsel %vm757, %v759, %v755
  %v761 = vmul.f32 1.0, %v760
  %v762 = vadd.f32 %v701, %v726
  %v763 = vxor.u32 %v762, 2147483648
  %v764 = vmul.f32 %v763, 1.442695
  %v765 = vpow.pop %v764
  %v766 = vadd.f32 %v765, 1.0
  %v767 = vrcp.pop %v766
  %v768 = vmul.f32 %v766, %v767
  %v769 = vsub.f32 1.0, %v768
  %v770 = vmul.f32 %v767, %v769
  %v771 = vadd.f32 %v767, %v770
  %vm772 = vweird.f32 %v766
  %vm773 = vweird.f32 %v767
  %vm774 = vmor %vm772, %vm773
  %v775 = vsel %vm774, %v767, %v771
  %v776 = vand.u32 2147483647, %v766
  %vm777 = vcmp.eq.f32.partialorder %v776, 8.507059e+37
  %v778 = vand.u32 %v766, 2147483648
  %v779 = vor.u32 1.1754944e-38, %v778
  %v780 = vsel %vm777, %v779, %v775
  %v781 = vmul.f32 1.0, %v780
  %v782 = vadd.f32 %v739, %v91
  %v783 = vmul.f32 %v761, %v782
  %v784 = vadd.f32 %v702, %v783
  %v785 = vtanh.pop %v784
  %v786 = vsub.f32 %v689, %v785
  %v787 = vmul.f32 %v781, %v786
  %v788 = vadd.f32 %v785, %v787
  %s789 = sadd.s32 0, 16
  %v790 = vpack.c.bf16 %v788, %v788
  %s791 = sshra.s32 %s789, 3
  %s792 = sand.u32 %s789, 7
  %s793 = smul.addr %s791, 4
  %s794 = scalar_lea.vmem [#allocation2], %s793
  %795 = vst [vmem:[%s794] sm:$0xf] %v790
  %s796 = smul.u32 3, 3
  %s797 = smul.addr %s796, 8
  %s798 = scalar_lea.vmem [#allocation3], %s797
  %v799 = vld [vmem:[%s798] sm:$0xff]
  %v800 = vld [vmem:[%s798 + $0x8] sm:$0xff]
  %v801 = vld [vmem:[%s798 + $0x10] sm:$0xff]
  %802 = vmatpush.bf16.msra.mxu0 %v478
  %803 = vmatpush.bf16.msra.mxu0 %v475
  %804 = vmatpush.bf16.msra.mxu0 %v472
  %805 = vmatpush.bf16.msra.mxu0 %v469
  %806 = vmatpush.bf16.msra.mxu0 %v466
  %807 = vmatpush.bf16.msra.mxu0 %v463
  %808 = vmatpush.bf16.msra.mxu0 %v460
  %809 = vmatpush.bf16.msra.mxu0 %v457
  %810 = vmatmul.bf16.gmra.mxu0 %v790
  %v811 = vpop.f32.mrf.mxu0
  %v812 = vadd.f32 0.0, %v811
  %v813 = vpop.f32.mrf.mxu0
  %814 = vdwg.mxu0
  %815 = vmatpush.bf16.msra.mxu0 %v479
  %816 = vmatpush.bf16.msra.mxu0 %v476
  %817 = vmatpush.bf16.msra.mxu0 %v473
  %818 = vmatpush.bf16.msra.mxu0 %v470
  %819 = vmatpush.bf16.msra.mxu0 %v467
  %820 = vmatpush.bf16.msra.mxu0 %v464
  %821 = vmatpush.bf16.msra.mxu0 %v461
  %822 = vmatpush.bf16.msra.mxu0 %v458
  %823 = vmatmul.bf16.gmra.mxu0 %v790
  %v824 = vpop.f32.mrf.mxu0
  %v825 = vadd.f32 0.0, %v824
  %v826 = vpop.f32.mrf.mxu0
  %827 = vdwg.mxu0
  %828 = vmatpush.bf16.msra.mxu0 %v480
  %829 = vmatpush.bf16.msra.mxu0 %v477
  %830 = vmatpush.bf16.msra.mxu0 %v474
  %831 = vmatpush.bf16.msra.mxu0 %v471
  %832 = vmatpush.bf16.msra.mxu0 %v468
  %833 = vmatpush.bf16.msra.mxu0 %v465
  %834 = vmatpush.bf16.msra.mxu0 %v462
  %835 = vmatpush.bf16.msra.mxu0 %v459
  %836 = vmatmul.bf16.gmra.mxu0 %v790
  %v837 = vpop.f32.mrf.mxu0
  %v838 = vadd.f32 0.0, %v837
  %v839 = vpop.f32.mrf.mxu0
  %840 = vdwg.mxu0
  %v841 = vadd.f32 %v799, %v812
  %v842 = vxor.u32 %v841, 2147483648
  %v843 = vmul.f32 %v842, 1.442695
  %v844 = vpow.pop %v843
  %v845 = vadd.f32 %v844, 1.0
  %v846 = vrcp.pop %v845
  %v847 = vmul.f32 %v845, %v846
  %v848 = vsub.f32 1.0, %v847
  %v849 = vmul.f32 %v846, %v848
  %v850 = vadd.f32 %v846, %v849
  %vm851 = vweird.f32 %v845
  %vm852 = vweird.f32 %v846
  %vm853 = vmor %vm851, %vm852
  %v854 = vsel %vm853, %v846, %v850
  %v855 = vand.u32 2147483647, %v845
  %vm856 = vcmp.eq.f32.partialorder %v855, 8.507059e+37
  %v857 = vand.u32 %v845, 2147483648
  %v858 = vor.u32 1.1754944e-38, %v857
  %v859 = vsel %vm856, %v858, %v854
  %v860 = vmul.f32 1.0, %v859
  %v861 = vadd.f32 %v800, %v825
  %v862 = vxor.u32 %v861, 2147483648
  %v863 = vmul.f32 %v862, 1.442695
  %v864 = vpow.pop %v863
  %v865 = vadd.f32 %v864, 1.0
  %v866 = vrcp.pop %v865
  %v867 = vmul.f32 %v865, %v866
  %v868 = vsub.f32 1.0, %v867
  %v869 = vmul.f32 %v866, %v868
  %v870 = vadd.f32 %v866, %v869
  %vm871 = vweird.f32 %v865
  %vm872 = vweird.f32 %v866
  %vm873 = vmor %vm871, %vm872
  %v874 = vsel %vm873, %v866, %v870
  %v875 = vand.u32 2147483647, %v865
  %vm876 = vcmp.eq.f32.partialorder %v875, 8.507059e+37
  %v877 = vand.u32 %v865, 2147483648
  %v878 = vor.u32 1.1754944e-38, %v877
  %v879 = vsel %vm876, %v878, %v874
  %v880 = vmul.f32 1.0, %v879
  %v881 = vadd.f32 %v838, %v91
  %v882 = vmul.f32 %v860, %v881
  %v883 = vadd.f32 %v801, %v882
  %v884 = vtanh.pop %v883
  %v885 = vsub.f32 %v788, %v884
  %v886 = vmul.f32 %v880, %v885
  %v887 = vadd.f32 %v884, %v886
  %s888 = sadd.s32 0, 24
  %v889 = vpack.c.bf16 %v887, %v887
  %s890 = sshra.s32 %s888, 3
  %s891 = sand.u32 %s888, 7
  %s892 = smul.addr %s890, 4
  %s893 = scalar_lea.vmem [#allocation2], %s892
  %894 = vst [vmem:[%s893] sm:$0xf] %v889
  %s895 = smul.u32 4, 3
  %s896 = smul.addr %s895, 8
  %s897 = scalar_lea.vmem [#allocation3], %s896
  %v898 = vld [vmem:[%s897] sm:$0xff]
  %v899 = vld [vmem:[%s897 + $0x8] sm:$0xff]
  %v900 = vld [vmem:[%s897 + $0x10] sm:$0xff]
  %901 = vmatpush.bf16.msra.mxu0 %v478
  %902 = vmatpush.bf16.msra.mxu0 %v475
  %903 = vmatpush.bf16.msra.mxu0 %v472
  %904 = vmatpush.bf16.msra.mxu0 %v469
  %905 = vmatpush.bf16.msra.mxu0 %v466
  %906 = vmatpush.bf16.msra.mxu0 %v463
  %907 = vmatpush.bf16.msra.mxu0 %v460
  %908 = vmatpush.bf16.msra.mxu0 %v457
  %909 = vmatmul.bf16.gmra.mxu0 %v889
  %v910 = vpop.f32.mrf.mxu0
  %v911 = vadd.f32 0.0, %v910
  %v912 = vpop.f32.mrf.mxu0
  %913 = vdwg.mxu0
  %914 = vmatpush.bf16.msra.mxu0 %v479
  %915 = vmatpush.bf16.msra.mxu0 %v476
  %916 = vmatpush.bf16.msra.mxu0 %v473
  %917 = vmatpush.bf16.msra.mxu0 %v470
  %918 = vmatpush.bf16.msra.mxu0 %v467
  %919 = vmatpush.bf16.msra.mxu0 %v464
  %920 = vmatpush.bf16.msra.mxu0 %v461
  %921 = vmatpush.bf16.msra.mxu0 %v458
  %922 = vmatmul.bf16.gmra.mxu0 %v889
  %v923 = vpop.f32.mrf.mxu0
  %v924 = vadd.f32 0.0, %v923
  %v925 = vpop.f32.mrf.mxu0
  %926 = vdwg.mxu0
  %927 = vmatpush.bf16.msra.mxu0 %v480
  %928 = vmatpush.bf16.msra.mxu0 %v477
  %929 = vmatpush.bf16.msra.mxu0 %v474
  %930 = vmatpush.bf16.msra.mxu0 %v471
  %931 = vmatpush.bf16.msra.mxu0 %v468
  %932 = vmatpush.bf16.msra.mxu0 %v465
  %933 = vmatpush.bf16.msra.mxu0 %v462
  %934 = vmatpush.bf16.msra.mxu0 %v459
  %935 = vmatmul.bf16.gmra.mxu0 %v889
  %v936 = vpop.f32.mrf.mxu0
  %v937 = vadd.f32 0.0, %v936
  %v938 = vpop.f32.mrf.mxu0
  %939 = vdwg.mxu0
  %v940 = vadd.f32 %v898, %v911
  %v941 = vxor.u32 %v940, 2147483648
  %v942 = vmul.f32 %v941, 1.442695
  %v943 = vpow.pop %v942
  %v944 = vadd.f32 %v943, 1.0
  %v945 = vrcp.pop %v944
  %v946 = vmul.f32 %v944, %v945
  %v947 = vsub.f32 1.0, %v946
  %v948 = vmul.f32 %v945, %v947
  %v949 = vadd.f32 %v945, %v948
  %vm950 = vweird.f32 %v944
  %vm951 = vweird.f32 %v945
  %vm952 = vmor %vm950, %vm951
  %v953 = vsel %vm952, %v945, %v949
  %v954 = vand.u32 2147483647, %v944
  %vm955 = vcmp.eq.f32.partialorder %v954, 8.507059e+37
  %v956 = vand.u32 %v944, 2147483648
  %v957 = vor.u32 1.1754944e-38, %v956
  %v958 = vsel %vm955, %v957, %v953
  %v959 = vmul.f32 1.0, %v958
  %v960 = vadd.f32 %v899, %v924
  %v961 = vxor.u32 %v960, 2147483648
  %v962 = vmul.f32 %v961, 1.442695
  %v963 = vpow.pop %v962
  %v964 = vadd.f32 %v963, 1.0
  %v965 = vrcp.pop %v964
  %v966 = vmul.f32 %v964, %v965
  %v967 = vsub.f32 1.0, %v966
  %v968 = vmul.f32 %v965, %v967
  %v969 = vadd.f32 %v965, %v968
  %vm970 = vweird.f32 %v964
  %vm971 = vweird.f32 %v965
  %vm972 = vmor %vm970, %vm971
  %v973 = vsel %vm972, %v965, %v969
  %v974 = vand.u32 2147483647, %v964
  %vm975 = vcmp.eq.f32.partialorder %v974, 8.507059e+37
  %v976 = vand.u32 %v964, 2147483648
  %v977 = vor.u32 1.1754944e-38, %v976
  %v978 = vsel %vm975, %v977, %v973
  %v979 = vmul.f32 1.0, %v978
  %v980 = vadd.f32 %v937, %v91
  %v981 = vmul.f32 %v959, %v980
  %v982 = vadd.f32 %v900, %v981
  %v983 = vtanh.pop %v982
  %v984 = vsub.f32 %v887, %v983
  %v985 = vmul.f32 %v979, %v984
  %v986 = vadd.f32 %v983, %v985
  %s987 = sadd.s32 0, 32
  %v988 = vpack.c.bf16 %v986, %v986
  %s989 = sshra.s32 %s987, 3
  %s990 = sand.u32 %s987, 7
  %s991 = smul.addr %s989, 4
  %s992 = scalar_lea.vmem [#allocation2], %s991
  %993 = vst [vmem:[%s992] sm:$0xf] %v988
  %s994 = smul.u32 5, 3
  %s995 = smul.addr %s994, 8
  %s996 = scalar_lea.vmem [#allocation3], %s995
  %v997 = vld [vmem:[%s996] sm:$0xff]
  %v998 = vld [vmem:[%s996 + $0x8] sm:$0xff]
  %v999 = vld [vmem:[%s996 + $0x10] sm:$0xff]
  %1000 = vmatpush.bf16.msra.mxu0 %v478
  %1001 = vmatpush.bf16.msra.mxu0 %v475
  %1002 = vmatpush.bf16.msra.mxu0 %v472
  %1003 = vmatpush.bf16.msra.mxu0 %v469
  %1004 = vmatpush.bf16.msra.mxu0 %v466
  %1005 = vmatpush.bf16.msra.mxu0 %v463
  %1006 = vmatpush.bf16.msra.mxu0 %v460
  %1007 = vmatpush.bf16.msra.mxu0 %v457
  %1008 = vmatmul.bf16.gmra.mxu0 %v988
  %v1009 = vpop.f32.mrf.mxu0
  %v1010 = vadd.f32 0.0, %v1009
  %v1011 = vpop.f32.mrf.mxu0
  %1012 = vdwg.mxu0
  %1013 = vmatpush.bf16.msra.mxu0 %v479
  %1014 = vmatpush.bf16.msra.mxu0 %v476
  %1015 = vmatpush.bf16.msra.mxu0 %v473
  %1016 = vmatpush.bf16.msra.mxu0 %v470
  %1017 = vmatpush.bf16.msra.mxu0 %v467
  %1018 = vmatpush.bf16.msra.mxu0 %v464
  %1019 = vmatpush.bf16.msra.mxu0 %v461
  %1020 = vmatpush.bf16.msra.mxu0 %v458
  %1021 = vmatmul.bf16.gmra.mxu0 %v988
  %v1022 = vpop.f32.mrf.mxu0
  %v1023 = vadd.f32 0.0, %v1022
  %v1024 = vpop.f32.mrf.mxu0
  %1025 = vdwg.mxu0
  %1026 = vmatpush.bf16.msra.mxu0 %v480
  %1027 = vmatpush.bf16.msra.mxu0 %v477
  %1028 = vmatpush.bf16.msra.mxu0 %v474
  %1029 = vmatpush.bf16.msra.mxu0 %v471
  %1030 = vmatpush.bf16.msra.mxu0 %v468
  %1031 = vmatpush.bf16.msra.mxu0 %v465
  %1032 = vmatpush.bf16.msra.mxu0 %v462
  %1033 = vmatpush.bf16.msra.mxu0 %v459
  %1034 = vmatmul.bf16.gmra.mxu0 %v988
  %v1035 = vpop.f32.mrf.mxu0
  %v1036 = vadd.f32 0.0, %v1035
  %v1037 = vpop.f32.mrf.mxu0
  %1038 = vdwg.mxu0
  %v1039 = vadd.f32 %v997, %v1010
  %v1040 = vxor.u32 %v1039, 2147483648
  %v1041 = vmul.f32 %v1040, 1.442695
  %v1042 = vpow.pop %v1041
  %v1043 = vadd.f32 %v1042, 1.0
  %v1044 = vrcp.pop %v1043
  %v1045 = vmul.f32 %v1043, %v1044
  %v1046 = vsub.f32 1.0, %v1045
  %v1047 = vmul.f32 %v1044, %v1046
  %v1048 = vadd.f32 %v1044, %v1047
  %vm1049 = vweird.f32 %v1043
  %vm1050 = vweird.f32 %v1044
  %vm1051 = vmor %vm1049, %vm1050
  %v1052 = vsel %vm1051, %v1044, %v1048
  %v1053 = vand.u32 2147483647, %v1043
  %vm1054 = vcmp.eq.f32.partialorder %v1053, 8.507059e+37
  %v1055 = vand.u32 %v1043, 2147483648
  %v1056 = vor.u32 1.1754944e-38, %v1055
  %v1057 = vsel %vm1054, %v1056, %v1052
  %v1058 = vmul.f32 1.0, %v1057
  %v1059 = vadd.f32 %v998, %v1023
  %v1060 = vxor.u32 %v1059, 2147483648
  %v1061 = vmul.f32 %v1060, 1.442695
  %v1062 = vpow.pop %v1061
  %v1063 = vadd.f32 %v1062, 1.0
  %v1064 = vrcp.pop %v1063
  %v1065 = vmul.f32 %v1063, %v1064
  %v1066 = vsub.f32 1.0, %v1065
  %v1067 = vmul.f32 %v1064, %v1066
  %v1068 = vadd.f32 %v1064, %v1067
  %vm1069 = vweird.f32 %v1063
  %vm1070 = vweird.f32 %v1064
  %vm1071 = vmor %vm1069, %vm1070
  %v1072 = vsel %vm1071, %v1064, %v1068
  %v1073 = vand.u32 2147483647, %v1063
  %vm1074 = vcmp.eq.f32.partialorder %v1073, 8.507059e+37
  %v1075 = vand.u32 %v1063, 2147483648
  %v1076 = vor.u32 1.1754944e-38, %v1075
  %v1077 = vsel %vm1074, %v1076, %v1072
  %v1078 = vmul.f32 1.0, %v1077
  %v1079 = vadd.f32 %v1036, %v91
  %v1080 = vmul.f32 %v1058, %v1079
  %v1081 = vadd.f32 %v999, %v1080
  %v1082 = vtanh.pop %v1081
  %v1083 = vsub.f32 %v986, %v1082
  %v1084 = vmul.f32 %v1078, %v1083
  %v1085 = vadd.f32 %v1082, %v1084
  %s1086 = sadd.s32 0, 40
  %v1087 = vpack.c.bf16 %v1085, %v1085
  %s1088 = sshra.s32 %s1086, 3
  %s1089 = sand.u32 %s1086, 7
  %s1090 = smul.addr %s1088, 4
  %s1091 = scalar_lea.vmem [#allocation2], %s1090
  %1092 = vst [vmem:[%s1091] sm:$0xf] %v1087
  %s1093 = smul.u32 6, 3
  %s1094 = smul.addr %s1093, 8
  %s1095 = scalar_lea.vmem [#allocation3], %s1094
  %v1096 = vld [vmem:[%s1095] sm:$0xff]
  %v1097 = vld [vmem:[%s1095 + $0x8] sm:$0xff]
  %v1098 = vld [vmem:[%s1095 + $0x10] sm:$0xff]
  %1099 = vmatpush.bf16.msra.mxu0 %v478
  %1100 = vmatpush.bf16.msra.mxu0 %v475
  %1101 = vmatpush.bf16.msra.mxu0 %v472
  %1102 = vmatpush.bf16.msra.mxu0 %v469
  %1103 = vmatpush.bf16.msra.mxu0 %v466
  %1104 = vmatpush.bf16.msra.mxu0 %v463
  %1105 = vmatpush.bf16.msra.mxu0 %v460
  %1106 = vmatpush.bf16.msra.mxu0 %v457
  %1107 = vmatmul.bf16.gmra.mxu0 %v1087
  %v1108 = vpop.f32.mrf.mxu0
  %v1109 = vadd.f32 0.0, %v1108
  %v1110 = vpop.f32.mrf.mxu0
  %1111 = vdwg.mxu0
  %1112 = vmatpush.bf16.msra.mxu0 %v479
  %1113 = vmatpush.bf16.msra.mxu0 %v476
  %1114 = vmatpush.bf16.msra.mxu0 %v473
  %1115 = vmatpush.bf16.msra.mxu0 %v470
  %1116 = vmatpush.bf16.msra.mxu0 %v467
  %1117 = vmatpush.bf16.msra.mxu0 %v464
  %1118 = vmatpush.bf16.msra.mxu0 %v461
  %1119 = vmatpush.bf16.msra.mxu0 %v458
  %1120 = vmatmul.bf16.gmra.mxu0 %v1087
  %v1121 = vpop.f32.mrf.mxu0
  %v1122 = vadd.f32 0.0, %v1121
  %v1123 = vpop.f32.mrf.mxu0
  %1124 = vdwg.mxu0
  %1125 = vmatpush.bf16.msra.mxu0 %v480
  %1126 = vmatpush.bf16.msra.mxu0 %v477
  %1127 = vmatpush.bf16.msra.mxu0 %v474
  %1128 = vmatpush.bf16.msra.mxu0 %v471
  %1129 = vmatpush.bf16.msra.mxu0 %v468
  %1130 = vmatpush.bf16.msra.mxu0 %v465
  %1131 = vmatpush.bf16.msra.mxu0 %v462
  %1132 = vmatpush.bf16.msra.mxu0 %v459
  %1133 = vmatmul.bf16.gmra.mxu0 %v1087
  %v1134 = vpop.f32.mrf.mxu0
  %v1135 = vadd.f32 0.0, %v1134
  %v1136 = vpop.f32.mrf.mxu0
  %1137 = vdwg.mxu0
  %v1138 = vadd.f32 %v1096, %v1109
  %v1139 = vxor.u32 %v1138, 2147483648
  %v1140 = vmul.f32 %v1139, 1.442695
  %v1141 = vpow.pop %v1140
  %v1142 = vadd.f32 %v1141, 1.0
  %v1143 = vrcp.pop %v1142
  %v1144 = vmul.f32 %v1142, %v1143
  %v1145 = vsub.f32 1.0, %v1144
  %v1146 = vmul.f32 %v1143, %v1145
  %v1147 = vadd.f32 %v1143, %v1146
  %vm1148 = vweird.f32 %v1142
  %vm1149 = vweird.f32 %v1143
  %vm1150 = vmor %vm1148, %vm1149
  %v1151 = vsel %vm1150, %v1143, %v1147
  %v1152 = vand.u32 2147483647, %v1142
  %vm1153 = vcmp.eq.f32.partialorder %v1152, 8.507059e+37
  %v1154 = vand.u32 %v1142, 2147483648
  %v1155 = vor.u32 1.1754944e-38, %v1154
  %v1156 = vsel %vm1153, %v1155, %v1151
  %v1157 = vmul.f32 1.0, %v1156
  %v1158 = vadd.f32 %v1097, %v1122
  %v1159 = vxor.u32 %v1158, 2147483648
  %v1160 = vmul.f32 %v1159, 1.442695
  %v1161 = vpow.pop %v1160
  %v1162 = vadd.f32 %v1161, 1.0
  %v1163 = vrcp.pop %v1162
  %v1164 = vmul.f32 %v1162, %v1163
  %v1165 = vsub.f32 1.0, %v1164
  %v1166 = vmul.f32 %v1163, %v1165
  %v1167 = vadd.f32 %v1163, %v1166
  %vm1168 = vweird.f32 %v1162
  %vm1169 = vweird.f32 %v1163
  %vm1170 = vmor %vm1168, %vm1169
  %v1171 = vsel %vm1170, %v1163, %v1167
  %v1172 = vand.u32 2147483647, %v1162
  %vm1173 = vcmp.eq.f32.partialorder %v1172, 8.507059e+37
  %v1174 = vand.u32 %v1162, 2147483648
  %v1175 = vor.u32 1.1754944e-38, %v1174
  %v1176 = vsel %vm1173, %v1175, %v1171
  %v1177 = vmul.f32 1.0, %v1176
  %v1178 = vadd.f32 %v1135, %v91
  %v1179 = vmul.f32 %v1157, %v1178
  %v1180 = vadd.f32 %v1098, %v1179
  %v1181 = vtanh.pop %v1180
  %v1182 = vsub.f32 %v1085, %v1181
  %v1183 = vmul.f32 %v1177, %v1182
  %v1184 = vadd.f32 %v1181, %v1183
  %s1185 = sadd.s32 0, 48
  %v1186 = vpack.c.bf16 %v1184, %v1184
  %s1187 = sshra.s32 %s1185, 3
  %s1188 = sand.u32 %s1185, 7
  %s1189 = smul.addr %s1187, 4
  %s1190 = scalar_lea.vmem [#allocation2], %s1189
  %1191 = vst [vmem:[%s1190] sm:$0xf] %v1186
  %s1192 = smul.u32 7, 3
  %s1193 = smul.addr %s1192, 8
  %s1194 = scalar_lea.vmem [#allocation3], %s1193
  %v1195 = vld [vmem:[%s1194] sm:$0xff]
  %v1196 = vld [vmem:[%s1194 + $0x8] sm:$0xff]
  %v1197 = vld [vmem:[%s1194 + $0x10] sm:$0xff]
  %1198 = vmatpush.bf16.msra.mxu0 %v478
  %1199 = vmatpush.bf16.msra.mxu0 %v475
  %1200 = vmatpush.bf16.msra.mxu0 %v472
  %1201 = vmatpush.bf16.msra.mxu0 %v469
  %1202 = vmatpush.bf16.msra.mxu0 %v466
  %1203 = vmatpush.bf16.msra.mxu0 %v463
  %1204 = vmatpush.bf16.msra.mxu0 %v460
  %1205 = vmatpush.bf16.msra.mxu0 %v457
  %1206 = vmatmul.bf16.gmra.mxu0 %v1186
  %v1207 = vpop.f32.mrf.mxu0
  %v1208 = vadd.f32 0.0, %v1207
  %v1209 = vpop.f32.mrf.mxu0
  %1210 = vdwg.mxu0
  %1211 = vmatpush.bf16.msra.mxu0 %v479
  %1212 = vmatpush.bf16.msra.mxu0 %v476
  %1213 = vmatpush.bf16.msra.mxu0 %v473
  %1214 = vmatpush.bf16.msra.mxu0 %v470
  %1215 = vmatpush.bf16.msra.mxu0 %v467
  %1216 = vmatpush.bf16.msra.mxu0 %v464
  %1217 = vmatpush.bf16.msra.mxu0 %v461
  %1218 = vmatpush.bf16.msra.mxu0 %v458
  %1219 = vmatmul.bf16.gmra.mxu0 %v1186
  %v1220 = vpop.f32.mrf.mxu0
  %v1221 = vadd.f32 0.0, %v1220
  %v1222 = vpop.f32.mrf.mxu0
  %1223 = vdwg.mxu0
  %1224 = vmatpush.bf16.msra.mxu0 %v480
  %1225 = vmatpush.bf16.msra.mxu0 %v477
  %1226 = vmatpush.bf16.msra.mxu0 %v474
  %1227 = vmatpush.bf16.msra.mxu0 %v471
  %1228 = vmatpush.bf16.msra.mxu0 %v468
  %1229 = vmatpush.bf16.msra.mxu0 %v465
  %1230 = vmatpush.bf16.msra.mxu0 %v462
  %1231 = vmatpush.bf16.msra.mxu0 %v459
  %1232 = vmatmul.bf16.gmra.mxu0 %v1186
  %v1233 = vpop.f32.mrf.mxu0
  %v1234 = vadd.f32 0.0, %v1233
  %v1235 = vpop.f32.mrf.mxu0
  %1236 = vdwg.mxu0
  %v1237 = vadd.f32 %v1195, %v1208
  %v1238 = vxor.u32 %v1237, 2147483648
  %v1239 = vmul.f32 %v1238, 1.442695
  %v1240 = vpow.pop %v1239
  %v1241 = vadd.f32 %v1240, 1.0
  %v1242 = vrcp.pop %v1241
  %v1243 = vmul.f32 %v1241, %v1242
  %v1244 = vsub.f32 1.0, %v1243
  %v1245 = vmul.f32 %v1242, %v1244
  %v1246 = vadd.f32 %v1242, %v1245
  %vm1247 = vweird.f32 %v1241
  %vm1248 = vweird.f32 %v1242
  %vm1249 = vmor %vm1247, %vm1248
  %v1250 = vsel %vm1249, %v1242, %v1246
  %v1251 = vand.u32 2147483647, %v1241
  %vm1252 = vcmp.eq.f32.partialorder %v1251, 8.507059e+37
  %v1253 = vand.u32 %v1241, 2147483648
  %v1254 = vor.u32 1.1754944e-38, %v1253
  %v1255 = vsel %vm1252, %v1254, %v1250
  %v1256 = vmul.f32 1.0, %v1255
  %v1257 = vadd.f32 %v1196, %v1221
  %v1258 = vxor.u32 %v1257, 2147483648
  %v1259 = vmul.f32 %v1258, 1.442695
  %v1260 = vpow.pop %v1259
  %v1261 = vadd.f32 %v1260, 1.0
  %v1262 = vrcp.pop %v1261
  %v1263 = vmul.f32 %v1261, %v1262
  %v1264 = vsub.f32 1.0, %v1263
  %v1265 = vmul.f32 %v1262, %v1264
  %v1266 = vadd.f32 %v1262, %v1265
  %vm1267 = vweird.f32 %v1261
  %vm1268 = vweird.f32 %v1262
  %vm1269 = vmor %vm1267, %vm1268
  %v1270 = vsel %vm1269, %v1262, %v1266
  %v1271 = vand.u32 2147483647, %v1261
  %vm1272 = vcmp.eq.f32.partialorder %v1271, 8.507059e+37
  %v1273 = vand.u32 %v1261, 2147483648
  %v1274 = vor.u32 1.1754944e-38, %v1273
  %v1275 = vsel %vm1272, %v1274, %v1270
  %v1276 = vmul.f32 1.0, %v1275
  %v1277 = vadd.f32 %v1234, %v91
  %v1278 = vmul.f32 %v1256, %v1277
  %v1279 = vadd.f32 %v1197, %v1278
  %v1280 = vtanh.pop %v1279
  %v1281 = vsub.f32 %v1184, %v1280
  %v1282 = vmul.f32 %v1276, %v1281
  %v1283 = vadd.f32 %v1280, %v1282
  %s1284 = sadd.s32 0, 56
  %v1285 = vpack.c.bf16 %v1283, %v1283
  %s1286 = sshra.s32 %s1284, 3
  %s1287 = sand.u32 %s1284, 7
  %s1288 = smul.addr %s1286, 4
  %s1289 = scalar_lea.vmem [#allocation2], %s1288
  %1290 = vst [vmem:[%s1289] sm:$0xf] %v1285
  %v1291 = vld [vmem:[%s2] sm:$0xff]
  %v1292 = vld [vmem:[%s2 + $0x8] sm:$0xf]
  %v1293 = vld [vmem:[%s2 + $0xc] sm:$0xff]
  %v1294 = vld [vmem:[%s2 + $0x14] sm:$0xf]
  %v1295 = vld [vmem:[%s2 + $0x18] sm:$0xff]
  %v1296 = vld [vmem:[%s2 + $0x20] sm:$0xf]
  %v1297 = vld [vmem:[%s2 + $0x24] sm:$0xff]
  %v1298 = vld [vmem:[%s2 + $0x2c] sm:$0xf]
  %v1299 = vld [vmem:[%s2 + $0x30] sm:$0xff]
  %v1300 = vld [vmem:[%s2 + $0x38] sm:$0xf]
  %v1301 = vld [vmem:[%s2 + $0x3c] sm:$0xff]
  %v1302 = vld [vmem:[%s2 + $0x44] sm:$0xf]
  %v1303 = vld [vmem:[%s2 + $0x48] sm:$0xff]
  %v1304 = vld [vmem:[%s2 + $0x50] sm:$0xf]
  %v1305 = vld [vmem:[%s2 + $0x54] sm:$0xff]
  %v1306 = vld [vmem:[%s2 + $0x5c] sm:$0xf]
  %v1307 = vld [vmem:[%s2 + $0x60] sm:$0xff]
  %v1308 = vld [vmem:[%s2 + $0x68] sm:$0xf]
  %v1309 = vld [vmem:[%s2 + $0x6c] sm:$0xff]
  %v1310 = vld [vmem:[%s2 + $0x74] sm:$0xf]
  %v1311 = vld [vmem:[%s2 + $0x78] sm:$0xff]
  %v1312 = vld [vmem:[%s2 + $0x80] sm:$0xf]
  %v1313 = vld [vmem:[%s2 + $0x84] sm:$0xff]
  %v1314 = vld [vmem:[%s2 + $0x8c] sm:$0xf]
  %v1315 = vld [vmem:[%s2 + $0x90] sm:$0xff]
  %v1316 = vld [vmem:[%s2 + $0x98] sm:$0xf]
  %v1317 = vld [vmem:[%s2 + $0x9c] sm:$0xff]
  %v1318 = vld [vmem:[%s2 + $0xa4] sm:$0xf]
  %v1319 = vld [vmem:[%s2 + $0xa8] sm:$0xff]
  %v1320 = vld [vmem:[%s2 + $0xb0] sm:$0xf]
  %v1321 = vld [vmem:[%s2 + $0xb4] sm:$0xff]
  %v1322 = vld [vmem:[%s2 + $0xbc] sm:$0xf]
  %s1323 = scalar_lea.vmem %s3, 192
  %v1324 = vld [vmem:[%s1323] sm:$0xff]
  %v1325 = vld [vmem:[%s1323 + $0x8] sm:$0xf]
  %v1326 = vld [vmem:[%s1323 + $0xc] sm:$0xff]
  %v1327 = vld [vmem:[%s1323 + $0x14] sm:$0xf]
  %v1328 = vld [vmem:[%s1323 + $0x18] sm:$0xff]
  %v1329 = vld [vmem:[%s1323 + $0x20] sm:$0xf]
  %v1330 = vld [vmem:[%s1323 + $0x24] sm:$0xff]
  %v1331 = vld [vmem:[%s1323 + $0x2c] sm:$0xf]
  %v1332 = vld [vmem:[%s1323 + $0x30] sm:$0xff]
  %v1333 = vld [vmem:[%s1323 + $0x38] sm:$0xf]
  %v1334 = vld [vmem:[%s1323 + $0x3c] sm:$0xff]
  %v1335 = vld [vmem:[%s1323 + $0x44] sm:$0xf]
  %v1336 = vld [vmem:[%s1323 + $0x48] sm:$0xff]
  %v1337 = vld [vmem:[%s1323 + $0x50] sm:$0xf]
  %v1338 = vld [vmem:[%s1323 + $0x54] sm:$0xff]
  %v1339 = vld [vmem:[%s1323 + $0x5c] sm:$0xf]
  %v1340 = vld [vmem:[%s1323 + $0x60] sm:$0xff]
  %v1341 = vld [vmem:[%s1323 + $0x68] sm:$0xf]
  %v1342 = vld [vmem:[%s1323 + $0x6c] sm:$0xff]
  %v1343 = vld [vmem:[%s1323 + $0x74] sm:$0xf]
  %v1344 = vld [vmem:[%s1323 + $0x78] sm:$0xff]
  %v1345 = vld [vmem:[%s1323 + $0x80] sm:$0xf]
  %v1346 = vld [vmem:[%s1323 + $0x84] sm:$0xff]
  %v1347 = vld [vmem:[%s1323 + $0x8c] sm:$0xf]
  %v1348 = vld [vmem:[%s1323 + $0x90] sm:$0xff]
  %v1349 = vld [vmem:[%s1323 + $0x98] sm:$0xf]
  %v1350 = vld [vmem:[%s1323 + $0x9c] sm:$0xff]
  %v1351 = vld [vmem:[%s1323 + $0xa4] sm:$0xf]
  %v1352 = vld [vmem:[%s1323 + $0xa8] sm:$0xff]
  %v1353 = vld [vmem:[%s1323 + $0xb0] sm:$0xf]
  %v1354 = vld [vmem:[%s1323 + $0xb4] sm:$0xff]
  %v1355 = vld [vmem:[%s1323 + $0xbc] sm:$0xf]
  %s1356 = scalar_lea.vmem %s4, 3
  %v1357 = vld [vmem:[%s1356] sm:$0x7]
  %s1358 = scalar_lea.vmem %s5, 1
  %v1359 = vld [vmem:[%s1358] sm:$0x1]
  %v1361 = vperm.slane %v1359, 0
  %v1363 = vld [vmem:[#allocation2] sm:$0xf]
  %v1364 = vld [vmem:[#allocation2 + $0x4] sm:$0xf]
  %v1365 = vld [vmem:[#allocation2 + $0x8] sm:$0xf]
  %v1366 = vld [vmem:[#allocation2 + $0xc] sm:$0xf]
  %v1367 = vld [vmem:[#allocation2 + $0x10] sm:$0xf]
  %v1368 = vld [vmem:[#allocation2 + $0x14] sm:$0xf]
  %v1369 = vld [vmem:[#allocation2 + $0x18] sm:$0xf]
  %v1370 = vld [vmem:[#allocation2 + $0x1c] sm:$0xf]
  %v1372 = vperm.slane %v1357, 0
  %v1373 = vperm.slane %v1357, 1
  %v1374 = vperm.slane %v1357, 2
  %v1386 = vunpack.c.l.b16 %v1363
  %v1387 = vunpack.c.l.b16 %v1364
  %v1388 = vunpack.c.l.b16 %v1365
  %v1389 = vunpack.c.l.b16 %v1366
  %v1390 = vunpack.c.l.b16 %v1367
  %v1391 = vunpack.c.l.b16 %v1368
  %v1392 = vunpack.c.l.b16 %v1369
  %v1393 = vunpack.c.l.b16 %v1370
  %v1394 = vpack.c.b16 %v1387, %v1386
  %v1395 = vpack.c.b16 %v1389, %v1388
  %v1396 = vpack.c.b16 %v1391, %v1390
  %v1397 = vpack.c.b16 %v1393, %v1392
  %v1434 = vunpack.c.l.b16 %v1291
  %v1435 = vunpack.c.h.b16 %v1291
  %v1436 = vunpack.c.l.b16 %v1292
  %v1437 = vunpack.c.l.b16 %v1293
  %v1438 = vunpack.c.h.b16 %v1293
  %v1439 = vunpack.c.l.b16 %v1294
  %v1440 = vunpack.c.l.b16 %v1295
  %v1441 = vunpack.c.h.b16 %v1295
  %v1442 = vunpack.c.l.b16 %v1296
  %v1443 = vunpack.c.l.b16 %v1297
  %v1444 = vunpack.c.h.b16 %v1297
  %v1445 = vunpack.c.l.b16 %v1298
  %v1446 = vunpack.c.l.b16 %v1299
  %v1447 = vunpack.c.h.b16 %v1299
  %v1448 = vunpack.c.l.b16 %v1300
  %v1449 = vunpack.c.l.b16 %v1301
  %v1450 = vunpack.c.h.b16 %v1301
  %v1451 = vunpack.c.l.b16 %v1302
  %v1452 = vunpack.c.l.b16 %v1303
  %v1453 = vunpack.c.h.b16 %v1303
  %v1454 = vunpack.c.l.b16 %v1304
  %v1455 = vunpack.c.l.b16 %v1305
  %v1456 = vunpack.c.h.b16 %v1305
  %v1457 = vunpack.c.l.b16 %v1306
  %v1458 = vunpack.c.l.b16 %v1307
  %v1459 = vunpack.c.h.b16 %v1307
  %v1460 = vunpack.c.l.b16 %v1308
  %v1461 = vunpack.c.l.b16 %v1309
  %v1462 = vunpack.c.h.b16 %v1309
  %v1463 = vunpack.c.l.b16 %v1310
  %v1464 = vunpack.c.l.b16 %v1311
  %v1465 = vunpack.c.h.b16 %v1311
  %v1466 = vunpack.c.l.b16 %v1312
  %v1467 = vunpack.c.l.b16 %v1313
  %v1468 = vunpack.c.h.b16 %v1313
  %v1469 = vunpack.c.l.b16 %v1314
  %v1470 = vunpack.c.l.b16 %v1315
  %v1471 = vunpack.c.h.b16 %v1315
  %v1472 = vunpack.c.l.b16 %v1316
  %v1473 = vunpack.c.l.b16 %v1317
  %v1474 = vunpack.c.h.b16 %v1317
  %v1475 = vunpack.c.l.b16 %v1318
  %v1476 = vunpack.c.l.b16 %v1319
  %v1477 = vunpack.c.h.b16 %v1319
  %v1478 = vunpack.c.l.b16 %v1320
  %v1479 = vunpack.c.l.b16 %v1321
  %v1480 = vunpack.c.h.b16 %v1321
  %v1481 = vunpack.c.l.b16 %v1322
  %v1482 = vpack.c.b16 %v1437, %v1434
  %v1483 = vpack.c.b16 %v1438, %v1435
  %v1484 = vpack.c.b16 %v1439, %v1436
  %v1485 = vpack.c.b16 %v1443, %v1440
  %v1486 = vpack.c.b16 %v1444, %v1441
  %v1487 = vpack.c.b16 %v1445, %v1442
  %v1488 = vpack.c.b16 %v1449, %v1446
  %v1489 = vpack.c.b16 %v1450, %v1447
  %v1490 = vpack.c.b16 %v1451, %v1448
  %v1491 = vpack.c.b16 %v1455, %v1452
  %v1492 = vpack.c.b16 %v1456, %v1453
  %v1493 = vpack.c.b16 %v1457, %v1454
  %v1494 = vpack.c.b16 %v1461, %v1458
  %v1495 = vpack.c.b16 %v1462, %v1459
  %v1496 = vpack.c.b16 %v1463, %v1460
  %v1497 = vpack.c.b16 %v1467, %v1464
  %v1498 = vpack.c.b16 %v1468, %v1465
  %v1499 = vpack.c.b16 %v1469, %v1466
  %v1500 = vpack.c.b16 %v1473, %v1470
  %v1501 = vpack.c.b16 %v1474, %v1471
  %v1502 = vpack.c.b16 %v1475, %v1472
  %v1503 = vpack.c.b16 %v1479, %v1476
  %v1504 = vpack.c.b16 %v1480, %v1477
  %v1505 = vpack.c.b16 %v1481, %v1478
  %1530 = vmatpush.bf16.msra.mxu0 %v1503
  %1531 = vmatpush.bf16.msra.mxu0 %v1500
  %1532 = vmatpush.bf16.msra.mxu0 %v1497
  %1533 = vmatpush.bf16.msra.mxu0 %v1494
  %1534 = vmatpush.bf16.msra.mxu0 %v1491
  %1535 = vmatpush.bf16.msra.mxu0 %v1488
  %1536 = vmatpush.bf16.msra.mxu0 %v1485
  %1537 = vmatpush.bf16.msra.mxu0 %v1482
  %1538 = vmatmul.bf16.gmra.mxu0 %v1394
  %v1539 = vpop.f32.mrf.mxu0
  %v1540 = vadd.f32 %v1372, %v1539
  %v1541 = vpop.f32.mrf.mxu0
  %v1542 = vadd.f32 %v1372, %v1541
  %1543 = vmatmul.bf16.gmra.mxu0 %v1395
  %v1544 = vpop.f32.mrf.mxu0
  %v1545 = vadd.f32 %v1372, %v1544
  %v1546 = vpop.f32.mrf.mxu0
  %v1547 = vadd.f32 %v1372, %v1546
  %1548 = vmatmul.bf16.gmra.mxu0 %v1396
  %v1549 = vpop.f32.mrf.mxu0
  %v1550 = vadd.f32 %v1372, %v1549
  %v1551 = vpop.f32.mrf.mxu0
  %v1552 = vadd.f32 %v1372, %v1551
  %1553 = vmatmul.bf16.gmra.mxu0 %v1397
  %v1554 = vpop.f32.mrf.mxu0
  %v1555 = vadd.f32 %v1372, %v1554
  %v1556 = vpop.f32.mrf.mxu0
  %v1557 = vadd.f32 %v1372, %v1556
  %1558 = vdwg.mxu0
  %1559 = vmatpush.bf16.msra.mxu0 %v1504
  %1560 = vmatpush.bf16.msra.mxu0 %v1501
  %1561 = vmatpush.bf16.msra.mxu0 %v1498
  %1562 = vmatpush.bf16.msra.mxu0 %v1495
  %1563 = vmatpush.bf16.msra.mxu0 %v1492
  %1564 = vmatpush.bf16.msra.mxu0 %v1489
  %1565 = vmatpush.bf16.msra.mxu0 %v1486
  %1566 = vmatpush.bf16.msra.mxu0 %v1483
  %1567 = vmatmul.bf16.gmra.mxu0 %v1394
  %v1568 = vpop.f32.mrf.mxu0
  %v1569 = vadd.f32 %v1373, %v1568
  %v1570 = vpop.f32.mrf.mxu0
  %v1571 = vadd.f32 %v1373, %v1570
  %1572 = vmatmul.bf16.gmra.mxu0 %v1395
  %v1573 = vpop.f32.mrf.mxu0
  %v1574 = vadd.f32 %v1373, %v1573
  %v1575 = vpop.f32.mrf.mxu0
  %v1576 = vadd.f32 %v1373, %v1575
  %1577 = vmatmul.bf16.gmra.mxu0 %v1396
  %v1578 = vpop.f32.mrf.mxu0
  %v1579 = vadd.f32 %v1373, %v1578
  %v1580 = vpop.f32.mrf.mxu0
  %v1581 = vadd.f32 %v1373, %v1580
  %1582 = vmatmul.bf16.gmra.mxu0 %v1397
  %v1583 = vpop.f32.mrf.mxu0
  %v1584 = vadd.f32 %v1373, %v1583
  %v1585 = vpop.f32.mrf.mxu0
  %v1586 = vadd.f32 %v1373, %v1585
  %1587 = vdwg.mxu0
  %1588 = vmatpush.bf16.msra.mxu0 %v1505
  %1589 = vmatpush.bf16.msra.mxu0 %v1502
  %1590 = vmatpush.bf16.msra.mxu0 %v1499
  %1591 = vmatpush.bf16.msra.mxu0 %v1496
  %1592 = vmatpush.bf16.msra.mxu0 %v1493
  %1593 = vmatpush.bf16.msra.mxu0 %v1490
  %1594 = vmatpush.bf16.msra.mxu0 %v1487
  %1595 = vmatpush.bf16.msra.mxu0 %v1484
  %1596 = vmatmul.bf16.gmra.mxu0 %v1394
  %v1597 = vpop.f32.mrf.mxu0
  %v1598 = vadd.f32 %v1374, %v1597
  %v1599 = vpop.f32.mrf.mxu0
  %v1600 = vadd.f32 %v1374, %v1599
  %1601 = vmatmul.bf16.gmra.mxu0 %v1395
  %v1602 = vpop.f32.mrf.mxu0
  %v1603 = vadd.f32 %v1374, %v1602
  %v1604 = vpop.f32.mrf.mxu0
  %v1605 = vadd.f32 %v1374, %v1604
  %1606 = vmatmul.bf16.gmra.mxu0 %v1396
  %v1607 = vpop.f32.mrf.mxu0
  %v1608 = vadd.f32 %v1374, %v1607
  %v1609 = vpop.f32.mrf.mxu0
  %v1610 = vadd.f32 %v1374, %v1609
  %1611 = vmatmul.bf16.gmra.mxu0 %v1397
  %v1612 = vpop.f32.mrf.mxu0
  %v1613 = vadd.f32 %v1374, %v1612
  %v1614 = vpop.f32.mrf.mxu0
  %v1615 = vadd.f32 %v1374, %v1614
  %1616 = vdwg.mxu0
  %1617 = vst [vmem:[#allocation3] sm:$0xff] %v1540
  %1618 = vst [vmem:[#allocation3 + $0x8] sm:$0xff] %v1569
  %1619 = vst [vmem:[#allocation3 + $0x10] sm:$0xff] %v1598
  %1620 = vst [vmem:[#allocation3 + $0x18] sm:$0xff] %v1542
  %1621 = vst [vmem:[#allocation3 + $0x20] sm:$0xff] %v1571
  %1622 = vst [vmem:[#allocation3 + $0x28] sm:$0xff] %v1600
  %1623 = vst [vmem:[#allocation3 + $0x30] sm:$0xff] %v1545
  %1624 = vst [vmem:[#allocation3 + $0x38] sm:$0xff] %v1574
  %1625 = vst [vmem:[#allocation3 + $0x40] sm:$0xff] %v1603
  %1626 = vst [vmem:[#allocation3 + $0x48] sm:$0xff] %v1547
  %1627 = vst [vmem:[#allocation3 + $0x50] sm:$0xff] %v1576
  %1628 = vst [vmem:[#allocation3 + $0x58] sm:$0xff] %v1605
  %1629 = vst [vmem:[#allocation3 + $0x60] sm:$0xff] %v1550
  %1630 = vst [vmem:[#allocation3 + $0x68] sm:$0xff] %v1579
  %1631 = vst [vmem:[#allocation3 + $0x70] sm:$0xff] %v1608
  %1632 = vst [vmem:[#allocation3 + $0x78] sm:$0xff] %v1552
  %1633 = vst [vmem:[#allocation3 + $0x80] sm:$0xff] %v1581
  %1634 = vst [vmem:[#allocation3 + $0x88] sm:$0xff] %v1610
  %1635 = vst [vmem:[#allocation3 + $0x90] sm:$0xff] %v1555
  %1636 = vst [vmem:[#allocation3 + $0x98] sm:$0xff] %v1584
  %1637 = vst [vmem:[#allocation3 + $0xa0] sm:$0xff] %v1613
  %1638 = vst [vmem:[#allocation3 + $0xa8] sm:$0xff] %v1557
  %1639 = vst [vmem:[#allocation3 + $0xb0] sm:$0xff] %v1586
  %1640 = vst [vmem:[#allocation3 + $0xb8] sm:$0xff] %v1615
  %v1641 = vld [vmem:[%s373] sm:$0xff]
  %v1642 = vld [vmem:[%s373 + $0x8] sm:$0xff]
  %v1643 = vld [vmem:[%s373 + $0x10] sm:$0xff]
  %v1676 = vunpack.c.l.b16 %v1324
  %v1677 = vunpack.c.h.b16 %v1324
  %v1678 = vunpack.c.l.b16 %v1325
  %v1679 = vunpack.c.l.b16 %v1326
  %v1680 = vunpack.c.h.b16 %v1326
  %v1681 = vunpack.c.l.b16 %v1327
  %v1682 = vunpack.c.l.b16 %v1328
  %v1683 = vunpack.c.h.b16 %v1328
  %v1684 = vunpack.c.l.b16 %v1329
  %v1685 = vunpack.c.l.b16 %v1330
  %v1686 = vunpack.c.h.b16 %v1330
  %v1687 = vunpack.c.l.b16 %v1331
  %v1688 = vunpack.c.l.b16 %v1332
  %v1689 = vunpack.c.h.b16 %v1332
  %v1690 = vunpack.c.l.b16 %v1333
  %v1691 = vunpack.c.l.b16 %v1334
  %v1692 = vunpack.c.h.b16 %v1334
  %v1693 = vunpack.c.l.b16 %v1335
  %v1694 = vunpack.c.l.b16 %v1336
  %v1695 = vunpack.c.h.b16 %v1336
  %v1696 = vunpack.c.l.b16 %v1337
  %v1697 = vunpack.c.l.b16 %v1338
  %v1698 = vunpack.c.h.b16 %v1338
  %v1699 = vunpack.c.l.b16 %v1339
  %v1700 = vunpack.c.l.b16 %v1340
  %v1701 = vunpack.c.h.b16 %v1340
  %v1702 = vunpack.c.l.b16 %v1341
  %v1703 = vunpack.c.l.b16 %v1342
  %v1704 = vunpack.c.h.b16 %v1342
  %v1705 = vunpack.c.l.b16 %v1343
  %v1706 = vunpack.c.l.b16 %v1344
  %v1707 = vunpack.c.h.b16 %v1344
  %v1708 = vunpack.c.l.b16 %v1345
  %v1709 = vunpack.c.l.b16 %v1346
  %v1710 = vunpack.c.h.b16 %v1346
  %v1711 = vunpack.c.l.b16 %v1347
  %v1712 = vunpack.c.l.b16 %v1348
  %v1713 = vunpack.c.h.b16 %v1348
  %v1714 = vunpack.c.l.b16 %v1349
  %v1715 = vunpack.c.l.b16 %v1350
  %v1716 = vunpack.c.h.b16 %v1350
  %v1717 = vunpack.c.l.b16 %v1351
  %v1718 = vunpack.c.l.b16 %v1352
  %v1719 = vunpack.c.h.b16 %v1352
  %v1720 = vunpack.c.l.b16 %v1353
  %v1721 = vunpack.c.l.b16 %v1354
  %v1722 = vunpack.c.h.b16 %v1354
  %v1723 = vunpack.c.l.b16 %v1355
  %v1724 = vpack.c.b16 %v1679, %v1676
  %v1725 = vpack.c.b16 %v1680, %v1677
  %v1726 = vpack.c.b16 %v1681, %v1678
  %v1727 = vpack.c.b16 %v1685, %v1682
  %v1728 = vpack.c.b16 %v1686, %v1683
  %v1729 = vpack.c.b16 %v1687, %v1684
  %v1730 = vpack.c.b16 %v1691, %v1688
  %v1731 = vpack.c.b16 %v1692, %v1689
  %v1732 = vpack.c.b16 %v1693, %v1690
  %v1733 = vpack.c.b16 %v1697, %v1694
  %v1734 = vpack.c.b16 %v1698, %v1695
  %v1735 = vpack.c.b16 %v1699, %v1696
  %v1736 = vpack.c.b16 %v1703, %v1700
  %v1737 = vpack.c.b16 %v1704, %v1701
  %v1738 = vpack.c.b16 %v1705, %v1702
  %v1739 = vpack.c.b16 %v1709, %v1706
  %v1740 = vpack.c.b16 %v1710, %v1707
  %v1741 = vpack.c.b16 %v1711, %v1708
  %v1742 = vpack.c.b16 %v1715, %v1712
  %v1743 = vpack.c.b16 %v1716, %v1713
  %v1744 = vpack.c.b16 %v1717, %v1714
  %v1745 = vpack.c.b16 %v1721, %v1718
  %v1746 = vpack.c.b16 %v1722, %v1719
  %v1747 = vpack.c.b16 %v1723, %v1720
  %1772 = vmatpush.bf16.msra.mxu0 %v1745
  %1773 = vmatpush.bf16.msra.mxu0 %v1742
  %1774 = vmatpush.bf16.msra.mxu0 %v1739
  %1775 = vmatpush.bf16.msra.mxu0 %v1736
  %1776 = vmatpush.bf16.msra.mxu0 %v1733
  %1777 = vmatpush.bf16.msra.mxu0 %v1730
  %1778 = vmatpush.bf16.msra.mxu0 %v1727
  %1779 = vmatpush.bf16.msra.mxu0 %v1724
  %1780 = vmatmul.bf16.gmra.mxu0 0
  %v1781 = vpop.f32.mrf.mxu0
  %v1782 = vadd.f32 0.0, %v1781
  %v1783 = vpop.f32.mrf.mxu0
  %1784 = vdwg.mxu0
  %1785 = vmatpush.bf16.msra.mxu0 %v1746
  %1786 = vmatpush.bf16.msra.mxu0 %v1743
  %1787 = vmatpush.bf16.msra.mxu0 %v1740
  %1788 = vmatpush.bf16.msra.mxu0 %v1737
  %1789 = vmatpush.bf16.msra.mxu0 %v1734
  %1790 = vmatpush.bf16.msra.mxu0 %v1731
  %1791 = vmatpush.bf16.msra.mxu0 %v1728
  %1792 = vmatpush.bf16.msra.mxu0 %v1725
  %1793 = vmatmul.bf16.gmra.mxu0 0
  %v1794 = vpop.f32.mrf.mxu0
  %v1795 = vadd.f32 0.0, %v1794
  %v1796 = vpop.f32.mrf.mxu0
  %1797 = vdwg.mxu0
  %1798 = vmatpush.bf16.msra.mxu0 %v1747
  %1799 = vmatpush.bf16.msra.mxu0 %v1744
  %1800 = vmatpush.bf16.msra.mxu0 %v1741
  %1801 = vmatpush.bf16.msra.mxu0 %v1738
  %1802 = vmatpush.bf16.msra.mxu0 %v1735
  %1803 = vmatpush.bf16.msra.mxu0 %v1732
  %1804 = vmatpush.bf16.msra.mxu0 %v1729
  %1805 = vmatpush.bf16.msra.mxu0 %v1726
  %1806 = vmatmul.bf16.gmra.mxu0 0
  %v1807 = vpop.f32.mrf.mxu0
  %v1808 = vadd.f32 0.0, %v1807
  %v1809 = vpop.f32.mrf.mxu0
  %1810 = vdwg.mxu0
  %v1811 = vadd.f32 %v1641, %v1782
  %v1812 = vxor.u32 %v1811, 2147483648
  %v1813 = vmul.f32 %v1812, 1.442695
  %v1814 = vpow.pop %v1813
  %v1815 = vadd.f32 %v1814, 1.0
  %v1816 = vrcp.pop %v1815
  %v1817 = vmul.f32 %v1815, %v1816
  %v1818 = vsub.f32 1.0, %v1817
  %v1819 = vmul.f32 %v1816, %v1818
  %v1820 = vadd.f32 %v1816, %v1819
  %vm1821 = vweird.f32 %v1815
  %vm1822 = vweird.f32 %v1816
  %vm1823 = vmor %vm1821, %vm1822
  %v1824 = vsel %vm1823, %v1816, %v1820
  %v1825 = vand.u32 2147483647, %v1815
  %vm1826 = vcmp.eq.f32.partialorder %v1825, 8.507059e+37
  %v1827 = vand.u32 %v1815, 2147483648
  %v1828 = vor.u32 1.1754944e-38, %v1827
  %v1829 = vsel %vm1826, %v1828, %v1824
  %v1830 = vmul.f32 1.0, %v1829
  %v1831 = vadd.f32 %v1642, %v1795
  %v1832 = vxor.u32 %v1831, 2147483648
  %v1833 = vmul.f32 %v1832, 1.442695
  %v1834 = vpow.pop %v1833
  %v1835 = vadd.f32 %v1834, 1.0
  %v1836 = vrcp.pop %v1835
  %v1837 = vmul.f32 %v1835, %v1836
  %v1838 = vsub.f32 1.0, %v1837
  %v1839 = vmul.f32 %v1836, %v1838
  %v1840 = vadd.f32 %v1836, %v1839
  %vm1841 = vweird.f32 %v1835
  %vm1842 = vweird.f32 %v1836
  %vm1843 = vmor %vm1841, %vm1842
  %v1844 = vsel %vm1843, %v1836, %v1840
  %v1845 = vand.u32 2147483647, %v1835
  %vm1846 = vcmp.eq.f32.partialorder %v1845, 8.507059e+37
  %v1847 = vand.u32 %v1835, 2147483648
  %v1848 = vor.u32 1.1754944e-38, %v1847
  %v1849 = vsel %vm1846, %v1848, %v1844
  %v1850 = vmul.f32 1.0, %v1849
  %v1851 = vadd.f32 %v1808, %v1361
  %v1852 = vmul.f32 %v1830, %v1851
  %v1853 = vadd.f32 %v1643, %v1852
  %v1854 = vtanh.pop %v1853
  %v1855 = vsub.f32 0.0, %v1854
  %v1856 = vmul.f32 %v1850, %v1855
  %v1857 = vadd.f32 %v1854, %v1856
  %s1858 = scalar_lea.vmem %s6, %s591
  %1859 = vst [vmem:[%s1858] sm:$0xff] %v1857
  %v1860 = vld [vmem:[%s600] sm:$0xff]
  %v1861 = vld [vmem:[%s600 + $0x8] sm:$0xff]
  %v1862 = vld [vmem:[%s600 + $0x10] sm:$0xff]
  %v1863 = vpack.c.bf16 %v1857, %v1857
  %1864 = vmatpush.bf16.msra.mxu0 %v1745
  %1865 = vmatpush.bf16.msra.mxu0 %v1742
  %1866 = vmatpush.bf16.msra.mxu0 %v1739
  %1867 = vmatpush.bf16.msra.mxu0 %v1736
  %1868 = vmatpush.bf16.msra.mxu0 %v1733
  %1869 = vmatpush.bf16.msra.mxu0 %v1730
  %1870 = vmatpush.bf16.msra.mxu0 %v1727
  %1871 = vmatpush.bf16.msra.mxu0 %v1724
  %1872 = vmatmul.bf16.gmra.mxu0 %v1863
  %v1873 = vpop.f32.mrf.mxu0
  %v1874 = vadd.f32 0.0, %v1873
  %v1875 = vpop.f32.mrf.mxu0
  %1876 = vdwg.mxu0
  %1877 = vmatpush.bf16.msra.mxu0 %v1746
  %1878 = vmatpush.bf16.msra.mxu0 %v1743
  %1879 = vmatpush.bf16.msra.mxu0 %v1740
  %1880 = vmatpush.bf16.msra.mxu0 %v1737
  %1881 = vmatpush.bf16.msra.mxu0 %v1734
  %1882 = vmatpush.bf16.msra.mxu0 %v1731
  %1883 = vmatpush.bf16.msra.mxu0 %v1728
  %1884 = vmatpush.bf16.msra.mxu0 %v1725
  %1885 = vmatmul.bf16.gmra.mxu0 %v1863
  %v1886 = vpop.f32.mrf.mxu0
  %v1887 = vadd.f32 0.0, %v1886
  %v1888 = vpop.f32.mrf.mxu0
  %1889 = vdwg.mxu0
  %1890 = vmatpush.bf16.msra.mxu0 %v1747
  %1891 = vmatpush.bf16.msra.mxu0 %v1744
  %1892 = vmatpush.bf16.msra.mxu0 %v1741
  %1893 = vmatpush.bf16.msra.mxu0 %v1738
  %1894 = vmatpush.bf16.msra.mxu0 %v1735
  %1895 = vmatpush.bf16.msra.mxu0 %v1732
  %1896 = vmatpush.bf16.msra.mxu0 %v1729
  %1897 = vmatpush.bf16.msra.mxu0 %v1726
  %1898 = vmatmul.bf16.gmra.mxu0 %v1863
  %v1899 = vpop.f32.mrf.mxu0
  %v1900 = vadd.f32 0.0, %v1899
  %v1901 = vpop.f32.mrf.mxu0
  %1902 = vdwg.mxu0
  %v1903 = vadd.f32 %v1860, %v1874
  %v1904 = vxor.u32 %v1903, 2147483648
  %v1905 = vmul.f32 %v1904, 1.442695
  %v1906 = vpow.pop %v1905
  %v1907 = vadd.f32 %v1906, 1.0
  %v1908 = vrcp.pop %v1907
  %v1909 = vmul.f32 %v1907, %v1908
  %v1910 = vsub.f32 1.0, %v1909
  %v1911 = vmul.f32 %v1908, %v1910
  %v1912 = vadd.f32 %v1908, %v1911
  %vm1913 = vweird.f32 %v1907
  %vm1914 = vweird.f32 %v1908
  %vm1915 = vmor %vm1913, %vm1914
  %v1916 = vsel %vm1915, %v1908, %v1912
  %v1917 = vand.u32 2147483647, %v1907
  %vm1918 = vcmp.eq.f32.partialorder %v1917, 8.507059e+37
  %v1919 = vand.u32 %v1907, 2147483648
  %v1920 = vor.u32 1.1754944e-38, %v1919
  %v1921 = vsel %vm1918, %v1920, %v1916
  %v1922 = vmul.f32 1.0, %v1921
  %v1923 = vadd.f32 %v1861, %v1887
  %v1924 = vxor.u32 %v1923, 2147483648
  %v1925 = vmul.f32 %v1924, 1.442695
  %v1926 = vpow.pop %v1925
  %v1927 = vadd.f32 %v1926, 1.0
  %v1928 = vrcp.pop %v1927
  %v1929 = vmul.f32 %v1927, %v1928
  %v1930 = vsub.f32 1.0, %v1929
  %v1931 = vmul.f32 %v1928, %v1930
  %v1932 = vadd.f32 %v1928, %v1931
  %vm1933 = vweird.f32 %v1927
  %vm1934 = vweird.f32 %v1928
  %vm1935 = vmor %vm1933, %vm1934
  %v1936 = vsel %vm1935, %v1928, %v1932
  %v1937 = vand.u32 2147483647, %v1927
  %vm1938 = vcmp.eq.f32.partialorder %v1937, 8.507059e+37
  %v1939 = vand.u32 %v1927, 2147483648
  %v1940 = vor.u32 1.1754944e-38, %v1939
  %v1941 = vsel %vm1938, %v1940, %v1936
  %v1942 = vmul.f32 1.0, %v1941
  %v1943 = vadd.f32 %v1900, %v1361
  %v1944 = vmul.f32 %v1922, %v1943
  %v1945 = vadd.f32 %v1862, %v1944
  %v1946 = vtanh.pop %v1945
  %v1947 = vsub.f32 %v1857, %v1946
  %v1948 = vmul.f32 %v1942, %v1947
  %v1949 = vadd.f32 %v1946, %v1948
  %s1950 = scalar_lea.vmem %s6, %s690
  %1951 = vst [vmem:[%s1950] sm:$0xff] %v1949
  %v1952 = vld [vmem:[%s699] sm:$0xff]
  %v1953 = vld [vmem:[%s699 + $0x8] sm:$0xff]
  %v1954 = vld [vmem:[%s699 + $0x10] sm:$0xff]
  %v1955 = vpack.c.bf16 %v1949, %v1949
  %1956 = vmatpush.bf16.msra.mxu0 %v1745
  %1957 = vmatpush.bf16.msra.mxu0 %v1742
  %1958 = vmatpush.bf16.msra.mxu0 %v1739
  %1959 = vmatpush.bf16.msra.mxu0 %v1736
  %1960 = vmatpush.bf16.msra.mxu0 %v1733
  %1961 = vmatpush.bf16.msra.mxu0 %v1730
  %1962 = vmatpush.bf16.msra.mxu0 %v1727
  %1963 = vmatpush.bf16.msra.mxu0 %v1724
  %1964 = vmatmul.bf16.gmra.mxu0 %v1955
  %v1965 = vpop.f32.mrf.mxu0
  %v1966 = vadd.f32 0.0, %v1965
  %v1967 = vpop.f32.mrf.mxu0
  %1968 = vdwg.mxu0
  %1969 = vmatpush.bf16.msra.mxu0 %v1746
  %1970 = vmatpush.bf16.msra.mxu0 %v1743
  %1971 = vmatpush.bf16.msra.mxu0 %v1740
  %1972 = vmatpush.bf16.msra.mxu0 %v1737
  %1973 = vmatpush.bf16.msra.mxu0 %v1734
  %1974 = vmatpush.bf16.msra.mxu0 %v1731
  %1975 = vmatpush.bf16.msra.mxu0 %v1728
  %1976 = vmatpush.bf16.msra.mxu0 %v1725
  %1977 = vmatmul.bf16.gmra.mxu0 %v1955
  %v1978 = vpop.f32.mrf.mxu0
  %v1979 = vadd.f32 0.0, %v1978
  %v1980 = vpop.f32.mrf.mxu0
  %1981 = vdwg.mxu0
  %1982 = vmatpush.bf16.msra.mxu0 %v1747
  %1983 = vmatpush.bf16.msra.mxu0 %v1744
  %1984 = vmatpush.bf16.msra.mxu0 %v1741
  %1985 = vmatpush.bf16.msra.mxu0 %v1738
  %1986 = vmatpush.bf16.msra.mxu0 %v1735
  %1987 = vmatpush.bf16.msra.mxu0 %v1732
  %1988 = vmatpush.bf16.msra.mxu0 %v1729
  %1989 = vmatpush.bf16.msra.mxu0 %v1726
  %1990 = vmatmul.bf16.gmra.mxu0 %v1955
  %v1991 = vpop.f32.mrf.mxu0
  %v1992 = vadd.f32 0.0, %v1991
  %v1993 = vpop.f32.mrf.mxu0
  %1994 = vdwg.mxu0
  %v1995 = vadd.f32 %v1952, %v1966
  %v1996 = vxor.u32 %v1995, 2147483648
  %v1997 = vmul.f32 %v1996, 1.442695
  %v1998 = vpow.pop %v1997
  %v1999 = vadd.f32 %v1998, 1.0
  %v2000 = vrcp.pop %v1999
  %v2001 = vmul.f32 %v1999, %v2000
  %v2002 = vsub.f32 1.0, %v2001
  %v2003 = vmul.f32 %v2000, %v2002
  %v2004 = vadd.f32 %v2000, %v2003
  %vm2005 = vweird.f32 %v1999
  %vm2006 = vweird.f32 %v2000
  %vm2007 = vmor %vm2005, %vm2006
  %v2008 = vsel %vm2007, %v2000, %v2004
  %v2009 = vand.u32 2147483647, %v1999
  %vm2010 = vcmp.eq.f32.partialorder %v2009, 8.507059e+37
  %v2011 = vand.u32 %v1999, 2147483648
  %v2012 = vor.u32 1.1754944e-38, %v2011
  %v2013 = vsel %vm2010, %v2012, %v2008
  %v2014 = vmul.f32 1.0, %v2013
  %v2015 = vadd.f32 %v1953, %v1979
  %v2016 = vxor.u32 %v2015, 2147483648
  %v2017 = vmul.f32 %v2016, 1.442695
  %v2018 = vpow.pop %v2017
  %v2019 = vadd.f32 %v2018, 1.0
  %v2020 = vrcp.pop %v2019
  %v2021 = vmul.f32 %v2019, %v2020
  %v2022 = vsub.f32 1.0, %v2021
  %v2023 = vmul.f32 %v2020, %v2022
  %v2024 = vadd.f32 %v2020, %v2023
  %vm2025 = vweird.f32 %v2019
  %vm2026 = vweird.f32 %v2020
  %vm2027 = vmor %vm2025, %vm2026
  %v2028 = vsel %vm2027, %v2020, %v2024
  %v2029 = vand.u32 2147483647, %v2019
  %vm2030 = vcmp.eq.f32.partialorder %v2029, 8.507059e+37
  %v2031 = vand.u32 %v2019, 2147483648
  %v2032 = vor.u32 1.1754944e-38, %v2031
  %v2033 = vsel %vm2030, %v2032, %v2028
  %v2034 = vmul.f32 1.0, %v2033
  %v2035 = vadd.f32 %v1992, %v1361
  %v2036 = vmul.f32 %v2014, %v2035
  %v2037 = vadd.f32 %v1954, %v2036
  %v2038 = vtanh.pop %v2037
  %v2039 = vsub.f32 %v1949, %v2038
  %v2040 = vmul.f32 %v2034, %v2039
  %v2041 = vadd.f32 %v2038, %v2040
  %s2042 = scalar_lea.vmem %s6, %s789
  %2043 = vst [vmem:[%s2042] sm:$0xff] %v2041
  %v2044 = vld [vmem:[%s798] sm:$0xff]
  %v2045 = vld [vmem:[%s798 + $0x8] sm:$0xff]
  %v2046 = vld [vmem:[%s798 + $0x10] sm:$0xff]
  %v2047 = vpack.c.bf16 %v2041, %v2041
  %2048 = vmatpush.bf16.msra.mxu0 %v1745
  %2049 = vmatpush.bf16.msra.mxu0 %v1742
  %2050 = vmatpush.bf16.msra.mxu0 %v1739
  %2051 = vmatpush.bf16.msra.mxu0 %v1736
  %2052 = vmatpush.bf16.msra.mxu0 %v1733
  %2053 = vmatpush.bf16.msra.mxu0 %v1730
  %2054 = vmatpush.bf16.msra.mxu0 %v1727
  %2055 = vmatpush.bf16.msra.mxu0 %v1724
  %2056 = vmatmul.bf16.gmra.mxu0 %v2047
  %v2057 = vpop.f32.mrf.mxu0
  %v2058 = vadd.f32 0.0, %v2057
  %v2059 = vpop.f32.mrf.mxu0
  %2060 = vdwg.mxu0
  %2061 = vmatpush.bf16.msra.mxu0 %v1746
  %2062 = vmatpush.bf16.msra.mxu0 %v1743
  %2063 = vmatpush.bf16.msra.mxu0 %v1740
  %2064 = vmatpush.bf16.msra.mxu0 %v1737
  %2065 = vmatpush.bf16.msra.mxu0 %v1734
  %2066 = vmatpush.bf16.msra.mxu0 %v1731
  %2067 = vmatpush.bf16.msra.mxu0 %v1728
  %2068 = vmatpush.bf16.msra.mxu0 %v1725
  %2069 = vmatmul.bf16.gmra.mxu0 %v2047
  %v2070 = vpop.f32.mrf.mxu0
  %v2071 = vadd.f32 0.0, %v2070
  %v2072 = vpop.f32.mrf.mxu0
  %2073 = vdwg.mxu0
  %2074 = vmatpush.bf16.msra.mxu0 %v1747
  %2075 = vmatpush.bf16.msra.mxu0 %v1744
  %2076 = vmatpush.bf16.msra.mxu0 %v1741
  %2077 = vmatpush.bf16.msra.mxu0 %v1738
  %2078 = vmatpush.bf16.msra.mxu0 %v1735
  %2079 = vmatpush.bf16.msra.mxu0 %v1732
  %2080 = vmatpush.bf16.msra.mxu0 %v1729
  %2081 = vmatpush.bf16.msra.mxu0 %v1726
  %2082 = vmatmul.bf16.gmra.mxu0 %v2047
  %v2083 = vpop.f32.mrf.mxu0
  %v2084 = vadd.f32 0.0, %v2083
  %v2085 = vpop.f32.mrf.mxu0
  %2086 = vdwg.mxu0
  %v2087 = vadd.f32 %v2044, %v2058
  %v2088 = vxor.u32 %v2087, 2147483648
  %v2089 = vmul.f32 %v2088, 1.442695
  %v2090 = vpow.pop %v2089
  %v2091 = vadd.f32 %v2090, 1.0
  %v2092 = vrcp.pop %v2091
  %v2093 = vmul.f32 %v2091, %v2092
  %v2094 = vsub.f32 1.0, %v2093
  %v2095 = vmul.f32 %v2092, %v2094
  %v2096 = vadd.f32 %v2092, %v2095
  %vm2097 = vweird.f32 %v2091
  %vm2098 = vweird.f32 %v2092
  %vm2099 = vmor %vm2097, %vm2098
  %v2100 = vsel %vm2099, %v2092, %v2096
  %v2101 = vand.u32 2147483647, %v2091
  %vm2102 = vcmp.eq.f32.partialorder %v2101, 8.507059e+37
  %v2103 = vand.u32 %v2091, 2147483648
  %v2104 = vor.u32 1.1754944e-38, %v2103
  %v2105 = vsel %vm2102, %v2104, %v2100
  %v2106 = vmul.f32 1.0, %v2105
  %v2107 = vadd.f32 %v2045, %v2071
  %v2108 = vxor.u32 %v2107, 2147483648
  %v2109 = vmul.f32 %v2108, 1.442695
  %v2110 = vpow.pop %v2109
  %v2111 = vadd.f32 %v2110, 1.0
  %v2112 = vrcp.pop %v2111
  %v2113 = vmul.f32 %v2111, %v2112
  %v2114 = vsub.f32 1.0, %v2113
  %v2115 = vmul.f32 %v2112, %v2114
  %v2116 = vadd.f32 %v2112, %v2115
  %vm2117 = vweird.f32 %v2111
  %vm2118 = vweird.f32 %v2112
  %vm2119 = vmor %vm2117, %vm2118
  %v2120 = vsel %vm2119, %v2112, %v2116
  %v2121 = vand.u32 2147483647, %v2111
  %vm2122 = vcmp.eq.f32.partialorder %v2121, 8.507059e+37
  %v2123 = vand.u32 %v2111, 2147483648
  %v2124 = vor.u32 1.1754944e-38, %v2123
  %v2125 = vsel %vm2122, %v2124, %v2120
  %v2126 = vmul.f32 1.0, %v2125
  %v2127 = vadd.f32 %v2084, %v1361
  %v2128 = vmul.f32 %v2106, %v2127
  %v2129 = vadd.f32 %v2046, %v2128
  %v2130 = vtanh.pop %v2129
  %v2131 = vsub.f32 %v2041, %v2130
  %v2132 = vmul.f32 %v2126, %v2131
  %v2133 = vadd.f32 %v2130, %v2132
  %s2134 = scalar_lea.vmem %s6, %s888
  %2135 = vst [vmem:[%s2134] sm:$0xff] %v2133
  %v2136 = vld [vmem:[%s897] sm:$0xff]
  %v2137 = vld [vmem:[%s897 + $0x8] sm:$0xff]
  %v2138 = vld [vmem:[%s897 + $0x10] sm:$0xff]
  %v2139 = vpack.c.bf16 %v2133, %v2133
  %2140 = vmatpush.bf16.msra.mxu0 %v1745
  %2141 = vmatpush.bf16.msra.mxu0 %v1742
  %2142 = vmatpush.bf16.msra.mxu0 %v1739
  %2143 = vmatpush.bf16.msra.mxu0 %v1736
  %2144 = vmatpush.bf16.msra.mxu0 %v1733
  %2145 = vmatpush.bf16.msra.mxu0 %v1730
  %2146 = vmatpush.bf16.msra.mxu0 %v1727
  %2147 = vmatpush.bf16.msra.mxu0 %v1724
  %2148 = vmatmul.bf16.gmra.mxu0 %v2139
  %v2149 = vpop.f32.mrf.mxu0
  %v2150 = vadd.f32 0.0, %v2149
  %v2151 = vpop.f32.mrf.mxu0
  %2152 = vdwg.mxu0
  %2153 = vmatpush.bf16.msra.mxu0 %v1746
  %2154 = vmatpush.bf16.msra.mxu0 %v1743
  %2155 = vmatpush.bf16.msra.mxu0 %v1740
  %2156 = vmatpush.bf16.msra.mxu0 %v1737
  %2157 = vmatpush.bf16.msra.mxu0 %v1734
  %2158 = vmatpush.bf16.msra.mxu0 %v1731
  %2159 = vmatpush.bf16.msra.mxu0 %v1728
  %2160 = vmatpush.bf16.msra.mxu0 %v1725
  %2161 = vmatmul.bf16.gmra.mxu0 %v2139
  %v2162 = vpop.f32.mrf.mxu0
  %v2163 = vadd.f32 0.0, %v2162
  %v2164 = vpop.f32.mrf.mxu0
  %2165 = vdwg.mxu0
  %2166 = vmatpush.bf16.msra.mxu0 %v1747
  %2167 = vmatpush.bf16.msra.mxu0 %v1744
  %2168 = vmatpush.bf16.msra.mxu0 %v1741
  %2169 = vmatpush.bf16.msra.mxu0 %v1738
  %2170 = vmatpush.bf16.msra.mxu0 %v1735
  %2171 = vmatpush.bf16.msra.mxu0 %v1732
  %2172 = vmatpush.bf16.msra.mxu0 %v1729
  %2173 = vmatpush.bf16.msra.mxu0 %v1726
  %2174 = vmatmul.bf16.gmra.mxu0 %v2139
  %v2175 = vpop.f32.mrf.mxu0
  %v2176 = vadd.f32 0.0, %v2175
  %v2177 = vpop.f32.mrf.mxu0
  %2178 = vdwg.mxu0
  %v2179 = vadd.f32 %v2136, %v2150
  %v2180 = vxor.u32 %v2179, 2147483648
  %v2181 = vmul.f32 %v2180, 1.442695
  %v2182 = vpow.pop %v2181
  %v2183 = vadd.f32 %v2182, 1.0
  %v2184 = vrcp.pop %v2183
  %v2185 = vmul.f32 %v2183, %v2184
  %v2186 = vsub.f32 1.0, %v2185
  %v2187 = vmul.f32 %v2184, %v2186
  %v2188 = vadd.f32 %v2184, %v2187
  %vm2189 = vweird.f32 %v2183
  %vm2190 = vweird.f32 %v2184
  %vm2191 = vmor %vm2189, %vm2190
  %v2192 = vsel %vm2191, %v2184, %v2188
  %v2193 = vand.u32 2147483647, %v2183
  %vm2194 = vcmp.eq.f32.partialorder %v2193, 8.507059e+37
  %v2195 = vand.u32 %v2183, 2147483648
  %v2196 = vor.u32 1.1754944e-38, %v2195
  %v2197 = vsel %vm2194, %v2196, %v2192
  %v2198 = vmul.f32 1.0, %v2197
  %v2199 = vadd.f32 %v2137, %v2163
  %v2200 = vxor.u32 %v2199, 2147483648
  %v2201 = vmul.f32 %v2200, 1.442695
  %v2202 = vpow.pop %v2201
  %v2203 = vadd.f32 %v2202, 1.0
  %v2204 = vrcp.pop %v2203
  %v2205 = vmul.f32 %v2203, %v2204
  %v2206 = vsub.f32 1.0, %v2205
  %v2207 = vmul.f32 %v2204, %v2206
  %v2208 = vadd.f32 %v2204, %v2207
  %vm2209 = vweird.f32 %v2203
  %vm2210 = vweird.f32 %v2204
  %vm2211 = vmor %vm2209, %vm2210
  %v2212 = vsel %vm2211, %v2204, %v2208
  %v2213 = vand.u32 2147483647, %v2203
  %vm2214 = vcmp.eq.f32.partialorder %v2213, 8.507059e+37
  %v2215 = vand.u32 %v2203, 2147483648
  %v2216 = vor.u32 1.1754944e-38, %v2215
  %v2217 = vsel %vm2214, %v2216, %v2212
  %v2218 = vmul.f32 1.0, %v2217
  %v2219 = vadd.f32 %v2176, %v1361
  %v2220 = vmul.f32 %v2198, %v2219
  %v2221 = vadd.f32 %v2138, %v2220
  %v2222 = vtanh.pop %v2221
  %v2223 = vsub.f32 %v2133, %v2222
  %v2224 = vmul.f32 %v2218, %v2223
  %v2225 = vadd.f32 %v2222, %v2224
  %s2226 = scalar_lea.vmem %s6, %s987
  %2227 = vst [vmem:[%s2226] sm:$0xff] %v2225
  %v2228 = vld [vmem:[%s996] sm:$0xff]
  %v2229 = vld [vmem:[%s996 + $0x8] sm:$0xff]
  %v2230 = vld [vmem:[%s996 + $0x10] sm:$0xff]
  %v2231 = vpack.c.bf16 %v2225, %v2225
  %2232 = vmatpush.bf16.msra.mxu0 %v1745
  %2233 = vmatpush.bf16.msra.mxu0 %v1742
  %2234 = vmatpush.bf16.msra.mxu0 %v1739
  %2235 = vmatpush.bf16.msra.mxu0 %v1736
  %2236 = vmatpush.bf16.msra.mxu0 %v1733
  %2237 = vmatpush.bf16.msra.mxu0 %v1730
  %2238 = vmatpush.bf16.msra.mxu0 %v1727
  %2239 = vmatpush.bf16.msra.mxu0 %v1724
  %2240 = vmatmul.bf16.gmra.mxu0 %v2231
  %v2241 = vpop.f32.mrf.mxu0
  %v2242 = vadd.f32 0.0, %v2241
  %v2243 = vpop.f32.mrf.mxu0
  %2244 = vdwg.mxu0
  %2245 = vmatpush.bf16.msra.mxu0 %v1746
  %2246 = vmatpush.bf16.msra.mxu0 %v1743
  %2247 = vmatpush.bf16.msra.mxu0 %v1740
  %2248 = vmatpush.bf16.msra.mxu0 %v1737
  %2249 = vmatpush.bf16.msra.mxu0 %v1734
  %2250 = vmatpush.bf16.msra.mxu0 %v1731
  %2251 = vmatpush.bf16.msra.mxu0 %v1728
  %2252 = vmatpush.bf16.msra.mxu0 %v1725
  %2253 = vmatmul.bf16.gmra.mxu0 %v2231
  %v2254 = vpop.f32.mrf.mxu0
  %v2255 = vadd.f32 0.0, %v2254
  %v2256 = vpop.f32.mrf.mxu0
  %2257 = vdwg.mxu0
  %2258 = vmatpush.bf16.msra.mxu0 %v1747
  %2259 = vmatpush.bf16.msra.mxu0 %v1744
  %2260 = vmatpush.bf16.msra.mxu0 %v1741
  %2261 = vmatpush.bf16.msra.mxu0 %v1738
  %2262 = vmatpush.bf16.msra.mxu0 %v1735
  %2263 = vmatpush.bf16.msra.mxu0 %v1732
  %2264 = vmatpush.bf16.msra.mxu0 %v1729
  %2265 = vmatpush.bf16.msra.mxu0 %v1726
  %2266 = vmatmul.bf16.gmra.mxu0 %v2231
  %v2267 = vpop.f32.mrf.mxu0
  %v2268 = vadd.f32 0.0, %v2267
  %v2269 = vpop.f32.mrf.mxu0
  %2270 = vdwg.mxu0
  %v2271 = vadd.f32 %v2228, %v2242
  %v2272 = vxor.u32 %v2271, 2147483648
  %v2273 = vmul.f32 %v2272, 1.442695
  %v2274 = vpow.pop %v2273
  %v2275 = vadd.f32 %v2274, 1.0
  %v2276 = vrcp.pop %v2275
  %v2277 = vmul.f32 %v2275, %v2276
  %v2278 = vsub.f32 1.0, %v2277
  %v2279 = vmul.f32 %v2276, %v2278
  %v2280 = vadd.f32 %v2276, %v2279
  %vm2281 = vweird.f32 %v2275
  %vm2282 = vweird.f32 %v2276
  %vm2283 = vmor %vm2281, %vm2282
  %v2284 = vsel %vm2283, %v2276, %v2280
  %v2285 = vand.u32 2147483647, %v2275
  %vm2286 = vcmp.eq.f32.partialorder %v2285, 8.507059e+37
  %v2287 = vand.u32 %v2275, 2147483648
  %v2288 = vor.u32 1.1754944e-38, %v2287
  %v2289 = vsel %vm2286, %v2288, %v2284
  %v2290 = vmul.f32 1.0, %v2289
  %v2291 = vadd.f32 %v2229, %v2255
  %v2292 = vxor.u32 %v2291, 2147483648
  %v2293 = vmul.f32 %v2292, 1.442695
  %v2294 = vpow.pop %v2293
  %v2295 = vadd.f32 %v2294, 1.0
  %v2296 = vrcp.pop %v2295
  %v2297 = vmul.f32 %v2295, %v2296
  %v2298 = vsub.f32 1.0, %v2297
  %v2299 = vmul.f32 %v2296, %v2298
  %v2300 = vadd.f32 %v2296, %v2299
  %vm2301 = vweird.f32 %v2295
  %vm2302 = vweird.f32 %v2296
  %vm2303 = vmor %vm2301, %vm2302
  %v2304 = vsel %vm2303, %v2296, %v2300
  %v2305 = vand.u32 2147483647, %v2295
  %vm2306 = vcmp.eq.f32.partialorder %v2305, 8.507059e+37
  %v2307 = vand.u32 %v2295, 2147483648
  %v2308 = vor.u32 1.1754944e-38, %v2307
  %v2309 = vsel %vm2306, %v2308, %v2304
  %v2310 = vmul.f32 1.0, %v2309
  %v2311 = vadd.f32 %v2268, %v1361
  %v2312 = vmul.f32 %v2290, %v2311
  %v2313 = vadd.f32 %v2230, %v2312
  %v2314 = vtanh.pop %v2313
  %v2315 = vsub.f32 %v2225, %v2314
  %v2316 = vmul.f32 %v2310, %v2315
  %v2317 = vadd.f32 %v2314, %v2316
  %s2318 = scalar_lea.vmem %s6, %s1086
  %2319 = vst [vmem:[%s2318] sm:$0xff] %v2317
  %v2320 = vld [vmem:[%s1095] sm:$0xff]
  %v2321 = vld [vmem:[%s1095 + $0x8] sm:$0xff]
  %v2322 = vld [vmem:[%s1095 + $0x10] sm:$0xff]
  %v2323 = vpack.c.bf16 %v2317, %v2317
  %2324 = vmatpush.bf16.msra.mxu0 %v1745
  %2325 = vmatpush.bf16.msra.mxu0 %v1742
  %2326 = vmatpush.bf16.msra.mxu0 %v1739
  %2327 = vmatpush.bf16.msra.mxu0 %v1736
  %2328 = vmatpush.bf16.msra.mxu0 %v1733
  %2329 = vmatpush.bf16.msra.mxu0 %v1730
  %2330 = vmatpush.bf16.msra.mxu0 %v1727
  %2331 = vmatpush.bf16.msra.mxu0 %v1724
  %2332 = vmatmul.bf16.gmra.mxu0 %v2323
  %v2333 = vpop.f32.mrf.mxu0
  %v2334 = vadd.f32 0.0, %v2333
  %v2335 = vpop.f32.mrf.mxu0
  %2336 = vdwg.mxu0
  %2337 = vmatpush.bf16.msra.mxu0 %v1746
  %2338 = vmatpush.bf16.msra.mxu0 %v1743
  %2339 = vmatpush.bf16.msra.mxu0 %v1740
  %2340 = vmatpush.bf16.msra.mxu0 %v1737
  %2341 = vmatpush.bf16.msra.mxu0 %v1734
  %2342 = vmatpush.bf16.msra.mxu0 %v1731
  %2343 = vmatpush.bf16.msra.mxu0 %v1728
  %2344 = vmatpush.bf16.msra.mxu0 %v1725
  %2345 = vmatmul.bf16.gmra.mxu0 %v2323
  %v2346 = vpop.f32.mrf.mxu0
  %v2347 = vadd.f32 0.0, %v2346
  %v2348 = vpop.f32.mrf.mxu0
  %2349 = vdwg.mxu0
  %2350 = vmatpush.bf16.msra.mxu0 %v1747
  %2351 = vmatpush.bf16.msra.mxu0 %v1744
  %2352 = vmatpush.bf16.msra.mxu0 %v1741
  %2353 = vmatpush.bf16.msra.mxu0 %v1738
  %2354 = vmatpush.bf16.msra.mxu0 %v1735
  %2355 = vmatpush.bf16.msra.mxu0 %v1732
  %2356 = vmatpush.bf16.msra.mxu0 %v1729
  %2357 = vmatpush.bf16.msra.mxu0 %v1726
  %2358 = vmatmul.bf16.gmra.mxu0 %v2323
  %v2359 = vpop.f32.mrf.mxu0
  %v2360 = vadd.f32 0.0, %v2359
  %v2361 = vpop.f32.mrf.mxu0
  %2362 = vdwg.mxu0
  %v2363 = vadd.f32 %v2320, %v2334
  %v2364 = vxor.u32 %v2363, 2147483648
  %v2365 = vmul.f32 %v2364, 1.442695
  %v2366 = vpow.pop %v2365
  %v2367 = vadd.f32 %v2366, 1.0
  %v2368 = vrcp.pop %v2367
  %v2369 = vmul.f32 %v2367, %v2368
  %v2370 = vsub.f32 1.0, %v2369
  %v2371 = vmul.f32 %v2368, %v2370
  %v2372 = vadd.f32 %v2368, %v2371
  %vm2373 = vweird.f32 %v2367
  %vm2374 = vweird.f32 %v2368
  %vm2375 = vmor %vm2373, %vm2374
  %v2376 = vsel %vm2375, %v2368, %v2372
  %v2377 = vand.u32 2147483647, %v2367
  %vm2378 = vcmp.eq.f32.partialorder %v2377, 8.507059e+37
  %v2379 = vand.u32 %v2367, 2147483648
  %v2380 = vor.u32 1.1754944e-38, %v2379
  %v2381 = vsel %vm2378, %v2380, %v2376
  %v2382 = vmul.f32 1.0, %v2381
  %v2383 = vadd.f32 %v2321, %v2347
  %v2384 = vxor.u32 %v2383, 2147483648
  %v2385 = vmul.f32 %v2384, 1.442695
  %v2386 = vpow.pop %v2385
  %v2387 = vadd.f32 %v2386, 1.0
  %v2388 = vrcp.pop %v2387
  %v2389 = vmul.f32 %v2387, %v2388
  %v2390 = vsub.f32 1.0, %v2389
  %v2391 = vmul.f32 %v2388, %v2390
  %v2392 = vadd.f32 %v2388, %v2391
  %vm2393 = vweird.f32 %v2387
  %vm2394 = vweird.f32 %v2388
  %vm2395 = vmor %vm2393, %vm2394
  %v2396 = vsel %vm2395, %v2388, %v2392
  %v2397 = vand.u32 2147483647, %v2387
  %vm2398 = vcmp.eq.f32.partialorder %v2397, 8.507059e+37
  %v2399 = vand.u32 %v2387, 2147483648
  %v2400 = vor.u32 1.1754944e-38, %v2399
  %v2401 = vsel %vm2398, %v2400, %v2396
  %v2402 = vmul.f32 1.0, %v2401
  %v2403 = vadd.f32 %v2360, %v1361
  %v2404 = vmul.f32 %v2382, %v2403
  %v2405 = vadd.f32 %v2322, %v2404
  %v2406 = vtanh.pop %v2405
  %v2407 = vsub.f32 %v2317, %v2406
  %v2408 = vmul.f32 %v2402, %v2407
  %v2409 = vadd.f32 %v2406, %v2408
  %s2410 = scalar_lea.vmem %s6, %s1185
  %2411 = vst [vmem:[%s2410] sm:$0xff] %v2409
  %v2412 = vld [vmem:[%s1194] sm:$0xff]
  %v2413 = vld [vmem:[%s1194 + $0x8] sm:$0xff]
  %v2414 = vld [vmem:[%s1194 + $0x10] sm:$0xff]
  %v2415 = vpack.c.bf16 %v2409, %v2409
  %2416 = vmatpush.bf16.msra.mxu0 %v1745
  %2417 = vmatpush.bf16.msra.mxu0 %v1742
  %2418 = vmatpush.bf16.msra.mxu0 %v1739
  %2419 = vmatpush.bf16.msra.mxu0 %v1736
  %2420 = vmatpush.bf16.msra.mxu0 %v1733
  %2421 = vmatpush.bf16.msra.mxu0 %v1730
  %2422 = vmatpush.bf16.msra.mxu0 %v1727
  %2423 = vmatpush.bf16.msra.mxu0 %v1724
  %2424 = vmatmul.bf16.gmra.mxu0 %v2415
  %v2425 = vpop.f32.mrf.mxu0
  %v2426 = vadd.f32 0.0, %v2425
  %v2427 = vpop.f32.mrf.mxu0
  %2428 = vdwg.mxu0
  %2429 = vmatpush.bf16.msra.mxu0 %v1746
  %2430 = vmatpush.bf16.msra.mxu0 %v1743
  %2431 = vmatpush.bf16.msra.mxu0 %v1740
  %2432 = vmatpush.bf16.msra.mxu0 %v1737
  %2433 = vmatpush.bf16.msra.mxu0 %v1734
  %2434 = vmatpush.bf16.msra.mxu0 %v1731
  %2435 = vmatpush.bf16.msra.mxu0 %v1728
  %2436 = vmatpush.bf16.msra.mxu0 %v1725
  %2437 = vmatmul.bf16.gmra.mxu0 %v2415
  %v2438 = vpop.f32.mrf.mxu0
  %v2439 = vadd.f32 0.0, %v2438
  %v2440 = vpop.f32.mrf.mxu0
  %2441 = vdwg.mxu0
  %2442 = vmatpush.bf16.msra.mxu0 %v1747
  %2443 = vmatpush.bf16.msra.mxu0 %v1744
  %2444 = vmatpush.bf16.msra.mxu0 %v1741
  %2445 = vmatpush.bf16.msra.mxu0 %v1738
  %2446 = vmatpush.bf16.msra.mxu0 %v1735
  %2447 = vmatpush.bf16.msra.mxu0 %v1732
  %2448 = vmatpush.bf16.msra.mxu0 %v1729
  %2449 = vmatpush.bf16.msra.mxu0 %v1726
  %2450 = vmatmul.bf16.gmra.mxu0 %v2415
  %v2451 = vpop.f32.mrf.mxu0
  %v2452 = vadd.f32 0.0, %v2451
  %v2453 = vpop.f32.mrf.mxu0
  %2454 = vdwg.mxu0
  %v2455 = vadd.f32 %v2412, %v2426
  %v2456 = vxor.u32 %v2455, 2147483648
  %v2457 = vmul.f32 %v2456, 1.442695
  %v2458 = vpow.pop %v2457
  %v2459 = vadd.f32 %v2458, 1.0
  %v2460 = vrcp.pop %v2459
  %v2461 = vmul.f32 %v2459, %v2460
  %v2462 = vsub.f32 1.0, %v2461
  %v2463 = vmul.f32 %v2460, %v2462
  %v2464 = vadd.f32 %v2460, %v2463
  %vm2465 = vweird.f32 %v2459
  %vm2466 = vweird.f32 %v2460
  %vm2467 = vmor %vm2465, %vm2466
  %v2468 = vsel %vm2467, %v2460, %v2464
  %v2469 = vand.u32 2147483647, %v2459
  %vm2470 = vcmp.eq.f32.partialorder %v2469, 8.507059e+37
  %v2471 = vand.u32 %v2459, 2147483648
  %v2472 = vor.u32 1.1754944e-38, %v2471
  %v2473 = vsel %vm2470, %v2472, %v2468
  %v2474 = vmul.f32 1.0, %v2473
  %v2475 = vadd.f32 %v2413, %v2439
  %v2476 = vxor.u32 %v2475, 2147483648
  %v2477 = vmul.f32 %v2476, 1.442695
  %v2478 = vpow.pop %v2477
  %v2479 = vadd.f32 %v2478, 1.0
  %v2480 = vrcp.pop %v2479
  %v2481 = vmul.f32 %v2479, %v2480
  %v2482 = vsub.f32 1.0, %v2481
  %v2483 = vmul.f32 %v2480, %v2482
  %v2484 = vadd.f32 %v2480, %v2483
  %vm2485 = vweird.f32 %v2479
  %vm2486 = vweird.f32 %v2480
  %vm2487 = vmor %vm2485, %vm2486
  %v2488 = vsel %vm2487, %v2480, %v2484
  %v2489 = vand.u32 2147483647, %v2479
  %vm2490 = vcmp.eq.f32.partialorder %v2489, 8.507059e+37
  %v2491 = vand.u32 %v2479, 2147483648
  %v2492 = vor.u32 1.1754944e-38, %v2491
  %v2493 = vsel %vm2490, %v2492, %v2488
  %v2494 = vmul.f32 1.0, %v2493
  %v2495 = vadd.f32 %v2452, %v1361
  %v2496 = vmul.f32 %v2474, %v2495
  %v2497 = vadd.f32 %v2414, %v2496
  %v2498 = vtanh.pop %v2497
  %v2499 = vsub.f32 %v2409, %v2498
  %v2500 = vmul.f32 %v2494, %v2499
  %v2501 = vadd.f32 %v2498, %v2500
  %s2502 = scalar_lea.vmem %s6, %s1284
  %2503 = vst [vmem:[%s2502] sm:$0xff] %v2501
  // Predicated region
  $region26: #{gru_net_forward.1} parent=0 // pred_check
    _
  $region27: #{gru_net_forward.1} parent=0 // pred_check_branch
    %2505 = sbr.rel (0) target = $region29
  $region28: #{gru_net_forward.1} parent=0 // pred_region
    _
  $region29: #{gru_net_forward.1} parent=0 // pred_fallthru
    _
  // Predicated region
  $region30: #{gru_net_forward.1} parent=0 // pred_check
    _
  $region31: #{gru_net_forward.1} parent=0 // pred_check_branch
    %2507 = sbr.rel (0) target = $region33
  $region32: #{gru_net_forward.1} parent=0 // pred_region
    _
  $region33: #{gru_net_forward.1} parent=0 // pred_fallthru
    _

</llo_original>
